<compile_context>
chip_gen: v7x
topology: tpu7x:2x2x1
jax: 0.10.0
libtpu: 0.0.40
codegen_flags: <defaults>
</compile_context>

<pallas_src>
import numpy as np
import jax
import jax.numpy as jnp
from jax.experimental import pallas as pl
from jax.experimental.pallas import tpu as pltpu

BLOCK = 8     # qmat block size (qmat.shape[1] == qmat.shape[2] == 8)
IMG = 64      # Fold output_size = (64, 64)
K_QMAT = 4    # number of learnable quantization matrices (qmat.shape[0])
LANE = 128    # TPU lane width


def _dct_matrix(n=BLOCK):
    """Exactly reproduces DCT2d.__init__ (pi = 3.1415926)."""
    C = np.zeros((n, n), dtype=np.float32)
    N = n
    C[0, :] = np.sqrt(1.0 / N)
    for i in range(1, n):
        for j in range(n):
            C[i, j] = np.cos(3.1415926 * i * (2 * j + 1) / (2 * N)) * np.sqrt(2.0 / N)
    return C


# Block-diagonal whole-plane DCT operator, built once with numpy (host side).
_C8 = _dct_matrix(BLOCK)
_M64 = np.kron(np.eye(IMG // BLOCK, dtype=np.float32), _C8).astype(np.float32)
_MT64 = np.ascontiguousarray(_M64.T).astype(np.float32)


def _plan(bc, max_planes_per_step=16):
    """Choose (pk = planes packed per MXU matmul, g = planes per grid step).

    Constraints: pk | g | bc, and the block lane width g*64 is either a
    multiple of 128 or equals the full array width.  Prefers >= 2 grid steps
    (megacore) and pk = 4 (256-wide MXU on v6e/v7x; pk = 2 still fills v5e).
    """
    best = None
    for pk in (4, 2, 1):
        if bc % pk:
            continue
        gs = [g for g in range(pk, min(bc, max_planes_per_step) + 1, pk)
              if bc % g == 0 and ((g * IMG) % LANE == 0 or g == bc)]
        if not gs:
            continue
        gs2 = [g for g in gs if bc // g >= 2]
        if gs2:
            return pk, max(gs2)
        if best is None:
            best = (pk, max(gs))
    return best if best is not None else (1, bc)


# ---------------------------------------------------------------------------
# Pallas kernel: blockwise DCT -> masked IDCT (low / high frequency)
# Operates on lane-packed planes: xl block (64, g*64), plane p in cols [64p,64p+64)
# ---------------------------------------------------------------------------
def dct_split_kernel(xl_ref, m_ref, mt_ref, km_ref, kmt_ref, ql_ref,
                     low_ref, high_ref):
    m = m_ref[...]         # (64, 64)         M  = kron(I_8, C)
    mt = mt_ref[...]       # (64, 64)         M^T
    km = km_ref[...]       # (pk*64, pk*64)   kron(I_pk, M)
    kmt = kmt_ref[...]     # (pk*64, pk*64)   kron(I_pk, M^T)
    ql = ql_ref[...]       # (64, pk*64)      learned qmat tiled (lane-packed)

    cw = ql_ref.shape[1]                 # chunk lane width = pk*64 (static)
    nchunk = xl_ref.shape[1] // cw       # chunks per grid step (static)

    def mm(a, b):
        return jnp.dot(a, b,
                       precision=jax.lax.Precision.HIGHEST,
                       preferred_element_type=jnp.float32)

    for c in range(nchunk):              # static unroll, pk planes per chunk
        lo, hi = c * cw, (c + 1) * cw
        x = xl_ref[:, lo:hi]             # (64, pk*64)  pk planes, lane-packed
        a = mm(x, kmt)                   # X_p @ M^T   (per packed plane)
        y = mm(m, a)                     # Y_p = M X_p M^T   (blockwise DCT)
        yq = y * ql                      # Q * Y        (low-freq coefficients)
        yh = y - yq                      # (1-Q) * Y    (one vmul saved)
        low_ref[:, lo:hi] = mm(mt, mm(yq, km))    # M^T (Q*Y) M
        high_ref[:, lo:hi] = mm(mt, mm(yh, km))   # M^T ((1-Q)*Y) M


def _dct_split_pallas(xl, ql, pk, g):
    H, L = xl.shape                      # (64, BC*64)
    bc = L // IMG
    grid = (bc // g,)

    m = jnp.asarray(_M64)
    mt = jnp.asarray(_MT64)
    km = jnp.asarray(np.kron(np.eye(pk, dtype=np.float32), _M64))
    kmt = jnp.asarray(np.kron(np.eye(pk, dtype=np.float32), _MT64))

    out_sd = jax.ShapeDtypeStruct((H, L), jnp.float32)
    cost = pl.CostEstimate(
        flops=int(6 * bc * 2 * IMG * IMG * IMG),
        transcendentals=0,
        bytes_accessed=int(3 * bc * IMG * IMG * 4 + 2 * (pk * IMG) ** 2 * 4),
    )

    return pl.pallas_call(
        dct_split_kernel,
        out_shape=(out_sd, out_sd),
        grid=grid,
        in_specs=[
            pl.BlockSpec((IMG, g * IMG), lambda i: (0, i)),          # xl
            pl.BlockSpec((IMG, IMG), lambda i: (0, 0)),              # M
            pl.BlockSpec((IMG, IMG), lambda i: (0, 0)),              # M^T
            pl.BlockSpec((pk * IMG, pk * IMG), lambda i: (0, 0)),    # kron(I,M)
            pl.BlockSpec((pk * IMG, pk * IMG), lambda i: (0, 0)),    # kron(I,M^T)
            pl.BlockSpec((IMG, pk * IMG), lambda i: (0, 0)),         # Q (packed)
        ],
        out_specs=(
            pl.BlockSpec((IMG, g * IMG), lambda i: (0, i)),
            pl.BlockSpec((IMG, g * IMG), lambda i: (0, i)),
        ),
        compiler_params=pltpu.CompilerParams(
            dimension_semantics=("parallel",),
        ),
        cost_estimate=cost,
    )(xl, m, mt, km, kmt, ql)


# ---------------------------------------------------------------------------
# Parameter init (deterministic, synthetic — mirrors __init__ shapes)
# TODO(synk): the real module loads qmats.mat via scipy.io.loadmat; the
# checkpoint is not available, so qmat is initialized randomly in-script.
# ---------------------------------------------------------------------------
def init_params(key):
    ks = jax.random.split(key, 8)
    return {
        "qmat": jax.random.uniform(ks[0], (K_QMAT, BLOCK, BLOCK), jnp.float32),
        "qmat64_weights": jnp.ones((K_QMAT,), jnp.float32),
        # noise_level_net: Linear(1,16) -> GELU -> Linear(16,16) -> GELU -> Linear(16, 2+K)
        "w1": 0.1 * jax.random.normal(ks[1], (1, 16), jnp.float32),
        "b1": jnp.zeros((16,), jnp.float32),
        "w2": 0.1 * jax.random.normal(ks[2], (16, 16), jnp.float32),
        "b2": jnp.zeros((16,), jnp.float32),
        "w3": 0.1 * jax.random.normal(ks[3], (16, 2 + K_QMAT), jnp.float32),
        "b3": jnp.zeros((2 + K_QMAT,), jnp.float32),
    }


def _learned_qmat(params, noise_level):
    """noise_level_net MLP + learned qmat combination (tiny glue)."""
    h = noise_level.astype(jnp.float32) @ params["w1"] + params["b1"]
    h = jax.nn.gelu(h, approximate=False)          # nn.GELU() default = exact
    h = h @ params["w2"] + params["b2"]
    h = jax.nn.gelu(h, approximate=False)
    r = h @ params["w3"] + params["b3"]            # (2 + K,)
    qw = jax.nn.softmax(params["qmat64_weights"]) * r[0] + r[1]           # (K,)
    return jnp.einsum("k,khw->hw", qw * r[2:], params["qmat"])            # (8, 8)


# ---------------------------------------------------------------------------
# Forward pass (glue in plain JAX, hot path in the Pallas kernel)
# ---------------------------------------------------------------------------
def learnable_dct_forward(params, x, noise_level):
    B, C, H, W = x.shape
    assert H == IMG and W == IMG, "Fold output_size is fixed to (64, 64)"
    bc = B * C

    learned_qmat = _learned_qmat(params, noise_level)                    # (8, 8)

    pk, g = _plan(bc)

    # learned qmat tiled for one lane-packed chunk of pk planes: (64, pk*64)
    ql = jnp.tile(learned_qmat, (IMG // BLOCK, pk * (IMG // BLOCK)))

    # lane-pack planes: (BC, 64, 64) -> (64, BC*64), plane p in cols [64p,64p+64)
    # (wrapper-side layout plumbing so kernel loads/stores are lane-dense)
    x_flat = x.reshape(bc, H, W).astype(jnp.float32)
    xl = jnp.transpose(x_flat, (1, 0, 2)).reshape(H, bc * W)

    lowl, highl = _dct_split_pallas(xl, ql, pk, g)

    def unpack(zl):
        return zl.reshape(H, bc, W).transpose(1, 0, 2).reshape(B, C, H, W)

    return unpack(lowl), unpack(highl)


# ---------------------------------------------------------------------------
# Pure-JAX reference (for a loose numerical sanity check)
# ---------------------------------------------------------------------------
def _reference(x, learned_qmat):
    B, C, H, W = x.shape
    m = jnp.asarray(_M64)
    q = jnp.tile(learned_qmat, (H // BLOCK, W // BLOCK))
    xf = x.reshape(B * C, H, W).astype(jnp.float32)
    hp = jax.lax.Precision.HIGHEST
    y = jnp.einsum("ij,pjk,lk->pil", m, xf, m, precision=hp)
    low = jnp.einsum("ji,pjk,kl->pil", m, y * q, m, precision=hp)
    high = jnp.einsum("ji,pjk,kl->pil", m, y * (1.0 - q), m, precision=hp)
    return low.reshape(B, C, H, W), high.reshape(B, C, H, W)


if __name__ == "__main__":
    key = jax.random.PRNGKey(0)
    k_param, k_x, k_n = jax.random.split(key, 3)

    params = init_params(k_param)
    # spatial must be 64x64 (Fold output_size); batch=2, channels=2
    x = jax.random.normal(k_x, (2, 2, IMG, IMG), jnp.float32)
    noise_level = jnp.array([0.1], dtype=jnp.float32)

    low, high = jax.jit(learnable_dct_forward)(params, x, noise_level)
    jax.block_until_ready((low, high))

    assert low.shape == (2, 2, IMG, IMG) and high.shape == (2, 2, IMG, IMG)

    # loose numerical check against a plain-JAX reference
    ref_low, ref_high = _reference(x, _learned_qmat(params, noise_level))
    assert jnp.allclose(low, ref_low, atol=1e-2, rtol=1e-2)
    assert jnp.allclose(high, ref_high, atol=1e-2, rtol=1e-2)

    print("KERNEL_OK")
</pallas_src>

<mosaic_0001>
module attributes {stable_mosaic.version = 11 : i64} {
  func.func @dct_split_kernel(%arg0: i32, %arg1: memref<64x128xf32, #tpu.memory_space<vmem>>, %arg2: memref<64x64xf32, #tpu.memory_space<vmem>>, %arg3: memref<64x64xf32, #tpu.memory_space<vmem>>, %arg4: memref<128x128xf32, #tpu.memory_space<vmem>>, %arg5: memref<128x128xf32, #tpu.memory_space<vmem>>, %arg6: memref<64x128xf32, #tpu.memory_space<vmem>>, %arg7: memref<64x128xf32, #tpu.memory_space<vmem>>, %arg8: memref<64x128xf32, #tpu.memory_space<vmem>>) attributes {dimension_semantics = [#tpu.dimension_semantics<parallel>], iteration_bounds = array<i64: 2>, scalar_prefetch = 0 : i64, scratch_operands = 0 : i64, tpu.core_type = #tpu.core_type<tc>, window_params = [{transform_indices = @transform_0, window_bounds = array<i64: 64, 128>}, {pipeline_mode = #tpu.pipeline_mode<synchronous>, transform_indices = @transform_1, window_bounds = array<i64: 64, 64>}, {pipeline_mode = #tpu.pipeline_mode<synchronous>, transform_indices = @transform_2, window_bounds = array<i64: 64, 64>}, {pipeline_mode = #tpu.pipeline_mode<synchronous>, transform_indices = @transform_3, window_bounds = array<i64: 128, 128>}, {pipeline_mode = #tpu.pipeline_mode<synchronous>, transform_indices = @transform_4, window_bounds = array<i64: 128, 128>}, {pipeline_mode = #tpu.pipeline_mode<synchronous>, transform_indices = @transform_5, window_bounds = array<i64: 64, 128>}, {transform_indices = @transform_6, window_bounds = array<i64: 64, 128>}, {transform_indices = @transform_7, window_bounds = array<i64: 64, 128>}]} {
    %c0 = arith.constant 0 : index
    %c0_0 = arith.constant 0 : index
    %0 = vector.load %arg2[%c0, %c0_0] : memref<64x64xf32, #tpu.memory_space<vmem>>, vector<64x64xf32>
    %c0_1 = arith.constant 0 : index
    %c0_2 = arith.constant 0 : index
    %1 = vector.load %arg3[%c0_1, %c0_2] : memref<64x64xf32, #tpu.memory_space<vmem>>, vector<64x64xf32>
    %c0_3 = arith.constant 0 : index
    %c0_4 = arith.constant 0 : index
    %2 = vector.load %arg4[%c0_3, %c0_4] : memref<128x128xf32, #tpu.memory_space<vmem>>, vector<128x128xf32>
    %c0_5 = arith.constant 0 : index
    %c0_6 = arith.constant 0 : index
    %3 = vector.load %arg5[%c0_5, %c0_6] : memref<128x128xf32, #tpu.memory_space<vmem>>, vector<128x128xf32>
    %c0_7 = arith.constant 0 : index
    %c0_8 = arith.constant 0 : index
    %4 = vector.load %arg6[%c0_7, %c0_8] : memref<64x128xf32, #tpu.memory_space<vmem>>, vector<64x128xf32>
    %c0_9 = arith.constant 0 : index
    %c0_10 = arith.constant 0 : index
    %5 = vector.load %arg1[%c0_9, %c0_10] : memref<64x128xf32, #tpu.memory_space<vmem>>, vector<64x128xf32>
    %cst = arith.constant dense<0.000000e+00> : vector<64x128xf32>
    %6 = tpu.matmul %5, %3, %cst {dimension_numbers = #tpu.dot_dimension_numbers<[1], [0], [0], [1], [0, 0, 1, 1], [], []>, precision = #tpu.contract_precision<fp32>} : vector<64x128xf32>, vector<128x128xf32>, vector<64x128xf32> -> vector<64x128xf32>
    %cst_11 = arith.constant dense<0.000000e+00> : vector<64x128xf32>
    %7 = tpu.matmul %0, %6, %cst_11 {dimension_numbers = #tpu.dot_dimension_numbers<[1], [0], [0], [1], [0, 0, 1, 1], [], []>, precision = #tpu.contract_precision<fp32>} : vector<64x64xf32>, vector<64x128xf32>, vector<64x128xf32> -> vector<64x128xf32>
    %8 = arith.mulf %7, %4 : vector<64x128xf32>
    %9 = arith.subf %7, %8 : vector<64x128xf32>
    %cst_12 = arith.constant dense<0.000000e+00> : vector<64x128xf32>
    %10 = tpu.matmul %8, %2, %cst_12 {dimension_numbers = #tpu.dot_dimension_numbers<[1], [0], [0], [1], [0, 0, 1, 1], [], []>, precision = #tpu.contract_precision<fp32>} : vector<64x128xf32>, vector<128x128xf32>, vector<64x128xf32> -> vector<64x128xf32>
    %cst_13 = arith.constant dense<0.000000e+00> : vector<64x128xf32>
    %11 = tpu.matmul %1, %10, %cst_13 {dimension_numbers = #tpu.dot_dimension_numbers<[1], [0], [0], [1], [0, 0, 1, 1], [], []>, precision = #tpu.contract_precision<fp32>} : vector<64x64xf32>, vector<64x128xf32>, vector<64x128xf32> -> vector<64x128xf32>
    %c0_14 = arith.constant 0 : index
    %c0_15 = arith.constant 0 : index
    %12 = vector.load %arg7[%c0_14, %c0_15] : memref<64x128xf32, #tpu.memory_space<vmem>>, vector<64x128xf32>
    tpu.vector_store %arg7[%c0_14, %c0_15], %11 {strides = array<i32>} : memref<64x128xf32, #tpu.memory_space<vmem>>, vector<64x128xf32>,
    %cst_16 = arith.constant dense<0.000000e+00> : vector<64x128xf32>
    %13 = tpu.matmul %9, %2, %cst_16 {dimension_numbers = #tpu.dot_dimension_numbers<[1], [0], [0], [1], [0, 0, 1, 1], [], []>, precision = #tpu.contract_precision<fp32>} : vector<64x128xf32>, vector<128x128xf32>, vector<64x128xf32> -> vector<64x128xf32>
    %cst_17 = arith.constant dense<0.000000e+00> : vector<64x128xf32>
    %14 = tpu.matmul %1, %13, %cst_17 {dimension_numbers = #tpu.dot_dimension_numbers<[1], [0], [0], [1], [0, 0, 1, 1], [], []>, precision = #tpu.contract_precision<fp32>} : vector<64x64xf32>, vector<64x128xf32>, vector<64x128xf32> -> vector<64x128xf32>
    %c0_18 = arith.constant 0 : index
    %c0_19 = arith.constant 0 : index
    %15 = vector.load %arg8[%c0_18, %c0_19] : memref<64x128xf32, #tpu.memory_space<vmem>>, vector<64x128xf32>
    tpu.vector_store %arg8[%c0_18, %c0_19], %14 {strides = array<i32>} : memref<64x128xf32, #tpu.memory_space<vmem>>, vector<64x128xf32>,
    return
  }
  func.func @transform_0(%arg0: i32) -> (i32, i32) {
    %c0_i32 = arith.constant 0 : i32
    %c0_i32_0 = arith.constant 0 : i32
    return %c0_i32, %arg0 : i32, i32
  }
  func.func @transform_1(%arg0: i32) -> (i32, i32) {
    %c0_i32 = arith.constant 0 : i32
    %c0_i32_0 = arith.constant 0 : i32
    %c0_i32_1 = arith.constant 0 : i32
    return %c0_i32, %c0_i32_0 : i32, i32
  }
  func.func @transform_2(%arg0: i32) -> (i32, i32) {
    %c0_i32 = arith.constant 0 : i32
    %c0_i32_0 = arith.constant 0 : i32
    %c0_i32_1 = arith.constant 0 : i32
    return %c0_i32, %c0_i32_0 : i32, i32
  }
  func.func @transform_3(%arg0: i32) -> (i32, i32) {
    %c0_i32 = arith.constant 0 : i32
    %c0_i32_0 = arith.constant 0 : i32
    %c0_i32_1 = arith.constant 0 : i32
    return %c0_i32, %c0_i32_0 : i32, i32
  }
  func.func @transform_4(%arg0: i32) -> (i32, i32) {
    %c0_i32 = arith.constant 0 : i32
    %c0_i32_0 = arith.constant 0 : i32
    %c0_i32_1 = arith.constant 0 : i32
    return %c0_i32, %c0_i32_0 : i32, i32
  }
  func.func @transform_5(%arg0: i32) -> (i32, i32) {
    %c0_i32 = arith.constant 0 : i32
    %c0_i32_0 = arith.constant 0 : i32
    %c0_i32_1 = arith.constant 0 : i32
    return %c0_i32, %c0_i32_0 : i32, i32
  }
  func.func @transform_6(%arg0: i32) -> (i32, i32) {
    %c0_i32 = arith.constant 0 : i32
    %c0_i32_0 = arith.constant 0 : i32
    return %c0_i32, %arg0 : i32, i32
  }
  func.func @transform_7(%arg0: i32) -> (i32, i32) {
    %c0_i32 = arith.constant 0 : i32
    %c0_i32_0 = arith.constant 0 : i32
    return %c0_i32, %arg0 : i32, i32
  }
}

</mosaic_0001>

<llo_original>
// kernel: tile.8
$region0: #{tile.8}
  #allocation0 [shape = 's32[1]{0}', space=sflag, size = 0x4, scoped, tag = 'scoped memory for tile.8']
  %s0 = inlined_call_operand.vmem [shape: f32[8,8], index: 0, kind: input, shape index: {}]
  %s1 = inlined_call_operand.vmem [shape: f32[8,8,16,8], index: 1, kind: output, shape index: {}]
  // Predicated region
  $region2: #{tile.8} parent=0 // pred_check
    _
  $region3: #{tile.8} parent=0 // pred_check_branch
    %3 = sbr.rel (0) target = $region5
  $region4: #{tile.8} parent=0 // pred_region
    _
  $region5: #{tile.8} parent=0 // pred_fallthru
    _
  %v4 = vld [vmem:[%s0] ss:$0 sm:$0xff]
  %5 = vst [vmem:[%s1] sm:$0xff] %v4
  %s6 = scalar_lea.vmem %s1, 128
  %7 = vst [vmem:[%s6] sm:$0xff] %v4
  %s8 = scalar_lea.vmem %s1, 256
  %9 = vst [vmem:[%s8] sm:$0xff] %v4
  %s10 = scalar_lea.vmem %s1, 384
  %11 = vst [vmem:[%s10] sm:$0xff] %v4
  %s12 = scalar_lea.vmem %s1, 512
  %13 = vst [vmem:[%s12] sm:$0xff] %v4
  %s14 = scalar_lea.vmem %s1, 640
  %15 = vst [vmem:[%s14] sm:$0xff] %v4
  %s16 = scalar_lea.vmem %s1, 768
  %17 = vst [vmem:[%s16] sm:$0xff] %v4
  %s18 = scalar_lea.vmem %s1, 896
  %19 = vst [vmem:[%s18] sm:$0xff] %v4
  %s20 = scalar_lea.vmem %s0, 1
  %v21 = vld [vmem:[%s20] ss:$0 sm:$0xff]
  %s22 = scalar_lea.vmem %s1, 16
  %23 = vst [vmem:[%s22] sm:$0xff] %v21
  %s24 = scalar_lea.vmem %s1, 144
  %25 = vst [vmem:[%s24] sm:$0xff] %v21
  %s26 = scalar_lea.vmem %s1, 272
  %27 = vst [vmem:[%s26] sm:$0xff] %v21
  %s28 = scalar_lea.vmem %s1, 400
  %29 = vst [vmem:[%s28] sm:$0xff] %v21
  %s30 = scalar_lea.vmem %s1, 528
  %31 = vst [vmem:[%s30] sm:$0xff] %v21
  %s32 = scalar_lea.vmem %s1, 656
  %33 = vst [vmem:[%s32] sm:$0xff] %v21
  %s34 = scalar_lea.vmem %s1, 784
  %35 = vst [vmem:[%s34] sm:$0xff] %v21
  %s36 = scalar_lea.vmem %s1, 912
  %37 = vst [vmem:[%s36] sm:$0xff] %v21
  %s38 = scalar_lea.vmem %s0, 2
  %v39 = vld [vmem:[%s38] ss:$0 sm:$0xff]
  %s40 = scalar_lea.vmem %s1, 32
  %41 = vst [vmem:[%s40] sm:$0xff] %v39
  %s42 = scalar_lea.vmem %s1, 160
  %43 = vst [vmem:[%s42] sm:$0xff] %v39
  %s44 = scalar_lea.vmem %s1, 288
  %45 = vst [vmem:[%s44] sm:$0xff] %v39
  %s46 = scalar_lea.vmem %s1, 416
  %47 = vst [vmem:[%s46] sm:$0xff] %v39
  %s48 = scalar_lea.vmem %s1, 544
  %49 = vst [vmem:[%s48] sm:$0xff] %v39
  %s50 = scalar_lea.vmem %s1, 672
  %51 = vst [vmem:[%s50] sm:$0xff] %v39
  %s52 = scalar_lea.vmem %s1, 800
  %53 = vst [vmem:[%s52] sm:$0xff] %v39
  %s54 = scalar_lea.vmem %s1, 928
  %55 = vst [vmem:[%s54] sm:$0xff] %v39
  %s56 = scalar_lea.vmem %s0, 3
  %v57 = vld [vmem:[%s56] ss:$0 sm:$0xff]
  %s58 = scalar_lea.vmem %s1, 48
  %59 = vst [vmem:[%s58] sm:$0xff] %v57
  %s60 = scalar_lea.vmem %s1, 176
  %61 = vst [vmem:[%s60] sm:$0xff] %v57
  %s62 = scalar_lea.vmem %s1, 304
  %63 = vst [vmem:[%s62] sm:$0xff] %v57
  %s64 = scalar_lea.vmem %s1, 432
  %65 = vst [vmem:[%s64] sm:$0xff] %v57
  %s66 = scalar_lea.vmem %s1, 560
  %67 = vst [vmem:[%s66] sm:$0xff] %v57
  %s68 = scalar_lea.vmem %s1, 688
  %69 = vst [vmem:[%s68] sm:$0xff] %v57
  %s70 = scalar_lea.vmem %s1, 816
  %71 = vst [vmem:[%s70] sm:$0xff] %v57
  %s72 = scalar_lea.vmem %s1, 944
  %73 = vst [vmem:[%s72] sm:$0xff] %v57
  %s74 = scalar_lea.vmem %s0, 4
  %v75 = vld [vmem:[%s74] ss:$0 sm:$0xff]
  %s76 = scalar_lea.vmem %s1, 64
  %77 = vst [vmem:[%s76] sm:$0xff] %v75
  %s78 = scalar_lea.vmem %s1, 192
  %79 = vst [vmem:[%s78] sm:$0xff] %v75
  %s80 = scalar_lea.vmem %s1, 320
  %81 = vst [vmem:[%s80] sm:$0xff] %v75
  %s82 = scalar_lea.vmem %s1, 448
  %83 = vst [vmem:[%s82] sm:$0xff] %v75
  %s84 = scalar_lea.vmem %s1, 576
  %85 = vst [vmem:[%s84] sm:$0xff] %v75
  %s86 = scalar_lea.vmem %s1, 704
  %87 = vst [vmem:[%s86] sm:$0xff] %v75
  %s88 = scalar_lea.vmem %s1, 832
  %89 = vst [vmem:[%s88] sm:$0xff] %v75
  %s90 = scalar_lea.vmem %s1, 960
  %91 = vst [vmem:[%s90] sm:$0xff] %v75
  %s92 = scalar_lea.vmem %s0, 5
  %v93 = vld [vmem:[%s92] ss:$0 sm:$0xff]
  %s94 = scalar_lea.vmem %s1, 80
  %95 = vst [vmem:[%s94] sm:$0xff] %v93
  %s96 = scalar_lea.vmem %s1, 208
  %97 = vst [vmem:[%s96] sm:$0xff] %v93
  %s98 = scalar_lea.vmem %s1, 336
  %99 = vst [vmem:[%s98] sm:$0xff] %v93
  %s100 = scalar_lea.vmem %s1, 464
  %101 = vst [vmem:[%s100] sm:$0xff] %v93
  %s102 = scalar_lea.vmem %s1, 592
  %103 = vst [vmem:[%s102] sm:$0xff] %v93
  %s104 = scalar_lea.vmem %s1, 720
  %105 = vst [vmem:[%s104] sm:$0xff] %v93
  %s106 = scalar_lea.vmem %s1, 848
  %107 = vst [vmem:[%s106] sm:$0xff] %v93
  %s108 = scalar_lea.vmem %s1, 976
  %109 = vst [vmem:[%s108] sm:$0xff] %v93
  %s110 = scalar_lea.vmem %s0, 6
  %v111 = vld [vmem:[%s110] ss:$0 sm:$0xff]
  %s112 = scalar_lea.vmem %s1, 96
  %113 = vst [vmem:[%s112] sm:$0xff] %v111
  %s114 = scalar_lea.vmem %s1, 224
  %115 = vst [vmem:[%s114] sm:$0xff] %v111
  %s116 = scalar_lea.vmem %s1, 352
  %117 = vst [vmem:[%s116] sm:$0xff] %v111
  %s118 = scalar_lea.vmem %s1, 480
  %119 = vst [vmem:[%s118] sm:$0xff] %v111
  %s120 = scalar_lea.vmem %s1, 608
  %121 = vst [vmem:[%s120] sm:$0xff] %v111
  %s122 = scalar_lea.vmem %s1, 736
  %123 = vst [vmem:[%s122] sm:$0xff] %v111
  %s124 = scalar_lea.vmem %s1, 864
  %125 = vst [vmem:[%s124] sm:$0xff] %v111
  %s126 = scalar_lea.vmem %s1, 992
  %127 = vst [vmem:[%s126] sm:$0xff] %v111
  %s128 = scalar_lea.vmem %s0, 7
  %v129 = vld [vmem:[%s128] ss:$0 sm:$0xff]
  %s130 = scalar_lea.vmem %s1, 112
  %131 = vst [vmem:[%s130] sm:$0xff] %v129
  %s132 = scalar_lea.vmem %s1, 240
  %133 = vst [vmem:[%s132] sm:$0xff] %v129
  %s134 = scalar_lea.vmem %s1, 368
  %135 = vst [vmem:[%s134] sm:$0xff] %v129
  %s136 = scalar_lea.vmem %s1, 496
  %137 = vst [vmem:[%s136] sm:$0xff] %v129
  %s138 = scalar_lea.vmem %s1, 624
  %139 = vst [vmem:[%s138] sm:$0xff] %v129
  %s140 = scalar_lea.vmem %s1, 752
  %141 = vst [vmem:[%s140] sm:$0xff] %v129
  %s142 = scalar_lea.vmem %s1, 880
  %143 = vst [vmem:[%s142] sm:$0xff] %v129
  %s144 = scalar_lea.vmem %s1, 1008
  %145 = vst [vmem:[%s144] sm:$0xff] %v129
  %s146 = scalar_lea.vmem %s1, 8
  %147 = vst [vmem:[%s146] sm:$0xff] %v4
  %s148 = scalar_lea.vmem %s1, 136
  %149 = vst [vmem:[%s148] sm:$0xff] %v4
  %s150 = scalar_lea.vmem %s1, 264
  %151 = vst [vmem:[%s150] sm:$0xff] %v4
  %s152 = scalar_lea.vmem %s1, 392
  %153 = vst [vmem:[%s152] sm:$0xff] %v4
  %s154 = scalar_lea.vmem %s1, 520
  %155 = vst [vmem:[%s154] sm:$0xff] %v4
  %s156 = scalar_lea.vmem %s1, 648
  %157 = vst [vmem:[%s156] sm:$0xff] %v4
  %s158 = scalar_lea.vmem %s1, 776
  %159 = vst [vmem:[%s158] sm:$0xff] %v4
  %s160 = scalar_lea.vmem %s1, 904
  %161 = vst [vmem:[%s160] sm:$0xff] %v4
  %s162 = scalar_lea.vmem %s1, 24
  %163 = vst [vmem:[%s162] sm:$0xff] %v21
  %s164 = scalar_lea.vmem %s1, 152
  %165 = vst [vmem:[%s164] sm:$0xff] %v21
  %s166 = scalar_lea.vmem %s1, 280
  %167 = vst [vmem:[%s166] sm:$0xff] %v21
  %s168 = scalar_lea.vmem %s1, 408
  %169 = vst [vmem:[%s168] sm:$0xff] %v21
  %s170 = scalar_lea.vmem %s1, 536
  %171 = vst [vmem:[%s170] sm:$0xff] %v21
  %s172 = scalar_lea.vmem %s1, 664
  %173 = vst [vmem:[%s172] sm:$0xff] %v21
  %s174 = scalar_lea.vmem %s1, 792
  %175 = vst [vmem:[%s174] sm:$0xff] %v21
  %s176 = scalar_lea.vmem %s1, 920
  %177 = vst [vmem:[%s176] sm:$0xff] %v21
  %s178 = scalar_lea.vmem %s1, 40
  %179 = vst [vmem:[%s178] sm:$0xff] %v39
  %s180 = scalar_lea.vmem %s1, 168
  %181 = vst [vmem:[%s180] sm:$0xff] %v39
  %s182 = scalar_lea.vmem %s1, 296
  %183 = vst [vmem:[%s182] sm:$0xff] %v39
  %s184 = scalar_lea.vmem %s1, 424
  %185 = vst [vmem:[%s184] sm:$0xff] %v39
  %s186 = scalar_lea.vmem %s1, 552
  %187 = vst [vmem:[%s186] sm:$0xff] %v39
  %s188 = scalar_lea.vmem %s1, 680
  %189 = vst [vmem:[%s188] sm:$0xff] %v39
  %s190 = scalar_lea.vmem %s1, 808
  %191 = vst [vmem:[%s190] sm:$0xff] %v39
  %s192 = scalar_lea.vmem %s1, 936
  %193 = vst [vmem:[%s192] sm:$0xff] %v39
  %s194 = scalar_lea.vmem %s1, 56
  %195 = vst [vmem:[%s194] sm:$0xff] %v57
  %s196 = scalar_lea.vmem %s1, 184
  %197 = vst [vmem:[%s196] sm:$0xff] %v57
  %s198 = scalar_lea.vmem %s1, 312
  %199 = vst [vmem:[%s198] sm:$0xff] %v57
  %s200 = scalar_lea.vmem %s1, 440
  %201 = vst [vmem:[%s200] sm:$0xff] %v57
  %s202 = scalar_lea.vmem %s1, 568
  %203 = vst [vmem:[%s202] sm:$0xff] %v57
  %s204 = scalar_lea.vmem %s1, 696
  %205 = vst [vmem:[%s204] sm:$0xff] %v57
  %s206 = scalar_lea.vmem %s1, 824
  %207 = vst [vmem:[%s206] sm:$0xff] %v57
  %s208 = scalar_lea.vmem %s1, 952
  %209 = vst [vmem:[%s208] sm:$0xff] %v57
  %s210 = scalar_lea.vmem %s1, 72
  %211 = vst [vmem:[%s210] sm:$0xff] %v75
  %s212 = scalar_lea.vmem %s1, 200
  %213 = vst [vmem:[%s212] sm:$0xff] %v75
  %s214 = scalar_lea.vmem %s1, 328
  %215 = vst [vmem:[%s214] sm:$0xff] %v75
  %s216 = scalar_lea.vmem %s1, 456
  %217 = vst [vmem:[%s216] sm:$0xff] %v75
  %s218 = scalar_lea.vmem %s1, 584
  %219 = vst [vmem:[%s218] sm:$0xff] %v75
  %s220 = scalar_lea.vmem %s1, 712
  %221 = vst [vmem:[%s220] sm:$0xff] %v75
  %s222 = scalar_lea.vmem %s1, 840
  %223 = vst [vmem:[%s222] sm:$0xff] %v75
  %s224 = scalar_lea.vmem %s1, 968
  %225 = vst [vmem:[%s224] sm:$0xff] %v75
  %s226 = scalar_lea.vmem %s1, 88
  %227 = vst [vmem:[%s226] sm:$0xff] %v93
  %s228 = scalar_lea.vmem %s1, 216
  %229 = vst [vmem:[%s228] sm:$0xff] %v93
  %s230 = scalar_lea.vmem %s1, 344
  %231 = vst [vmem:[%s230] sm:$0xff] %v93
  %s232 = scalar_lea.vmem %s1, 472
  %233 = vst [vmem:[%s232] sm:$0xff] %v93
  %s234 = scalar_lea.vmem %s1, 600
  %235 = vst [vmem:[%s234] sm:$0xff] %v93
  %s236 = scalar_lea.vmem %s1, 728
  %237 = vst [vmem:[%s236] sm:$0xff] %v93
  %s238 = scalar_lea.vmem %s1, 856
  %239 = vst [vmem:[%s238] sm:$0xff] %v93
  %s240 = scalar_lea.vmem %s1, 984
  %241 = vst [vmem:[%s240] sm:$0xff] %v93
  %s242 = scalar_lea.vmem %s1, 104
  %243 = vst [vmem:[%s242] sm:$0xff] %v111
  %s244 = scalar_lea.vmem %s1, 232
  %245 = vst [vmem:[%s244] sm:$0xff] %v111
  %s246 = scalar_lea.vmem %s1, 360
  %247 = vst [vmem:[%s246] sm:$0xff] %v111
  %s248 = scalar_lea.vmem %s1, 488
  %249 = vst [vmem:[%s248] sm:$0xff] %v111
  %s250 = scalar_lea.vmem %s1, 616
  %251 = vst [vmem:[%s250] sm:$0xff] %v111
  %s252 = scalar_lea.vmem %s1, 744
  %253 = vst [vmem:[%s252] sm:$0xff] %v111
  %s254 = scalar_lea.vmem %s1, 872
  %255 = vst [vmem:[%s254] sm:$0xff] %v111
  %s256 = scalar_lea.vmem %s1, 1000
  %257 = vst [vmem:[%s256] sm:$0xff] %v111
  %s258 = scalar_lea.vmem %s1, 120
  %259 = vst [vmem:[%s258] sm:$0xff] %v129
  %s260 = scalar_lea.vmem %s1, 248
  %261 = vst [vmem:[%s260] sm:$0xff] %v129
  %s262 = scalar_lea.vmem %s1, 376
  %263 = vst [vmem:[%s262] sm:$0xff] %v129
  %s264 = scalar_lea.vmem %s1, 504
  %265 = vst [vmem:[%s264] sm:$0xff] %v129
  %s266 = scalar_lea.vmem %s1, 632
  %267 = vst [vmem:[%s266] sm:$0xff] %v129
  %s268 = scalar_lea.vmem %s1, 760
  %269 = vst [vmem:[%s268] sm:$0xff] %v129
  %s270 = scalar_lea.vmem %s1, 888
  %271 = vst [vmem:[%s270] sm:$0xff] %v129
  %s272 = scalar_lea.vmem %s1, 1016
  %273 = vst [vmem:[%s272] sm:$0xff] %v129

// kernel: tile.9
$region0: #{tile.9}
  %s0 = inlined_call_operand.vmem [shape: f32[8,8,16,8], index: 0, kind: input, shape index: {}]
  %s1 = inlined_call_operand.vmem [shape: f32[64,128], index: 1, kind: output, shape index: {}]
  %s2 = smov 3
  %v3 = vld [vmem:[%s0] ss:$16 sm:%s2]
  %s4 = smov 12
  %v5 = vld [vmem:[%s0] ss:$16 sm:%s4]
  %vm6 = vcmask 1043458
  %v7 = vsel %vm6, %v5, %v3
  %s8 = smov 48
  %v9 = vld [vmem:[%s0] ss:$16 sm:%s8]
  %vm10 = vcmask 1045508
  %v11 = vsel %vm10, %v9, %v7
  %s12 = smov 192
  %v13 = vld [vmem:[%s0] ss:$16 sm:%s12]
  %vm14 = vcmask 1047558
  %v15 = vsel %vm14, %v13, %v11
  %vm16 = vcmask 64512
  %17 = vst.msk [vmem:[%s1] sm:$0xff] %vm16, %v15
  %s18 = scalar_lea.vmem %s0, 128
  %s19 = smov 3
  %v20 = vld [vmem:[%s18] ss:$16 sm:%s19]
  %s21 = scalar_lea.vmem %s0, 128
  %s22 = smov 12
  %v23 = vld [vmem:[%s21] ss:$16 sm:%s22]
  %vm24 = vcmask 1043458
  %v25 = vsel %vm24, %v23, %v20
  %s26 = scalar_lea.vmem %s0, 128
  %s27 = smov 48
  %v28 = vld [vmem:[%s26] ss:$16 sm:%s27]
  %vm29 = vcmask 1045508
  %v30 = vsel %vm29, %v28, %v25
  %s31 = scalar_lea.vmem %s0, 128
  %s32 = smov 192
  %v33 = vld [vmem:[%s31] ss:$16 sm:%s32]
  %vm34 = vcmask 1047558
  %v35 = vsel %vm34, %v33, %v30
  %vm36 = vcmask 64512
  %s37 = scalar_lea.vmem %s1, 8
  %38 = vst.msk [vmem:[%s37] sm:$0xff] %vm36, %v35
  %s39 = scalar_lea.vmem %s0, 256
  %s40 = smov 3
  %v41 = vld [vmem:[%s39] ss:$16 sm:%s40]
  %s42 = scalar_lea.vmem %s0, 256
  %s43 = smov 12
  %v44 = vld [vmem:[%s42] ss:$16 sm:%s43]
  %vm45 = vcmask 1043458
  %v46 = vsel %vm45, %v44, %v41
  %s47 = scalar_lea.vmem %s0, 256
  %s48 = smov 48
  %v49 = vld [vmem:[%s47] ss:$16 sm:%s48]
  %vm50 = vcmask 1045508
  %v51 = vsel %vm50, %v49, %v46
  %s52 = scalar_lea.vmem %s0, 256
  %s53 = smov 192
  %v54 = vld [vmem:[%s52] ss:$16 sm:%s53]
  %vm55 = vcmask 1047558
  %v56 = vsel %vm55, %v54, %v51
  %vm57 = vcmask 64512
  %s58 = scalar_lea.vmem %s1, 16
  %59 = vst.msk [vmem:[%s58] sm:$0xff] %vm57, %v56
  %s60 = scalar_lea.vmem %s0, 384
  %s61 = smov 3
  %v62 = vld [vmem:[%s60] ss:$16 sm:%s61]
  %s63 = scalar_lea.vmem %s0, 384
  %s64 = smov 12
  %v65 = vld [vmem:[%s63] ss:$16 sm:%s64]
  %vm66 = vcmask 1043458
  %v67 = vsel %vm66, %v65, %v62
  %s68 = scalar_lea.vmem %s0, 384
  %s69 = smov 48
  %v70 = vld [vmem:[%s68] ss:$16 sm:%s69]
  %vm71 = vcmask 1045508
  %v72 = vsel %vm71, %v70, %v67
  %s73 = scalar_lea.vmem %s0, 384
  %s74 = smov 192
  %v75 = vld [vmem:[%s73] ss:$16 sm:%s74]
  %vm76 = vcmask 1047558
  %v77 = vsel %vm76, %v75, %v72
  %vm78 = vcmask 64512
  %s79 = scalar_lea.vmem %s1, 24
  %80 = vst.msk [vmem:[%s79] sm:$0xff] %vm78, %v77
  %s81 = scalar_lea.vmem %s0, 512
  %s82 = smov 3
  %v83 = vld [vmem:[%s81] ss:$16 sm:%s82]
  %s84 = scalar_lea.vmem %s0, 512
  %s85 = smov 12
  %v86 = vld [vmem:[%s84] ss:$16 sm:%s85]
  %vm87 = vcmask 1043458
  %v88 = vsel %vm87, %v86, %v83
  %s89 = scalar_lea.vmem %s0, 512
  %s90 = smov 48
  %v91 = vld [vmem:[%s89] ss:$16 sm:%s90]
  %vm92 = vcmask 1045508
  %v93 = vsel %vm92, %v91, %v88
  %s94 = scalar_lea.vmem %s0, 512
  %s95 = smov 192
  %v96 = vld [vmem:[%s94] ss:$16 sm:%s95]
  %vm97 = vcmask 1047558
  %v98 = vsel %vm97, %v96, %v93
  %vm99 = vcmask 64512
  %s100 = scalar_lea.vmem %s1, 32
  %101 = vst.msk [vmem:[%s100] sm:$0xff] %vm99, %v98
  %s102 = scalar_lea.vmem %s0, 640
  %s103 = smov 3
  %v104 = vld [vmem:[%s102] ss:$16 sm:%s103]
  %s105 = scalar_lea.vmem %s0, 640
  %s106 = smov 12
  %v107 = vld [vmem:[%s105] ss:$16 sm:%s106]
  %vm108 = vcmask 1043458
  %v109 = vsel %vm108, %v107, %v104
  %s110 = scalar_lea.vmem %s0, 640
  %s111 = smov 48
  %v112 = vld [vmem:[%s110] ss:$16 sm:%s111]
  %vm113 = vcmask 1045508
  %v114 = vsel %vm113, %v112, %v109
  %s115 = scalar_lea.vmem %s0, 640
  %s116 = smov 192
  %v117 = vld [vmem:[%s115] ss:$16 sm:%s116]
  %vm118 = vcmask 1047558
  %v119 = vsel %vm118, %v117, %v114
  %vm120 = vcmask 64512
  %s121 = scalar_lea.vmem %s1, 40
  %122 = vst.msk [vmem:[%s121] sm:$0xff] %vm120, %v119
  %s123 = scalar_lea.vmem %s0, 768
  %s124 = smov 3
  %v125 = vld [vmem:[%s123] ss:$16 sm:%s124]
  %s126 = scalar_lea.vmem %s0, 768
  %s127 = smov 12
  %v128 = vld [vmem:[%s126] ss:$16 sm:%s127]
  %vm129 = vcmask 1043458
  %v130 = vsel %vm129, %v128, %v125
  %s131 = scalar_lea.vmem %s0, 768
  %s132 = smov 48
  %v133 = vld [vmem:[%s131] ss:$16 sm:%s132]
  %vm134 = vcmask 1045508
  %v135 = vsel %vm134, %v133, %v130
  %s136 = scalar_lea.vmem %s0, 768
  %s137 = smov 192
  %v138 = vld [vmem:[%s136] ss:$16 sm:%s137]
  %vm139 = vcmask 1047558
  %v140 = vsel %vm139, %v138, %v135
  %vm141 = vcmask 64512
  %s142 = scalar_lea.vmem %s1, 48
  %143 = vst.msk [vmem:[%s142] sm:$0xff] %vm141, %v140
  %s144 = scalar_lea.vmem %s0, 896
  %s145 = smov 3
  %v146 = vld [vmem:[%s144] ss:$16 sm:%s145]
  %s147 = scalar_lea.vmem %s0, 896
  %s148 = smov 12
  %v149 = vld [vmem:[%s147] ss:$16 sm:%s148]
  %vm150 = vcmask 1043458
  %v151 = vsel %vm150, %v149, %v146
  %s152 = scalar_lea.vmem %s0, 896
  %s153 = smov 48
  %v154 = vld [vmem:[%s152] ss:$16 sm:%s153]
  %vm155 = vcmask 1045508
  %v156 = vsel %vm155, %v154, %v151
  %s157 = scalar_lea.vmem %s0, 896
  %s158 = smov 192
  %v159 = vld [vmem:[%s157] ss:$16 sm:%s158]
  %vm160 = vcmask 1047558
  %v161 = vsel %vm160, %v159, %v156
  %vm162 = vcmask 64512
  %s163 = scalar_lea.vmem %s1, 56
  %164 = vst.msk [vmem:[%s163] sm:$0xff] %vm162, %v161
  %s165 = scalar_lea.vmem %s0, 15
  %s166 = smov 3
  %v167 = vld [vmem:[%s165] ss:$16 sm:%s166]
  %s168 = scalar_lea.vmem %s0, 15
  %s169 = smov 12
  %v170 = vld [vmem:[%s168] ss:$16 sm:%s169]
  %vm171 = vcmask 1043458
  %v172 = vsel %vm171, %v170, %v167
  %s173 = scalar_lea.vmem %s0, 15
  %s174 = smov 48
  %v175 = vld [vmem:[%s173] ss:$16 sm:%s174]
  %vm176 = vcmask 1045508
  %v177 = vsel %vm176, %v175, %v172
  %s178 = scalar_lea.vmem %s0, 15
  %s179 = smov 192
  %v180 = vld [vmem:[%s178] ss:$16 sm:%s179]
  %vm181 = vcmask 1047558
  %v182 = vsel %vm181, %v180, %v177
  %183 = vrot.lane.b32.xlu0 %v182, 120
  %v184 = vpop.permute.xlu0 %183
  %vm185 = vcmask 1048512
  %186 = vst.msk [vmem:[%s1] sm:$0xff] %vm185, %v184
  %s187 = scalar_lea.vmem %s0, 527
  %s188 = smov 3
  %v189 = vld [vmem:[%s187] ss:$16 sm:%s188]
  %s190 = scalar_lea.vmem %s0, 527
  %s191 = smov 12
  %v192 = vld [vmem:[%s190] ss:$16 sm:%s191]
  %vm193 = vcmask 1043458
  %v194 = vsel %vm193, %v192, %v189
  %s195 = scalar_lea.vmem %s0, 527
  %s196 = smov 48
  %v197 = vld [vmem:[%s195] ss:$16 sm:%s196]
  %vm198 = vcmask 1045508
  %v199 = vsel %vm198, %v197, %v194
  %s200 = scalar_lea.vmem %s0, 527
  %s201 = smov 192
  %v202 = vld [vmem:[%s200] ss:$16 sm:%s201]
  %vm203 = vcmask 1047558
  %v204 = vsel %vm203, %v202, %v199
  %205 = vrot.lane.b32.xlu0 %v204, 120
  %v206 = vpop.permute.xlu0 %205
  %vm207 = vcmask 1048512
  %s208 = scalar_lea.vmem %s1, 32
  %209 = vst.msk [vmem:[%s208] sm:$0xff] %vm207, %v206
  %s210 = scalar_lea.vmem %s0, 143
  %s211 = smov 3
  %v212 = vld [vmem:[%s210] ss:$16 sm:%s211]
  %s213 = scalar_lea.vmem %s0, 143
  %s214 = smov 12
  %v215 = vld [vmem:[%s213] ss:$16 sm:%s214]
  %vm216 = vcmask 1043458
  %v217 = vsel %vm216, %v215, %v212
  %s218 = scalar_lea.vmem %s0, 143
  %s219 = smov 48
  %v220 = vld [vmem:[%s218] ss:$16 sm:%s219]
  %vm221 = vcmask 1045508
  %v222 = vsel %vm221, %v220, %v217
  %s223 = scalar_lea.vmem %s0, 143
  %s224 = smov 192
  %v225 = vld [vmem:[%s223] ss:$16 sm:%s224]
  %vm226 = vcmask 1047558
  %v227 = vsel %vm226, %v225, %v222
  %228 = vrot.lane.b32.xlu0 %v227, 120
  %v229 = vpop.permute.xlu0 %228
  %vm230 = vcmask 1048512
  %s231 = scalar_lea.vmem %s1, 8
  %232 = vst.msk [vmem:[%s231] sm:$0xff] %vm230, %v229
  %s233 = scalar_lea.vmem %s0, 655
  %s234 = smov 3
  %v235 = vld [vmem:[%s233] ss:$16 sm:%s234]
  %s236 = scalar_lea.vmem %s0, 655
  %s237 = smov 12
  %v238 = vld [vmem:[%s236] ss:$16 sm:%s237]
  %vm239 = vcmask 1043458
  %v240 = vsel %vm239, %v238, %v235
  %s241 = scalar_lea.vmem %s0, 655
  %s242 = smov 48
  %v243 = vld [vmem:[%s241] ss:$16 sm:%s242]
  %vm244 = vcmask 1045508
  %v245 = vsel %vm244, %v243, %v240
  %s246 = scalar_lea.vmem %s0, 655
  %s247 = smov 192
  %v248 = vld [vmem:[%s246] ss:$16 sm:%s247]
  %vm249 = vcmask 1047558
  %v250 = vsel %vm249, %v248, %v245
  %251 = vrot.lane.b32.xlu0 %v250, 120
  %v252 = vpop.permute.xlu0 %251
  %vm253 = vcmask 1048512
  %s254 = scalar_lea.vmem %s1, 40
  %255 = vst.msk [vmem:[%s254] sm:$0xff] %vm253, %v252
  %s256 = scalar_lea.vmem %s0, 271
  %s257 = smov 3
  %v258 = vld [vmem:[%s256] ss:$16 sm:%s257]
  %s259 = scalar_lea.vmem %s0, 271
  %s260 = smov 12
  %v261 = vld [vmem:[%s259] ss:$16 sm:%s260]
  %vm262 = vcmask 1043458
  %v263 = vsel %vm262, %v261, %v258
  %s264 = scalar_lea.vmem %s0, 271
  %s265 = smov 48
  %v266 = vld [vmem:[%s264] ss:$16 sm:%s265]
  %vm267 = vcmask 1045508
  %v268 = vsel %vm267, %v266, %v263
  %s269 = scalar_lea.vmem %s0, 271
  %s270 = smov 192
  %v271 = vld [vmem:[%s269] ss:$16 sm:%s270]
  %vm272 = vcmask 1047558
  %v273 = vsel %vm272, %v271, %v268
  %274 = vrot.lane.b32.xlu0 %v273, 120
  %v275 = vpop.permute.xlu0 %274
  %vm276 = vcmask 1048512
  %s277 = scalar_lea.vmem %s1, 16
  %278 = vst.msk [vmem:[%s277] sm:$0xff] %vm276, %v275
  %s279 = scalar_lea.vmem %s0, 783
  %s280 = smov 3
  %v281 = vld [vmem:[%s279] ss:$16 sm:%s280]
  %s282 = scalar_lea.vmem %s0, 783
  %s283 = smov 12
  %v284 = vld [vmem:[%s282] ss:$16 sm:%s283]
  %vm285 = vcmask 1043458
  %v286 = vsel %vm285, %v284, %v281
  %s287 = scalar_lea.vmem %s0, 783
  %s288 = smov 48
  %v289 = vld [vmem:[%s287] ss:$16 sm:%s288]
  %vm290 = vcmask 1045508
  %v291 = vsel %vm290, %v289, %v286
  %s292 = scalar_lea.vmem %s0, 783
  %s293 = smov 192
  %v294 = vld [vmem:[%s292] ss:$16 sm:%s293]
  %vm295 = vcmask 1047558
  %v296 = vsel %vm295, %v294, %v291
  %297 = vrot.lane.b32.xlu0 %v296, 120
  %v298 = vpop.permute.xlu0 %297
  %vm299 = vcmask 1048512
  %s300 = scalar_lea.vmem %s1, 48
  %301 = vst.msk [vmem:[%s300] sm:$0xff] %vm299, %v298
  %s302 = scalar_lea.vmem %s0, 399
  %s303 = smov 3
  %v304 = vld [vmem:[%s302] ss:$16 sm:%s303]
  %s305 = scalar_lea.vmem %s0, 399
  %s306 = smov 12
  %v307 = vld [vmem:[%s305] ss:$16 sm:%s306]
  %vm308 = vcmask 1043458
  %v309 = vsel %vm308, %v307, %v304
  %s310 = scalar_lea.vmem %s0, 399
  %s311 = smov 48
  %v312 = vld [vmem:[%s310] ss:$16 sm:%s311]
  %vm313 = vcmask 1045508
  %v314 = vsel %vm313, %v312, %v309
  %s315 = scalar_lea.vmem %s0, 399
  %s316 = smov 192
  %v317 = vld [vmem:[%s315] ss:$16 sm:%s316]
  %vm318 = vcmask 1047558
  %v319 = vsel %vm318, %v317, %v314
  %320 = vrot.lane.b32.xlu0 %v319, 120
  %v321 = vpop.permute.xlu0 %320
  %vm322 = vcmask 1048512
  %s323 = scalar_lea.vmem %s1, 24
  %324 = vst.msk [vmem:[%s323] sm:$0xff] %vm322, %v321
  %s325 = scalar_lea.vmem %s0, 911
  %s326 = smov 3
  %v327 = vld [vmem:[%s325] ss:$16 sm:%s326]
  %s328 = scalar_lea.vmem %s0, 911
  %s329 = smov 12
  %v330 = vld [vmem:[%s328] ss:$16 sm:%s329]
  %vm331 = vcmask 1043458
  %v332 = vsel %vm331, %v330, %v327
  %s333 = scalar_lea.vmem %s0, 911
  %s334 = smov 48
  %v335 = vld [vmem:[%s333] ss:$16 sm:%s334]
  %vm336 = vcmask 1045508
  %v337 = vsel %vm336, %v335, %v332
  %s338 = scalar_lea.vmem %s0, 911
  %s339 = smov 192
  %v340 = vld [vmem:[%s338] ss:$16 sm:%s339]
  %vm341 = vcmask 1047558
  %v342 = vsel %vm341, %v340, %v337
  %343 = vrot.lane.b32.xlu0 %v342, 120
  %v344 = vpop.permute.xlu0 %343
  %vm345 = vcmask 1048512
  %s346 = scalar_lea.vmem %s1, 56
  %347 = vst.msk [vmem:[%s346] sm:$0xff] %vm345, %v344
  %s348 = scalar_lea.vmem %s0, 14
  %s349 = smov 3
  %v350 = vld [vmem:[%s348] ss:$16 sm:%s349]
  %s351 = scalar_lea.vmem %s0, 14
  %s352 = smov 12
  %v353 = vld [vmem:[%s351] ss:$16 sm:%s352]
  %vm354 = vcmask 1043458
  %v355 = vsel %vm354, %v353, %v350
  %s356 = scalar_lea.vmem %s0, 14
  %s357 = smov 48
  %v358 = vld [vmem:[%s356] ss:$16 sm:%s357]
  %vm359 = vcmask 1045508
  %v360 = vsel %vm359, %v358, %v355
  %s361 = scalar_lea.vmem %s0, 14
  %s362 = smov 192
  %v363 = vld [vmem:[%s361] ss:$16 sm:%s362]
  %vm364 = vcmask 1047558
  %v365 = vsel %vm364, %v363, %v360
  %366 = vrot.lane.b32.xlu0 %v365, 112
  %v367 = vpop.permute.xlu0 %366
  %vm368 = vcmask 982912
  %369 = vst.msk [vmem:[%s1] sm:$0xff] %vm368, %v367
  %s370 = scalar_lea.vmem %s0, 526
  %s371 = smov 3
  %v372 = vld [vmem:[%s370] ss:$16 sm:%s371]
  %s373 = scalar_lea.vmem %s0, 526
  %s374 = smov 12
  %v375 = vld [vmem:[%s373] ss:$16 sm:%s374]
  %vm376 = vcmask 1043458
  %v377 = vsel %vm376, %v375, %v372
  %s378 = scalar_lea.vmem %s0, 526
  %s379 = smov 48
  %v380 = vld [vmem:[%s378] ss:$16 sm:%s379]
  %vm381 = vcmask 1045508
  %v382 = vsel %vm381, %v380, %v377
  %s383 = scalar_lea.vmem %s0, 526
  %s384 = smov 192
  %v385 = vld [vmem:[%s383] ss:$16 sm:%s384]
  %vm386 = vcmask 1047558
  %v387 = vsel %vm386, %v385, %v382
  %388 = vrot.lane.b32.xlu0 %v387, 112
  %v389 = vpop.permute.xlu0 %388
  %vm390 = vcmask 982912
  %s391 = scalar_lea.vmem %s1, 32
  %392 = vst.msk [vmem:[%s391] sm:$0xff] %vm390, %v389
  %s393 = scalar_lea.vmem %s0, 142
  %s394 = smov 3
  %v395 = vld [vmem:[%s393] ss:$16 sm:%s394]
  %s396 = scalar_lea.vmem %s0, 142
  %s397 = smov 12
  %v398 = vld [vmem:[%s396] ss:$16 sm:%s397]
  %vm399 = vcmask 1043458
  %v400 = vsel %vm399, %v398, %v395
  %s401 = scalar_lea.vmem %s0, 142
  %s402 = smov 48
  %v403 = vld [vmem:[%s401] ss:$16 sm:%s402]
  %vm404 = vcmask 1045508
  %v405 = vsel %vm404, %v403, %v400
  %s406 = scalar_lea.vmem %s0, 142
  %s407 = smov 192
  %v408 = vld [vmem:[%s406] ss:$16 sm:%s407]
  %vm409 = vcmask 1047558
  %v410 = vsel %vm409, %v408, %v405
  %411 = vrot.lane.b32.xlu0 %v410, 112
  %v412 = vpop.permute.xlu0 %411
  %vm413 = vcmask 982912
  %s414 = scalar_lea.vmem %s1, 8
  %415 = vst.msk [vmem:[%s414] sm:$0xff] %vm413, %v412
  %s416 = scalar_lea.vmem %s0, 654
  %s417 = smov 3
  %v418 = vld [vmem:[%s416] ss:$16 sm:%s417]
  %s419 = scalar_lea.vmem %s0, 654
  %s420 = smov 12
  %v421 = vld [vmem:[%s419] ss:$16 sm:%s420]
  %vm422 = vcmask 1043458
  %v423 = vsel %vm422, %v421, %v418
  %s424 = scalar_lea.vmem %s0, 654
  %s425 = smov 48
  %v426 = vld [vmem:[%s424] ss:$16 sm:%s425]
  %vm427 = vcmask 1045508
  %v428 = vsel %vm427, %v426, %v423
  %s429 = scalar_lea.vmem %s0, 654
  %s430 = smov 192
  %v431 = vld [vmem:[%s429] ss:$16 sm:%s430]
  %vm432 = vcmask 1047558
  %v433 = vsel %vm432, %v431, %v428
  %434 = vrot.lane.b32.xlu0 %v433, 112
  %v435 = vpop.permute.xlu0 %434
  %vm436 = vcmask 982912
  %s437 = scalar_lea.vmem %s1, 40
  %438 = vst.msk [vmem:[%s437] sm:$0xff] %vm436, %v435
  %s439 = scalar_lea.vmem %s0, 270
  %s440 = smov 3
  %v441 = vld [vmem:[%s439] ss:$16 sm:%s440]
  %s442 = scalar_lea.vmem %s0, 270
  %s443 = smov 12
  %v444 = vld [vmem:[%s442] ss:$16 sm:%s443]
  %vm445 = vcmask 1043458
  %v446 = vsel %vm445, %v444, %v441
  %s447 = scalar_lea.vmem %s0, 270
  %s448 = smov 48
  %v449 = vld [vmem:[%s447] ss:$16 sm:%s448]
  %vm450 = vcmask 1045508
  %v451 = vsel %vm450, %v449, %v446
  %s452 = scalar_lea.vmem %s0, 270
  %s453 = smov 192
  %v454 = vld [vmem:[%s452] ss:$16 sm:%s453]
  %vm455 = vcmask 1047558
  %v456 = vsel %vm455, %v454, %v451
  %457 = vrot.lane.b32.xlu0 %v456, 112
  %v458 = vpop.permute.xlu0 %457
  %vm459 = vcmask 982912
  %s460 = scalar_lea.vmem %s1, 16
  %461 = vst.msk [vmem:[%s460] sm:$0xff] %vm459, %v458
  %s462 = scalar_lea.vmem %s0, 782
  %s463 = smov 3
  %v464 = vld [vmem:[%s462] ss:$16 sm:%s463]
  %s465 = scalar_lea.vmem %s0, 782
  %s466 = smov 12
  %v467 = vld [vmem:[%s465] ss:$16 sm:%s466]
  %vm468 = vcmask 1043458
  %v469 = vsel %vm468, %v467, %v464
  %s470 = scalar_lea.vmem %s0, 782
  %s471 = smov 48
  %v472 = vld [vmem:[%s470] ss:$16 sm:%s471]
  %vm473 = vcmask 1045508
  %v474 = vsel %vm473, %v472, %v469
  %s475 = scalar_lea.vmem %s0, 782
  %s476 = smov 192
  %v477 = vld [vmem:[%s475] ss:$16 sm:%s476]
  %vm478 = vcmask 1047558
  %v479 = vsel %vm478, %v477, %v474
  %480 = vrot.lane.b32.xlu0 %v479, 112
  %v481 = vpop.permute.xlu0 %480
  %vm482 = vcmask 982912
  %s483 = scalar_lea.vmem %s1, 48
  %484 = vst.msk [vmem:[%s483] sm:$0xff] %vm482, %v481
  %s485 = scalar_lea.vmem %s0, 398
  %s486 = smov 3
  %v487 = vld [vmem:[%s485] ss:$16 sm:%s486]
  %s488 = scalar_lea.vmem %s0, 398
  %s489 = smov 12
  %v490 = vld [vmem:[%s488] ss:$16 sm:%s489]
  %vm491 = vcmask 1043458
  %v492 = vsel %vm491, %v490, %v487
  %s493 = scalar_lea.vmem %s0, 398
  %s494 = smov 48
  %v495 = vld [vmem:[%s493] ss:$16 sm:%s494]
  %vm496 = vcmask 1045508
  %v497 = vsel %vm496, %v495, %v492
  %s498 = scalar_lea.vmem %s0, 398
  %s499 = smov 192
  %v500 = vld [vmem:[%s498] ss:$16 sm:%s499]
  %vm501 = vcmask 1047558
  %v502 = vsel %vm501, %v500, %v497
  %503 = vrot.lane.b32.xlu0 %v502, 112
  %v504 = vpop.permute.xlu0 %503
  %vm505 = vcmask 982912
  %s506 = scalar_lea.vmem %s1, 24
  %507 = vst.msk [vmem:[%s506] sm:$0xff] %vm505, %v504
  %s508 = scalar_lea.vmem %s0, 910
  %s509 = smov 3
  %v510 = vld [vmem:[%s508] ss:$16 sm:%s509]
  %s511 = scalar_lea.vmem %s0, 910
  %s512 = smov 12
  %v513 = vld [vmem:[%s511] ss:$16 sm:%s512]
  %vm514 = vcmask 1043458
  %v515 = vsel %vm514, %v513, %v510
  %s516 = scalar_lea.vmem %s0, 910
  %s517 = smov 48
  %v518 = vld [vmem:[%s516] ss:$16 sm:%s517]
  %vm519 = vcmask 1045508
  %v520 = vsel %vm519, %v518, %v515
  %s521 = scalar_lea.vmem %s0, 910
  %s522 = smov 192
  %v523 = vld [vmem:[%s521] ss:$16 sm:%s522]
  %vm524 = vcmask 1047558
  %v525 = vsel %vm524, %v523, %v520
  %526 = vrot.lane.b32.xlu0 %v525, 112
  %v527 = vpop.permute.xlu0 %526
  %vm528 = vcmask 982912
  %s529 = scalar_lea.vmem %s1, 56
  %530 = vst.msk [vmem:[%s529] sm:$0xff] %vm528, %v527
  %s531 = scalar_lea.vmem %s0, 13
  %s532 = smov 3
  %v533 = vld [vmem:[%s531] ss:$16 sm:%s532]
  %s534 = scalar_lea.vmem %s0, 13
  %s535 = smov 12
  %v536 = vld [vmem:[%s534] ss:$16 sm:%s535]
  %vm537 = vcmask 1043458
  %v538 = vsel %vm537, %v536, %v533
  %s539 = scalar_lea.vmem %s0, 13
  %s540 = smov 48
  %v541 = vld [vmem:[%s539] ss:$16 sm:%s540]
  %vm542 = vcmask 1045508
  %v543 = vsel %vm542, %v541, %v538
  %s544 = scalar_lea.vmem %s0, 13
  %s545 = smov 192
  %v546 = vld [vmem:[%s544] ss:$16 sm:%s545]
  %vm547 = vcmask 1047558
  %v548 = vsel %vm547, %v546, %v543
  %549 = vrot.lane.b32.xlu0 %v548, 104
  %v550 = vpop.permute.xlu0 %549
  %vm551 = vcmask 917312
  %552 = vst.msk [vmem:[%s1] sm:$0xff] %vm551, %v550
  %s553 = scalar_lea.vmem %s0, 525
  %s554 = smov 3
  %v555 = vld [vmem:[%s553] ss:$16 sm:%s554]
  %s556 = scalar_lea.vmem %s0, 525
  %s557 = smov 12
  %v558 = vld [vmem:[%s556] ss:$16 sm:%s557]
  %vm559 = vcmask 1043458
  %v560 = vsel %vm559, %v558, %v555
  %s561 = scalar_lea.vmem %s0, 525
  %s562 = smov 48
  %v563 = vld [vmem:[%s561] ss:$16 sm:%s562]
  %vm564 = vcmask 1045508
  %v565 = vsel %vm564, %v563, %v560
  %s566 = scalar_lea.vmem %s0, 525
  %s567 = smov 192
  %v568 = vld [vmem:[%s566] ss:$16 sm:%s567]
  %vm569 = vcmask 1047558
  %v570 = vsel %vm569, %v568, %v565
  %571 = vrot.lane.b32.xlu0 %v570, 104
  %v572 = vpop.permute.xlu0 %571
  %vm573 = vcmask 917312
  %s574 = scalar_lea.vmem %s1, 32
  %575 = vst.msk [vmem:[%s574] sm:$0xff] %vm573, %v572
  %s576 = scalar_lea.vmem %s0, 141
  %s577 = smov 3
  %v578 = vld [vmem:[%s576] ss:$16 sm:%s577]
  %s579 = scalar_lea.vmem %s0, 141
  %s580 = smov 12
  %v581 = vld [vmem:[%s579] ss:$16 sm:%s580]
  %vm582 = vcmask 1043458
  %v583 = vsel %vm582, %v581, %v578
  %s584 = scalar_lea.vmem %s0, 141
  %s585 = smov 48
  %v586 = vld [vmem:[%s584] ss:$16 sm:%s585]
  %vm587 = vcmask 1045508
  %v588 = vsel %vm587, %v586, %v583
  %s589 = scalar_lea.vmem %s0, 141
  %s590 = smov 192
  %v591 = vld [vmem:[%s589] ss:$16 sm:%s590]
  %vm592 = vcmask 1047558
  %v593 = vsel %vm592, %v591, %v588
  %594 = vrot.lane.b32.xlu0 %v593, 104
  %v595 = vpop.permute.xlu0 %594
  %vm596 = vcmask 917312
  %s597 = scalar_lea.vmem %s1, 8
  %598 = vst.msk [vmem:[%s597] sm:$0xff] %vm596, %v595
  %s599 = scalar_lea.vmem %s0, 653
  %s600 = smov 3
  %v601 = vld [vmem:[%s599] ss:$16 sm:%s600]
  %s602 = scalar_lea.vmem %s0, 653
  %s603 = smov 12
  %v604 = vld [vmem:[%s602] ss:$16 sm:%s603]
  %vm605 = vcmask 1043458
  %v606 = vsel %vm605, %v604, %v601
  %s607 = scalar_lea.vmem %s0, 653
  %s608 = smov 48
  %v609 = vld [vmem:[%s607] ss:$16 sm:%s608]
  %vm610 = vcmask 1045508
  %v611 = vsel %vm610, %v609, %v606
  %s612 = scalar_lea.vmem %s0, 653
  %s613 = smov 192
  %v614 = vld [vmem:[%s612] ss:$16 sm:%s613]
  %vm615 = vcmask 1047558
  %v616 = vsel %vm615, %v614, %v611
  %617 = vrot.lane.b32.xlu0 %v616, 104
  %v618 = vpop.permute.xlu0 %617
  %vm619 = vcmask 917312
  %s620 = scalar_lea.vmem %s1, 40
  %621 = vst.msk [vmem:[%s620] sm:$0xff] %vm619, %v618
  %s622 = scalar_lea.vmem %s0, 269
  %s623 = smov 3
  %v624 = vld [vmem:[%s622] ss:$16 sm:%s623]
  %s625 = scalar_lea.vmem %s0, 269
  %s626 = smov 12
  %v627 = vld [vmem:[%s625] ss:$16 sm:%s626]
  %vm628 = vcmask 1043458
  %v629 = vsel %vm628, %v627, %v624
  %s630 = scalar_lea.vmem %s0, 269
  %s631 = smov 48
  %v632 = vld [vmem:[%s630] ss:$16 sm:%s631]
  %vm633 = vcmask 1045508
  %v634 = vsel %vm633, %v632, %v629
  %s635 = scalar_lea.vmem %s0, 269
  %s636 = smov 192
  %v637 = vld [vmem:[%s635] ss:$16 sm:%s636]
  %vm638 = vcmask 1047558
  %v639 = vsel %vm638, %v637, %v634
  %640 = vrot.lane.b32.xlu0 %v639, 104
  %v641 = vpop.permute.xlu0 %640
  %vm642 = vcmask 917312
  %s643 = scalar_lea.vmem %s1, 16
  %644 = vst.msk [vmem:[%s643] sm:$0xff] %vm642, %v641
  %s645 = scalar_lea.vmem %s0, 781
  %s646 = smov 3
  %v647 = vld [vmem:[%s645] ss:$16 sm:%s646]
  %s648 = scalar_lea.vmem %s0, 781
  %s649 = smov 12
  %v650 = vld [vmem:[%s648] ss:$16 sm:%s649]
  %vm651 = vcmask 1043458
  %v652 = vsel %vm651, %v650, %v647
  %s653 = scalar_lea.vmem %s0, 781
  %s654 = smov 48
  %v655 = vld [vmem:[%s653] ss:$16 sm:%s654]
  %vm656 = vcmask 1045508
  %v657 = vsel %vm656, %v655, %v652
  %s658 = scalar_lea.vmem %s0, 781
  %s659 = smov 192
  %v660 = vld [vmem:[%s658] ss:$16 sm:%s659]
  %vm661 = vcmask 1047558
  %v662 = vsel %vm661, %v660, %v657
  %663 = vrot.lane.b32.xlu0 %v662, 104
  %v664 = vpop.permute.xlu0 %663
  %vm665 = vcmask 917312
  %s666 = scalar_lea.vmem %s1, 48
  %667 = vst.msk [vmem:[%s666] sm:$0xff] %vm665, %v664
  %s668 = scalar_lea.vmem %s0, 397
  %s669 = smov 3
  %v670 = vld [vmem:[%s668] ss:$16 sm:%s669]
  %s671 = scalar_lea.vmem %s0, 397
  %s672 = smov 12
  %v673 = vld [vmem:[%s671] ss:$16 sm:%s672]
  %vm674 = vcmask 1043458
  %v675 = vsel %vm674, %v673, %v670
  %s676 = scalar_lea.vmem %s0, 397
  %s677 = smov 48
  %v678 = vld [vmem:[%s676] ss:$16 sm:%s677]
  %vm679 = vcmask 1045508
  %v680 = vsel %vm679, %v678, %v675
  %s681 = scalar_lea.vmem %s0, 397
  %s682 = smov 192
  %v683 = vld [vmem:[%s681] ss:$16 sm:%s682]
  %vm684 = vcmask 1047558
  %v685 = vsel %vm684, %v683, %v680
  %686 = vrot.lane.b32.xlu0 %v685, 104
  %v687 = vpop.permute.xlu0 %686
  %vm688 = vcmask 917312
  %s689 = scalar_lea.vmem %s1, 24
  %690 = vst.msk [vmem:[%s689] sm:$0xff] %vm688, %v687
  %s691 = scalar_lea.vmem %s0, 909
  %s692 = smov 3
  %v693 = vld [vmem:[%s691] ss:$16 sm:%s692]
  %s694 = scalar_lea.vmem %s0, 909
  %s695 = smov 12
  %v696 = vld [vmem:[%s694] ss:$16 sm:%s695]
  %vm697 = vcmask 1043458
  %v698 = vsel %vm697, %v696, %v693
  %s699 = scalar_lea.vmem %s0, 909
  %s700 = smov 48
  %v701 = vld [vmem:[%s699] ss:$16 sm:%s700]
  %vm702 = vcmask 1045508
  %v703 = vsel %vm702, %v701, %v698
  %s704 = scalar_lea.vmem %s0, 909
  %s705 = smov 192
  %v706 = vld [vmem:[%s704] ss:$16 sm:%s705]
  %vm707 = vcmask 1047558
  %v708 = vsel %vm707, %v706, %v703
  %709 = vrot.lane.b32.xlu0 %v708, 104
  %v710 = vpop.permute.xlu0 %709
  %vm711 = vcmask 917312
  %s712 = scalar_lea.vmem %s1, 56
  %713 = vst.msk [vmem:[%s712] sm:$0xff] %vm711, %v710
  %s714 = scalar_lea.vmem %s0, 12
  %s715 = smov 3
  %v716 = vld [vmem:[%s714] ss:$16 sm:%s715]
  %s717 = scalar_lea.vmem %s0, 12
  %s718 = smov 12
  %v719 = vld [vmem:[%s717] ss:$16 sm:%s718]
  %vm720 = vcmask 1043458
  %v721 = vsel %vm720, %v719, %v716
  %s722 = scalar_lea.vmem %s0, 12
  %s723 = smov 48
  %v724 = vld [vmem:[%s722] ss:$16 sm:%s723]
  %vm725 = vcmask 1045508
  %v726 = vsel %vm725, %v724, %v721
  %s727 = scalar_lea.vmem %s0, 12
  %s728 = smov 192
  %v729 = vld [vmem:[%s727] ss:$16 sm:%s728]
  %vm730 = vcmask 1047558
  %v731 = vsel %vm730, %v729, %v726
  %732 = vrot.lane.b32.xlu0 %v731, 96
  %v733 = vpop.permute.xlu0 %732
  %vm734 = vcmask 851712
  %735 = vst.msk [vmem:[%s1] sm:$0xff] %vm734, %v733
  %s736 = scalar_lea.vmem %s0, 524
  %s737 = smov 3
  %v738 = vld [vmem:[%s736] ss:$16 sm:%s737]
  %s739 = scalar_lea.vmem %s0, 524
  %s740 = smov 12
  %v741 = vld [vmem:[%s739] ss:$16 sm:%s740]
  %vm742 = vcmask 1043458
  %v743 = vsel %vm742, %v741, %v738
  %s744 = scalar_lea.vmem %s0, 524
  %s745 = smov 48
  %v746 = vld [vmem:[%s744] ss:$16 sm:%s745]
  %vm747 = vcmask 1045508
  %v748 = vsel %vm747, %v746, %v743
  %s749 = scalar_lea.vmem %s0, 524
  %s750 = smov 192
  %v751 = vld [vmem:[%s749] ss:$16 sm:%s750]
  %vm752 = vcmask 1047558
  %v753 = vsel %vm752, %v751, %v748
  %754 = vrot.lane.b32.xlu0 %v753, 96
  %v755 = vpop.permute.xlu0 %754
  %vm756 = vcmask 851712
  %s757 = scalar_lea.vmem %s1, 32
  %758 = vst.msk [vmem:[%s757] sm:$0xff] %vm756, %v755
  %s759 = scalar_lea.vmem %s0, 140
  %s760 = smov 3
  %v761 = vld [vmem:[%s759] ss:$16 sm:%s760]
  %s762 = scalar_lea.vmem %s0, 140
  %s763 = smov 12
  %v764 = vld [vmem:[%s762] ss:$16 sm:%s763]
  %vm765 = vcmask 1043458
  %v766 = vsel %vm765, %v764, %v761
  %s767 = scalar_lea.vmem %s0, 140
  %s768 = smov 48
  %v769 = vld [vmem:[%s767] ss:$16 sm:%s768]
  %vm770 = vcmask 1045508
  %v771 = vsel %vm770, %v769, %v766
  %s772 = scalar_lea.vmem %s0, 140
  %s773 = smov 192
  %v774 = vld [vmem:[%s772] ss:$16 sm:%s773]
  %vm775 = vcmask 1047558
  %v776 = vsel %vm775, %v774, %v771
  %777 = vrot.lane.b32.xlu0 %v776, 96
  %v778 = vpop.permute.xlu0 %777
  %vm779 = vcmask 851712
  %s780 = scalar_lea.vmem %s1, 8
  %781 = vst.msk [vmem:[%s780] sm:$0xff] %vm779, %v778
  %s782 = scalar_lea.vmem %s0, 652
  %s783 = smov 3
  %v784 = vld [vmem:[%s782] ss:$16 sm:%s783]
  %s785 = scalar_lea.vmem %s0, 652
  %s786 = smov 12
  %v787 = vld [vmem:[%s785] ss:$16 sm:%s786]
  %vm788 = vcmask 1043458
  %v789 = vsel %vm788, %v787, %v784
  %s790 = scalar_lea.vmem %s0, 652
  %s791 = smov 48
  %v792 = vld [vmem:[%s790] ss:$16 sm:%s791]
  %vm793 = vcmask 1045508
  %v794 = vsel %vm793, %v792, %v789
  %s795 = scalar_lea.vmem %s0, 652
  %s796 = smov 192
  %v797 = vld [vmem:[%s795] ss:$16 sm:%s796]
  %vm798 = vcmask 1047558
  %v799 = vsel %vm798, %v797, %v794
  %800 = vrot.lane.b32.xlu0 %v799, 96
  %v801 = vpop.permute.xlu0 %800
  %vm802 = vcmask 851712
  %s803 = scalar_lea.vmem %s1, 40
  %804 = vst.msk [vmem:[%s803] sm:$0xff] %vm802, %v801
  %s805 = scalar_lea.vmem %s0, 268
  %s806 = smov 3
  %v807 = vld [vmem:[%s805] ss:$16 sm:%s806]
  %s808 = scalar_lea.vmem %s0, 268
  %s809 = smov 12
  %v810 = vld [vmem:[%s808] ss:$16 sm:%s809]
  %vm811 = vcmask 1043458
  %v812 = vsel %vm811, %v810, %v807
  %s813 = scalar_lea.vmem %s0, 268
  %s814 = smov 48
  %v815 = vld [vmem:[%s813] ss:$16 sm:%s814]
  %vm816 = vcmask 1045508
  %v817 = vsel %vm816, %v815, %v812
  %s818 = scalar_lea.vmem %s0, 268
  %s819 = smov 192
  %v820 = vld [vmem:[%s818] ss:$16 sm:%s819]
  %vm821 = vcmask 1047558
  %v822 = vsel %vm821, %v820, %v817
  %823 = vrot.lane.b32.xlu0 %v822, 96
  %v824 = vpop.permute.xlu0 %823
  %vm825 = vcmask 851712
  %s826 = scalar_lea.vmem %s1, 16
  %827 = vst.msk [vmem:[%s826] sm:$0xff] %vm825, %v824
  %s828 = scalar_lea.vmem %s0, 780
  %s829 = smov 3
  %v830 = vld [vmem:[%s828] ss:$16 sm:%s829]
  %s831 = scalar_lea.vmem %s0, 780
  %s832 = smov 12
  %v833 = vld [vmem:[%s831] ss:$16 sm:%s832]
  %vm834 = vcmask 1043458
  %v835 = vsel %vm834, %v833, %v830
  %s836 = scalar_lea.vmem %s0, 780
  %s837 = smov 48
  %v838 = vld [vmem:[%s836] ss:$16 sm:%s837]
  %vm839 = vcmask 1045508
  %v840 = vsel %vm839, %v838, %v835
  %s841 = scalar_lea.vmem %s0, 780
  %s842 = smov 192
  %v843 = vld [vmem:[%s841] ss:$16 sm:%s842]
  %vm844 = vcmask 1047558
  %v845 = vsel %vm844, %v843, %v840
  %846 = vrot.lane.b32.xlu0 %v845, 96
  %v847 = vpop.permute.xlu0 %846
  %vm848 = vcmask 851712
  %s849 = scalar_lea.vmem %s1, 48
  %850 = vst.msk [vmem:[%s849] sm:$0xff] %vm848, %v847
  %s851 = scalar_lea.vmem %s0, 396
  %s852 = smov 3
  %v853 = vld [vmem:[%s851] ss:$16 sm:%s852]
  %s854 = scalar_lea.vmem %s0, 396
  %s855 = smov 12
  %v856 = vld [vmem:[%s854] ss:$16 sm:%s855]
  %vm857 = vcmask 1043458
  %v858 = vsel %vm857, %v856, %v853
  %s859 = scalar_lea.vmem %s0, 396
  %s860 = smov 48
  %v861 = vld [vmem:[%s859] ss:$16 sm:%s860]
  %vm862 = vcmask 1045508
  %v863 = vsel %vm862, %v861, %v858
  %s864 = scalar_lea.vmem %s0, 396
  %s865 = smov 192
  %v866 = vld [vmem:[%s864] ss:$16 sm:%s865]
  %vm867 = vcmask 1047558
  %v868 = vsel %vm867, %v866, %v863
  %869 = vrot.lane.b32.xlu0 %v868, 96
  %v870 = vpop.permute.xlu0 %869
  %vm871 = vcmask 851712
  %s872 = scalar_lea.vmem %s1, 24
  %873 = vst.msk [vmem:[%s872] sm:$0xff] %vm871, %v870
  %s874 = scalar_lea.vmem %s0, 908
  %s875 = smov 3
  %v876 = vld [vmem:[%s874] ss:$16 sm:%s875]
  %s877 = scalar_lea.vmem %s0, 908
  %s878 = smov 12
  %v879 = vld [vmem:[%s877] ss:$16 sm:%s878]
  %vm880 = vcmask 1043458
  %v881 = vsel %vm880, %v879, %v876
  %s882 = scalar_lea.vmem %s0, 908
  %s883 = smov 48
  %v884 = vld [vmem:[%s882] ss:$16 sm:%s883]
  %vm885 = vcmask 1045508
  %v886 = vsel %vm885, %v884, %v881
  %s887 = scalar_lea.vmem %s0, 908
  %s888 = smov 192
  %v889 = vld [vmem:[%s887] ss:$16 sm:%s888]
  %vm890 = vcmask 1047558
  %v891 = vsel %vm890, %v889, %v886
  %892 = vrot.lane.b32.xlu0 %v891, 96
  %v893 = vpop.permute.xlu0 %892
  %vm894 = vcmask 851712
  %s895 = scalar_lea.vmem %s1, 56
  %896 = vst.msk [vmem:[%s895] sm:$0xff] %vm894, %v893
  %s897 = scalar_lea.vmem %s0, 11
  %s898 = smov 3
  %v899 = vld [vmem:[%s897] ss:$16 sm:%s898]
  %s900 = scalar_lea.vmem %s0, 11
  %s901 = smov 12
  %v902 = vld [vmem:[%s900] ss:$16 sm:%s901]
  %vm903 = vcmask 1043458
  %v904 = vsel %vm903, %v902, %v899
  %s905 = scalar_lea.vmem %s0, 11
  %s906 = smov 48
  %v907 = vld [vmem:[%s905] ss:$16 sm:%s906]
  %vm908 = vcmask 1045508
  %v909 = vsel %vm908, %v907, %v904
  %s910 = scalar_lea.vmem %s0, 11
  %s911 = smov 192
  %v912 = vld [vmem:[%s910] ss:$16 sm:%s911]
  %vm913 = vcmask 1047558
  %v914 = vsel %vm913, %v912, %v909
  %915 = vrot.lane.b32.xlu0 %v914, 88
  %v916 = vpop.permute.xlu0 %915
  %vm917 = vcmask 786112
  %918 = vst.msk [vmem:[%s1] sm:$0xff] %vm917, %v916
  %s919 = scalar_lea.vmem %s0, 523
  %s920 = smov 3
  %v921 = vld [vmem:[%s919] ss:$16 sm:%s920]
  %s922 = scalar_lea.vmem %s0, 523
  %s923 = smov 12
  %v924 = vld [vmem:[%s922] ss:$16 sm:%s923]
  %vm925 = vcmask 1043458
  %v926 = vsel %vm925, %v924, %v921
  %s927 = scalar_lea.vmem %s0, 523
  %s928 = smov 48
  %v929 = vld [vmem:[%s927] ss:$16 sm:%s928]
  %vm930 = vcmask 1045508
  %v931 = vsel %vm930, %v929, %v926
  %s932 = scalar_lea.vmem %s0, 523
  %s933 = smov 192
  %v934 = vld [vmem:[%s932] ss:$16 sm:%s933]
  %vm935 = vcmask 1047558
  %v936 = vsel %vm935, %v934, %v931
  %937 = vrot.lane.b32.xlu0 %v936, 88
  %v938 = vpop.permute.xlu0 %937
  %vm939 = vcmask 786112
  %s940 = scalar_lea.vmem %s1, 32
  %941 = vst.msk [vmem:[%s940] sm:$0xff] %vm939, %v938
  %s942 = scalar_lea.vmem %s0, 139
  %s943 = smov 3
  %v944 = vld [vmem:[%s942] ss:$16 sm:%s943]
  %s945 = scalar_lea.vmem %s0, 139
  %s946 = smov 12
  %v947 = vld [vmem:[%s945] ss:$16 sm:%s946]
  %vm948 = vcmask 1043458
  %v949 = vsel %vm948, %v947, %v944
  %s950 = scalar_lea.vmem %s0, 139
  %s951 = smov 48
  %v952 = vld [vmem:[%s950] ss:$16 sm:%s951]
  %vm953 = vcmask 1045508
  %v954 = vsel %vm953, %v952, %v949
  %s955 = scalar_lea.vmem %s0, 139
  %s956 = smov 192
  %v957 = vld [vmem:[%s955] ss:$16 sm:%s956]
  %vm958 = vcmask 1047558
  %v959 = vsel %vm958, %v957, %v954
  %960 = vrot.lane.b32.xlu0 %v959, 88
  %v961 = vpop.permute.xlu0 %960
  %vm962 = vcmask 786112
  %s963 = scalar_lea.vmem %s1, 8
  %964 = vst.msk [vmem:[%s963] sm:$0xff] %vm962, %v961
  %s965 = scalar_lea.vmem %s0, 651
  %s966 = smov 3
  %v967 = vld [vmem:[%s965] ss:$16 sm:%s966]
  %s968 = scalar_lea.vmem %s0, 651
  %s969 = smov 12
  %v970 = vld [vmem:[%s968] ss:$16 sm:%s969]
  %vm971 = vcmask 1043458
  %v972 = vsel %vm971, %v970, %v967
  %s973 = scalar_lea.vmem %s0, 651
  %s974 = smov 48
  %v975 = vld [vmem:[%s973] ss:$16 sm:%s974]
  %vm976 = vcmask 1045508
  %v977 = vsel %vm976, %v975, %v972
  %s978 = scalar_lea.vmem %s0, 651
  %s979 = smov 192
  %v980 = vld [vmem:[%s978] ss:$16 sm:%s979]
  %vm981 = vcmask 1047558
  %v982 = vsel %vm981, %v980, %v977
  %983 = vrot.lane.b32.xlu0 %v982, 88
  %v984 = vpop.permute.xlu0 %983
  %vm985 = vcmask 786112
  %s986 = scalar_lea.vmem %s1, 40
  %987 = vst.msk [vmem:[%s986] sm:$0xff] %vm985, %v984
  %s988 = scalar_lea.vmem %s0, 267
  %s989 = smov 3
  %v990 = vld [vmem:[%s988] ss:$16 sm:%s989]
  %s991 = scalar_lea.vmem %s0, 267
  %s992 = smov 12
  %v993 = vld [vmem:[%s991] ss:$16 sm:%s992]
  %vm994 = vcmask 1043458
  %v995 = vsel %vm994, %v993, %v990
  %s996 = scalar_lea.vmem %s0, 267
  %s997 = smov 48
  %v998 = vld [vmem:[%s996] ss:$16 sm:%s997]
  %vm999 = vcmask 1045508
  %v1000 = vsel %vm999, %v998, %v995
  %s1001 = scalar_lea.vmem %s0, 267
  %s1002 = smov 192
  %v1003 = vld [vmem:[%s1001] ss:$16 sm:%s1002]
  %vm1004 = vcmask 1047558
  %v1005 = vsel %vm1004, %v1003, %v1000
  %1006 = vrot.lane.b32.xlu0 %v1005, 88
  %v1007 = vpop.permute.xlu0 %1006
  %vm1008 = vcmask 786112
  %s1009 = scalar_lea.vmem %s1, 16
  %1010 = vst.msk [vmem:[%s1009] sm:$0xff] %vm1008, %v1007
  %s1011 = scalar_lea.vmem %s0, 779
  %s1012 = smov 3
  %v1013 = vld [vmem:[%s1011] ss:$16 sm:%s1012]
  %s1014 = scalar_lea.vmem %s0, 779
  %s1015 = smov 12
  %v1016 = vld [vmem:[%s1014] ss:$16 sm:%s1015]
  %vm1017 = vcmask 1043458
  %v1018 = vsel %vm1017, %v1016, %v1013
  %s1019 = scalar_lea.vmem %s0, 779
  %s1020 = smov 48
  %v1021 = vld [vmem:[%s1019] ss:$16 sm:%s1020]
  %vm1022 = vcmask 1045508
  %v1023 = vsel %vm1022, %v1021, %v1018
  %s1024 = scalar_lea.vmem %s0, 779
  %s1025 = smov 192
  %v1026 = vld [vmem:[%s1024] ss:$16 sm:%s1025]
  %vm1027 = vcmask 1047558
  %v1028 = vsel %vm1027, %v1026, %v1023
  %1029 = vrot.lane.b32.xlu0 %v1028, 88
  %v1030 = vpop.permute.xlu0 %1029
  %vm1031 = vcmask 786112
  %s1032 = scalar_lea.vmem %s1, 48
  %1033 = vst.msk [vmem:[%s1032] sm:$0xff] %vm1031, %v1030
  %s1034 = scalar_lea.vmem %s0, 395
  %s1035 = smov 3
  %v1036 = vld [vmem:[%s1034] ss:$16 sm:%s1035]
  %s1037 = scalar_lea.vmem %s0, 395
  %s1038 = smov 12
  %v1039 = vld [vmem:[%s1037] ss:$16 sm:%s1038]
  %vm1040 = vcmask 1043458
  %v1041 = vsel %vm1040, %v1039, %v1036
  %s1042 = scalar_lea.vmem %s0, 395
  %s1043 = smov 48
  %v1044 = vld [vmem:[%s1042] ss:$16 sm:%s1043]
  %vm1045 = vcmask 1045508
  %v1046 = vsel %vm1045, %v1044, %v1041
  %s1047 = scalar_lea.vmem %s0, 395
  %s1048 = smov 192
  %v1049 = vld [vmem:[%s1047] ss:$16 sm:%s1048]
  %vm1050 = vcmask 1047558
  %v1051 = vsel %vm1050, %v1049, %v1046
  %1052 = vrot.lane.b32.xlu0 %v1051, 88
  %v1053 = vpop.permute.xlu0 %1052
  %vm1054 = vcmask 786112
  %s1055 = scalar_lea.vmem %s1, 24
  %1056 = vst.msk [vmem:[%s1055] sm:$0xff] %vm1054, %v1053
  %s1057 = scalar_lea.vmem %s0, 907
  %s1058 = smov 3
  %v1059 = vld [vmem:[%s1057] ss:$16 sm:%s1058]
  %s1060 = scalar_lea.vmem %s0, 907
  %s1061 = smov 12
  %v1062 = vld [vmem:[%s1060] ss:$16 sm:%s1061]
  %vm1063 = vcmask 1043458
  %v1064 = vsel %vm1063, %v1062, %v1059
  %s1065 = scalar_lea.vmem %s0, 907
  %s1066 = smov 48
  %v1067 = vld [vmem:[%s1065] ss:$16 sm:%s1066]
  %vm1068 = vcmask 1045508
  %v1069 = vsel %vm1068, %v1067, %v1064
  %s1070 = scalar_lea.vmem %s0, 907
  %s1071 = smov 192
  %v1072 = vld [vmem:[%s1070] ss:$16 sm:%s1071]
  %vm1073 = vcmask 1047558
  %v1074 = vsel %vm1073, %v1072, %v1069
  %1075 = vrot.lane.b32.xlu0 %v1074, 88
  %v1076 = vpop.permute.xlu0 %1075
  %vm1077 = vcmask 786112
  %s1078 = scalar_lea.vmem %s1, 56
  %1079 = vst.msk [vmem:[%s1078] sm:$0xff] %vm1077, %v1076
  %s1080 = scalar_lea.vmem %s0, 10
  %s1081 = smov 3
  %v1082 = vld [vmem:[%s1080] ss:$16 sm:%s1081]
  %s1083 = scalar_lea.vmem %s0, 10
  %s1084 = smov 12
  %v1085 = vld [vmem:[%s1083] ss:$16 sm:%s1084]
  %vm1086 = vcmask 1043458
  %v1087 = vsel %vm1086, %v1085, %v1082
  %s1088 = scalar_lea.vmem %s0, 10
  %s1089 = smov 48
  %v1090 = vld [vmem:[%s1088] ss:$16 sm:%s1089]
  %vm1091 = vcmask 1045508
  %v1092 = vsel %vm1091, %v1090, %v1087
  %s1093 = scalar_lea.vmem %s0, 10
  %s1094 = smov 192
  %v1095 = vld [vmem:[%s1093] ss:$16 sm:%s1094]
  %vm1096 = vcmask 1047558
  %v1097 = vsel %vm1096, %v1095, %v1092
  %1098 = vrot.lane.b32.xlu0 %v1097, 80
  %v1099 = vpop.permute.xlu0 %1098
  %vm1100 = vcmask 720512
  %1101 = vst.msk [vmem:[%s1] sm:$0xff] %vm1100, %v1099
  %s1102 = scalar_lea.vmem %s0, 522
  %s1103 = smov 3
  %v1104 = vld [vmem:[%s1102] ss:$16 sm:%s1103]
  %s1105 = scalar_lea.vmem %s0, 522
  %s1106 = smov 12
  %v1107 = vld [vmem:[%s1105] ss:$16 sm:%s1106]
  %vm1108 = vcmask 1043458
  %v1109 = vsel %vm1108, %v1107, %v1104
  %s1110 = scalar_lea.vmem %s0, 522
  %s1111 = smov 48
  %v1112 = vld [vmem:[%s1110] ss:$16 sm:%s1111]
  %vm1113 = vcmask 1045508
  %v1114 = vsel %vm1113, %v1112, %v1109
  %s1115 = scalar_lea.vmem %s0, 522
  %s1116 = smov 192
  %v1117 = vld [vmem:[%s1115] ss:$16 sm:%s1116]
  %vm1118 = vcmask 1047558
  %v1119 = vsel %vm1118, %v1117, %v1114
  %1120 = vrot.lane.b32.xlu0 %v1119, 80
  %v1121 = vpop.permute.xlu0 %1120
  %vm1122 = vcmask 720512
  %s1123 = scalar_lea.vmem %s1, 32
  %1124 = vst.msk [vmem:[%s1123] sm:$0xff] %vm1122, %v1121
  %s1125 = scalar_lea.vmem %s0, 138
  %s1126 = smov 3
  %v1127 = vld [vmem:[%s1125] ss:$16 sm:%s1126]
  %s1128 = scalar_lea.vmem %s0, 138
  %s1129 = smov 12
  %v1130 = vld [vmem:[%s1128] ss:$16 sm:%s1129]
  %vm1131 = vcmask 1043458
  %v1132 = vsel %vm1131, %v1130, %v1127
  %s1133 = scalar_lea.vmem %s0, 138
  %s1134 = smov 48
  %v1135 = vld [vmem:[%s1133] ss:$16 sm:%s1134]
  %vm1136 = vcmask 1045508
  %v1137 = vsel %vm1136, %v1135, %v1132
  %s1138 = scalar_lea.vmem %s0, 138
  %s1139 = smov 192
  %v1140 = vld [vmem:[%s1138] ss:$16 sm:%s1139]
  %vm1141 = vcmask 1047558
  %v1142 = vsel %vm1141, %v1140, %v1137
  %1143 = vrot.lane.b32.xlu0 %v1142, 80
  %v1144 = vpop.permute.xlu0 %1143
  %vm1145 = vcmask 720512
  %s1146 = scalar_lea.vmem %s1, 8
  %1147 = vst.msk [vmem:[%s1146] sm:$0xff] %vm1145, %v1144
  %s1148 = scalar_lea.vmem %s0, 650
  %s1149 = smov 3
  %v1150 = vld [vmem:[%s1148] ss:$16 sm:%s1149]
  %s1151 = scalar_lea.vmem %s0, 650
  %s1152 = smov 12
  %v1153 = vld [vmem:[%s1151] ss:$16 sm:%s1152]
  %vm1154 = vcmask 1043458
  %v1155 = vsel %vm1154, %v1153, %v1150
  %s1156 = scalar_lea.vmem %s0, 650
  %s1157 = smov 48
  %v1158 = vld [vmem:[%s1156] ss:$16 sm:%s1157]
  %vm1159 = vcmask 1045508
  %v1160 = vsel %vm1159, %v1158, %v1155
  %s1161 = scalar_lea.vmem %s0, 650
  %s1162 = smov 192
  %v1163 = vld [vmem:[%s1161] ss:$16 sm:%s1162]
  %vm1164 = vcmask 1047558
  %v1165 = vsel %vm1164, %v1163, %v1160
  %1166 = vrot.lane.b32.xlu0 %v1165, 80
  %v1167 = vpop.permute.xlu0 %1166
  %vm1168 = vcmask 720512
  %s1169 = scalar_lea.vmem %s1, 40
  %1170 = vst.msk [vmem:[%s1169] sm:$0xff] %vm1168, %v1167
  %s1171 = scalar_lea.vmem %s0, 266
  %s1172 = smov 3
  %v1173 = vld [vmem:[%s1171] ss:$16 sm:%s1172]
  %s1174 = scalar_lea.vmem %s0, 266
  %s1175 = smov 12
  %v1176 = vld [vmem:[%s1174] ss:$16 sm:%s1175]
  %vm1177 = vcmask 1043458
  %v1178 = vsel %vm1177, %v1176, %v1173
  %s1179 = scalar_lea.vmem %s0, 266
  %s1180 = smov 48
  %v1181 = vld [vmem:[%s1179] ss:$16 sm:%s1180]
  %vm1182 = vcmask 1045508
  %v1183 = vsel %vm1182, %v1181, %v1178
  %s1184 = scalar_lea.vmem %s0, 266
  %s1185 = smov 192
  %v1186 = vld [vmem:[%s1184] ss:$16 sm:%s1185]
  %vm1187 = vcmask 1047558
  %v1188 = vsel %vm1187, %v1186, %v1183
  %1189 = vrot.lane.b32.xlu0 %v1188, 80
  %v1190 = vpop.permute.xlu0 %1189
  %vm1191 = vcmask 720512
  %s1192 = scalar_lea.vmem %s1, 16
  %1193 = vst.msk [vmem:[%s1192] sm:$0xff] %vm1191, %v1190
  %s1194 = scalar_lea.vmem %s0, 778
  %s1195 = smov 3
  %v1196 = vld [vmem:[%s1194] ss:$16 sm:%s1195]
  %s1197 = scalar_lea.vmem %s0, 778
  %s1198 = smov 12
  %v1199 = vld [vmem:[%s1197] ss:$16 sm:%s1198]
  %vm1200 = vcmask 1043458
  %v1201 = vsel %vm1200, %v1199, %v1196
  %s1202 = scalar_lea.vmem %s0, 778
  %s1203 = smov 48
  %v1204 = vld [vmem:[%s1202] ss:$16 sm:%s1203]
  %vm1205 = vcmask 1045508
  %v1206 = vsel %vm1205, %v1204, %v1201
  %s1207 = scalar_lea.vmem %s0, 778
  %s1208 = smov 192
  %v1209 = vld [vmem:[%s1207] ss:$16 sm:%s1208]
  %vm1210 = vcmask 1047558
  %v1211 = vsel %vm1210, %v1209, %v1206
  %1212 = vrot.lane.b32.xlu0 %v1211, 80
  %v1213 = vpop.permute.xlu0 %1212
  %vm1214 = vcmask 720512
  %s1215 = scalar_lea.vmem %s1, 48
  %1216 = vst.msk [vmem:[%s1215] sm:$0xff] %vm1214, %v1213
  %s1217 = scalar_lea.vmem %s0, 394
  %s1218 = smov 3
  %v1219 = vld [vmem:[%s1217] ss:$16 sm:%s1218]
  %s1220 = scalar_lea.vmem %s0, 394
  %s1221 = smov 12
  %v1222 = vld [vmem:[%s1220] ss:$16 sm:%s1221]
  %vm1223 = vcmask 1043458
  %v1224 = vsel %vm1223, %v1222, %v1219
  %s1225 = scalar_lea.vmem %s0, 394
  %s1226 = smov 48
  %v1227 = vld [vmem:[%s1225] ss:$16 sm:%s1226]
  %vm1228 = vcmask 1045508
  %v1229 = vsel %vm1228, %v1227, %v1224
  %s1230 = scalar_lea.vmem %s0, 394
  %s1231 = smov 192
  %v1232 = vld [vmem:[%s1230] ss:$16 sm:%s1231]
  %vm1233 = vcmask 1047558
  %v1234 = vsel %vm1233, %v1232, %v1229
  %1235 = vrot.lane.b32.xlu0 %v1234, 80
  %v1236 = vpop.permute.xlu0 %1235
  %vm1237 = vcmask 720512
  %s1238 = scalar_lea.vmem %s1, 24
  %1239 = vst.msk [vmem:[%s1238] sm:$0xff] %vm1237, %v1236
  %s1240 = scalar_lea.vmem %s0, 906
  %s1241 = smov 3
  %v1242 = vld [vmem:[%s1240] ss:$16 sm:%s1241]
  %s1243 = scalar_lea.vmem %s0, 906
  %s1244 = smov 12
  %v1245 = vld [vmem:[%s1243] ss:$16 sm:%s1244]
  %vm1246 = vcmask 1043458
  %v1247 = vsel %vm1246, %v1245, %v1242
  %s1248 = scalar_lea.vmem %s0, 906
  %s1249 = smov 48
  %v1250 = vld [vmem:[%s1248] ss:$16 sm:%s1249]
  %vm1251 = vcmask 1045508
  %v1252 = vsel %vm1251, %v1250, %v1247
  %s1253 = scalar_lea.vmem %s0, 906
  %s1254 = smov 192
  %v1255 = vld [vmem:[%s1253] ss:$16 sm:%s1254]
  %vm1256 = vcmask 1047558
  %v1257 = vsel %vm1256, %v1255, %v1252
  %1258 = vrot.lane.b32.xlu0 %v1257, 80
  %v1259 = vpop.permute.xlu0 %1258
  %vm1260 = vcmask 720512
  %s1261 = scalar_lea.vmem %s1, 56
  %1262 = vst.msk [vmem:[%s1261] sm:$0xff] %vm1260, %v1259
  %s1263 = scalar_lea.vmem %s0, 9
  %s1264 = smov 3
  %v1265 = vld [vmem:[%s1263] ss:$16 sm:%s1264]
  %s1266 = scalar_lea.vmem %s0, 9
  %s1267 = smov 12
  %v1268 = vld [vmem:[%s1266] ss:$16 sm:%s1267]
  %vm1269 = vcmask 1043458
  %v1270 = vsel %vm1269, %v1268, %v1265
  %s1271 = scalar_lea.vmem %s0, 9
  %s1272 = smov 48
  %v1273 = vld [vmem:[%s1271] ss:$16 sm:%s1272]
  %vm1274 = vcmask 1045508
  %v1275 = vsel %vm1274, %v1273, %v1270
  %s1276 = scalar_lea.vmem %s0, 9
  %s1277 = smov 192
  %v1278 = vld [vmem:[%s1276] ss:$16 sm:%s1277]
  %vm1279 = vcmask 1047558
  %v1280 = vsel %vm1279, %v1278, %v1275
  %1281 = vrot.lane.b32.xlu0 %v1280, 72
  %v1282 = vpop.permute.xlu0 %1281
  %vm1283 = vcmask 654912
  %1284 = vst.msk [vmem:[%s1] sm:$0xff] %vm1283, %v1282
  %s1285 = scalar_lea.vmem %s0, 521
  %s1286 = smov 3
  %v1287 = vld [vmem:[%s1285] ss:$16 sm:%s1286]
  %s1288 = scalar_lea.vmem %s0, 521
  %s1289 = smov 12
  %v1290 = vld [vmem:[%s1288] ss:$16 sm:%s1289]
  %vm1291 = vcmask 1043458
  %v1292 = vsel %vm1291, %v1290, %v1287
  %s1293 = scalar_lea.vmem %s0, 521
  %s1294 = smov 48
  %v1295 = vld [vmem:[%s1293] ss:$16 sm:%s1294]
  %vm1296 = vcmask 1045508
  %v1297 = vsel %vm1296, %v1295, %v1292
  %s1298 = scalar_lea.vmem %s0, 521
  %s1299 = smov 192
  %v1300 = vld [vmem:[%s1298] ss:$16 sm:%s1299]
  %vm1301 = vcmask 1047558
  %v1302 = vsel %vm1301, %v1300, %v1297
  %1303 = vrot.lane.b32.xlu0 %v1302, 72
  %v1304 = vpop.permute.xlu0 %1303
  %vm1305 = vcmask 654912
  %s1306 = scalar_lea.vmem %s1, 32
  %1307 = vst.msk [vmem:[%s1306] sm:$0xff] %vm1305, %v1304
  %s1308 = scalar_lea.vmem %s0, 137
  %s1309 = smov 3
  %v1310 = vld [vmem:[%s1308] ss:$16 sm:%s1309]
  %s1311 = scalar_lea.vmem %s0, 137
  %s1312 = smov 12
  %v1313 = vld [vmem:[%s1311] ss:$16 sm:%s1312]
  %vm1314 = vcmask 1043458
  %v1315 = vsel %vm1314, %v1313, %v1310
  %s1316 = scalar_lea.vmem %s0, 137
  %s1317 = smov 48
  %v1318 = vld [vmem:[%s1316] ss:$16 sm:%s1317]
  %vm1319 = vcmask 1045508
  %v1320 = vsel %vm1319, %v1318, %v1315
  %s1321 = scalar_lea.vmem %s0, 137
  %s1322 = smov 192
  %v1323 = vld [vmem:[%s1321] ss:$16 sm:%s1322]
  %vm1324 = vcmask 1047558
  %v1325 = vsel %vm1324, %v1323, %v1320
  %1326 = vrot.lane.b32.xlu0 %v1325, 72
  %v1327 = vpop.permute.xlu0 %1326
  %vm1328 = vcmask 654912
  %s1329 = scalar_lea.vmem %s1, 8
  %1330 = vst.msk [vmem:[%s1329] sm:$0xff] %vm1328, %v1327
  %s1331 = scalar_lea.vmem %s0, 649
  %s1332 = smov 3
  %v1333 = vld [vmem:[%s1331] ss:$16 sm:%s1332]
  %s1334 = scalar_lea.vmem %s0, 649
  %s1335 = smov 12
  %v1336 = vld [vmem:[%s1334] ss:$16 sm:%s1335]
  %vm1337 = vcmask 1043458
  %v1338 = vsel %vm1337, %v1336, %v1333
  %s1339 = scalar_lea.vmem %s0, 649
  %s1340 = smov 48
  %v1341 = vld [vmem:[%s1339] ss:$16 sm:%s1340]
  %vm1342 = vcmask 1045508
  %v1343 = vsel %vm1342, %v1341, %v1338
  %s1344 = scalar_lea.vmem %s0, 649
  %s1345 = smov 192
  %v1346 = vld [vmem:[%s1344] ss:$16 sm:%s1345]
  %vm1347 = vcmask 1047558
  %v1348 = vsel %vm1347, %v1346, %v1343
  %1349 = vrot.lane.b32.xlu0 %v1348, 72
  %v1350 = vpop.permute.xlu0 %1349
  %vm1351 = vcmask 654912
  %s1352 = scalar_lea.vmem %s1, 40
  %1353 = vst.msk [vmem:[%s1352] sm:$0xff] %vm1351, %v1350
  %s1354 = scalar_lea.vmem %s0, 265
  %s1355 = smov 3
  %v1356 = vld [vmem:[%s1354] ss:$16 sm:%s1355]
  %s1357 = scalar_lea.vmem %s0, 265
  %s1358 = smov 12
  %v1359 = vld [vmem:[%s1357] ss:$16 sm:%s1358]
  %vm1360 = vcmask 1043458
  %v1361 = vsel %vm1360, %v1359, %v1356
  %s1362 = scalar_lea.vmem %s0, 265
  %s1363 = smov 48
  %v1364 = vld [vmem:[%s1362] ss:$16 sm:%s1363]
  %vm1365 = vcmask 1045508
  %v1366 = vsel %vm1365, %v1364, %v1361
  %s1367 = scalar_lea.vmem %s0, 265
  %s1368 = smov 192
  %v1369 = vld [vmem:[%s1367] ss:$16 sm:%s1368]
  %vm1370 = vcmask 1047558
  %v1371 = vsel %vm1370, %v1369, %v1366
  %1372 = vrot.lane.b32.xlu0 %v1371, 72
  %v1373 = vpop.permute.xlu0 %1372
  %vm1374 = vcmask 654912
  %s1375 = scalar_lea.vmem %s1, 16
  %1376 = vst.msk [vmem:[%s1375] sm:$0xff] %vm1374, %v1373
  %s1377 = scalar_lea.vmem %s0, 777
  %s1378 = smov 3
  %v1379 = vld [vmem:[%s1377] ss:$16 sm:%s1378]
  %s1380 = scalar_lea.vmem %s0, 777
  %s1381 = smov 12
  %v1382 = vld [vmem:[%s1380] ss:$16 sm:%s1381]
  %vm1383 = vcmask 1043458
  %v1384 = vsel %vm1383, %v1382, %v1379
  %s1385 = scalar_lea.vmem %s0, 777
  %s1386 = smov 48
  %v1387 = vld [vmem:[%s1385] ss:$16 sm:%s1386]
  %vm1388 = vcmask 1045508
  %v1389 = vsel %vm1388, %v1387, %v1384
  %s1390 = scalar_lea.vmem %s0, 777
  %s1391 = smov 192
  %v1392 = vld [vmem:[%s1390] ss:$16 sm:%s1391]
  %vm1393 = vcmask 1047558
  %v1394 = vsel %vm1393, %v1392, %v1389
  %1395 = vrot.lane.b32.xlu0 %v1394, 72
  %v1396 = vpop.permute.xlu0 %1395
  %vm1397 = vcmask 654912
  %s1398 = scalar_lea.vmem %s1, 48
  %1399 = vst.msk [vmem:[%s1398] sm:$0xff] %vm1397, %v1396
  %s1400 = scalar_lea.vmem %s0, 393
  %s1401 = smov 3
  %v1402 = vld [vmem:[%s1400] ss:$16 sm:%s1401]
  %s1403 = scalar_lea.vmem %s0, 393
  %s1404 = smov 12
  %v1405 = vld [vmem:[%s1403] ss:$16 sm:%s1404]
  %vm1406 = vcmask 1043458
  %v1407 = vsel %vm1406, %v1405, %v1402
  %s1408 = scalar_lea.vmem %s0, 393
  %s1409 = smov 48
  %v1410 = vld [vmem:[%s1408] ss:$16 sm:%s1409]
  %vm1411 = vcmask 1045508
  %v1412 = vsel %vm1411, %v1410, %v1407
  %s1413 = scalar_lea.vmem %s0, 393
  %s1414 = smov 192
  %v1415 = vld [vmem:[%s1413] ss:$16 sm:%s1414]
  %vm1416 = vcmask 1047558
  %v1417 = vsel %vm1416, %v1415, %v1412
  %1418 = vrot.lane.b32.xlu0 %v1417, 72
  %v1419 = vpop.permute.xlu0 %1418
  %vm1420 = vcmask 654912
  %s1421 = scalar_lea.vmem %s1, 24
  %1422 = vst.msk [vmem:[%s1421] sm:$0xff] %vm1420, %v1419
  %s1423 = scalar_lea.vmem %s0, 905
  %s1424 = smov 3
  %v1425 = vld [vmem:[%s1423] ss:$16 sm:%s1424]
  %s1426 = scalar_lea.vmem %s0, 905
  %s1427 = smov 12
  %v1428 = vld [vmem:[%s1426] ss:$16 sm:%s1427]
  %vm1429 = vcmask 1043458
  %v1430 = vsel %vm1429, %v1428, %v1425
  %s1431 = scalar_lea.vmem %s0, 905
  %s1432 = smov 48
  %v1433 = vld [vmem:[%s1431] ss:$16 sm:%s1432]
  %vm1434 = vcmask 1045508
  %v1435 = vsel %vm1434, %v1433, %v1430
  %s1436 = scalar_lea.vmem %s0, 905
  %s1437 = smov 192
  %v1438 = vld [vmem:[%s1436] ss:$16 sm:%s1437]
  %vm1439 = vcmask 1047558
  %v1440 = vsel %vm1439, %v1438, %v1435
  %1441 = vrot.lane.b32.xlu0 %v1440, 72
  %v1442 = vpop.permute.xlu0 %1441
  %vm1443 = vcmask 654912
  %s1444 = scalar_lea.vmem %s1, 56
  %1445 = vst.msk [vmem:[%s1444] sm:$0xff] %vm1443, %v1442
  %s1446 = scalar_lea.vmem %s0, 8
  %s1447 = smov 3
  %v1448 = vld [vmem:[%s1446] ss:$16 sm:%s1447]
  %s1449 = scalar_lea.vmem %s0, 8
  %s1450 = smov 12
  %v1451 = vld [vmem:[%s1449] ss:$16 sm:%s1450]
  %vm1452 = vcmask 1043458
  %v1453 = vsel %vm1452, %v1451, %v1448
  %s1454 = scalar_lea.vmem %s0, 8
  %s1455 = smov 48
  %v1456 = vld [vmem:[%s1454] ss:$16 sm:%s1455]
  %vm1457 = vcmask 1045508
  %v1458 = vsel %vm1457, %v1456, %v1453
  %s1459 = scalar_lea.vmem %s0, 8
  %s1460 = smov 192
  %v1461 = vld [vmem:[%s1459] ss:$16 sm:%s1460]
  %vm1462 = vcmask 1047558
  %v1463 = vsel %vm1462, %v1461, %v1458
  %1464 = vrot.lane.b32.xlu0 %v1463, 64
  %v1465 = vpop.permute.xlu0 %1464
  %vm1466 = vcmask 589312
  %1467 = vst.msk [vmem:[%s1] sm:$0xff] %vm1466, %v1465
  %s1468 = scalar_lea.vmem %s0, 520
  %s1469 = smov 3
  %v1470 = vld [vmem:[%s1468] ss:$16 sm:%s1469]
  %s1471 = scalar_lea.vmem %s0, 520
  %s1472 = smov 12
  %v1473 = vld [vmem:[%s1471] ss:$16 sm:%s1472]
  %vm1474 = vcmask 1043458
  %v1475 = vsel %vm1474, %v1473, %v1470
  %s1476 = scalar_lea.vmem %s0, 520
  %s1477 = smov 48
  %v1478 = vld [vmem:[%s1476] ss:$16 sm:%s1477]
  %vm1479 = vcmask 1045508
  %v1480 = vsel %vm1479, %v1478, %v1475
  %s1481 = scalar_lea.vmem %s0, 520
  %s1482 = smov 192
  %v1483 = vld [vmem:[%s1481] ss:$16 sm:%s1482]
  %vm1484 = vcmask 1047558
  %v1485 = vsel %vm1484, %v1483, %v1480
  %1486 = vrot.lane.b32.xlu0 %v1485, 64
  %v1487 = vpop.permute.xlu0 %1486
  %vm1488 = vcmask 589312
  %s1489 = scalar_lea.vmem %s1, 32
  %1490 = vst.msk [vmem:[%s1489] sm:$0xff] %vm1488, %v1487
  %s1491 = scalar_lea.vmem %s0, 136
  %s1492 = smov 3
  %v1493 = vld [vmem:[%s1491] ss:$16 sm:%s1492]
  %s1494 = scalar_lea.vmem %s0, 136
  %s1495 = smov 12
  %v1496 = vld [vmem:[%s1494] ss:$16 sm:%s1495]
  %vm1497 = vcmask 1043458
  %v1498 = vsel %vm1497, %v1496, %v1493
  %s1499 = scalar_lea.vmem %s0, 136
  %s1500 = smov 48
  %v1501 = vld [vmem:[%s1499] ss:$16 sm:%s1500]
  %vm1502 = vcmask 1045508
  %v1503 = vsel %vm1502, %v1501, %v1498
  %s1504 = scalar_lea.vmem %s0, 136
  %s1505 = smov 192
  %v1506 = vld [vmem:[%s1504] ss:$16 sm:%s1505]
  %vm1507 = vcmask 1047558
  %v1508 = vsel %vm1507, %v1506, %v1503
  %1509 = vrot.lane.b32.xlu0 %v1508, 64
  %v1510 = vpop.permute.xlu0 %1509
  %vm1511 = vcmask 589312
  %s1512 = scalar_lea.vmem %s1, 8
  %1513 = vst.msk [vmem:[%s1512] sm:$0xff] %vm1511, %v1510
  %s1514 = scalar_lea.vmem %s0, 648
  %s1515 = smov 3
  %v1516 = vld [vmem:[%s1514] ss:$16 sm:%s1515]
  %s1517 = scalar_lea.vmem %s0, 648
  %s1518 = smov 12
  %v1519 = vld [vmem:[%s1517] ss:$16 sm:%s1518]
  %vm1520 = vcmask 1043458
  %v1521 = vsel %vm1520, %v1519, %v1516
  %s1522 = scalar_lea.vmem %s0, 648
  %s1523 = smov 48
  %v1524 = vld [vmem:[%s1522] ss:$16 sm:%s1523]
  %vm1525 = vcmask 1045508
  %v1526 = vsel %vm1525, %v1524, %v1521
  %s1527 = scalar_lea.vmem %s0, 648
  %s1528 = smov 192
  %v1529 = vld [vmem:[%s1527] ss:$16 sm:%s1528]
  %vm1530 = vcmask 1047558
  %v1531 = vsel %vm1530, %v1529, %v1526
  %1532 = vrot.lane.b32.xlu0 %v1531, 64
  %v1533 = vpop.permute.xlu0 %1532
  %vm1534 = vcmask 589312
  %s1535 = scalar_lea.vmem %s1, 40
  %1536 = vst.msk [vmem:[%s1535] sm:$0xff] %vm1534, %v1533
  %s1537 = scalar_lea.vmem %s0, 264
  %s1538 = smov 3
  %v1539 = vld [vmem:[%s1537] ss:$16 sm:%s1538]
  %s1540 = scalar_lea.vmem %s0, 264
  %s1541 = smov 12
  %v1542 = vld [vmem:[%s1540] ss:$16 sm:%s1541]
  %vm1543 = vcmask 1043458
  %v1544 = vsel %vm1543, %v1542, %v1539
  %s1545 = scalar_lea.vmem %s0, 264
  %s1546 = smov 48
  %v1547 = vld [vmem:[%s1545] ss:$16 sm:%s1546]
  %vm1548 = vcmask 1045508
  %v1549 = vsel %vm1548, %v1547, %v1544
  %s1550 = scalar_lea.vmem %s0, 264
  %s1551 = smov 192
  %v1552 = vld [vmem:[%s1550] ss:$16 sm:%s1551]
  %vm1553 = vcmask 1047558
  %v1554 = vsel %vm1553, %v1552, %v1549
  %1555 = vrot.lane.b32.xlu0 %v1554, 64
  %v1556 = vpop.permute.xlu0 %1555
  %vm1557 = vcmask 589312
  %s1558 = scalar_lea.vmem %s1, 16
  %1559 = vst.msk [vmem:[%s1558] sm:$0xff] %vm1557, %v1556
  %s1560 = scalar_lea.vmem %s0, 776
  %s1561 = smov 3
  %v1562 = vld [vmem:[%s1560] ss:$16 sm:%s1561]
  %s1563 = scalar_lea.vmem %s0, 776
  %s1564 = smov 12
  %v1565 = vld [vmem:[%s1563] ss:$16 sm:%s1564]
  %vm1566 = vcmask 1043458
  %v1567 = vsel %vm1566, %v1565, %v1562
  %s1568 = scalar_lea.vmem %s0, 776
  %s1569 = smov 48
  %v1570 = vld [vmem:[%s1568] ss:$16 sm:%s1569]
  %vm1571 = vcmask 1045508
  %v1572 = vsel %vm1571, %v1570, %v1567
  %s1573 = scalar_lea.vmem %s0, 776
  %s1574 = smov 192
  %v1575 = vld [vmem:[%s1573] ss:$16 sm:%s1574]
  %vm1576 = vcmask 1047558
  %v1577 = vsel %vm1576, %v1575, %v1572
  %1578 = vrot.lane.b32.xlu0 %v1577, 64
  %v1579 = vpop.permute.xlu0 %1578
  %vm1580 = vcmask 589312
  %s1581 = scalar_lea.vmem %s1, 48
  %1582 = vst.msk [vmem:[%s1581] sm:$0xff] %vm1580, %v1579
  %s1583 = scalar_lea.vmem %s0, 392
  %s1584 = smov 3
  %v1585 = vld [vmem:[%s1583] ss:$16 sm:%s1584]
  %s1586 = scalar_lea.vmem %s0, 392
  %s1587 = smov 12
  %v1588 = vld [vmem:[%s1586] ss:$16 sm:%s1587]
  %vm1589 = vcmask 1043458
  %v1590 = vsel %vm1589, %v1588, %v1585
  %s1591 = scalar_lea.vmem %s0, 392
  %s1592 = smov 48
  %v1593 = vld [vmem:[%s1591] ss:$16 sm:%s1592]
  %vm1594 = vcmask 1045508
  %v1595 = vsel %vm1594, %v1593, %v1590
  %s1596 = scalar_lea.vmem %s0, 392
  %s1597 = smov 192
  %v1598 = vld [vmem:[%s1596] ss:$16 sm:%s1597]
  %vm1599 = vcmask 1047558
  %v1600 = vsel %vm1599, %v1598, %v1595
  %1601 = vrot.lane.b32.xlu0 %v1600, 64
  %v1602 = vpop.permute.xlu0 %1601
  %vm1603 = vcmask 589312
  %s1604 = scalar_lea.vmem %s1, 24
  %1605 = vst.msk [vmem:[%s1604] sm:$0xff] %vm1603, %v1602
  %s1606 = scalar_lea.vmem %s0, 904
  %s1607 = smov 3
  %v1608 = vld [vmem:[%s1606] ss:$16 sm:%s1607]
  %s1609 = scalar_lea.vmem %s0, 904
  %s1610 = smov 12
  %v1611 = vld [vmem:[%s1609] ss:$16 sm:%s1610]
  %vm1612 = vcmask 1043458
  %v1613 = vsel %vm1612, %v1611, %v1608
  %s1614 = scalar_lea.vmem %s0, 904
  %s1615 = smov 48
  %v1616 = vld [vmem:[%s1614] ss:$16 sm:%s1615]
  %vm1617 = vcmask 1045508
  %v1618 = vsel %vm1617, %v1616, %v1613
  %s1619 = scalar_lea.vmem %s0, 904
  %s1620 = smov 192
  %v1621 = vld [vmem:[%s1619] ss:$16 sm:%s1620]
  %vm1622 = vcmask 1047558
  %v1623 = vsel %vm1622, %v1621, %v1618
  %1624 = vrot.lane.b32.xlu0 %v1623, 64
  %v1625 = vpop.permute.xlu0 %1624
  %vm1626 = vcmask 589312
  %s1627 = scalar_lea.vmem %s1, 56
  %1628 = vst.msk [vmem:[%s1627] sm:$0xff] %vm1626, %v1625
  %s1629 = scalar_lea.vmem %s0, 7
  %s1630 = smov 3
  %v1631 = vld [vmem:[%s1629] ss:$16 sm:%s1630]
  %s1632 = scalar_lea.vmem %s0, 7
  %s1633 = smov 12
  %v1634 = vld [vmem:[%s1632] ss:$16 sm:%s1633]
  %vm1635 = vcmask 1043458
  %v1636 = vsel %vm1635, %v1634, %v1631
  %s1637 = scalar_lea.vmem %s0, 7
  %s1638 = smov 48
  %v1639 = vld [vmem:[%s1637] ss:$16 sm:%s1638]
  %vm1640 = vcmask 1045508
  %v1641 = vsel %vm1640, %v1639, %v1636
  %s1642 = scalar_lea.vmem %s0, 7
  %s1643 = smov 192
  %v1644 = vld [vmem:[%s1642] ss:$16 sm:%s1643]
  %vm1645 = vcmask 1047558
  %v1646 = vsel %vm1645, %v1644, %v1641
  %1647 = vrot.lane.b32.xlu0 %v1646, 56
  %v1648 = vpop.permute.xlu0 %1647
  %vm1649 = vcmask 523712
  %1650 = vst.msk [vmem:[%s1] sm:$0xff] %vm1649, %v1648
  %s1651 = scalar_lea.vmem %s0, 519
  %s1652 = smov 3
  %v1653 = vld [vmem:[%s1651] ss:$16 sm:%s1652]
  %s1654 = scalar_lea.vmem %s0, 519
  %s1655 = smov 12
  %v1656 = vld [vmem:[%s1654] ss:$16 sm:%s1655]
  %vm1657 = vcmask 1043458
  %v1658 = vsel %vm1657, %v1656, %v1653
  %s1659 = scalar_lea.vmem %s0, 519
  %s1660 = smov 48
  %v1661 = vld [vmem:[%s1659] ss:$16 sm:%s1660]
  %vm1662 = vcmask 1045508
  %v1663 = vsel %vm1662, %v1661, %v1658
  %s1664 = scalar_lea.vmem %s0, 519
  %s1665 = smov 192
  %v1666 = vld [vmem:[%s1664] ss:$16 sm:%s1665]
  %vm1667 = vcmask 1047558
  %v1668 = vsel %vm1667, %v1666, %v1663
  %1669 = vrot.lane.b32.xlu0 %v1668, 56
  %v1670 = vpop.permute.xlu0 %1669
  %vm1671 = vcmask 523712
  %s1672 = scalar_lea.vmem %s1, 32
  %1673 = vst.msk [vmem:[%s1672] sm:$0xff] %vm1671, %v1670
  %s1674 = scalar_lea.vmem %s0, 135
  %s1675 = smov 3
  %v1676 = vld [vmem:[%s1674] ss:$16 sm:%s1675]
  %s1677 = scalar_lea.vmem %s0, 135
  %s1678 = smov 12
  %v1679 = vld [vmem:[%s1677] ss:$16 sm:%s1678]
  %vm1680 = vcmask 1043458
  %v1681 = vsel %vm1680, %v1679, %v1676
  %s1682 = scalar_lea.vmem %s0, 135
  %s1683 = smov 48
  %v1684 = vld [vmem:[%s1682] ss:$16 sm:%s1683]
  %vm1685 = vcmask 1045508
  %v1686 = vsel %vm1685, %v1684, %v1681
  %s1687 = scalar_lea.vmem %s0, 135
  %s1688 = smov 192
  %v1689 = vld [vmem:[%s1687] ss:$16 sm:%s1688]
  %vm1690 = vcmask 1047558
  %v1691 = vsel %vm1690, %v1689, %v1686
  %1692 = vrot.lane.b32.xlu0 %v1691, 56
  %v1693 = vpop.permute.xlu0 %1692
  %vm1694 = vcmask 523712
  %s1695 = scalar_lea.vmem %s1, 8
  %1696 = vst.msk [vmem:[%s1695] sm:$0xff] %vm1694, %v1693
  %s1697 = scalar_lea.vmem %s0, 647
  %s1698 = smov 3
  %v1699 = vld [vmem:[%s1697] ss:$16 sm:%s1698]
  %s1700 = scalar_lea.vmem %s0, 647
  %s1701 = smov 12
  %v1702 = vld [vmem:[%s1700] ss:$16 sm:%s1701]
  %vm1703 = vcmask 1043458
  %v1704 = vsel %vm1703, %v1702, %v1699
  %s1705 = scalar_lea.vmem %s0, 647
  %s1706 = smov 48
  %v1707 = vld [vmem:[%s1705] ss:$16 sm:%s1706]
  %vm1708 = vcmask 1045508
  %v1709 = vsel %vm1708, %v1707, %v1704
  %s1710 = scalar_lea.vmem %s0, 647
  %s1711 = smov 192
  %v1712 = vld [vmem:[%s1710] ss:$16 sm:%s1711]
  %vm1713 = vcmask 1047558
  %v1714 = vsel %vm1713, %v1712, %v1709
  %1715 = vrot.lane.b32.xlu0 %v1714, 56
  %v1716 = vpop.permute.xlu0 %1715
  %vm1717 = vcmask 523712
  %s1718 = scalar_lea.vmem %s1, 40
  %1719 = vst.msk [vmem:[%s1718] sm:$0xff] %vm1717, %v1716
  %s1720 = scalar_lea.vmem %s0, 263
  %s1721 = smov 3
  %v1722 = vld [vmem:[%s1720] ss:$16 sm:%s1721]
  %s1723 = scalar_lea.vmem %s0, 263
  %s1724 = smov 12
  %v1725 = vld [vmem:[%s1723] ss:$16 sm:%s1724]
  %vm1726 = vcmask 1043458
  %v1727 = vsel %vm1726, %v1725, %v1722
  %s1728 = scalar_lea.vmem %s0, 263
  %s1729 = smov 48
  %v1730 = vld [vmem:[%s1728] ss:$16 sm:%s1729]
  %vm1731 = vcmask 1045508
  %v1732 = vsel %vm1731, %v1730, %v1727
  %s1733 = scalar_lea.vmem %s0, 263
  %s1734 = smov 192
  %v1735 = vld [vmem:[%s1733] ss:$16 sm:%s1734]
  %vm1736 = vcmask 1047558
  %v1737 = vsel %vm1736, %v1735, %v1732
  %1738 = vrot.lane.b32.xlu0 %v1737, 56
  %v1739 = vpop.permute.xlu0 %1738
  %vm1740 = vcmask 523712
  %s1741 = scalar_lea.vmem %s1, 16
  %1742 = vst.msk [vmem:[%s1741] sm:$0xff] %vm1740, %v1739
  %s1743 = scalar_lea.vmem %s0, 775
  %s1744 = smov 3
  %v1745 = vld [vmem:[%s1743] ss:$16 sm:%s1744]
  %s1746 = scalar_lea.vmem %s0, 775
  %s1747 = smov 12
  %v1748 = vld [vmem:[%s1746] ss:$16 sm:%s1747]
  %vm1749 = vcmask 1043458
  %v1750 = vsel %vm1749, %v1748, %v1745
  %s1751 = scalar_lea.vmem %s0, 775
  %s1752 = smov 48
  %v1753 = vld [vmem:[%s1751] ss:$16 sm:%s1752]
  %vm1754 = vcmask 1045508
  %v1755 = vsel %vm1754, %v1753, %v1750
  %s1756 = scalar_lea.vmem %s0, 775
  %s1757 = smov 192
  %v1758 = vld [vmem:[%s1756] ss:$16 sm:%s1757]
  %vm1759 = vcmask 1047558
  %v1760 = vsel %vm1759, %v1758, %v1755
  %1761 = vrot.lane.b32.xlu0 %v1760, 56
  %v1762 = vpop.permute.xlu0 %1761
  %vm1763 = vcmask 523712
  %s1764 = scalar_lea.vmem %s1, 48
  %1765 = vst.msk [vmem:[%s1764] sm:$0xff] %vm1763, %v1762
  %s1766 = scalar_lea.vmem %s0, 391
  %s1767 = smov 3
  %v1768 = vld [vmem:[%s1766] ss:$16 sm:%s1767]
  %s1769 = scalar_lea.vmem %s0, 391
  %s1770 = smov 12
  %v1771 = vld [vmem:[%s1769] ss:$16 sm:%s1770]
  %vm1772 = vcmask 1043458
  %v1773 = vsel %vm1772, %v1771, %v1768
  %s1774 = scalar_lea.vmem %s0, 391
  %s1775 = smov 48
  %v1776 = vld [vmem:[%s1774] ss:$16 sm:%s1775]
  %vm1777 = vcmask 1045508
  %v1778 = vsel %vm1777, %v1776, %v1773
  %s1779 = scalar_lea.vmem %s0, 391
  %s1780 = smov 192
  %v1781 = vld [vmem:[%s1779] ss:$16 sm:%s1780]
  %vm1782 = vcmask 1047558
  %v1783 = vsel %vm1782, %v1781, %v1778
  %1784 = vrot.lane.b32.xlu0 %v1783, 56
  %v1785 = vpop.permute.xlu0 %1784
  %vm1786 = vcmask 523712
  %s1787 = scalar_lea.vmem %s1, 24
  %1788 = vst.msk [vmem:[%s1787] sm:$0xff] %vm1786, %v1785
  %s1789 = scalar_lea.vmem %s0, 903
  %s1790 = smov 3
  %v1791 = vld [vmem:[%s1789] ss:$16 sm:%s1790]
  %s1792 = scalar_lea.vmem %s0, 903
  %s1793 = smov 12
  %v1794 = vld [vmem:[%s1792] ss:$16 sm:%s1793]
  %vm1795 = vcmask 1043458
  %v1796 = vsel %vm1795, %v1794, %v1791
  %s1797 = scalar_lea.vmem %s0, 903
  %s1798 = smov 48
  %v1799 = vld [vmem:[%s1797] ss:$16 sm:%s1798]
  %vm1800 = vcmask 1045508
  %v1801 = vsel %vm1800, %v1799, %v1796
  %s1802 = scalar_lea.vmem %s0, 903
  %s1803 = smov 192
  %v1804 = vld [vmem:[%s1802] ss:$16 sm:%s1803]
  %vm1805 = vcmask 1047558
  %v1806 = vsel %vm1805, %v1804, %v1801
  %1807 = vrot.lane.b32.xlu0 %v1806, 56
  %v1808 = vpop.permute.xlu0 %1807
  %vm1809 = vcmask 523712
  %s1810 = scalar_lea.vmem %s1, 56
  %1811 = vst.msk [vmem:[%s1810] sm:$0xff] %vm1809, %v1808
  %s1812 = scalar_lea.vmem %s0, 6
  %s1813 = smov 3
  %v1814 = vld [vmem:[%s1812] ss:$16 sm:%s1813]
  %s1815 = scalar_lea.vmem %s0, 6
  %s1816 = smov 12
  %v1817 = vld [vmem:[%s1815] ss:$16 sm:%s1816]
  %vm1818 = vcmask 1043458
  %v1819 = vsel %vm1818, %v1817, %v1814
  %s1820 = scalar_lea.vmem %s0, 6
  %s1821 = smov 48
  %v1822 = vld [vmem:[%s1820] ss:$16 sm:%s1821]
  %vm1823 = vcmask 1045508
  %v1824 = vsel %vm1823, %v1822, %v1819
  %s1825 = scalar_lea.vmem %s0, 6
  %s1826 = smov 192
  %v1827 = vld [vmem:[%s1825] ss:$16 sm:%s1826]
  %vm1828 = vcmask 1047558
  %v1829 = vsel %vm1828, %v1827, %v1824
  %1830 = vrot.lane.b32.xlu0 %v1829, 48
  %v1831 = vpop.permute.xlu0 %1830
  %vm1832 = vcmask 458112
  %1833 = vst.msk [vmem:[%s1] sm:$0xff] %vm1832, %v1831
  %s1834 = scalar_lea.vmem %s0, 518
  %s1835 = smov 3
  %v1836 = vld [vmem:[%s1834] ss:$16 sm:%s1835]
  %s1837 = scalar_lea.vmem %s0, 518
  %s1838 = smov 12
  %v1839 = vld [vmem:[%s1837] ss:$16 sm:%s1838]
  %vm1840 = vcmask 1043458
  %v1841 = vsel %vm1840, %v1839, %v1836
  %s1842 = scalar_lea.vmem %s0, 518
  %s1843 = smov 48
  %v1844 = vld [vmem:[%s1842] ss:$16 sm:%s1843]
  %vm1845 = vcmask 1045508
  %v1846 = vsel %vm1845, %v1844, %v1841
  %s1847 = scalar_lea.vmem %s0, 518
  %s1848 = smov 192
  %v1849 = vld [vmem:[%s1847] ss:$16 sm:%s1848]
  %vm1850 = vcmask 1047558
  %v1851 = vsel %vm1850, %v1849, %v1846
  %1852 = vrot.lane.b32.xlu0 %v1851, 48
  %v1853 = vpop.permute.xlu0 %1852
  %vm1854 = vcmask 458112
  %s1855 = scalar_lea.vmem %s1, 32
  %1856 = vst.msk [vmem:[%s1855] sm:$0xff] %vm1854, %v1853
  %s1857 = scalar_lea.vmem %s0, 134
  %s1858 = smov 3
  %v1859 = vld [vmem:[%s1857] ss:$16 sm:%s1858]
  %s1860 = scalar_lea.vmem %s0, 134
  %s1861 = smov 12
  %v1862 = vld [vmem:[%s1860] ss:$16 sm:%s1861]
  %vm1863 = vcmask 1043458
  %v1864 = vsel %vm1863, %v1862, %v1859
  %s1865 = scalar_lea.vmem %s0, 134
  %s1866 = smov 48
  %v1867 = vld [vmem:[%s1865] ss:$16 sm:%s1866]
  %vm1868 = vcmask 1045508
  %v1869 = vsel %vm1868, %v1867, %v1864
  %s1870 = scalar_lea.vmem %s0, 134
  %s1871 = smov 192
  %v1872 = vld [vmem:[%s1870] ss:$16 sm:%s1871]
  %vm1873 = vcmask 1047558
  %v1874 = vsel %vm1873, %v1872, %v1869
  %1875 = vrot.lane.b32.xlu0 %v1874, 48
  %v1876 = vpop.permute.xlu0 %1875
  %vm1877 = vcmask 458112
  %s1878 = scalar_lea.vmem %s1, 8
  %1879 = vst.msk [vmem:[%s1878] sm:$0xff] %vm1877, %v1876
  %s1880 = scalar_lea.vmem %s0, 646
  %s1881 = smov 3
  %v1882 = vld [vmem:[%s1880] ss:$16 sm:%s1881]
  %s1883 = scalar_lea.vmem %s0, 646
  %s1884 = smov 12
  %v1885 = vld [vmem:[%s1883] ss:$16 sm:%s1884]
  %vm1886 = vcmask 1043458
  %v1887 = vsel %vm1886, %v1885, %v1882
  %s1888 = scalar_lea.vmem %s0, 646
  %s1889 = smov 48
  %v1890 = vld [vmem:[%s1888] ss:$16 sm:%s1889]
  %vm1891 = vcmask 1045508
  %v1892 = vsel %vm1891, %v1890, %v1887
  %s1893 = scalar_lea.vmem %s0, 646
  %s1894 = smov 192
  %v1895 = vld [vmem:[%s1893] ss:$16 sm:%s1894]
  %vm1896 = vcmask 1047558
  %v1897 = vsel %vm1896, %v1895, %v1892
  %1898 = vrot.lane.b32.xlu0 %v1897, 48
  %v1899 = vpop.permute.xlu0 %1898
  %vm1900 = vcmask 458112
  %s1901 = scalar_lea.vmem %s1, 40
  %1902 = vst.msk [vmem:[%s1901] sm:$0xff] %vm1900, %v1899
  %s1903 = scalar_lea.vmem %s0, 262
  %s1904 = smov 3
  %v1905 = vld [vmem:[%s1903] ss:$16 sm:%s1904]
  %s1906 = scalar_lea.vmem %s0, 262
  %s1907 = smov 12
  %v1908 = vld [vmem:[%s1906] ss:$16 sm:%s1907]
  %vm1909 = vcmask 1043458
  %v1910 = vsel %vm1909, %v1908, %v1905
  %s1911 = scalar_lea.vmem %s0, 262
  %s1912 = smov 48
  %v1913 = vld [vmem:[%s1911] ss:$16 sm:%s1912]
  %vm1914 = vcmask 1045508
  %v1915 = vsel %vm1914, %v1913, %v1910
  %s1916 = scalar_lea.vmem %s0, 262
  %s1917 = smov 192
  %v1918 = vld [vmem:[%s1916] ss:$16 sm:%s1917]
  %vm1919 = vcmask 1047558
  %v1920 = vsel %vm1919, %v1918, %v1915
  %1921 = vrot.lane.b32.xlu0 %v1920, 48
  %v1922 = vpop.permute.xlu0 %1921
  %vm1923 = vcmask 458112
  %s1924 = scalar_lea.vmem %s1, 16
  %1925 = vst.msk [vmem:[%s1924] sm:$0xff] %vm1923, %v1922
  %s1926 = scalar_lea.vmem %s0, 774
  %s1927 = smov 3
  %v1928 = vld [vmem:[%s1926] ss:$16 sm:%s1927]
  %s1929 = scalar_lea.vmem %s0, 774
  %s1930 = smov 12
  %v1931 = vld [vmem:[%s1929] ss:$16 sm:%s1930]
  %vm1932 = vcmask 1043458
  %v1933 = vsel %vm1932, %v1931, %v1928
  %s1934 = scalar_lea.vmem %s0, 774
  %s1935 = smov 48
  %v1936 = vld [vmem:[%s1934] ss:$16 sm:%s1935]
  %vm1937 = vcmask 1045508
  %v1938 = vsel %vm1937, %v1936, %v1933
  %s1939 = scalar_lea.vmem %s0, 774
  %s1940 = smov 192
  %v1941 = vld [vmem:[%s1939] ss:$16 sm:%s1940]
  %vm1942 = vcmask 1047558
  %v1943 = vsel %vm1942, %v1941, %v1938
  %1944 = vrot.lane.b32.xlu0 %v1943, 48
  %v1945 = vpop.permute.xlu0 %1944
  %vm1946 = vcmask 458112
  %s1947 = scalar_lea.vmem %s1, 48
  %1948 = vst.msk [vmem:[%s1947] sm:$0xff] %vm1946, %v1945
  %s1949 = scalar_lea.vmem %s0, 390
  %s1950 = smov 3
  %v1951 = vld [vmem:[%s1949] ss:$16 sm:%s1950]
  %s1952 = scalar_lea.vmem %s0, 390
  %s1953 = smov 12
  %v1954 = vld [vmem:[%s1952] ss:$16 sm:%s1953]
  %vm1955 = vcmask 1043458
  %v1956 = vsel %vm1955, %v1954, %v1951
  %s1957 = scalar_lea.vmem %s0, 390
  %s1958 = smov 48
  %v1959 = vld [vmem:[%s1957] ss:$16 sm:%s1958]
  %vm1960 = vcmask 1045508
  %v1961 = vsel %vm1960, %v1959, %v1956
  %s1962 = scalar_lea.vmem %s0, 390
  %s1963 = smov 192
  %v1964 = vld [vmem:[%s1962] ss:$16 sm:%s1963]
  %vm1965 = vcmask 1047558
  %v1966 = vsel %vm1965, %v1964, %v1961
  %1967 = vrot.lane.b32.xlu0 %v1966, 48
  %v1968 = vpop.permute.xlu0 %1967
  %vm1969 = vcmask 458112
  %s1970 = scalar_lea.vmem %s1, 24
  %1971 = vst.msk [vmem:[%s1970] sm:$0xff] %vm1969, %v1968
  %s1972 = scalar_lea.vmem %s0, 902
  %s1973 = smov 3
  %v1974 = vld [vmem:[%s1972] ss:$16 sm:%s1973]
  %s1975 = scalar_lea.vmem %s0, 902
  %s1976 = smov 12
  %v1977 = vld [vmem:[%s1975] ss:$16 sm:%s1976]
  %vm1978 = vcmask 1043458
  %v1979 = vsel %vm1978, %v1977, %v1974
  %s1980 = scalar_lea.vmem %s0, 902
  %s1981 = smov 48
  %v1982 = vld [vmem:[%s1980] ss:$16 sm:%s1981]
  %vm1983 = vcmask 1045508
  %v1984 = vsel %vm1983, %v1982, %v1979
  %s1985 = scalar_lea.vmem %s0, 902
  %s1986 = smov 192
  %v1987 = vld [vmem:[%s1985] ss:$16 sm:%s1986]
  %vm1988 = vcmask 1047558
  %v1989 = vsel %vm1988, %v1987, %v1984
  %1990 = vrot.lane.b32.xlu0 %v1989, 48
  %v1991 = vpop.permute.xlu0 %1990
  %vm1992 = vcmask 458112
  %s1993 = scalar_lea.vmem %s1, 56
  %1994 = vst.msk [vmem:[%s1993] sm:$0xff] %vm1992, %v1991
  %s1995 = scalar_lea.vmem %s0, 5
  %s1996 = smov 3
  %v1997 = vld [vmem:[%s1995] ss:$16 sm:%s1996]
  %s1998 = scalar_lea.vmem %s0, 5
  %s1999 = smov 12
  %v2000 = vld [vmem:[%s1998] ss:$16 sm:%s1999]
  %vm2001 = vcmask 1043458
  %v2002 = vsel %vm2001, %v2000, %v1997
  %s2003 = scalar_lea.vmem %s0, 5
  %s2004 = smov 48
  %v2005 = vld [vmem:[%s2003] ss:$16 sm:%s2004]
  %vm2006 = vcmask 1045508
  %v2007 = vsel %vm2006, %v2005, %v2002
  %s2008 = scalar_lea.vmem %s0, 5
  %s2009 = smov 192
  %v2010 = vld [vmem:[%s2008] ss:$16 sm:%s2009]
  %vm2011 = vcmask 1047558
  %v2012 = vsel %vm2011, %v2010, %v2007
  %2013 = vrot.lane.b32.xlu0 %v2012, 40
  %v2014 = vpop.permute.xlu0 %2013
  %vm2015 = vcmask 392512
  %2016 = vst.msk [vmem:[%s1] sm:$0xff] %vm2015, %v2014
  %s2017 = scalar_lea.vmem %s0, 517
  %s2018 = smov 3
  %v2019 = vld [vmem:[%s2017] ss:$16 sm:%s2018]
  %s2020 = scalar_lea.vmem %s0, 517
  %s2021 = smov 12
  %v2022 = vld [vmem:[%s2020] ss:$16 sm:%s2021]
  %vm2023 = vcmask 1043458
  %v2024 = vsel %vm2023, %v2022, %v2019
  %s2025 = scalar_lea.vmem %s0, 517
  %s2026 = smov 48
  %v2027 = vld [vmem:[%s2025] ss:$16 sm:%s2026]
  %vm2028 = vcmask 1045508
  %v2029 = vsel %vm2028, %v2027, %v2024
  %s2030 = scalar_lea.vmem %s0, 517
  %s2031 = smov 192
  %v2032 = vld [vmem:[%s2030] ss:$16 sm:%s2031]
  %vm2033 = vcmask 1047558
  %v2034 = vsel %vm2033, %v2032, %v2029
  %2035 = vrot.lane.b32.xlu0 %v2034, 40
  %v2036 = vpop.permute.xlu0 %2035
  %vm2037 = vcmask 392512
  %s2038 = scalar_lea.vmem %s1, 32
  %2039 = vst.msk [vmem:[%s2038] sm:$0xff] %vm2037, %v2036
  %s2040 = scalar_lea.vmem %s0, 133
  %s2041 = smov 3
  %v2042 = vld [vmem:[%s2040] ss:$16 sm:%s2041]
  %s2043 = scalar_lea.vmem %s0, 133
  %s2044 = smov 12
  %v2045 = vld [vmem:[%s2043] ss:$16 sm:%s2044]
  %vm2046 = vcmask 1043458
  %v2047 = vsel %vm2046, %v2045, %v2042
  %s2048 = scalar_lea.vmem %s0, 133
  %s2049 = smov 48
  %v2050 = vld [vmem:[%s2048] ss:$16 sm:%s2049]
  %vm2051 = vcmask 1045508
  %v2052 = vsel %vm2051, %v2050, %v2047
  %s2053 = scalar_lea.vmem %s0, 133
  %s2054 = smov 192
  %v2055 = vld [vmem:[%s2053] ss:$16 sm:%s2054]
  %vm2056 = vcmask 1047558
  %v2057 = vsel %vm2056, %v2055, %v2052
  %2058 = vrot.lane.b32.xlu0 %v2057, 40
  %v2059 = vpop.permute.xlu0 %2058
  %vm2060 = vcmask 392512
  %s2061 = scalar_lea.vmem %s1, 8
  %2062 = vst.msk [vmem:[%s2061] sm:$0xff] %vm2060, %v2059
  %s2063 = scalar_lea.vmem %s0, 645
  %s2064 = smov 3
  %v2065 = vld [vmem:[%s2063] ss:$16 sm:%s2064]
  %s2066 = scalar_lea.vmem %s0, 645
  %s2067 = smov 12
  %v2068 = vld [vmem:[%s2066] ss:$16 sm:%s2067]
  %vm2069 = vcmask 1043458
  %v2070 = vsel %vm2069, %v2068, %v2065
  %s2071 = scalar_lea.vmem %s0, 645
  %s2072 = smov 48
  %v2073 = vld [vmem:[%s2071] ss:$16 sm:%s2072]
  %vm2074 = vcmask 1045508
  %v2075 = vsel %vm2074, %v2073, %v2070
  %s2076 = scalar_lea.vmem %s0, 645
  %s2077 = smov 192
  %v2078 = vld [vmem:[%s2076] ss:$16 sm:%s2077]
  %vm2079 = vcmask 1047558
  %v2080 = vsel %vm2079, %v2078, %v2075
  %2081 = vrot.lane.b32.xlu0 %v2080, 40
  %v2082 = vpop.permute.xlu0 %2081
  %vm2083 = vcmask 392512
  %s2084 = scalar_lea.vmem %s1, 40
  %2085 = vst.msk [vmem:[%s2084] sm:$0xff] %vm2083, %v2082
  %s2086 = scalar_lea.vmem %s0, 261
  %s2087 = smov 3
  %v2088 = vld [vmem:[%s2086] ss:$16 sm:%s2087]
  %s2089 = scalar_lea.vmem %s0, 261
  %s2090 = smov 12
  %v2091 = vld [vmem:[%s2089] ss:$16 sm:%s2090]
  %vm2092 = vcmask 1043458
  %v2093 = vsel %vm2092, %v2091, %v2088
  %s2094 = scalar_lea.vmem %s0, 261
  %s2095 = smov 48
  %v2096 = vld [vmem:[%s2094] ss:$16 sm:%s2095]
  %vm2097 = vcmask 1045508
  %v2098 = vsel %vm2097, %v2096, %v2093
  %s2099 = scalar_lea.vmem %s0, 261
  %s2100 = smov 192
  %v2101 = vld [vmem:[%s2099] ss:$16 sm:%s2100]
  %vm2102 = vcmask 1047558
  %v2103 = vsel %vm2102, %v2101, %v2098
  %2104 = vrot.lane.b32.xlu0 %v2103, 40
  %v2105 = vpop.permute.xlu0 %2104
  %vm2106 = vcmask 392512
  %s2107 = scalar_lea.vmem %s1, 16
  %2108 = vst.msk [vmem:[%s2107] sm:$0xff] %vm2106, %v2105
  %s2109 = scalar_lea.vmem %s0, 773
  %s2110 = smov 3
  %v2111 = vld [vmem:[%s2109] ss:$16 sm:%s2110]
  %s2112 = scalar_lea.vmem %s0, 773
  %s2113 = smov 12
  %v2114 = vld [vmem:[%s2112] ss:$16 sm:%s2113]
  %vm2115 = vcmask 1043458
  %v2116 = vsel %vm2115, %v2114, %v2111
  %s2117 = scalar_lea.vmem %s0, 773
  %s2118 = smov 48
  %v2119 = vld [vmem:[%s2117] ss:$16 sm:%s2118]
  %vm2120 = vcmask 1045508
  %v2121 = vsel %vm2120, %v2119, %v2116
  %s2122 = scalar_lea.vmem %s0, 773
  %s2123 = smov 192
  %v2124 = vld [vmem:[%s2122] ss:$16 sm:%s2123]
  %vm2125 = vcmask 1047558
  %v2126 = vsel %vm2125, %v2124, %v2121
  %2127 = vrot.lane.b32.xlu0 %v2126, 40
  %v2128 = vpop.permute.xlu0 %2127
  %vm2129 = vcmask 392512
  %s2130 = scalar_lea.vmem %s1, 48
  %2131 = vst.msk [vmem:[%s2130] sm:$0xff] %vm2129, %v2128
  %s2132 = scalar_lea.vmem %s0, 389
  %s2133 = smov 3
  %v2134 = vld [vmem:[%s2132] ss:$16 sm:%s2133]
  %s2135 = scalar_lea.vmem %s0, 389
  %s2136 = smov 12
  %v2137 = vld [vmem:[%s2135] ss:$16 sm:%s2136]
  %vm2138 = vcmask 1043458
  %v2139 = vsel %vm2138, %v2137, %v2134
  %s2140 = scalar_lea.vmem %s0, 389
  %s2141 = smov 48
  %v2142 = vld [vmem:[%s2140] ss:$16 sm:%s2141]
  %vm2143 = vcmask 1045508
  %v2144 = vsel %vm2143, %v2142, %v2139
  %s2145 = scalar_lea.vmem %s0, 389
  %s2146 = smov 192
  %v2147 = vld [vmem:[%s2145] ss:$16 sm:%s2146]
  %vm2148 = vcmask 1047558
  %v2149 = vsel %vm2148, %v2147, %v2144
  %2150 = vrot.lane.b32.xlu0 %v2149, 40
  %v2151 = vpop.permute.xlu0 %2150
  %vm2152 = vcmask 392512
  %s2153 = scalar_lea.vmem %s1, 24
  %2154 = vst.msk [vmem:[%s2153] sm:$0xff] %vm2152, %v2151
  %s2155 = scalar_lea.vmem %s0, 901
  %s2156 = smov 3
  %v2157 = vld [vmem:[%s2155] ss:$16 sm:%s2156]
  %s2158 = scalar_lea.vmem %s0, 901
  %s2159 = smov 12
  %v2160 = vld [vmem:[%s2158] ss:$16 sm:%s2159]
  %vm2161 = vcmask 1043458
  %v2162 = vsel %vm2161, %v2160, %v2157
  %s2163 = scalar_lea.vmem %s0, 901
  %s2164 = smov 48
  %v2165 = vld [vmem:[%s2163] ss:$16 sm:%s2164]
  %vm2166 = vcmask 1045508
  %v2167 = vsel %vm2166, %v2165, %v2162
  %s2168 = scalar_lea.vmem %s0, 901
  %s2169 = smov 192
  %v2170 = vld [vmem:[%s2168] ss:$16 sm:%s2169]
  %vm2171 = vcmask 1047558
  %v2172 = vsel %vm2171, %v2170, %v2167
  %2173 = vrot.lane.b32.xlu0 %v2172, 40
  %v2174 = vpop.permute.xlu0 %2173
  %vm2175 = vcmask 392512
  %s2176 = scalar_lea.vmem %s1, 56
  %2177 = vst.msk [vmem:[%s2176] sm:$0xff] %vm2175, %v2174
  %s2178 = scalar_lea.vmem %s0, 4
  %s2179 = smov 3
  %v2180 = vld [vmem:[%s2178] ss:$16 sm:%s2179]
  %s2181 = scalar_lea.vmem %s0, 4
  %s2182 = smov 12
  %v2183 = vld [vmem:[%s2181] ss:$16 sm:%s2182]
  %vm2184 = vcmask 1043458
  %v2185 = vsel %vm2184, %v2183, %v2180
  %s2186 = scalar_lea.vmem %s0, 4
  %s2187 = smov 48
  %v2188 = vld [vmem:[%s2186] ss:$16 sm:%s2187]
  %vm2189 = vcmask 1045508
  %v2190 = vsel %vm2189, %v2188, %v2185
  %s2191 = scalar_lea.vmem %s0, 4
  %s2192 = smov 192
  %v2193 = vld [vmem:[%s2191] ss:$16 sm:%s2192]
  %vm2194 = vcmask 1047558
  %v2195 = vsel %vm2194, %v2193, %v2190
  %2196 = vrot.lane.b32.xlu0 %v2195, 32
  %v2197 = vpop.permute.xlu0 %2196
  %vm2198 = vcmask 326912
  %2199 = vst.msk [vmem:[%s1] sm:$0xff] %vm2198, %v2197
  %s2200 = scalar_lea.vmem %s0, 516
  %s2201 = smov 3
  %v2202 = vld [vmem:[%s2200] ss:$16 sm:%s2201]
  %s2203 = scalar_lea.vmem %s0, 516
  %s2204 = smov 12
  %v2205 = vld [vmem:[%s2203] ss:$16 sm:%s2204]
  %vm2206 = vcmask 1043458
  %v2207 = vsel %vm2206, %v2205, %v2202
  %s2208 = scalar_lea.vmem %s0, 516
  %s2209 = smov 48
  %v2210 = vld [vmem:[%s2208] ss:$16 sm:%s2209]
  %vm2211 = vcmask 1045508
  %v2212 = vsel %vm2211, %v2210, %v2207
  %s2213 = scalar_lea.vmem %s0, 516
  %s2214 = smov 192
  %v2215 = vld [vmem:[%s2213] ss:$16 sm:%s2214]
  %vm2216 = vcmask 1047558
  %v2217 = vsel %vm2216, %v2215, %v2212
  %2218 = vrot.lane.b32.xlu0 %v2217, 32
  %v2219 = vpop.permute.xlu0 %2218
  %vm2220 = vcmask 326912
  %s2221 = scalar_lea.vmem %s1, 32
  %2222 = vst.msk [vmem:[%s2221] sm:$0xff] %vm2220, %v2219
  %s2223 = scalar_lea.vmem %s0, 132
  %s2224 = smov 3
  %v2225 = vld [vmem:[%s2223] ss:$16 sm:%s2224]
  %s2226 = scalar_lea.vmem %s0, 132
  %s2227 = smov 12
  %v2228 = vld [vmem:[%s2226] ss:$16 sm:%s2227]
  %vm2229 = vcmask 1043458
  %v2230 = vsel %vm2229, %v2228, %v2225
  %s2231 = scalar_lea.vmem %s0, 132
  %s2232 = smov 48
  %v2233 = vld [vmem:[%s2231] ss:$16 sm:%s2232]
  %vm2234 = vcmask 1045508
  %v2235 = vsel %vm2234, %v2233, %v2230
  %s2236 = scalar_lea.vmem %s0, 132
  %s2237 = smov 192
  %v2238 = vld [vmem:[%s2236] ss:$16 sm:%s2237]
  %vm2239 = vcmask 1047558
  %v2240 = vsel %vm2239, %v2238, %v2235
  %2241 = vrot.lane.b32.xlu0 %v2240, 32
  %v2242 = vpop.permute.xlu0 %2241
  %vm2243 = vcmask 326912
  %s2244 = scalar_lea.vmem %s1, 8
  %2245 = vst.msk [vmem:[%s2244] sm:$0xff] %vm2243, %v2242
  %s2246 = scalar_lea.vmem %s0, 644
  %s2247 = smov 3
  %v2248 = vld [vmem:[%s2246] ss:$16 sm:%s2247]
  %s2249 = scalar_lea.vmem %s0, 644
  %s2250 = smov 12
  %v2251 = vld [vmem:[%s2249] ss:$16 sm:%s2250]
  %vm2252 = vcmask 1043458
  %v2253 = vsel %vm2252, %v2251, %v2248
  %s2254 = scalar_lea.vmem %s0, 644
  %s2255 = smov 48
  %v2256 = vld [vmem:[%s2254] ss:$16 sm:%s2255]
  %vm2257 = vcmask 1045508
  %v2258 = vsel %vm2257, %v2256, %v2253
  %s2259 = scalar_lea.vmem %s0, 644
  %s2260 = smov 192
  %v2261 = vld [vmem:[%s2259] ss:$16 sm:%s2260]
  %vm2262 = vcmask 1047558
  %v2263 = vsel %vm2262, %v2261, %v2258
  %2264 = vrot.lane.b32.xlu0 %v2263, 32
  %v2265 = vpop.permute.xlu0 %2264
  %vm2266 = vcmask 326912
  %s2267 = scalar_lea.vmem %s1, 40
  %2268 = vst.msk [vmem:[%s2267] sm:$0xff] %vm2266, %v2265
  %s2269 = scalar_lea.vmem %s0, 260
  %s2270 = smov 3
  %v2271 = vld [vmem:[%s2269] ss:$16 sm:%s2270]
  %s2272 = scalar_lea.vmem %s0, 260
  %s2273 = smov 12
  %v2274 = vld [vmem:[%s2272] ss:$16 sm:%s2273]
  %vm2275 = vcmask 1043458
  %v2276 = vsel %vm2275, %v2274, %v2271
  %s2277 = scalar_lea.vmem %s0, 260
  %s2278 = smov 48
  %v2279 = vld [vmem:[%s2277] ss:$16 sm:%s2278]
  %vm2280 = vcmask 1045508
  %v2281 = vsel %vm2280, %v2279, %v2276
  %s2282 = scalar_lea.vmem %s0, 260
  %s2283 = smov 192
  %v2284 = vld [vmem:[%s2282] ss:$16 sm:%s2283]
  %vm2285 = vcmask 1047558
  %v2286 = vsel %vm2285, %v2284, %v2281
  %2287 = vrot.lane.b32.xlu0 %v2286, 32
  %v2288 = vpop.permute.xlu0 %2287
  %vm2289 = vcmask 326912
  %s2290 = scalar_lea.vmem %s1, 16
  %2291 = vst.msk [vmem:[%s2290] sm:$0xff] %vm2289, %v2288
  %s2292 = scalar_lea.vmem %s0, 772
  %s2293 = smov 3
  %v2294 = vld [vmem:[%s2292] ss:$16 sm:%s2293]
  %s2295 = scalar_lea.vmem %s0, 772
  %s2296 = smov 12
  %v2297 = vld [vmem:[%s2295] ss:$16 sm:%s2296]
  %vm2298 = vcmask 1043458
  %v2299 = vsel %vm2298, %v2297, %v2294
  %s2300 = scalar_lea.vmem %s0, 772
  %s2301 = smov 48
  %v2302 = vld [vmem:[%s2300] ss:$16 sm:%s2301]
  %vm2303 = vcmask 1045508
  %v2304 = vsel %vm2303, %v2302, %v2299
  %s2305 = scalar_lea.vmem %s0, 772
  %s2306 = smov 192
  %v2307 = vld [vmem:[%s2305] ss:$16 sm:%s2306]
  %vm2308 = vcmask 1047558
  %v2309 = vsel %vm2308, %v2307, %v2304
  %2310 = vrot.lane.b32.xlu0 %v2309, 32
  %v2311 = vpop.permute.xlu0 %2310
  %vm2312 = vcmask 326912
  %s2313 = scalar_lea.vmem %s1, 48
  %2314 = vst.msk [vmem:[%s2313] sm:$0xff] %vm2312, %v2311
  %s2315 = scalar_lea.vmem %s0, 388
  %s2316 = smov 3
  %v2317 = vld [vmem:[%s2315] ss:$16 sm:%s2316]
  %s2318 = scalar_lea.vmem %s0, 388
  %s2319 = smov 12
  %v2320 = vld [vmem:[%s2318] ss:$16 sm:%s2319]
  %vm2321 = vcmask 1043458
  %v2322 = vsel %vm2321, %v2320, %v2317
  %s2323 = scalar_lea.vmem %s0, 388
  %s2324 = smov 48
  %v2325 = vld [vmem:[%s2323] ss:$16 sm:%s2324]
  %vm2326 = vcmask 1045508
  %v2327 = vsel %vm2326, %v2325, %v2322
  %s2328 = scalar_lea.vmem %s0, 388
  %s2329 = smov 192
  %v2330 = vld [vmem:[%s2328] ss:$16 sm:%s2329]
  %vm2331 = vcmask 1047558
  %v2332 = vsel %vm2331, %v2330, %v2327
  %2333 = vrot.lane.b32.xlu0 %v2332, 32
  %v2334 = vpop.permute.xlu0 %2333
  %vm2335 = vcmask 326912
  %s2336 = scalar_lea.vmem %s1, 24
  %2337 = vst.msk [vmem:[%s2336] sm:$0xff] %vm2335, %v2334
  %s2338 = scalar_lea.vmem %s0, 900
  %s2339 = smov 3
  %v2340 = vld [vmem:[%s2338] ss:$16 sm:%s2339]
  %s2341 = scalar_lea.vmem %s0, 900
  %s2342 = smov 12
  %v2343 = vld [vmem:[%s2341] ss:$16 sm:%s2342]
  %vm2344 = vcmask 1043458
  %v2345 = vsel %vm2344, %v2343, %v2340
  %s2346 = scalar_lea.vmem %s0, 900
  %s2347 = smov 48
  %v2348 = vld [vmem:[%s2346] ss:$16 sm:%s2347]
  %vm2349 = vcmask 1045508
  %v2350 = vsel %vm2349, %v2348, %v2345
  %s2351 = scalar_lea.vmem %s0, 900
  %s2352 = smov 192
  %v2353 = vld [vmem:[%s2351] ss:$16 sm:%s2352]
  %vm2354 = vcmask 1047558
  %v2355 = vsel %vm2354, %v2353, %v2350
  %2356 = vrot.lane.b32.xlu0 %v2355, 32
  %v2357 = vpop.permute.xlu0 %2356
  %vm2358 = vcmask 326912
  %s2359 = scalar_lea.vmem %s1, 56
  %2360 = vst.msk [vmem:[%s2359] sm:$0xff] %vm2358, %v2357
  %s2361 = scalar_lea.vmem %s0, 3
  %s2362 = smov 3
  %v2363 = vld [vmem:[%s2361] ss:$16 sm:%s2362]
  %s2364 = scalar_lea.vmem %s0, 3
  %s2365 = smov 12
  %v2366 = vld [vmem:[%s2364] ss:$16 sm:%s2365]
  %vm2367 = vcmask 1043458
  %v2368 = vsel %vm2367, %v2366, %v2363
  %s2369 = scalar_lea.vmem %s0, 3
  %s2370 = smov 48
  %v2371 = vld [vmem:[%s2369] ss:$16 sm:%s2370]
  %vm2372 = vcmask 1045508
  %v2373 = vsel %vm2372, %v2371, %v2368
  %s2374 = scalar_lea.vmem %s0, 3
  %s2375 = smov 192
  %v2376 = vld [vmem:[%s2374] ss:$16 sm:%s2375]
  %vm2377 = vcmask 1047558
  %v2378 = vsel %vm2377, %v2376, %v2373
  %2379 = vrot.lane.b32.xlu0 %v2378, 24
  %v2380 = vpop.permute.xlu0 %2379
  %vm2381 = vcmask 261312
  %2382 = vst.msk [vmem:[%s1] sm:$0xff] %vm2381, %v2380
  %s2383 = scalar_lea.vmem %s0, 515
  %s2384 = smov 3
  %v2385 = vld [vmem:[%s2383] ss:$16 sm:%s2384]
  %s2386 = scalar_lea.vmem %s0, 515
  %s2387 = smov 12
  %v2388 = vld [vmem:[%s2386] ss:$16 sm:%s2387]
  %vm2389 = vcmask 1043458
  %v2390 = vsel %vm2389, %v2388, %v2385
  %s2391 = scalar_lea.vmem %s0, 515
  %s2392 = smov 48
  %v2393 = vld [vmem:[%s2391] ss:$16 sm:%s2392]
  %vm2394 = vcmask 1045508
  %v2395 = vsel %vm2394, %v2393, %v2390
  %s2396 = scalar_lea.vmem %s0, 515
  %s2397 = smov 192
  %v2398 = vld [vmem:[%s2396] ss:$16 sm:%s2397]
  %vm2399 = vcmask 1047558
  %v2400 = vsel %vm2399, %v2398, %v2395
  %2401 = vrot.lane.b32.xlu0 %v2400, 24
  %v2402 = vpop.permute.xlu0 %2401
  %vm2403 = vcmask 261312
  %s2404 = scalar_lea.vmem %s1, 32
  %2405 = vst.msk [vmem:[%s2404] sm:$0xff] %vm2403, %v2402
  %s2406 = scalar_lea.vmem %s0, 131
  %s2407 = smov 3
  %v2408 = vld [vmem:[%s2406] ss:$16 sm:%s2407]
  %s2409 = scalar_lea.vmem %s0, 131
  %s2410 = smov 12
  %v2411 = vld [vmem:[%s2409] ss:$16 sm:%s2410]
  %vm2412 = vcmask 1043458
  %v2413 = vsel %vm2412, %v2411, %v2408
  %s2414 = scalar_lea.vmem %s0, 131
  %s2415 = smov 48
  %v2416 = vld [vmem:[%s2414] ss:$16 sm:%s2415]
  %vm2417 = vcmask 1045508
  %v2418 = vsel %vm2417, %v2416, %v2413
  %s2419 = scalar_lea.vmem %s0, 131
  %s2420 = smov 192
  %v2421 = vld [vmem:[%s2419] ss:$16 sm:%s2420]
  %vm2422 = vcmask 1047558
  %v2423 = vsel %vm2422, %v2421, %v2418
  %2424 = vrot.lane.b32.xlu0 %v2423, 24
  %v2425 = vpop.permute.xlu0 %2424
  %vm2426 = vcmask 261312
  %s2427 = scalar_lea.vmem %s1, 8
  %2428 = vst.msk [vmem:[%s2427] sm:$0xff] %vm2426, %v2425
  %s2429 = scalar_lea.vmem %s0, 643
  %s2430 = smov 3
  %v2431 = vld [vmem:[%s2429] ss:$16 sm:%s2430]
  %s2432 = scalar_lea.vmem %s0, 643
  %s2433 = smov 12
  %v2434 = vld [vmem:[%s2432] ss:$16 sm:%s2433]
  %vm2435 = vcmask 1043458
  %v2436 = vsel %vm2435, %v2434, %v2431
  %s2437 = scalar_lea.vmem %s0, 643
  %s2438 = smov 48
  %v2439 = vld [vmem:[%s2437] ss:$16 sm:%s2438]
  %vm2440 = vcmask 1045508
  %v2441 = vsel %vm2440, %v2439, %v2436
  %s2442 = scalar_lea.vmem %s0, 643
  %s2443 = smov 192
  %v2444 = vld [vmem:[%s2442] ss:$16 sm:%s2443]
  %vm2445 = vcmask 1047558
  %v2446 = vsel %vm2445, %v2444, %v2441
  %2447 = vrot.lane.b32.xlu0 %v2446, 24
  %v2448 = vpop.permute.xlu0 %2447
  %vm2449 = vcmask 261312
  %s2450 = scalar_lea.vmem %s1, 40
  %2451 = vst.msk [vmem:[%s2450] sm:$0xff] %vm2449, %v2448
  %s2452 = scalar_lea.vmem %s0, 259
  %s2453 = smov 3
  %v2454 = vld [vmem:[%s2452] ss:$16 sm:%s2453]
  %s2455 = scalar_lea.vmem %s0, 259
  %s2456 = smov 12
  %v2457 = vld [vmem:[%s2455] ss:$16 sm:%s2456]
  %vm2458 = vcmask 1043458
  %v2459 = vsel %vm2458, %v2457, %v2454
  %s2460 = scalar_lea.vmem %s0, 259
  %s2461 = smov 48
  %v2462 = vld [vmem:[%s2460] ss:$16 sm:%s2461]
  %vm2463 = vcmask 1045508
  %v2464 = vsel %vm2463, %v2462, %v2459
  %s2465 = scalar_lea.vmem %s0, 259
  %s2466 = smov 192
  %v2467 = vld [vmem:[%s2465] ss:$16 sm:%s2466]
  %vm2468 = vcmask 1047558
  %v2469 = vsel %vm2468, %v2467, %v2464
  %2470 = vrot.lane.b32.xlu0 %v2469, 24
  %v2471 = vpop.permute.xlu0 %2470
  %vm2472 = vcmask 261312
  %s2473 = scalar_lea.vmem %s1, 16
  %2474 = vst.msk [vmem:[%s2473] sm:$0xff] %vm2472, %v2471
  %s2475 = scalar_lea.vmem %s0, 771
  %s2476 = smov 3
  %v2477 = vld [vmem:[%s2475] ss:$16 sm:%s2476]
  %s2478 = scalar_lea.vmem %s0, 771
  %s2479 = smov 12
  %v2480 = vld [vmem:[%s2478] ss:$16 sm:%s2479]
  %vm2481 = vcmask 1043458
  %v2482 = vsel %vm2481, %v2480, %v2477
  %s2483 = scalar_lea.vmem %s0, 771
  %s2484 = smov 48
  %v2485 = vld [vmem:[%s2483] ss:$16 sm:%s2484]
  %vm2486 = vcmask 1045508
  %v2487 = vsel %vm2486, %v2485, %v2482
  %s2488 = scalar_lea.vmem %s0, 771
  %s2489 = smov 192
  %v2490 = vld [vmem:[%s2488] ss:$16 sm:%s2489]
  %vm2491 = vcmask 1047558
  %v2492 = vsel %vm2491, %v2490, %v2487
  %2493 = vrot.lane.b32.xlu0 %v2492, 24
  %v2494 = vpop.permute.xlu0 %2493
  %vm2495 = vcmask 261312
  %s2496 = scalar_lea.vmem %s1, 48
  %2497 = vst.msk [vmem:[%s2496] sm:$0xff] %vm2495, %v2494
  %s2498 = scalar_lea.vmem %s0, 387
  %s2499 = smov 3
  %v2500 = vld [vmem:[%s2498] ss:$16 sm:%s2499]
  %s2501 = scalar_lea.vmem %s0, 387
  %s2502 = smov 12
  %v2503 = vld [vmem:[%s2501] ss:$16 sm:%s2502]
  %vm2504 = vcmask 1043458
  %v2505 = vsel %vm2504, %v2503, %v2500
  %s2506 = scalar_lea.vmem %s0, 387
  %s2507 = smov 48
  %v2508 = vld [vmem:[%s2506] ss:$16 sm:%s2507]
  %vm2509 = vcmask 1045508
  %v2510 = vsel %vm2509, %v2508, %v2505
  %s2511 = scalar_lea.vmem %s0, 387
  %s2512 = smov 192
  %v2513 = vld [vmem:[%s2511] ss:$16 sm:%s2512]
  %vm2514 = vcmask 1047558
  %v2515 = vsel %vm2514, %v2513, %v2510
  %2516 = vrot.lane.b32.xlu0 %v2515, 24
  %v2517 = vpop.permute.xlu0 %2516
  %vm2518 = vcmask 261312
  %s2519 = scalar_lea.vmem %s1, 24
  %2520 = vst.msk [vmem:[%s2519] sm:$0xff] %vm2518, %v2517
  %s2521 = scalar_lea.vmem %s0, 899
  %s2522 = smov 3
  %v2523 = vld [vmem:[%s2521] ss:$16 sm:%s2522]
  %s2524 = scalar_lea.vmem %s0, 899
  %s2525 = smov 12
  %v2526 = vld [vmem:[%s2524] ss:$16 sm:%s2525]
  %vm2527 = vcmask 1043458
  %v2528 = vsel %vm2527, %v2526, %v2523
  %s2529 = scalar_lea.vmem %s0, 899
  %s2530 = smov 48
  %v2531 = vld [vmem:[%s2529] ss:$16 sm:%s2530]
  %vm2532 = vcmask 1045508
  %v2533 = vsel %vm2532, %v2531, %v2528
  %s2534 = scalar_lea.vmem %s0, 899
  %s2535 = smov 192
  %v2536 = vld [vmem:[%s2534] ss:$16 sm:%s2535]
  %vm2537 = vcmask 1047558
  %v2538 = vsel %vm2537, %v2536, %v2533
  %2539 = vrot.lane.b32.xlu0 %v2538, 24
  %v2540 = vpop.permute.xlu0 %2539
  %vm2541 = vcmask 261312
  %s2542 = scalar_lea.vmem %s1, 56
  %2543 = vst.msk [vmem:[%s2542] sm:$0xff] %vm2541, %v2540
  %s2544 = scalar_lea.vmem %s0, 2
  %s2545 = smov 3
  %v2546 = vld [vmem:[%s2544] ss:$16 sm:%s2545]
  %s2547 = scalar_lea.vmem %s0, 2
  %s2548 = smov 12
  %v2549 = vld [vmem:[%s2547] ss:$16 sm:%s2548]
  %vm2550 = vcmask 1043458
  %v2551 = vsel %vm2550, %v2549, %v2546
  %s2552 = scalar_lea.vmem %s0, 2
  %s2553 = smov 48
  %v2554 = vld [vmem:[%s2552] ss:$16 sm:%s2553]
  %vm2555 = vcmask 1045508
  %v2556 = vsel %vm2555, %v2554, %v2551
  %s2557 = scalar_lea.vmem %s0, 2
  %s2558 = smov 192
  %v2559 = vld [vmem:[%s2557] ss:$16 sm:%s2558]
  %vm2560 = vcmask 1047558
  %v2561 = vsel %vm2560, %v2559, %v2556
  %2562 = vrot.lane.b32.xlu0 %v2561, 16
  %v2563 = vpop.permute.xlu0 %2562
  %vm2564 = vcmask 195712
  %2565 = vst.msk [vmem:[%s1] sm:$0xff] %vm2564, %v2563
  %s2566 = scalar_lea.vmem %s0, 514
  %s2567 = smov 3
  %v2568 = vld [vmem:[%s2566] ss:$16 sm:%s2567]
  %s2569 = scalar_lea.vmem %s0, 514
  %s2570 = smov 12
  %v2571 = vld [vmem:[%s2569] ss:$16 sm:%s2570]
  %vm2572 = vcmask 1043458
  %v2573 = vsel %vm2572, %v2571, %v2568
  %s2574 = scalar_lea.vmem %s0, 514
  %s2575 = smov 48
  %v2576 = vld [vmem:[%s2574] ss:$16 sm:%s2575]
  %vm2577 = vcmask 1045508
  %v2578 = vsel %vm2577, %v2576, %v2573
  %s2579 = scalar_lea.vmem %s0, 514
  %s2580 = smov 192
  %v2581 = vld [vmem:[%s2579] ss:$16 sm:%s2580]
  %vm2582 = vcmask 1047558
  %v2583 = vsel %vm2582, %v2581, %v2578
  %2584 = vrot.lane.b32.xlu0 %v2583, 16
  %v2585 = vpop.permute.xlu0 %2584
  %vm2586 = vcmask 195712
  %s2587 = scalar_lea.vmem %s1, 32
  %2588 = vst.msk [vmem:[%s2587] sm:$0xff] %vm2586, %v2585
  %s2589 = scalar_lea.vmem %s0, 130
  %s2590 = smov 3
  %v2591 = vld [vmem:[%s2589] ss:$16 sm:%s2590]
  %s2592 = scalar_lea.vmem %s0, 130
  %s2593 = smov 12
  %v2594 = vld [vmem:[%s2592] ss:$16 sm:%s2593]
  %vm2595 = vcmask 1043458
  %v2596 = vsel %vm2595, %v2594, %v2591
  %s2597 = scalar_lea.vmem %s0, 130
  %s2598 = smov 48
  %v2599 = vld [vmem:[%s2597] ss:$16 sm:%s2598]
  %vm2600 = vcmask 1045508
  %v2601 = vsel %vm2600, %v2599, %v2596
  %s2602 = scalar_lea.vmem %s0, 130
  %s2603 = smov 192
  %v2604 = vld [vmem:[%s2602] ss:$16 sm:%s2603]
  %vm2605 = vcmask 1047558
  %v2606 = vsel %vm2605, %v2604, %v2601
  %2607 = vrot.lane.b32.xlu0 %v2606, 16
  %v2608 = vpop.permute.xlu0 %2607
  %vm2609 = vcmask 195712
  %s2610 = scalar_lea.vmem %s1, 8
  %2611 = vst.msk [vmem:[%s2610] sm:$0xff] %vm2609, %v2608
  %s2612 = scalar_lea.vmem %s0, 642
  %s2613 = smov 3
  %v2614 = vld [vmem:[%s2612] ss:$16 sm:%s2613]
  %s2615 = scalar_lea.vmem %s0, 642
  %s2616 = smov 12
  %v2617 = vld [vmem:[%s2615] ss:$16 sm:%s2616]
  %vm2618 = vcmask 1043458
  %v2619 = vsel %vm2618, %v2617, %v2614
  %s2620 = scalar_lea.vmem %s0, 642
  %s2621 = smov 48
  %v2622 = vld [vmem:[%s2620] ss:$16 sm:%s2621]
  %vm2623 = vcmask 1045508
  %v2624 = vsel %vm2623, %v2622, %v2619
  %s2625 = scalar_lea.vmem %s0, 642
  %s2626 = smov 192
  %v2627 = vld [vmem:[%s2625] ss:$16 sm:%s2626]
  %vm2628 = vcmask 1047558
  %v2629 = vsel %vm2628, %v2627, %v2624
  %2630 = vrot.lane.b32.xlu0 %v2629, 16
  %v2631 = vpop.permute.xlu0 %2630
  %vm2632 = vcmask 195712
  %s2633 = scalar_lea.vmem %s1, 40
  %2634 = vst.msk [vmem:[%s2633] sm:$0xff] %vm2632, %v2631
  %s2635 = scalar_lea.vmem %s0, 258
  %s2636 = smov 3
  %v2637 = vld [vmem:[%s2635] ss:$16 sm:%s2636]
  %s2638 = scalar_lea.vmem %s0, 258
  %s2639 = smov 12
  %v2640 = vld [vmem:[%s2638] ss:$16 sm:%s2639]
  %vm2641 = vcmask 1043458
  %v2642 = vsel %vm2641, %v2640, %v2637
  %s2643 = scalar_lea.vmem %s0, 258
  %s2644 = smov 48
  %v2645 = vld [vmem:[%s2643] ss:$16 sm:%s2644]
  %vm2646 = vcmask 1045508
  %v2647 = vsel %vm2646, %v2645, %v2642
  %s2648 = scalar_lea.vmem %s0, 258
  %s2649 = smov 192
  %v2650 = vld [vmem:[%s2648] ss:$16 sm:%s2649]
  %vm2651 = vcmask 1047558
  %v2652 = vsel %vm2651, %v2650, %v2647
  %2653 = vrot.lane.b32.xlu0 %v2652, 16
  %v2654 = vpop.permute.xlu0 %2653
  %vm2655 = vcmask 195712
  %s2656 = scalar_lea.vmem %s1, 16
  %2657 = vst.msk [vmem:[%s2656] sm:$0xff] %vm2655, %v2654
  %s2658 = scalar_lea.vmem %s0, 770
  %s2659 = smov 3
  %v2660 = vld [vmem:[%s2658] ss:$16 sm:%s2659]
  %s2661 = scalar_lea.vmem %s0, 770
  %s2662 = smov 12
  %v2663 = vld [vmem:[%s2661] ss:$16 sm:%s2662]
  %vm2664 = vcmask 1043458
  %v2665 = vsel %vm2664, %v2663, %v2660
  %s2666 = scalar_lea.vmem %s0, 770
  %s2667 = smov 48
  %v2668 = vld [vmem:[%s2666] ss:$16 sm:%s2667]
  %vm2669 = vcmask 1045508
  %v2670 = vsel %vm2669, %v2668, %v2665
  %s2671 = scalar_lea.vmem %s0, 770
  %s2672 = smov 192
  %v2673 = vld [vmem:[%s2671] ss:$16 sm:%s2672]
  %vm2674 = vcmask 1047558
  %v2675 = vsel %vm2674, %v2673, %v2670
  %2676 = vrot.lane.b32.xlu0 %v2675, 16
  %v2677 = vpop.permute.xlu0 %2676
  %vm2678 = vcmask 195712
  %s2679 = scalar_lea.vmem %s1, 48
  %2680 = vst.msk [vmem:[%s2679] sm:$0xff] %vm2678, %v2677
  %s2681 = scalar_lea.vmem %s0, 386
  %s2682 = smov 3
  %v2683 = vld [vmem:[%s2681] ss:$16 sm:%s2682]
  %s2684 = scalar_lea.vmem %s0, 386
  %s2685 = smov 12
  %v2686 = vld [vmem:[%s2684] ss:$16 sm:%s2685]
  %vm2687 = vcmask 1043458
  %v2688 = vsel %vm2687, %v2686, %v2683
  %s2689 = scalar_lea.vmem %s0, 386
  %s2690 = smov 48
  %v2691 = vld [vmem:[%s2689] ss:$16 sm:%s2690]
  %vm2692 = vcmask 1045508
  %v2693 = vsel %vm2692, %v2691, %v2688
  %s2694 = scalar_lea.vmem %s0, 386
  %s2695 = smov 192
  %v2696 = vld [vmem:[%s2694] ss:$16 sm:%s2695]
  %vm2697 = vcmask 1047558
  %v2698 = vsel %vm2697, %v2696, %v2693
  %2699 = vrot.lane.b32.xlu0 %v2698, 16
  %v2700 = vpop.permute.xlu0 %2699
  %vm2701 = vcmask 195712
  %s2702 = scalar_lea.vmem %s1, 24
  %2703 = vst.msk [vmem:[%s2702] sm:$0xff] %vm2701, %v2700
  %s2704 = scalar_lea.vmem %s0, 898
  %s2705 = smov 3
  %v2706 = vld [vmem:[%s2704] ss:$16 sm:%s2705]
  %s2707 = scalar_lea.vmem %s0, 898
  %s2708 = smov 12
  %v2709 = vld [vmem:[%s2707] ss:$16 sm:%s2708]
  %vm2710 = vcmask 1043458
  %v2711 = vsel %vm2710, %v2709, %v2706
  %s2712 = scalar_lea.vmem %s0, 898
  %s2713 = smov 48
  %v2714 = vld [vmem:[%s2712] ss:$16 sm:%s2713]
  %vm2715 = vcmask 1045508
  %v2716 = vsel %vm2715, %v2714, %v2711
  %s2717 = scalar_lea.vmem %s0, 898
  %s2718 = smov 192
  %v2719 = vld [vmem:[%s2717] ss:$16 sm:%s2718]
  %vm2720 = vcmask 1047558
  %v2721 = vsel %vm2720, %v2719, %v2716
  %2722 = vrot.lane.b32.xlu0 %v2721, 16
  %v2723 = vpop.permute.xlu0 %2722
  %vm2724 = vcmask 195712
  %s2725 = scalar_lea.vmem %s1, 56
  %2726 = vst.msk [vmem:[%s2725] sm:$0xff] %vm2724, %v2723
  %s2727 = scalar_lea.vmem %s0, 1
  %s2728 = smov 3
  %v2729 = vld [vmem:[%s2727] ss:$16 sm:%s2728]
  %s2730 = scalar_lea.vmem %s0, 1
  %s2731 = smov 12
  %v2732 = vld [vmem:[%s2730] ss:$16 sm:%s2731]
  %vm2733 = vcmask 1043458
  %v2734 = vsel %vm2733, %v2732, %v2729
  %s2735 = scalar_lea.vmem %s0, 1
  %s2736 = smov 48
  %v2737 = vld [vmem:[%s2735] ss:$16 sm:%s2736]
  %vm2738 = vcmask 1045508
  %v2739 = vsel %vm2738, %v2737, %v2734
  %s2740 = scalar_lea.vmem %s0, 1
  %s2741 = smov 192
  %v2742 = vld [vmem:[%s2740] ss:$16 sm:%s2741]
  %vm2743 = vcmask 1047558
  %v2744 = vsel %vm2743, %v2742, %v2739
  %2745 = vrot.lane.b32.xlu0 %v2744, 8
  %v2746 = vpop.permute.xlu0 %2745
  %vm2747 = vcmask 130112
  %2748 = vst.msk [vmem:[%s1] sm:$0xff] %vm2747, %v2746
  %s2749 = scalar_lea.vmem %s0, 513
  %s2750 = smov 3
  %v2751 = vld [vmem:[%s2749] ss:$16 sm:%s2750]
  %s2752 = scalar_lea.vmem %s0, 513
  %s2753 = smov 12
  %v2754 = vld [vmem:[%s2752] ss:$16 sm:%s2753]
  %vm2755 = vcmask 1043458
  %v2756 = vsel %vm2755, %v2754, %v2751
  %s2757 = scalar_lea.vmem %s0, 513
  %s2758 = smov 48
  %v2759 = vld [vmem:[%s2757] ss:$16 sm:%s2758]
  %vm2760 = vcmask 1045508
  %v2761 = vsel %vm2760, %v2759, %v2756
  %s2762 = scalar_lea.vmem %s0, 513
  %s2763 = smov 192
  %v2764 = vld [vmem:[%s2762] ss:$16 sm:%s2763]
  %vm2765 = vcmask 1047558
  %v2766 = vsel %vm2765, %v2764, %v2761
  %2767 = vrot.lane.b32.xlu0 %v2766, 8
  %v2768 = vpop.permute.xlu0 %2767
  %vm2769 = vcmask 130112
  %s2770 = scalar_lea.vmem %s1, 32
  %2771 = vst.msk [vmem:[%s2770] sm:$0xff] %vm2769, %v2768
  %s2772 = scalar_lea.vmem %s0, 129
  %s2773 = smov 3
  %v2774 = vld [vmem:[%s2772] ss:$16 sm:%s2773]
  %s2775 = scalar_lea.vmem %s0, 129
  %s2776 = smov 12
  %v2777 = vld [vmem:[%s2775] ss:$16 sm:%s2776]
  %vm2778 = vcmask 1043458
  %v2779 = vsel %vm2778, %v2777, %v2774
  %s2780 = scalar_lea.vmem %s0, 129
  %s2781 = smov 48
  %v2782 = vld [vmem:[%s2780] ss:$16 sm:%s2781]
  %vm2783 = vcmask 1045508
  %v2784 = vsel %vm2783, %v2782, %v2779
  %s2785 = scalar_lea.vmem %s0, 129
  %s2786 = smov 192
  %v2787 = vld [vmem:[%s2785] ss:$16 sm:%s2786]
  %vm2788 = vcmask 1047558
  %v2789 = vsel %vm2788, %v2787, %v2784
  %2790 = vrot.lane.b32.xlu0 %v2789, 8
  %v2791 = vpop.permute.xlu0 %2790
  %vm2792 = vcmask 130112
  %s2793 = scalar_lea.vmem %s1, 8
  %2794 = vst.msk [vmem:[%s2793] sm:$0xff] %vm2792, %v2791
  %s2795 = scalar_lea.vmem %s0, 641
  %s2796 = smov 3
  %v2797 = vld [vmem:[%s2795] ss:$16 sm:%s2796]
  %s2798 = scalar_lea.vmem %s0, 641
  %s2799 = smov 12
  %v2800 = vld [vmem:[%s2798] ss:$16 sm:%s2799]
  %vm2801 = vcmask 1043458
  %v2802 = vsel %vm2801, %v2800, %v2797
  %s2803 = scalar_lea.vmem %s0, 641
  %s2804 = smov 48
  %v2805 = vld [vmem:[%s2803] ss:$16 sm:%s2804]
  %vm2806 = vcmask 1045508
  %v2807 = vsel %vm2806, %v2805, %v2802
  %s2808 = scalar_lea.vmem %s0, 641
  %s2809 = smov 192
  %v2810 = vld [vmem:[%s2808] ss:$16 sm:%s2809]
  %vm2811 = vcmask 1047558
  %v2812 = vsel %vm2811, %v2810, %v2807
  %2813 = vrot.lane.b32.xlu0 %v2812, 8
  %v2814 = vpop.permute.xlu0 %2813
  %vm2815 = vcmask 130112
  %s2816 = scalar_lea.vmem %s1, 40
  %2817 = vst.msk [vmem:[%s2816] sm:$0xff] %vm2815, %v2814
  %s2818 = scalar_lea.vmem %s0, 257
  %s2819 = smov 3
  %v2820 = vld [vmem:[%s2818] ss:$16 sm:%s2819]
  %s2821 = scalar_lea.vmem %s0, 257
  %s2822 = smov 12
  %v2823 = vld [vmem:[%s2821] ss:$16 sm:%s2822]
  %vm2824 = vcmask 1043458
  %v2825 = vsel %vm2824, %v2823, %v2820
  %s2826 = scalar_lea.vmem %s0, 257
  %s2827 = smov 48
  %v2828 = vld [vmem:[%s2826] ss:$16 sm:%s2827]
  %vm2829 = vcmask 1045508
  %v2830 = vsel %vm2829, %v2828, %v2825
  %s2831 = scalar_lea.vmem %s0, 257
  %s2832 = smov 192
  %v2833 = vld [vmem:[%s2831] ss:$16 sm:%s2832]
  %vm2834 = vcmask 1047558
  %v2835 = vsel %vm2834, %v2833, %v2830
  %2836 = vrot.lane.b32.xlu0 %v2835, 8
  %v2837 = vpop.permute.xlu0 %2836
  %vm2838 = vcmask 130112
  %s2839 = scalar_lea.vmem %s1, 16
  %2840 = vst.msk [vmem:[%s2839] sm:$0xff] %vm2838, %v2837
  %s2841 = scalar_lea.vmem %s0, 769
  %s2842 = smov 3
  %v2843 = vld [vmem:[%s2841] ss:$16 sm:%s2842]
  %s2844 = scalar_lea.vmem %s0, 769
  %s2845 = smov 12
  %v2846 = vld [vmem:[%s2844] ss:$16 sm:%s2845]
  %vm2847 = vcmask 1043458
  %v2848 = vsel %vm2847, %v2846, %v2843
  %s2849 = scalar_lea.vmem %s0, 769
  %s2850 = smov 48
  %v2851 = vld [vmem:[%s2849] ss:$16 sm:%s2850]
  %vm2852 = vcmask 1045508
  %v2853 = vsel %vm2852, %v2851, %v2848
  %s2854 = scalar_lea.vmem %s0, 769
  %s2855 = smov 192
  %v2856 = vld [vmem:[%s2854] ss:$16 sm:%s2855]
  %vm2857 = vcmask 1047558
  %v2858 = vsel %vm2857, %v2856, %v2853
  %2859 = vrot.lane.b32.xlu0 %v2858, 8
  %v2860 = vpop.permute.xlu0 %2859
  %vm2861 = vcmask 130112
  %s2862 = scalar_lea.vmem %s1, 48
  %2863 = vst.msk [vmem:[%s2862] sm:$0xff] %vm2861, %v2860
  %s2864 = scalar_lea.vmem %s0, 385
  %s2865 = smov 3
  %v2866 = vld [vmem:[%s2864] ss:$16 sm:%s2865]
  %s2867 = scalar_lea.vmem %s0, 385
  %s2868 = smov 12
  %v2869 = vld [vmem:[%s2867] ss:$16 sm:%s2868]
  %vm2870 = vcmask 1043458
  %v2871 = vsel %vm2870, %v2869, %v2866
  %s2872 = scalar_lea.vmem %s0, 385
  %s2873 = smov 48
  %v2874 = vld [vmem:[%s2872] ss:$16 sm:%s2873]
  %vm2875 = vcmask 1045508
  %v2876 = vsel %vm2875, %v2874, %v2871
  %s2877 = scalar_lea.vmem %s0, 385
  %s2878 = smov 192
  %v2879 = vld [vmem:[%s2877] ss:$16 sm:%s2878]
  %vm2880 = vcmask 1047558
  %v2881 = vsel %vm2880, %v2879, %v2876
  %2882 = vrot.lane.b32.xlu0 %v2881, 8
  %v2883 = vpop.permute.xlu0 %2882
  %vm2884 = vcmask 130112
  %s2885 = scalar_lea.vmem %s1, 24
  %2886 = vst.msk [vmem:[%s2885] sm:$0xff] %vm2884, %v2883
  %s2887 = scalar_lea.vmem %s0, 897
  %s2888 = smov 3
  %v2889 = vld [vmem:[%s2887] ss:$16 sm:%s2888]
  %s2890 = scalar_lea.vmem %s0, 897
  %s2891 = smov 12
  %v2892 = vld [vmem:[%s2890] ss:$16 sm:%s2891]
  %vm2893 = vcmask 1043458
  %v2894 = vsel %vm2893, %v2892, %v2889
  %s2895 = scalar_lea.vmem %s0, 897
  %s2896 = smov 48
  %v2897 = vld [vmem:[%s2895] ss:$16 sm:%s2896]
  %vm2898 = vcmask 1045508
  %v2899 = vsel %vm2898, %v2897, %v2894
  %s2900 = scalar_lea.vmem %s0, 897
  %s2901 = smov 192
  %v2902 = vld [vmem:[%s2900] ss:$16 sm:%s2901]
  %vm2903 = vcmask 1047558
  %v2904 = vsel %vm2903, %v2902, %v2899
  %2905 = vrot.lane.b32.xlu0 %v2904, 8
  %v2906 = vpop.permute.xlu0 %2905
  %vm2907 = vcmask 130112
  %s2908 = scalar_lea.vmem %s1, 56
  %2909 = vst.msk [vmem:[%s2908] sm:$0xff] %vm2907, %v2906

// kernel: learnable_dct_forward.1
$region0: #{learnable_dct_forward.1}
  #allocation0 [shape = 'u32[]', space=smem, size = 0x4, offset = 0x4, fixed_abs, tag = 'smem constant byte address 0x4 - core index']
  #allocation1 [shape = 'u32[144,128]{1,0:T(1,128)}', space=vmem, size = 0x12000, scoped, tag = 'internal scratch']
  %s0 = inlined_call_operand.vmem [shape: f32[64,256], index: 0, kind: input, shape index: {}]
  %s1 = inlined_call_operand.vmem [shape: f32[64,64], index: 1, kind: input, shape index: {}]
  %s2 = inlined_call_operand.vmem [shape: f32[64,64], index: 2, kind: input, shape index: {}]
  %s3 = inlined_call_operand.vmem [shape: f32[128,128], index: 3, kind: input, shape index: {}]
  %s4 = inlined_call_operand.vmem [shape: f32[128,128], index: 4, kind: input, shape index: {}]
  %s5 = inlined_call_operand.vmem [shape: f32[64,128], index: 5, kind: input, shape index: {}]
  %s6 = inlined_call_operand.vmem [shape: f32[64,256], index: 6, kind: output, shape index: {0}]
  %s7 = inlined_call_operand.vmem [shape: f32[64,256], index: 7, kind: output, shape index: {1}]
  %8 = xla_tuple %s6, %s7
  %s9 = sld [smem:[#allocation0]]
  $region171: #{learnable_dct_forward.1} parent=0
    _
  %s11 = ssub.s32 1, %s9
  %s12 = scalar_select 0, %s11, %s9
  $region1: #{learnable_dct_forward.1} parent=0
    #allocation2 [shape = 'u8[65536]{0}', space=vmem, size = 0x10000, scoped, tag = 'input window, operand 0']
    #allocation3 [shape = 'u8[65536]{0}', space=vmem, size = 0x10000, scoped, tag = 'output window, operand 0']
    #allocation4 [shape = 'u8[65536]{0}', space=vmem, size = 0x10000, scoped, tag = 'output window, operand 1']
    loop: start=0, step=1, limit=4
    $region2: #{learnable_dct_forward.1} parent=1 // loop_pre_header
      _
    $region3: #{learnable_dct_forward.1} parent=1 // loop_header
      %s14 = sphi 0, %s18
      %p15 = scmp.ge.s32.totalorder %s14, 4
      %s24 = sphi 0, %s26
      %s27 = sphi 0, %s24
      %s28 = sphi 0, %s27
      %s44 = sphi 0, %s28
      %s48 = sphi 0, %s48
      %s50 = sphi 0, %s48
      %s51 = sphi 0, %s50
      %s65 = sphi 0, %s51
      %s69 = sphi 0, %s69
      %s71 = sphi 0, %s69
      %s72 = sphi 0, %s71
      %s86 = sphi 0, %s72
      %s90 = sphi 0, %s90
      %s92 = sphi 0, %s90
      %s93 = sphi 0, %s92
      %s107 = sphi 0, %s93
      %s111 = sphi 0, %s111
      %s113 = sphi 0, %s111
      %s114 = sphi 0, %s113
      %s128 = sphi 0, %s114
      %s132 = sphi 0, %s132
      %s134 = sphi 0, %s132
      %s135 = sphi 0, %s134
      %s149 = sphi 0, %s135
      %s155 = sphi 0, %s157
      %s158 = sphi 0, %s155
      %s159 = sphi 0, %s158
      %s175 = sphi 0, %s159
      %s181 = sphi 0, %s183
      %s184 = sphi 0, %s181
      %s185 = sphi 0, %s184
      %s201 = sphi 0, %s185
    $region4: #{learnable_dct_forward.1} parent=1 // loop_header_branch
      %17 = sbr.rel (%p15) target = $region8
    $region5: #{learnable_dct_forward.1} parent=1 // loop_body
      %s19 = ssub.s32 %s14, 1
      %s20 = ssub.s32 %s14, 2
      %s21 = sadd.s32 %s14, 1
      %s22 = ssub.s32 %s14, %s21
      %p23 = scmp.eq.s32.totalorder %s22, 0
      %s25 = sadd.s32 %s24, 1
      %s26 = scalar_select %p23, %s24, %s25
      %p29 = pneg %p23
      %p30 = scmp.eq.s32.totalorder %s14, 1
      %p31 = por %p29, %p30
      %p32 = scmp.ne.s32.totalorder %s24, %s27
      %p33 = scmp.eq.s32.totalorder %s14, 0
      %p34 = por %p32, %p33
      %p35 = scmp.ne.s32.totalorder %s24, %s27
      %p36 = scmp.eq.s32.totalorder %s19, 1
      %p37 = por %p35, %p36
      %p38 = scmp.ne.s32.totalorder %s27, %s28
      %p39 = scmp.eq.s32.totalorder %s19, 0
      %p40 = por %p38, %p39
      %p41 = scmp.ne.s32.totalorder %s27, %s28
      %p42 = scmp.eq.s32.totalorder %s20, 1
      %p43 = por %p41, %p42
      %p45 = scmp.ne.s32.totalorder %s28, %s44
      %p46 = scmp.eq.s32.totalorder %s20, 0
      %p47 = por %p45, %p46
      %s49 = sadd.s32 %s48, 1
      %p52 = scmp.eq.s32.totalorder %s14, 1
      %p53 = scmp.ne.s32.totalorder %s48, %s50
      %p54 = scmp.eq.s32.totalorder %s14, 0
      %p55 = por %p53, %p54
      %p56 = scmp.ne.s32.totalorder %s48, %s50
      %p57 = scmp.eq.s32.totalorder %s19, 1
      %p58 = por %p56, %p57
      %p59 = scmp.ne.s32.totalorder %s50, %s51
      %p60 = scmp.eq.s32.totalorder %s19, 0
      %p61 = por %p59, %p60
      %p62 = scmp.ne.s32.totalorder %s50, %s51
      %p63 = scmp.eq.s32.totalorder %s20, 1
      %p64 = por %p62, %p63
      %p66 = scmp.ne.s32.totalorder %s51, %s65
      %p67 = scmp.eq.s32.totalorder %s20, 0
      %p68 = por %p66, %p67
      %s70 = sadd.s32 %s69, 1
      %p73 = scmp.eq.s32.totalorder %s14, 1
      %p74 = scmp.ne.s32.totalorder %s69, %s71
      %p75 = scmp.eq.s32.totalorder %s14, 0
      %p76 = por %p74, %p75
      %p77 = scmp.ne.s32.totalorder %s69, %s71
      %p78 = scmp.eq.s32.totalorder %s19, 1
      %p79 = por %p77, %p78
      %p80 = scmp.ne.s32.totalorder %s71, %s72
      %p81 = scmp.eq.s32.totalorder %s19, 0
      %p82 = por %p80, %p81
      %p83 = scmp.ne.s32.totalorder %s71, %s72
      %p84 = scmp.eq.s32.totalorder %s20, 1
      %p85 = por %p83, %p84
      %p87 = scmp.ne.s32.totalorder %s72, %s86
      %p88 = scmp.eq.s32.totalorder %s20, 0
      %p89 = por %p87, %p88
      %s91 = sadd.s32 %s90, 1
      %p94 = scmp.eq.s32.totalorder %s14, 1
      %p95 = scmp.ne.s32.totalorder %s90, %s92
      %p96 = scmp.eq.s32.totalorder %s14, 0
      %p97 = por %p95, %p96
      %p98 = scmp.ne.s32.totalorder %s90, %s92
      %p99 = scmp.eq.s32.totalorder %s19, 1
      %p100 = por %p98, %p99
      %p101 = scmp.ne.s32.totalorder %s92, %s93
      %p102 = scmp.eq.s32.totalorder %s19, 0
      %p103 = por %p101, %p102
      %p104 = scmp.ne.s32.totalorder %s92, %s93
      %p105 = scmp.eq.s32.totalorder %s20, 1
      %p106 = por %p104, %p105
      %p108 = scmp.ne.s32.totalorder %s93, %s107
      %p109 = scmp.eq.s32.totalorder %s20, 0
      %p110 = por %p108, %p109
      %s112 = sadd.s32 %s111, 1
      %p115 = scmp.eq.s32.totalorder %s14, 1
      %p116 = scmp.ne.s32.totalorder %s111, %s113
      %p117 = scmp.eq.s32.totalorder %s14, 0
      %p118 = por %p116, %p117
      %p119 = scmp.ne.s32.totalorder %s111, %s113
      %p120 = scmp.eq.s32.totalorder %s19, 1
      %p121 = por %p119, %p120
      %p122 = scmp.ne.s32.totalorder %s113, %s114
      %p123 = scmp.eq.s32.totalorder %s19, 0
      %p124 = por %p122, %p123
      %p125 = scmp.ne.s32.totalorder %s113, %s114
      %p126 = scmp.eq.s32.totalorder %s20, 1
      %p127 = por %p125, %p126
      %p129 = scmp.ne.s32.totalorder %s114, %s128
      %p130 = scmp.eq.s32.totalorder %s20, 0
      %p131 = por %p129, %p130
      %s133 = sadd.s32 %s132, 1
      %p136 = scmp.eq.s32.totalorder %s14, 1
      %p137 = scmp.ne.s32.totalorder %s132, %s134
      %p138 = scmp.eq.s32.totalorder %s14, 0
      %p139 = por %p137, %p138
      %p140 = scmp.ne.s32.totalorder %s132, %s134
      %p141 = scmp.eq.s32.totalorder %s19, 1
      %p142 = por %p140, %p141
      %p143 = scmp.ne.s32.totalorder %s134, %s135
      %p144 = scmp.eq.s32.totalorder %s19, 0
      %p145 = por %p143, %p144
      %p146 = scmp.ne.s32.totalorder %s134, %s135
      %p147 = scmp.eq.s32.totalorder %s20, 1
      %p148 = por %p146, %p147
      %p150 = scmp.ne.s32.totalorder %s135, %s149
      %p151 = scmp.eq.s32.totalorder %s20, 0
      %p152 = por %p150, %p151
      %s153 = ssub.s32 %s14, %s21
      %p154 = scmp.eq.s32.totalorder %s153, 0
      %s156 = sadd.s32 %s155, 1
      %s157 = scalar_select %p154, %s155, %s156
      %p160 = pneg %p154
      %p161 = scmp.eq.s32.totalorder %s14, 1
      %p162 = por %p160, %p161
      %p163 = scmp.ne.s32.totalorder %s155, %s158
      %p164 = scmp.eq.s32.totalorder %s14, 0
      %p165 = por %p163, %p164
      %p166 = scmp.ne.s32.totalorder %s155, %s158
      %p167 = scmp.eq.s32.totalorder %s19, 1
      %p168 = por %p166, %p167
      %p169 = scmp.ne.s32.totalorder %s158, %s159
      %p170 = scmp.eq.s32.totalorder %s19, 0
      %p171 = por %p169, %p170
      %p172 = scmp.ne.s32.totalorder %s158, %s159
      %p173 = scmp.eq.s32.totalorder %s20, 1
      %p174 = por %p172, %p173
      %p176 = scmp.ne.s32.totalorder %s159, %s175
      %p177 = scmp.eq.s32.totalorder %s20, 0
      %p178 = por %p176, %p177
      %s179 = ssub.s32 %s14, %s21
      %p180 = scmp.eq.s32.totalorder %s179, 0
      %s182 = sadd.s32 %s181, 1
      %s183 = scalar_select %p180, %s181, %s182
      %p186 = pneg %p180
      %p187 = scmp.eq.s32.totalorder %s14, 1
      %p188 = por %p186, %p187
      %p189 = scmp.ne.s32.totalorder %s181, %s184
      %p190 = scmp.eq.s32.totalorder %s14, 0
      %p191 = por %p189, %p190
      %p192 = scmp.ne.s32.totalorder %s181, %s184
      %p193 = scmp.eq.s32.totalorder %s19, 1
      %p194 = por %p192, %p193
      %p195 = scmp.ne.s32.totalorder %s184, %s185
      %p196 = scmp.eq.s32.totalorder %s19, 0
      %p197 = por %p195, %p196
      %p198 = scmp.ne.s32.totalorder %s184, %s185
      %p199 = scmp.eq.s32.totalorder %s20, 1
      %p200 = por %p198, %p199
      %p202 = scmp.ne.s32.totalorder %s185, %s201
      %p203 = scmp.eq.s32.totalorder %s20, 0
      %p204 = por %p202, %p203
      %p205 = scmp.le.s32.totalorder 1, %s14
      %p206 = scmp.lt.s32.totalorder %s14, 3
      %p207 = pnand %p205, %p206
      %p208 = pneg %p207
      // Predicated region
      $region9: #{learnable_dct_forward.1} parent=5 // pred_check
        _
      $region10: #{learnable_dct_forward.1} parent=5 // pred_check_branch
        %210 = sbr.rel (%p207) target = $region12
      $region11: #{learnable_dct_forward.1} parent=5 // pred_region
        %s211 = ssub.s32 %s14, 1
        // Predicated region
        $region13: #{learnable_dct_forward.1} parent=11 // pred_check
          %p212 = pneg %p61
        $region14: #{learnable_dct_forward.1} parent=11 // pred_check_branch
          %214 = sbr.rel (%p212) target = $region16
        $region15: #{learnable_dct_forward.1} parent=11 // pred_region
          _
        $region16: #{learnable_dct_forward.1} parent=11 // pred_fallthru
          _
        // Predicated region
        $region17: #{learnable_dct_forward.1} parent=11 // pred_check
          %p215 = pneg %p82
        $region18: #{learnable_dct_forward.1} parent=11 // pred_check_branch
          %217 = sbr.rel (%p215) target = $region20
        $region19: #{learnable_dct_forward.1} parent=11 // pred_region
          _
        $region20: #{learnable_dct_forward.1} parent=11 // pred_fallthru
          _
        // Predicated region
        $region21: #{learnable_dct_forward.1} parent=11 // pred_check
          %p218 = pneg %p103
        $region22: #{learnable_dct_forward.1} parent=11 // pred_check_branch
          %220 = sbr.rel (%p218) target = $region24
        $region23: #{learnable_dct_forward.1} parent=11 // pred_region
          _
        $region24: #{learnable_dct_forward.1} parent=11 // pred_fallthru
          _
        // Predicated region
        $region25: #{learnable_dct_forward.1} parent=11 // pred_check
          %p221 = pneg %p124
        $region26: #{learnable_dct_forward.1} parent=11 // pred_check_branch
          %223 = sbr.rel (%p221) target = $region28
        $region27: #{learnable_dct_forward.1} parent=11 // pred_region
          _
        $region28: #{learnable_dct_forward.1} parent=11 // pred_fallthru
          _
        // Predicated region
        $region29: #{learnable_dct_forward.1} parent=11 // pred_check
          %p224 = pneg %p145
        $region30: #{learnable_dct_forward.1} parent=11 // pred_check_branch
          %226 = sbr.rel (%p224) target = $region32
        $region31: #{learnable_dct_forward.1} parent=11 // pred_region
          _
        $region32: #{learnable_dct_forward.1} parent=11 // pred_fallthru
          _
      $region12: #{learnable_dct_forward.1} parent=5 // pred_fallthru
        _
      %p227 = scmp.lt.s32.totalorder %s14, 2
      // Predicated region
      $region33: #{learnable_dct_forward.1} parent=5 // pred_check
        %p228 = pneg %p227
      $region34: #{learnable_dct_forward.1} parent=5 // pred_check_branch
        %230 = sbr.rel (%p228) target = $region36
      $region35: #{learnable_dct_forward.1} parent=5 // pred_region
        // Predicated region
        $region37: #{learnable_dct_forward.1} parent=35 // pred_check
          %p231 = pneg %p34
        $region38: #{learnable_dct_forward.1} parent=35 // pred_check_branch
          %233 = sbr.rel (%p231) target = $region40
        $region39: #{learnable_dct_forward.1} parent=35 // pred_region
          %s234 = sand.u32 %s24, 1
          %s235 = sand.u32 %s24, 1
          %s236 = smul.addr %s235, 64
          %s237 = scalar_lea.vmem [#allocation2], %s236
          %s238 = smul.addr %s14, 8
          %s239 = scalar_lea.vmem %s0, %s238
          // Predicated region
          $region41: #{learnable_dct_forward.1} parent=39 // pred_check
            _
          $region42: #{learnable_dct_forward.1} parent=39 // pred_check_branch
            %241 = sbr.rel (0) target = $region44
          $region43: #{learnable_dct_forward.1} parent=39 // pred_region
            // Predicated region
            $region45: #{learnable_dct_forward.1} parent=43 // pred_check
              _
            $region46: #{learnable_dct_forward.1} parent=43 // pred_check_branch
              %243 = sbr.rel (0) target = $region48
            $region47: #{learnable_dct_forward.1} parent=43 // pred_region
              // Predicated region
              $region60: #{learnable_dct_forward.1} parent=47 // pred_check
                _
              $region61: #{learnable_dct_forward.1} parent=47 // pred_check_branch
                %272 = sbr.rel (0) target = $region63
              $region62: #{learnable_dct_forward.1} parent=47 // pred_region
                loop: start=0, step=1, limit=1
                $region64: #{learnable_dct_forward.1} parent=62 // loop_pre_header
                  _
                $region65: #{learnable_dct_forward.1} parent=62 // loop_header
                  %s274 = sphi 0, %s278
                  %p275 = scmp.ge.s32.totalorder %s274, 1
                  %s279 = sphi %s239, %s239
                  %s280 = sphi %s237, %s237
                $region66: #{learnable_dct_forward.1} parent=62 // loop_header_branch
                  %277 = sbr.rel (%p275) target = $region70
                $region67: #{learnable_dct_forward.1} parent=62 // loop_body
                  %v281 = vld [vmem:[%s279] sm:$0xff]
                  %282 = vst [vmem:[%s280] sm:$0xff] %v281
                  %v283 = vld [vmem:[%s279 + $0x10] sm:$0xff]
                  %284 = vst [vmem:[%s280 + $0x8] sm:$0xff] %v283
                  %v285 = vld [vmem:[%s279 + $0x20] sm:$0xff]
                  %286 = vst [vmem:[%s280 + $0x10] sm:$0xff] %v285
                  %v287 = vld [vmem:[%s279 + $0x30] sm:$0xff]
                  %288 = vst [vmem:[%s280 + $0x18] sm:$0xff] %v287
                  %v289 = vld [vmem:[%s279 + $0x40] sm:$0xff]
                  %290 = vst [vmem:[%s280 + $0x20] sm:$0xff] %v289
                  %v291 = vld [vmem:[%s279 + $0x50] sm:$0xff]
                  %292 = vst [vmem:[%s280 + $0x28] sm:$0xff] %v291
                  %v293 = vld [vmem:[%s279 + $0x60] sm:$0xff]
                  %294 = vst [vmem:[%s280 + $0x30] sm:$0xff] %v293
                  %v295 = vld [vmem:[%s279 + $0x70] sm:$0xff]
                  %296 = vst [vmem:[%s280 + $0x38] sm:$0xff] %v295
                $region68: #{learnable_dct_forward.1} parent=62 // loop_footer
                  %s278 = sadd.s32 1, %s274
                $region69: #{learnable_dct_forward.1} parent=62 // loop_footer_branch
                  %273 = sbr.rel target = $region65
                $region70: #{learnable_dct_forward.1} parent=62 // loop_exit
                  _
              $region63: #{learnable_dct_forward.1} parent=47 // pred_fallthru
                _
              // Predicated region
              $region71: #{learnable_dct_forward.1} parent=47 // pred_check
                _
              $region72: #{learnable_dct_forward.1} parent=47 // pred_check_branch
                %298 = sbr.rel target = $region74
              $region73: #{learnable_dct_forward.1} parent=47 // pred_region
                _
              $region74: #{learnable_dct_forward.1} parent=47 // pred_fallthru
                _
            $region48: #{learnable_dct_forward.1} parent=43 // pred_fallthru
              _
            // Predicated region
            $region49: #{learnable_dct_forward.1} parent=43 // pred_check
              _
            $region50: #{learnable_dct_forward.1} parent=43 // pred_check_branch
              %245 = sbr.rel target = $region52
            $region51: #{learnable_dct_forward.1} parent=43 // pred_region
              loop: start=0, step=1, limit=1
              $region53: #{learnable_dct_forward.1} parent=51 // loop_pre_header
                _
              $region54: #{learnable_dct_forward.1} parent=51 // loop_header
                %s248 = sphi 0, %s252
                %p249 = scmp.ge.s32.totalorder %s248, 1
                %s253 = sphi %s239, %s239
                %s254 = sphi %s237, %s237
              $region55: #{learnable_dct_forward.1} parent=51 // loop_header_branch
                %251 = sbr.rel (%p249) target = $region59
              $region56: #{learnable_dct_forward.1} parent=51 // loop_body
                %v255 = vld [vmem:[%s253] sm:$0xff]
                %256 = vst [vmem:[%s254] sm:$0xff] %v255
                %v257 = vld [vmem:[%s253 + $0x10] sm:$0xff]
                %258 = vst [vmem:[%s254 + $0x8] sm:$0xff] %v257
                %v259 = vld [vmem:[%s253 + $0x20] sm:$0xff]
                %260 = vst [vmem:[%s254 + $0x10] sm:$0xff] %v259
                %v261 = vld [vmem:[%s253 + $0x30] sm:$0xff]
                %262 = vst [vmem:[%s254 + $0x18] sm:$0xff] %v261
                %v263 = vld [vmem:[%s253 + $0x40] sm:$0xff]
                %264 = vst [vmem:[%s254 + $0x20] sm:$0xff] %v263
                %v265 = vld [vmem:[%s253 + $0x50] sm:$0xff]
                %266 = vst [vmem:[%s254 + $0x28] sm:$0xff] %v265
                %v267 = vld [vmem:[%s253 + $0x60] sm:$0xff]
                %268 = vst [vmem:[%s254 + $0x30] sm:$0xff] %v267
                %v269 = vld [vmem:[%s253 + $0x70] sm:$0xff]
                %270 = vst [vmem:[%s254 + $0x38] sm:$0xff] %v269
              $region57: #{learnable_dct_forward.1} parent=51 // loop_footer
                %s252 = sadd.s32 1, %s248
              $region58: #{learnable_dct_forward.1} parent=51 // loop_footer_branch
                %247 = sbr.rel target = $region54
              $region59: #{learnable_dct_forward.1} parent=51 // loop_exit
                _
            $region52: #{learnable_dct_forward.1} parent=43 // pred_fallthru
              _
          $region44: #{learnable_dct_forward.1} parent=39 // pred_fallthru
            _
          %299 = vnop
        $region40: #{learnable_dct_forward.1} parent=35 // pred_fallthru
          _
      $region36: #{learnable_dct_forward.1} parent=5 // pred_fallthru
        _
      %p300 = scmp.le.s32.totalorder 1, %s14
      %p301 = scmp.lt.s32.totalorder %s14, 3
      %p302 = pnand %p300, %p301
      %p303 = pneg %p302
      // Predicated region
      $region75: #{learnable_dct_forward.1} parent=5 // pred_check
        _
      $region76: #{learnable_dct_forward.1} parent=5 // pred_check_branch
        %305 = sbr.rel (%p302) target = $region78
      $region77: #{learnable_dct_forward.1} parent=5 // pred_region
        %s306 = ssub.s32 %s14, 1
        %s307 = sand.u32 %s27, 1
        %s308 = sand.u32 %s27, 1
        %s309 = smul.addr %s308, 64
        %s310 = scalar_lea.vmem [#allocation2], %s309
        // Predicated region
        $region79: #{learnable_dct_forward.1} parent=77 // pred_check
          %p311 = pneg %p40
        $region80: #{learnable_dct_forward.1} parent=77 // pred_check_branch
          %313 = sbr.rel (%p311) target = $region82
        $region81: #{learnable_dct_forward.1} parent=77 // pred_region
          _
        $region82: #{learnable_dct_forward.1} parent=77 // pred_fallthru
          _
        %s314 = sand.u32 %s27, 1
        %s315 = sand.u32 %s27, 1
        %s316 = smul.addr %s315, 64
        %s317 = scalar_lea.vmem [#allocation2], %s316
        %p318 = pneg %p40
        %p319 = pneg %p37
        %p320 = pneg %p61
        %p321 = pneg %p58
        %p322 = pneg %p82
        %p323 = pneg %p79
        %p324 = pneg %p103
        %p325 = pneg %p100
        %p326 = pneg %p124
        %p327 = pneg %p121
        %p328 = pneg %p145
        %p329 = pneg %p142
        %p330 = pneg %p171
        %p331 = pneg %p168
        %s332 = sand.u32 %s158, 1
        %s333 = sand.u32 %s158, 1
        %s334 = smul.addr %s333, 64
        %s335 = scalar_lea.vmem [#allocation3], %s334
        %p336 = pneg %p197
        %p337 = pneg %p194
        %s338 = sand.u32 %s184, 1
        %s339 = sand.u32 %s184, 1
        %s340 = smul.addr %s339, 64
        %s341 = scalar_lea.vmem [#allocation4], %s340
        %v342 = vld [vmem:[%s1] sm:$0xff]
        %v343 = vld [vmem:[%s1 + $0x8] sm:$0xff]
        %v344 = vld [vmem:[%s1 + $0x10] sm:$0xff]
        %v345 = vld [vmem:[%s1 + $0x18] sm:$0xff]
        %v346 = vld [vmem:[%s1 + $0x20] sm:$0xff]
        %v347 = vld [vmem:[%s1 + $0x28] sm:$0xff]
        %v348 = vld [vmem:[%s1 + $0x30] sm:$0xff]
        %v349 = vld [vmem:[%s1 + $0x38] sm:$0xff]
        %v350 = vld [vmem:[%s2] sm:$0xff]
        %v351 = vld [vmem:[%s2 + $0x8] sm:$0xff]
        %v352 = vld [vmem:[%s2 + $0x10] sm:$0xff]
        %v353 = vld [vmem:[%s2 + $0x18] sm:$0xff]
        %v354 = vld [vmem:[%s2 + $0x20] sm:$0xff]
        %v355 = vld [vmem:[%s2 + $0x28] sm:$0xff]
        %v356 = vld [vmem:[%s2 + $0x30] sm:$0xff]
        %v357 = vld [vmem:[%s2 + $0x38] sm:$0xff]
        %v358 = vld [vmem:[%s3] sm:$0xff]
        %v359 = vld [vmem:[%s3 + $0x8] sm:$0xff]
        %v360 = vld [vmem:[%s3 + $0x10] sm:$0xff]
        %v361 = vld [vmem:[%s3 + $0x18] sm:$0xff]
        %v362 = vld [vmem:[%s3 + $0x20] sm:$0xff]
        %v363 = vld [vmem:[%s3 + $0x28] sm:$0xff]
        %v364 = vld [vmem:[%s3 + $0x30] sm:$0xff]
        %v365 = vld [vmem:[%s3 + $0x38] sm:$0xff]
        %v366 = vld [vmem:[%s3 + $0x40] sm:$0xff]
        %v367 = vld [vmem:[%s3 + $0x48] sm:$0xff]
        %v368 = vld [vmem:[%s3 + $0x50] sm:$0xff]
        %v369 = vld [vmem:[%s3 + $0x58] sm:$0xff]
        %v370 = vld [vmem:[%s3 + $0x60] sm:$0xff]
        %v371 = vld [vmem:[%s3 + $0x68] sm:$0xff]
        %v372 = vld [vmem:[%s3 + $0x70] sm:$0xff]
        %v373 = vld [vmem:[%s3 + $0x78] sm:$0xff]
        %v374 = vld [vmem:[%s4] sm:$0xff]
        %v375 = vld [vmem:[%s4 + $0x8] sm:$0xff]
        %v376 = vld [vmem:[%s4 + $0x10] sm:$0xff]
        %v377 = vld [vmem:[%s4 + $0x18] sm:$0xff]
        %v378 = vld [vmem:[%s4 + $0x20] sm:$0xff]
        %v379 = vld [vmem:[%s4 + $0x28] sm:$0xff]
        %v380 = vld [vmem:[%s4 + $0x30] sm:$0xff]
        %v381 = vld [vmem:[%s4 + $0x38] sm:$0xff]
        %v382 = vld [vmem:[%s4 + $0x40] sm:$0xff]
        %v383 = vld [vmem:[%s4 + $0x48] sm:$0xff]
        %v384 = vld [vmem:[%s4 + $0x50] sm:$0xff]
        %v385 = vld [vmem:[%s4 + $0x58] sm:$0xff]
        %v386 = vld [vmem:[%s4 + $0x60] sm:$0xff]
        %v387 = vld [vmem:[%s4 + $0x68] sm:$0xff]
        %v388 = vld [vmem:[%s4 + $0x70] sm:$0xff]
        %v389 = vld [vmem:[%s4 + $0x78] sm:$0xff]
        %v390 = vld [vmem:[%s5] sm:$0xff]
        %v391 = vld [vmem:[%s5 + $0x8] sm:$0xff]
        %v392 = vld [vmem:[%s5 + $0x10] sm:$0xff]
        %v393 = vld [vmem:[%s5 + $0x18] sm:$0xff]
        %v394 = vld [vmem:[%s5 + $0x20] sm:$0xff]
        %v395 = vld [vmem:[%s5 + $0x28] sm:$0xff]
        %v396 = vld [vmem:[%s5 + $0x30] sm:$0xff]
        %v397 = vld [vmem:[%s5 + $0x38] sm:$0xff]
        %v398 = vld [vmem:[%s310] sm:$0xff]
        %v399 = vld [vmem:[%s310 + $0x8] sm:$0xff]
        %v400 = vld [vmem:[%s310 + $0x10] sm:$0xff]
        %v401 = vld [vmem:[%s310 + $0x18] sm:$0xff]
        %v402 = vld [vmem:[%s310 + $0x20] sm:$0xff]
        %v403 = vld [vmem:[%s310 + $0x28] sm:$0xff]
        %v404 = vld [vmem:[%s310 + $0x30] sm:$0xff]
        %v405 = vld [vmem:[%s310 + $0x38] sm:$0xff]
        %406 = vmatprep.subr.mxu0 0.0
        %v407 = vand.u32 %v374, 4294901760
        %408 = vmatpush1.msra.mxu0 %v407
        %409 = vmatprep.subr.mxu0 0.0
        %v410 = vand.u32 %v375, 4294901760
        %411 = vmatpush1.msra.mxu0 %v410
        %412 = vmatprep.subr.mxu0 0.0
        %v413 = vand.u32 %v376, 4294901760
        %414 = vmatpush1.msra.mxu0 %v413
        %415 = vmatprep.subr.mxu0 0.0
        %v416 = vand.u32 %v377, 4294901760
        %417 = vmatpush1.msra.mxu0 %v416
        %418 = vmatprep.subr.mxu0 0.0
        %v419 = vand.u32 %v378, 4294901760
        %420 = vmatpush1.msra.mxu0 %v419
        %421 = vmatprep.subr.mxu0 0.0
        %v422 = vand.u32 %v379, 4294901760
        %423 = vmatpush1.msra.mxu0 %v422
        %424 = vmatprep.subr.mxu0 0.0
        %v425 = vand.u32 %v380, 4294901760
        %426 = vmatpush1.msra.mxu0 %v425
        %427 = vmatprep.subr.mxu0 0.0
        %v428 = vand.u32 %v381, 4294901760
        %429 = vmatpush1.msra.mxu0 %v428
        %430 = vmatprep.subr.mxu0 0.0
        %v431 = vand.u32 %v382, 4294901760
        %432 = vmatpush1.msra.mxu0 %v431
        %433 = vmatprep.subr.mxu0 0.0
        %v434 = vand.u32 %v383, 4294901760
        %435 = vmatpush1.msra.mxu0 %v434
        %436 = vmatprep.subr.mxu0 0.0
        %v437 = vand.u32 %v384, 4294901760
        %438 = vmatpush1.msra.mxu0 %v437
        %439 = vmatprep.subr.mxu0 0.0
        %v440 = vand.u32 %v385, 4294901760
        %441 = vmatpush1.msra.mxu0 %v440
        %442 = vmatprep.subr.mxu0 0.0
        %v443 = vand.u32 %v386, 4294901760
        %444 = vmatpush1.msra.mxu0 %v443
        %445 = vmatprep.subr.mxu0 0.0
        %v446 = vand.u32 %v387, 4294901760
        %447 = vmatpush1.msra.mxu0 %v446
        %448 = vmatprep.subr.mxu0 0.0
        %v449 = vand.u32 %v388, 4294901760
        %450 = vmatpush1.msra.mxu0 %v449
        %451 = vmatprep.subr.mxu0 0.0
        %v452 = vand.u32 %v389, 4294901760
        %453 = vmatpush1.msra.mxu0 %v452
        %454 = vmatprep.subr.mxu0 0.0
        %455 = vmatpush1.msra.mxu0 0.0
        %456 = vmatprep.subr.mxu0 0.0
        %457 = vmatpush1.msra.mxu0 0.0
        %458 = vmatprep.subr.mxu0 0.0
        %459 = vmatpush1.msra.mxu0 0.0
        %460 = vmatprep.subr.mxu0 0.0
        %461 = vmatpush1.msra.mxu0 0.0
        %462 = vmatprep.subr.mxu0 0.0
        %463 = vmatpush1.msra.mxu0 0.0
        %464 = vmatprep.subr.mxu0 0.0
        %465 = vmatpush1.msra.mxu0 0.0
        %466 = vmatprep.subr.mxu0 0.0
        %467 = vmatpush1.msra.mxu0 0.0
        %468 = vmatprep.subr.mxu0 0.0
        %469 = vmatpush1.msra.mxu0 0.0
        %470 = vmatprep.subr.mxu0 0.0
        %471 = vmatpush1.msra.mxu0 0.0
        %472 = vmatprep.subr.mxu0 0.0
        %473 = vmatpush1.msra.mxu0 0.0
        %474 = vmatprep.subr.mxu0 0.0
        %475 = vmatpush1.msra.mxu0 0.0
        %476 = vmatprep.subr.mxu0 0.0
        %477 = vmatpush1.msra.mxu0 0.0
        %478 = vmatprep.subr.mxu0 0.0
        %479 = vmatpush1.msra.mxu0 0.0
        %480 = vmatprep.subr.mxu0 0.0
        %481 = vmatpush1.msra.mxu0 0.0
        %482 = vmatprep.subr.mxu0 0.0
        %483 = vmatpush1.msra.mxu0 0.0
        %484 = vmatprep.subr.mxu0 0.0
        %485 = vmatpush1.msra.mxu0 0.0
        %486 = vmatprep.mubr.f32.mxu0 0.0
        %v487 = vand.u32 %v398, 4294901760
        %v488 = vsub.f32 %v398, %v487
        %v489 = vand.u32 %v488, 4294901760
        %v490 = vsub.f32 %v488, %v489
        %v491 = vand.u32 %v490, 4294901760
        %492 = vmatmul.mubr.f32.gmra.mrb[0].mxu0 %v491
        %v493 = vpop.f32.mrb[0].mxu0
        %v494 = vadd.f32 0.0, %v493
        %v495 = vpop.f32.mrb[0].mxu0
        %496 = vmatprep.mubr.f32.mxu0 0.0
        %v497 = vand.u32 %v399, 4294901760
        %v498 = vsub.f32 %v399, %v497
        %v499 = vand.u32 %v498, 4294901760
        %v500 = vsub.f32 %v498, %v499
        %v501 = vand.u32 %v500, 4294901760
        %502 = vmatmul.mubr.f32.gmra.mrb[0].mxu0 %v501
        %v503 = vpop.f32.mrb[0].mxu0
        %v504 = vadd.f32 0.0, %v503
        %v505 = vpop.f32.mrb[0].mxu0
        %506 = vmatprep.mubr.f32.mxu0 0.0
        %v507 = vand.u32 %v400, 4294901760
        %v508 = vsub.f32 %v400, %v507
        %v509 = vand.u32 %v508, 4294901760
        %v510 = vsub.f32 %v508, %v509
        %v511 = vand.u32 %v510, 4294901760
        %512 = vmatmul.mubr.f32.gmra.mrb[0].mxu0 %v511
        %v513 = vpop.f32.mrb[0].mxu0
        %v514 = vadd.f32 0.0, %v513
        %v515 = vpop.f32.mrb[0].mxu0
        %516 = vmatprep.mubr.f32.mxu0 0.0
        %v517 = vand.u32 %v401, 4294901760
        %v518 = vsub.f32 %v401, %v517
        %v519 = vand.u32 %v518, 4294901760
        %v520 = vsub.f32 %v518, %v519
        %v521 = vand.u32 %v520, 4294901760
        %522 = vmatmul.mubr.f32.gmra.mrb[0].mxu0 %v521
        %v523 = vpop.f32.mrb[0].mxu0
        %v524 = vadd.f32 0.0, %v523
        %v525 = vpop.f32.mrb[0].mxu0
        %526 = vmatprep.mubr.f32.mxu0 0.0
        %v527 = vand.u32 %v402, 4294901760
        %v528 = vsub.f32 %v402, %v527
        %v529 = vand.u32 %v528, 4294901760
        %v530 = vsub.f32 %v528, %v529
        %v531 = vand.u32 %v530, 4294901760
        %532 = vmatmul.mubr.f32.gmra.mrb[0].mxu0 %v531
        %v533 = vpop.f32.mrb[0].mxu0
        %v534 = vadd.f32 0.0, %v533
        %v535 = vpop.f32.mrb[0].mxu0
        %536 = vmatprep.mubr.f32.mxu0 0.0
        %v537 = vand.u32 %v403, 4294901760
        %v538 = vsub.f32 %v403, %v537
        %v539 = vand.u32 %v538, 4294901760
        %v540 = vsub.f32 %v538, %v539
        %v541 = vand.u32 %v540, 4294901760
        %542 = vmatmul.mubr.f32.gmra.mrb[0].mxu0 %v541
        %v543 = vpop.f32.mrb[0].mxu0
        %v544 = vadd.f32 0.0, %v543
        %v545 = vpop.f32.mrb[0].mxu0
        %546 = vmatprep.mubr.f32.mxu0 0.0
        %v547 = vand.u32 %v404, 4294901760
        %v548 = vsub.f32 %v404, %v547
        %v549 = vand.u32 %v548, 4294901760
        %v550 = vsub.f32 %v548, %v549
        %v551 = vand.u32 %v550, 4294901760
        %552 = vmatmul.mubr.f32.gmra.mrb[0].mxu0 %v551
        %v553 = vpop.f32.mrb[0].mxu0
        %v554 = vadd.f32 0.0, %v553
        %v555 = vpop.f32.mrb[0].mxu0
        %556 = vmatprep.mubr.f32.mxu0 0.0
        %v557 = vand.u32 %v405, 4294901760
        %v558 = vsub.f32 %v405, %v557
        %v559 = vand.u32 %v558, 4294901760
        %v560 = vsub.f32 %v558, %v559
        %v561 = vand.u32 %v560, 4294901760
        %562 = vmatmul.mubr.f32.gmra.mrb[0].mxu0 %v561
        %v563 = vpop.f32.mrb[0].mxu0
        %v564 = vadd.f32 0.0, %v563
        %v565 = vpop.f32.mrb[0].mxu0
        %566 = vdwg.mxu0
        %567 = vmatprep.subr.mxu0 0.0
        %v568 = vand.u32 %v374, 4294901760
        %v569 = vsub.f32 %v374, %v568
        %v570 = vand.u32 %v569, 4294901760
        %v571 = vsub.f32 %v569, %v570
        %v572 = vand.u32 %v571, 4294901760
        %573 = vmatpush1.msra.mxu0 %v572
        %574 = vmatprep.subr.mxu0 0.0
        %v575 = vand.u32 %v375, 4294901760
        %v576 = vsub.f32 %v375, %v575
        %v577 = vand.u32 %v576, 4294901760
        %v578 = vsub.f32 %v576, %v577
        %v579 = vand.u32 %v578, 4294901760
        %580 = vmatpush1.msra.mxu0 %v579
        %581 = vmatprep.subr.mxu0 0.0
        %v582 = vand.u32 %v376, 4294901760
        %v583 = vsub.f32 %v376, %v582
        %v584 = vand.u32 %v583, 4294901760
        %v585 = vsub.f32 %v583, %v584
        %v586 = vand.u32 %v585, 4294901760
        %587 = vmatpush1.msra.mxu0 %v586
        %588 = vmatprep.subr.mxu0 0.0
        %v589 = vand.u32 %v377, 4294901760
        %v590 = vsub.f32 %v377, %v589
        %v591 = vand.u32 %v590, 4294901760
        %v592 = vsub.f32 %v590, %v591
        %v593 = vand.u32 %v592, 4294901760
        %594 = vmatpush1.msra.mxu0 %v593
        %595 = vmatprep.subr.mxu0 0.0
        %v596 = vand.u32 %v378, 4294901760
        %v597 = vsub.f32 %v378, %v596
        %v598 = vand.u32 %v597, 4294901760
        %v599 = vsub.f32 %v597, %v598
        %v600 = vand.u32 %v599, 4294901760
        %601 = vmatpush1.msra.mxu0 %v600
        %602 = vmatprep.subr.mxu0 0.0
        %v603 = vand.u32 %v379, 4294901760
        %v604 = vsub.f32 %v379, %v603
        %v605 = vand.u32 %v604, 4294901760
        %v606 = vsub.f32 %v604, %v605
        %v607 = vand.u32 %v606, 4294901760
        %608 = vmatpush1.msra.mxu0 %v607
        %609 = vmatprep.subr.mxu0 0.0
        %v610 = vand.u32 %v380, 4294901760
        %v611 = vsub.f32 %v380, %v610
        %v612 = vand.u32 %v611, 4294901760
        %v613 = vsub.f32 %v611, %v612
        %v614 = vand.u32 %v613, 4294901760
        %615 = vmatpush1.msra.mxu0 %v614
        %616 = vmatprep.subr.mxu0 0.0
        %v617 = vand.u32 %v381, 4294901760
        %v618 = vsub.f32 %v381, %v617
        %v619 = vand.u32 %v618, 4294901760
        %v620 = vsub.f32 %v618, %v619
        %v621 = vand.u32 %v620, 4294901760
        %622 = vmatpush1.msra.mxu0 %v621
        %623 = vmatprep.subr.mxu0 0.0
        %v624 = vand.u32 %v382, 4294901760
        %v625 = vsub.f32 %v382, %v624
        %v626 = vand.u32 %v625, 4294901760
        %v627 = vsub.f32 %v625, %v626
        %v628 = vand.u32 %v627, 4294901760
        %629 = vmatpush1.msra.mxu0 %v628
        %630 = vmatprep.subr.mxu0 0.0
        %v631 = vand.u32 %v383, 4294901760
        %v632 = vsub.f32 %v383, %v631
        %v633 = vand.u32 %v632, 4294901760
        %v634 = vsub.f32 %v632, %v633
        %v635 = vand.u32 %v634, 4294901760
        %636 = vmatpush1.msra.mxu0 %v635
        %637 = vmatprep.subr.mxu0 0.0
        %v638 = vand.u32 %v384, 4294901760
        %v639 = vsub.f32 %v384, %v638
        %v640 = vand.u32 %v639, 4294901760
        %v641 = vsub.f32 %v639, %v640
        %v642 = vand.u32 %v641, 4294901760
        %643 = vmatpush1.msra.mxu0 %v642
        %644 = vmatprep.subr.mxu0 0.0
        %v645 = vand.u32 %v385, 4294901760
        %v646 = vsub.f32 %v385, %v645
        %v647 = vand.u32 %v646, 4294901760
        %v648 = vsub.f32 %v646, %v647
        %v649 = vand.u32 %v648, 4294901760
        %650 = vmatpush1.msra.mxu0 %v649
        %651 = vmatprep.subr.mxu0 0.0
        %v652 = vand.u32 %v386, 4294901760
        %v653 = vsub.f32 %v386, %v652
        %v654 = vand.u32 %v653, 4294901760
        %v655 = vsub.f32 %v653, %v654
        %v656 = vand.u32 %v655, 4294901760
        %657 = vmatpush1.msra.mxu0 %v656
        %658 = vmatprep.subr.mxu0 0.0
        %v659 = vand.u32 %v387, 4294901760
        %v660 = vsub.f32 %v387, %v659
        %v661 = vand.u32 %v660, 4294901760
        %v662 = vsub.f32 %v660, %v661
        %v663 = vand.u32 %v662, 4294901760
        %664 = vmatpush1.msra.mxu0 %v663
        %665 = vmatprep.subr.mxu0 0.0
        %v666 = vand.u32 %v388, 4294901760
        %v667 = vsub.f32 %v388, %v666
        %v668 = vand.u32 %v667, 4294901760
        %v669 = vsub.f32 %v667, %v668
        %v670 = vand.u32 %v669, 4294901760
        %671 = vmatpush1.msra.mxu0 %v670
        %672 = vmatprep.subr.mxu0 0.0
        %v673 = vand.u32 %v389, 4294901760
        %v674 = vsub.f32 %v389, %v673
        %v675 = vand.u32 %v674, 4294901760
        %v676 = vsub.f32 %v674, %v675
        %v677 = vand.u32 %v676, 4294901760
        %678 = vmatpush1.msra.mxu0 %v677
        %679 = vmatprep.subr.mxu0 0.0
        %680 = vmatpush1.msra.mxu0 0.0
        %681 = vmatprep.subr.mxu0 0.0
        %682 = vmatpush1.msra.mxu0 0.0
        %683 = vmatprep.subr.mxu0 0.0
        %684 = vmatpush1.msra.mxu0 0.0
        %685 = vmatprep.subr.mxu0 0.0
        %686 = vmatpush1.msra.mxu0 0.0
        %687 = vmatprep.subr.mxu0 0.0
        %688 = vmatpush1.msra.mxu0 0.0
        %689 = vmatprep.subr.mxu0 0.0
        %690 = vmatpush1.msra.mxu0 0.0
        %691 = vmatprep.subr.mxu0 0.0
        %692 = vmatpush1.msra.mxu0 0.0
        %693 = vmatprep.subr.mxu0 0.0
        %694 = vmatpush1.msra.mxu0 0.0
        %695 = vmatprep.subr.mxu0 0.0
        %696 = vmatpush1.msra.mxu0 0.0
        %697 = vmatprep.subr.mxu0 0.0
        %698 = vmatpush1.msra.mxu0 0.0
        %699 = vmatprep.subr.mxu0 0.0
        %700 = vmatpush1.msra.mxu0 0.0
        %701 = vmatprep.subr.mxu0 0.0
        %702 = vmatpush1.msra.mxu0 0.0
        %703 = vmatprep.subr.mxu0 0.0
        %704 = vmatpush1.msra.mxu0 0.0
        %705 = vmatprep.subr.mxu0 0.0
        %706 = vmatpush1.msra.mxu0 0.0
        %707 = vmatprep.subr.mxu0 0.0
        %708 = vmatpush1.msra.mxu0 0.0
        %709 = vmatprep.subr.mxu0 0.0
        %710 = vmatpush1.msra.mxu0 0.0
        %711 = vmatprep.mubr.f32.mxu0 0.0
        %v712 = vand.u32 %v398, 4294901760
        %713 = vmatmul.mubr.f32.gmra.mrb[0].mxu0 %v712
        %v714 = vpop.f32.mrb[0].mxu0
        %v715 = vadd.f32 %v494, %v714
        %v716 = vpop.f32.mrb[0].mxu0
        %717 = vmatprep.mubr.f32.mxu0 0.0
        %v718 = vand.u32 %v399, 4294901760
        %719 = vmatmul.mubr.f32.gmra.mrb[0].mxu0 %v718
        %v720 = vpop.f32.mrb[0].mxu0
        %v721 = vadd.f32 %v504, %v720
        %v722 = vpop.f32.mrb[0].mxu0
        %723 = vmatprep.mubr.f32.mxu0 0.0
        %v724 = vand.u32 %v400, 4294901760
        %725 = vmatmul.mubr.f32.gmra.mrb[0].mxu0 %v724
        %v726 = vpop.f32.mrb[0].mxu0
        %v727 = vadd.f32 %v514, %v726
        %v728 = vpop.f32.mrb[0].mxu0
        %729 = vmatprep.mubr.f32.mxu0 0.0
        %v730 = vand.u32 %v401, 4294901760
        %731 = vmatmul.mubr.f32.gmra.mrb[0].mxu0 %v730
        %v732 = vpop.f32.mrb[0].mxu0
        %v733 = vadd.f32 %v524, %v732
        %v734 = vpop.f32.mrb[0].mxu0
        %735 = vmatprep.mubr.f32.mxu0 0.0
        %v736 = vand.u32 %v402, 4294901760
        %737 = vmatmul.mubr.f32.gmra.mrb[0].mxu0 %v736
        %v738 = vpop.f32.mrb[0].mxu0
        %v739 = vadd.f32 %v534, %v738
        %v740 = vpop.f32.mrb[0].mxu0
        %741 = vmatprep.mubr.f32.mxu0 0.0
        %v742 = vand.u32 %v403, 4294901760
        %743 = vmatmul.mubr.f32.gmra.mrb[0].mxu0 %v742
        %v744 = vpop.f32.mrb[0].mxu0
        %v745 = vadd.f32 %v544, %v744
        %v746 = vpop.f32.mrb[0].mxu0
        %747 = vmatprep.mubr.f32.mxu0 0.0
        %v748 = vand.u32 %v404, 4294901760
        %749 = vmatmul.mubr.f32.gmra.mrb[0].mxu0 %v748
        %v750 = vpop.f32.mrb[0].mxu0
        %v751 = vadd.f32 %v554, %v750
        %v752 = vpop.f32.mrb[0].mxu0
        %753 = vmatprep.mubr.f32.mxu0 0.0
        %v754 = vand.u32 %v405, 4294901760
        %755 = vmatmul.mubr.f32.gmra.mrb[0].mxu0 %v754
        %v756 = vpop.f32.mrb[0].mxu0
        %v757 = vadd.f32 %v564, %v756
        %v758 = vpop.f32.mrb[0].mxu0
        %759 = vdwg.mxu0
        %760 = vmatprep.subr.mxu0 0.0
        %v761 = vand.u32 %v374, 4294901760
        %v762 = vsub.f32 %v374, %v761
        %763 = vmatpush1.msra.mxu0 %v762
        %764 = vmatprep.subr.mxu0 0.0
        %v765 = vand.u32 %v375, 4294901760
        %v766 = vsub.f32 %v375, %v765
        %767 = vmatpush1.msra.mxu0 %v766
        %768 = vmatprep.subr.mxu0 0.0
        %v769 = vand.u32 %v376, 4294901760
        %v770 = vsub.f32 %v376, %v769
        %771 = vmatpush1.msra.mxu0 %v770
        %772 = vmatprep.subr.mxu0 0.0
        %v773 = vand.u32 %v377, 4294901760
        %v774 = vsub.f32 %v377, %v773
        %775 = vmatpush1.msra.mxu0 %v774
        %776 = vmatprep.subr.mxu0 0.0
        %v777 = vand.u32 %v378, 4294901760
        %v778 = vsub.f32 %v378, %v777
        %779 = vmatpush1.msra.mxu0 %v778
        %780 = vmatprep.subr.mxu0 0.0
        %v781 = vand.u32 %v379, 4294901760
        %v782 = vsub.f32 %v379, %v781
        %783 = vmatpush1.msra.mxu0 %v782
        %784 = vmatprep.subr.mxu0 0.0
        %v785 = vand.u32 %v380, 4294901760
        %v786 = vsub.f32 %v380, %v785
        %787 = vmatpush1.msra.mxu0 %v786
        %788 = vmatprep.subr.mxu0 0.0
        %v789 = vand.u32 %v381, 4294901760
        %v790 = vsub.f32 %v381, %v789
        %791 = vmatpush1.msra.mxu0 %v790
        %792 = vmatprep.subr.mxu0 0.0
        %v793 = vand.u32 %v382, 4294901760
        %v794 = vsub.f32 %v382, %v793
        %795 = vmatpush1.msra.mxu0 %v794
        %796 = vmatprep.subr.mxu0 0.0
        %v797 = vand.u32 %v383, 4294901760
        %v798 = vsub.f32 %v383, %v797
        %799 = vmatpush1.msra.mxu0 %v798
        %800 = vmatprep.subr.mxu0 0.0
        %v801 = vand.u32 %v384, 4294901760
        %v802 = vsub.f32 %v384, %v801
        %803 = vmatpush1.msra.mxu0 %v802
        %804 = vmatprep.subr.mxu0 0.0
        %v805 = vand.u32 %v385, 4294901760
        %v806 = vsub.f32 %v385, %v805
        %807 = vmatpush1.msra.mxu0 %v806
        %808 = vmatprep.subr.mxu0 0.0
        %v809 = vand.u32 %v386, 4294901760
        %v810 = vsub.f32 %v386, %v809
        %811 = vmatpush1.msra.mxu0 %v810
        %812 = vmatprep.subr.mxu0 0.0
        %v813 = vand.u32 %v387, 4294901760
        %v814 = vsub.f32 %v387, %v813
        %815 = vmatpush1.msra.mxu0 %v814
        %816 = vmatprep.subr.mxu0 0.0
        %v817 = vand.u32 %v388, 4294901760
        %v818 = vsub.f32 %v388, %v817
        %819 = vmatpush1.msra.mxu0 %v818
        %820 = vmatprep.subr.mxu0 0.0
        %v821 = vand.u32 %v389, 4294901760
        %v822 = vsub.f32 %v389, %v821
        %823 = vmatpush1.msra.mxu0 %v822
        %824 = vmatprep.subr.mxu0 0.0
        %825 = vmatpush1.msra.mxu0 0.0
        %826 = vmatprep.subr.mxu0 0.0
        %827 = vmatpush1.msra.mxu0 0.0
        %828 = vmatprep.subr.mxu0 0.0
        %829 = vmatpush1.msra.mxu0 0.0
        %830 = vmatprep.subr.mxu0 0.0
        %831 = vmatpush1.msra.mxu0 0.0
        %832 = vmatprep.subr.mxu0 0.0
        %833 = vmatpush1.msra.mxu0 0.0
        %834 = vmatprep.subr.mxu0 0.0
        %835 = vmatpush1.msra.mxu0 0.0
        %836 = vmatprep.subr.mxu0 0.0
        %837 = vmatpush1.msra.mxu0 0.0
        %838 = vmatprep.subr.mxu0 0.0
        %839 = vmatpush1.msra.mxu0 0.0
        %840 = vmatprep.subr.mxu0 0.0
        %841 = vmatpush1.msra.mxu0 0.0
        %842 = vmatprep.subr.mxu0 0.0
        %843 = vmatpush1.msra.mxu0 0.0
        %844 = vmatprep.subr.mxu0 0.0
        %845 = vmatpush1.msra.mxu0 0.0
        %846 = vmatprep.subr.mxu0 0.0
        %847 = vmatpush1.msra.mxu0 0.0
        %848 = vmatprep.subr.mxu0 0.0
        %849 = vmatpush1.msra.mxu0 0.0
        %850 = vmatprep.subr.mxu0 0.0
        %851 = vmatpush1.msra.mxu0 0.0
        %852 = vmatprep.subr.mxu0 0.0
        %853 = vmatpush1.msra.mxu0 0.0
        %854 = vmatprep.subr.mxu0 0.0
        %855 = vmatpush1.msra.mxu0 0.0
        %856 = vmatprep.mubr.f32.mxu0 0.0
        %v857 = vand.u32 %v398, 4294901760
        %v858 = vsub.f32 %v398, %v857
        %859 = vmatmul.mubr.f32.gmra.mrb[0].mxu0 %v858
        %v860 = vpop.f32.mrb[0].mxu0
        %v861 = vadd.f32 %v715, %v860
        %v862 = vpop.f32.mrb[0].mxu0
        %863 = vmatprep.mubr.f32.mxu0 0.0
        %v864 = vand.u32 %v399, 4294901760
        %v865 = vsub.f32 %v399, %v864
        %866 = vmatmul.mubr.f32.gmra.mrb[0].mxu0 %v865
        %v867 = vpop.f32.mrb[0].mxu0
        %v868 = vadd.f32 %v721, %v867
        %v869 = vpop.f32.mrb[0].mxu0
        %870 = vmatprep.mubr.f32.mxu0 0.0
        %v871 = vand.u32 %v400, 4294901760
        %v872 = vsub.f32 %v400, %v871
        %873 = vmatmul.mubr.f32.gmra.mrb[0].mxu0 %v872
        %v874 = vpop.f32.mrb[0].mxu0
        %v875 = vadd.f32 %v727, %v874
        %v876 = vpop.f32.mrb[0].mxu0
        %877 = vmatprep.mubr.f32.mxu0 0.0
        %v878 = vand.u32 %v401, 4294901760
        %v879 = vsub.f32 %v401, %v878
        %880 = vmatmul.mubr.f32.gmra.mrb[0].mxu0 %v879
        %v881 = vpop.f32.mrb[0].mxu0
        %v882 = vadd.f32 %v733, %v881
        %v883 = vpop.f32.mrb[0].mxu0
        %884 = vmatprep.mubr.f32.mxu0 0.0
        %v885 = vand.u32 %v402, 4294901760
        %v886 = vsub.f32 %v402, %v885
        %887 = vmatmul.mubr.f32.gmra.mrb[0].mxu0 %v886
        %v888 = vpop.f32.mrb[0].mxu0
        %v889 = vadd.f32 %v739, %v888
        %v890 = vpop.f32.mrb[0].mxu0
        %891 = vmatprep.mubr.f32.mxu0 0.0
        %v892 = vand.u32 %v403, 4294901760
        %v893 = vsub.f32 %v403, %v892
        %894 = vmatmul.mubr.f32.gmra.mrb[0].mxu0 %v893
        %v895 = vpop.f32.mrb[0].mxu0
        %v896 = vadd.f32 %v745, %v895
        %v897 = vpop.f32.mrb[0].mxu0
        %898 = vmatprep.mubr.f32.mxu0 0.0
        %v899 = vand.u32 %v404, 4294901760
        %v900 = vsub.f32 %v404, %v899
        %901 = vmatmul.mubr.f32.gmra.mrb[0].mxu0 %v900
        %v902 = vpop.f32.mrb[0].mxu0
        %v903 = vadd.f32 %v751, %v902
        %v904 = vpop.f32.mrb[0].mxu0
        %905 = vmatprep.mubr.f32.mxu0 0.0
        %v906 = vand.u32 %v405, 4294901760
        %v907 = vsub.f32 %v405, %v906
        %908 = vmatmul.mubr.f32.gmra.mrb[0].mxu0 %v907
        %v909 = vpop.f32.mrb[0].mxu0
        %v910 = vadd.f32 %v757, %v909
        %v911 = vpop.f32.mrb[0].mxu0
        %912 = vdwg.mxu0
        %913 = vmatprep.subr.mxu0 0.0
        %v914 = vand.u32 %v374, 4294901760
        %915 = vmatpush1.msra.mxu0 %v914
        %916 = vmatprep.subr.mxu0 0.0
        %v917 = vand.u32 %v375, 4294901760
        %918 = vmatpush1.msra.mxu0 %v917
        %919 = vmatprep.subr.mxu0 0.0
        %v920 = vand.u32 %v376, 4294901760
        %921 = vmatpush1.msra.mxu0 %v920
        %922 = vmatprep.subr.mxu0 0.0
        %v923 = vand.u32 %v377, 4294901760
        %924 = vmatpush1.msra.mxu0 %v923
        %925 = vmatprep.subr.mxu0 0.0
        %v926 = vand.u32 %v378, 4294901760
        %927 = vmatpush1.msra.mxu0 %v926
        %928 = vmatprep.subr.mxu0 0.0
        %v929 = vand.u32 %v379, 4294901760
        %930 = vmatpush1.msra.mxu0 %v929
        %931 = vmatprep.subr.mxu0 0.0
        %v932 = vand.u32 %v380, 4294901760
        %933 = vmatpush1.msra.mxu0 %v932
        %934 = vmatprep.subr.mxu0 0.0
        %v935 = vand.u32 %v381, 4294901760
        %936 = vmatpush1.msra.mxu0 %v935
        %937 = vmatprep.subr.mxu0 0.0
        %v938 = vand.u32 %v382, 4294901760
        %939 = vmatpush1.msra.mxu0 %v938
        %940 = vmatprep.subr.mxu0 0.0
        %v941 = vand.u32 %v383, 4294901760
        %942 = vmatpush1.msra.mxu0 %v941
        %943 = vmatprep.subr.mxu0 0.0
        %v944 = vand.u32 %v384, 4294901760
        %945 = vmatpush1.msra.mxu0 %v944
        %946 = vmatprep.subr.mxu0 0.0
        %v947 = vand.u32 %v385, 4294901760
        %948 = vmatpush1.msra.mxu0 %v947
        %949 = vmatprep.subr.mxu0 0.0
        %v950 = vand.u32 %v386, 4294901760
        %951 = vmatpush1.msra.mxu0 %v950
        %952 = vmatprep.subr.mxu0 0.0
        %v953 = vand.u32 %v387, 4294901760
        %954 = vmatpush1.msra.mxu0 %v953
        %955 = vmatprep.subr.mxu0 0.0
        %v956 = vand.u32 %v388, 4294901760
        %957 = vmatpush1.msra.mxu0 %v956
        %958 = vmatprep.subr.mxu0 0.0
        %v959 = vand.u32 %v389, 4294901760
        %960 = vmatpush1.msra.mxu0 %v959
        %961 = vmatprep.subr.mxu0 0.0
        %962 = vmatpush1.msra.mxu0 0.0
        %963 = vmatprep.subr.mxu0 0.0
        %964 = vmatpush1.msra.mxu0 0.0
        %965 = vmatprep.subr.mxu0 0.0
        %966 = vmatpush1.msra.mxu0 0.0
        %967 = vmatprep.subr.mxu0 0.0
        %968 = vmatpush1.msra.mxu0 0.0
        %969 = vmatprep.subr.mxu0 0.0
        %970 = vmatpush1.msra.mxu0 0.0
        %971 = vmatprep.subr.mxu0 0.0
        %972 = vmatpush1.msra.mxu0 0.0
        %973 = vmatprep.subr.mxu0 0.0
        %974 = vmatpush1.msra.mxu0 0.0
        %975 = vmatprep.subr.mxu0 0.0
        %976 = vmatpush1.msra.mxu0 0.0
        %977 = vmatprep.subr.mxu0 0.0
        %978 = vmatpush1.msra.mxu0 0.0
        %979 = vmatprep.subr.mxu0 0.0
        %980 = vmatpush1.msra.mxu0 0.0
        %981 = vmatprep.subr.mxu0 0.0
        %982 = vmatpush1.msra.mxu0 0.0
        %983 = vmatprep.subr.mxu0 0.0
        %984 = vmatpush1.msra.mxu0 0.0
        %985 = vmatprep.subr.mxu0 0.0
        %986 = vmatpush1.msra.mxu0 0.0
        %987 = vmatprep.subr.mxu0 0.0
        %988 = vmatpush1.msra.mxu0 0.0
        %989 = vmatprep.subr.mxu0 0.0
        %990 = vmatpush1.msra.mxu0 0.0
        %991 = vmatprep.subr.mxu0 0.0
        %992 = vmatpush1.msra.mxu0 0.0
        %993 = vmatprep.mubr.f32.mxu0 0.0
        %v994 = vand.u32 %v398, 4294901760
        %v995 = vsub.f32 %v398, %v994
        %v996 = vand.u32 %v995, 4294901760
        %997 = vmatmul.mubr.f32.gmra.mrb[0].mxu0 %v996
        %v998 = vpop.f32.mrb[0].mxu0
        %v999 = vadd.f32 %v861, %v998
        %v1000 = vpop.f32.mrb[0].mxu0
        %1001 = vmatprep.mubr.f32.mxu0 0.0
        %v1002 = vand.u32 %v399, 4294901760
        %v1003 = vsub.f32 %v399, %v1002
        %v1004 = vand.u32 %v1003, 4294901760
        %1005 = vmatmul.mubr.f32.gmra.mrb[0].mxu0 %v1004
        %v1006 = vpop.f32.mrb[0].mxu0
        %v1007 = vadd.f32 %v868, %v1006
        %v1008 = vpop.f32.mrb[0].mxu0
        %1009 = vmatprep.mubr.f32.mxu0 0.0
        %v1010 = vand.u32 %v400, 4294901760
        %v1011 = vsub.f32 %v400, %v1010
        %v1012 = vand.u32 %v1011, 4294901760
        %1013 = vmatmul.mubr.f32.gmra.mrb[0].mxu0 %v1012
        %v1014 = vpop.f32.mrb[0].mxu0
        %v1015 = vadd.f32 %v875, %v1014
        %v1016 = vpop.f32.mrb[0].mxu0
        %1017 = vmatprep.mubr.f32.mxu0 0.0
        %v1018 = vand.u32 %v401, 4294901760
        %v1019 = vsub.f32 %v401, %v1018
        %v1020 = vand.u32 %v1019, 4294901760
        %1021 = vmatmul.mubr.f32.gmra.mrb[0].mxu0 %v1020
        %v1022 = vpop.f32.mrb[0].mxu0
        %v1023 = vadd.f32 %v882, %v1022
        %v1024 = vpop.f32.mrb[0].mxu0
        %1025 = vmatprep.mubr.f32.mxu0 0.0
        %v1026 = vand.u32 %v402, 4294901760
        %v1027 = vsub.f32 %v402, %v1026
        %v1028 = vand.u32 %v1027, 4294901760
        %1029 = vmatmul.mubr.f32.gmra.mrb[0].mxu0 %v1028
        %v1030 = vpop.f32.mrb[0].mxu0
        %v1031 = vadd.f32 %v889, %v1030
        %v1032 = vpop.f32.mrb[0].mxu0
        %1033 = vmatprep.mubr.f32.mxu0 0.0
        %v1034 = vand.u32 %v403, 4294901760
        %v1035 = vsub.f32 %v403, %v1034
        %v1036 = vand.u32 %v1035, 4294901760
        %1037 = vmatmul.mubr.f32.gmra.mrb[0].mxu0 %v1036
        %v1038 = vpop.f32.mrb[0].mxu0
        %v1039 = vadd.f32 %v896, %v1038
        %v1040 = vpop.f32.mrb[0].mxu0
        %1041 = vmatprep.mubr.f32.mxu0 0.0
        %v1042 = vand.u32 %v404, 4294901760
        %v1043 = vsub.f32 %v404, %v1042
        %v1044 = vand.u32 %v1043, 4294901760
        %1045 = vmatmul.mubr.f32.gmra.mrb[0].mxu0 %v1044
        %v1046 = vpop.f32.mrb[0].mxu0
        %v1047 = vadd.f32 %v903, %v1046
        %v1048 = vpop.f32.mrb[0].mxu0
        %1049 = vmatprep.mubr.f32.mxu0 0.0
        %v1050 = vand.u32 %v405, 4294901760
        %v1051 = vsub.f32 %v405, %v1050
        %v1052 = vand.u32 %v1051, 4294901760
        %1053 = vmatmul.mubr.f32.gmra.mrb[0].mxu0 %v1052
        %v1054 = vpop.f32.mrb[0].mxu0
        %v1055 = vadd.f32 %v910, %v1054
        %v1056 = vpop.f32.mrb[0].mxu0
        %1057 = vdwg.mxu0
        %1058 = vmatprep.subr.mxu0 0.0
        %v1059 = vand.u32 %v374, 4294901760
        %v1060 = vsub.f32 %v374, %v1059
        %v1061 = vand.u32 %v1060, 4294901760
        %1062 = vmatpush1.msra.mxu0 %v1061
        %1063 = vmatprep.subr.mxu0 0.0
        %v1064 = vand.u32 %v375, 4294901760
        %v1065 = vsub.f32 %v375, %v1064
        %v1066 = vand.u32 %v1065, 4294901760
        %1067 = vmatpush1.msra.mxu0 %v1066
        %1068 = vmatprep.subr.mxu0 0.0
        %v1069 = vand.u32 %v376, 4294901760
        %v1070 = vsub.f32 %v376, %v1069
        %v1071 = vand.u32 %v1070, 4294901760
        %1072 = vmatpush1.msra.mxu0 %v1071
        %1073 = vmatprep.subr.mxu0 0.0
        %v1074 = vand.u32 %v377, 4294901760
        %v1075 = vsub.f32 %v377, %v1074
        %v1076 = vand.u32 %v1075, 4294901760
        %1077 = vmatpush1.msra.mxu0 %v1076
        %1078 = vmatprep.subr.mxu0 0.0
        %v1079 = vand.u32 %v378, 4294901760
        %v1080 = vsub.f32 %v378, %v1079
        %v1081 = vand.u32 %v1080, 4294901760
        %1082 = vmatpush1.msra.mxu0 %v1081
        %1083 = vmatprep.subr.mxu0 0.0
        %v1084 = vand.u32 %v379, 4294901760
        %v1085 = vsub.f32 %v379, %v1084
        %v1086 = vand.u32 %v1085, 4294901760
        %1087 = vmatpush1.msra.mxu0 %v1086
        %1088 = vmatprep.subr.mxu0 0.0
        %v1089 = vand.u32 %v380, 4294901760
        %v1090 = vsub.f32 %v380, %v1089
        %v1091 = vand.u32 %v1090, 4294901760
        %1092 = vmatpush1.msra.mxu0 %v1091
        %1093 = vmatprep.subr.mxu0 0.0
        %v1094 = vand.u32 %v381, 4294901760
        %v1095 = vsub.f32 %v381, %v1094
        %v1096 = vand.u32 %v1095, 4294901760
        %1097 = vmatpush1.msra.mxu0 %v1096
        %1098 = vmatprep.subr.mxu0 0.0
        %v1099 = vand.u32 %v382, 4294901760
        %v1100 = vsub.f32 %v382, %v1099
        %v1101 = vand.u32 %v1100, 4294901760
        %1102 = vmatpush1.msra.mxu0 %v1101
        %1103 = vmatprep.subr.mxu0 0.0
        %v1104 = vand.u32 %v383, 4294901760
        %v1105 = vsub.f32 %v383, %v1104
        %v1106 = vand.u32 %v1105, 4294901760
        %1107 = vmatpush1.msra.mxu0 %v1106
        %1108 = vmatprep.subr.mxu0 0.0
        %v1109 = vand.u32 %v384, 4294901760
        %v1110 = vsub.f32 %v384, %v1109
        %v1111 = vand.u32 %v1110, 4294901760
        %1112 = vmatpush1.msra.mxu0 %v1111
        %1113 = vmatprep.subr.mxu0 0.0
        %v1114 = vand.u32 %v385, 4294901760
        %v1115 = vsub.f32 %v385, %v1114
        %v1116 = vand.u32 %v1115, 4294901760
        %1117 = vmatpush1.msra.mxu0 %v1116
        %1118 = vmatprep.subr.mxu0 0.0
        %v1119 = vand.u32 %v386, 4294901760
        %v1120 = vsub.f32 %v386, %v1119
        %v1121 = vand.u32 %v1120, 4294901760
        %1122 = vmatpush1.msra.mxu0 %v1121
        %1123 = vmatprep.subr.mxu0 0.0
        %v1124 = vand.u32 %v387, 4294901760
        %v1125 = vsub.f32 %v387, %v1124
        %v1126 = vand.u32 %v1125, 4294901760
        %1127 = vmatpush1.msra.mxu0 %v1126
        %1128 = vmatprep.subr.mxu0 0.0
        %v1129 = vand.u32 %v388, 4294901760
        %v1130 = vsub.f32 %v388, %v1129
        %v1131 = vand.u32 %v1130, 4294901760
        %1132 = vmatpush1.msra.mxu0 %v1131
        %1133 = vmatprep.subr.mxu0 0.0
        %v1134 = vand.u32 %v389, 4294901760
        %v1135 = vsub.f32 %v389, %v1134
        %v1136 = vand.u32 %v1135, 4294901760
        %1137 = vmatpush1.msra.mxu0 %v1136
        %1138 = vmatprep.subr.mxu0 0.0
        %1139 = vmatpush1.msra.mxu0 0.0
        %1140 = vmatprep.subr.mxu0 0.0
        %1141 = vmatpush1.msra.mxu0 0.0
        %1142 = vmatprep.subr.mxu0 0.0
        %1143 = vmatpush1.msra.mxu0 0.0
        %1144 = vmatprep.subr.mxu0 0.0
        %1145 = vmatpush1.msra.mxu0 0.0
        %1146 = vmatprep.subr.mxu0 0.0
        %1147 = vmatpush1.msra.mxu0 0.0
        %1148 = vmatprep.subr.mxu0 0.0
        %1149 = vmatpush1.msra.mxu0 0.0
        %1150 = vmatprep.subr.mxu0 0.0
        %1151 = vmatpush1.msra.mxu0 0.0
        %1152 = vmatprep.subr.mxu0 0.0
        %1153 = vmatpush1.msra.mxu0 0.0
        %1154 = vmatprep.subr.mxu0 0.0
        %1155 = vmatpush1.msra.mxu0 0.0
        %1156 = vmatprep.subr.mxu0 0.0
        %1157 = vmatpush1.msra.mxu0 0.0
        %1158 = vmatprep.subr.mxu0 0.0
        %1159 = vmatpush1.msra.mxu0 0.0
        %1160 = vmatprep.subr.mxu0 0.0
        %1161 = vmatpush1.msra.mxu0 0.0
        %1162 = vmatprep.subr.mxu0 0.0
        %1163 = vmatpush1.msra.mxu0 0.0
        %1164 = vmatprep.subr.mxu0 0.0
        %1165 = vmatpush1.msra.mxu0 0.0
        %1166 = vmatprep.subr.mxu0 0.0
        %1167 = vmatpush1.msra.mxu0 0.0
        %1168 = vmatprep.subr.mxu0 0.0
        %1169 = vmatpush1.msra.mxu0 0.0
        %1170 = vmatprep.mubr.f32.mxu0 0.0
        %v1171 = vand.u32 %v398, 4294901760
        %1172 = vmatmul.mubr.f32.gmra.mrb[0].mxu0 %v1171
        %v1173 = vpop.f32.mrb[0].mxu0
        %v1174 = vadd.f32 %v999, %v1173
        %v1175 = vpop.f32.mrb[0].mxu0
        %1176 = vmatprep.mubr.f32.mxu0 0.0
        %v1177 = vand.u32 %v399, 4294901760
        %1178 = vmatmul.mubr.f32.gmra.mrb[0].mxu0 %v1177
        %v1179 = vpop.f32.mrb[0].mxu0
        %v1180 = vadd.f32 %v1007, %v1179
        %v1181 = vpop.f32.mrb[0].mxu0
        %1182 = vmatprep.mubr.f32.mxu0 0.0
        %v1183 = vand.u32 %v400, 4294901760
        %1184 = vmatmul.mubr.f32.gmra.mrb[0].mxu0 %v1183
        %v1185 = vpop.f32.mrb[0].mxu0
        %v1186 = vadd.f32 %v1015, %v1185
        %v1187 = vpop.f32.mrb[0].mxu0
        %1188 = vmatprep.mubr.f32.mxu0 0.0
        %v1189 = vand.u32 %v401, 4294901760
        %1190 = vmatmul.mubr.f32.gmra.mrb[0].mxu0 %v1189
        %v1191 = vpop.f32.mrb[0].mxu0
        %v1192 = vadd.f32 %v1023, %v1191
        %v1193 = vpop.f32.mrb[0].mxu0
        %1194 = vmatprep.mubr.f32.mxu0 0.0
        %v1195 = vand.u32 %v402, 4294901760
        %1196 = vmatmul.mubr.f32.gmra.mrb[0].mxu0 %v1195
        %v1197 = vpop.f32.mrb[0].mxu0
        %v1198 = vadd.f32 %v1031, %v1197
        %v1199 = vpop.f32.mrb[0].mxu0
        %1200 = vmatprep.mubr.f32.mxu0 0.0
        %v1201 = vand.u32 %v403, 4294901760
        %1202 = vmatmul.mubr.f32.gmra.mrb[0].mxu0 %v1201
        %v1203 = vpop.f32.mrb[0].mxu0
        %v1204 = vadd.f32 %v1039, %v1203
        %v1205 = vpop.f32.mrb[0].mxu0
        %1206 = vmatprep.mubr.f32.mxu0 0.0
        %v1207 = vand.u32 %v404, 4294901760
        %1208 = vmatmul.mubr.f32.gmra.mrb[0].mxu0 %v1207
        %v1209 = vpop.f32.mrb[0].mxu0
        %v1210 = vadd.f32 %v1047, %v1209
        %v1211 = vpop.f32.mrb[0].mxu0
        %1212 = vmatprep.mubr.f32.mxu0 0.0
        %v1213 = vand.u32 %v405, 4294901760
        %1214 = vmatmul.mubr.f32.gmra.mrb[0].mxu0 %v1213
        %v1215 = vpop.f32.mrb[0].mxu0
        %v1216 = vadd.f32 %v1055, %v1215
        %v1217 = vpop.f32.mrb[0].mxu0
        %1218 = vdwg.mxu0
        %1219 = vmatprep.subr.mxu0 0.0
        %v1220 = vand.u32 %v374, 4294901760
        %1221 = vmatpush1.msra.mxu0 %v1220
        %1222 = vmatprep.subr.mxu0 0.0
        %v1223 = vand.u32 %v375, 4294901760
        %1224 = vmatpush1.msra.mxu0 %v1223
        %1225 = vmatprep.subr.mxu0 0.0
        %v1226 = vand.u32 %v376, 4294901760
        %1227 = vmatpush1.msra.mxu0 %v1226
        %1228 = vmatprep.subr.mxu0 0.0
        %v1229 = vand.u32 %v377, 4294901760
        %1230 = vmatpush1.msra.mxu0 %v1229
        %1231 = vmatprep.subr.mxu0 0.0
        %v1232 = vand.u32 %v378, 4294901760
        %1233 = vmatpush1.msra.mxu0 %v1232
        %1234 = vmatprep.subr.mxu0 0.0
        %v1235 = vand.u32 %v379, 4294901760
        %1236 = vmatpush1.msra.mxu0 %v1235
        %1237 = vmatprep.subr.mxu0 0.0
        %v1238 = vand.u32 %v380, 4294901760
        %1239 = vmatpush1.msra.mxu0 %v1238
        %1240 = vmatprep.subr.mxu0 0.0
        %v1241 = vand.u32 %v381, 4294901760
        %1242 = vmatpush1.msra.mxu0 %v1241
        %1243 = vmatprep.subr.mxu0 0.0
        %v1244 = vand.u32 %v382, 4294901760
        %1245 = vmatpush1.msra.mxu0 %v1244
        %1246 = vmatprep.subr.mxu0 0.0
        %v1247 = vand.u32 %v383, 4294901760
        %1248 = vmatpush1.msra.mxu0 %v1247
        %1249 = vmatprep.subr.mxu0 0.0
        %v1250 = vand.u32 %v384, 4294901760
        %1251 = vmatpush1.msra.mxu0 %v1250
        %1252 = vmatprep.subr.mxu0 0.0
        %v1253 = vand.u32 %v385, 4294901760
        %1254 = vmatpush1.msra.mxu0 %v1253
        %1255 = vmatprep.subr.mxu0 0.0
        %v1256 = vand.u32 %v386, 4294901760
        %1257 = vmatpush1.msra.mxu0 %v1256
        %1258 = vmatprep.subr.mxu0 0.0
        %v1259 = vand.u32 %v387, 4294901760
        %1260 = vmatpush1.msra.mxu0 %v1259
        %1261 = vmatprep.subr.mxu0 0.0
        %v1262 = vand.u32 %v388, 4294901760
        %1263 = vmatpush1.msra.mxu0 %v1262
        %1264 = vmatprep.subr.mxu0 0.0
        %v1265 = vand.u32 %v389, 4294901760
        %1266 = vmatpush1.msra.mxu0 %v1265
        %1267 = vmatprep.subr.mxu0 0.0
        %1268 = vmatpush1.msra.mxu0 0.0
        %1269 = vmatprep.subr.mxu0 0.0
        %1270 = vmatpush1.msra.mxu0 0.0
        %1271 = vmatprep.subr.mxu0 0.0
        %1272 = vmatpush1.msra.mxu0 0.0
        %1273 = vmatprep.subr.mxu0 0.0
        %1274 = vmatpush1.msra.mxu0 0.0
        %1275 = vmatprep.subr.mxu0 0.0
        %1276 = vmatpush1.msra.mxu0 0.0
        %1277 = vmatprep.subr.mxu0 0.0
        %1278 = vmatpush1.msra.mxu0 0.0
        %1279 = vmatprep.subr.mxu0 0.0
        %1280 = vmatpush1.msra.mxu0 0.0
        %1281 = vmatprep.subr.mxu0 0.0
        %1282 = vmatpush1.msra.mxu0 0.0
        %1283 = vmatprep.subr.mxu0 0.0
        %1284 = vmatpush1.msra.mxu0 0.0
        %1285 = vmatprep.subr.mxu0 0.0
        %1286 = vmatpush1.msra.mxu0 0.0
        %1287 = vmatprep.subr.mxu0 0.0
        %1288 = vmatpush1.msra.mxu0 0.0
        %1289 = vmatprep.subr.mxu0 0.0
        %1290 = vmatpush1.msra.mxu0 0.0
        %1291 = vmatprep.subr.mxu0 0.0
        %1292 = vmatpush1.msra.mxu0 0.0
        %1293 = vmatprep.subr.mxu0 0.0
        %1294 = vmatpush1.msra.mxu0 0.0
        %1295 = vmatprep.subr.mxu0 0.0
        %1296 = vmatpush1.msra.mxu0 0.0
        %1297 = vmatprep.subr.mxu0 0.0
        %1298 = vmatpush1.msra.mxu0 0.0
        %1299 = vmatprep.mubr.f32.mxu0 0.0
        %v1300 = vand.u32 %v398, 4294901760
        %1301 = vmatmul.mubr.f32.gmra.mrb[0].mxu0 %v1300
        %v1302 = vpop.f32.mrb[0].mxu0
        %v1303 = vadd.f32 %v1174, %v1302
        %v1304 = vpop.f32.mrb[0].mxu0
        %1305 = vmatprep.mubr.f32.mxu0 0.0
        %v1306 = vand.u32 %v399, 4294901760
        %1307 = vmatmul.mubr.f32.gmra.mrb[0].mxu0 %v1306
        %v1308 = vpop.f32.mrb[0].mxu0
        %v1309 = vadd.f32 %v1180, %v1308
        %v1310 = vpop.f32.mrb[0].mxu0
        %1311 = vmatprep.mubr.f32.mxu0 0.0
        %v1312 = vand.u32 %v400, 4294901760
        %1313 = vmatmul.mubr.f32.gmra.mrb[0].mxu0 %v1312
        %v1314 = vpop.f32.mrb[0].mxu0
        %v1315 = vadd.f32 %v1186, %v1314
        %v1316 = vpop.f32.mrb[0].mxu0
        %1317 = vmatprep.mubr.f32.mxu0 0.0
        %v1318 = vand.u32 %v401, 4294901760
        %1319 = vmatmul.mubr.f32.gmra.mrb[0].mxu0 %v1318
        %v1320 = vpop.f32.mrb[0].mxu0
        %v1321 = vadd.f32 %v1192, %v1320
        %v1322 = vpop.f32.mrb[0].mxu0
        %1323 = vmatprep.mubr.f32.mxu0 0.0
        %v1324 = vand.u32 %v402, 4294901760
        %1325 = vmatmul.mubr.f32.gmra.mrb[0].mxu0 %v1324
        %v1326 = vpop.f32.mrb[0].mxu0
        %v1327 = vadd.f32 %v1198, %v1326
        %v1328 = vpop.f32.mrb[0].mxu0
        %1329 = vmatprep.mubr.f32.mxu0 0.0
        %v1330 = vand.u32 %v403, 4294901760
        %1331 = vmatmul.mubr.f32.gmra.mrb[0].mxu0 %v1330
        %v1332 = vpop.f32.mrb[0].mxu0
        %v1333 = vadd.f32 %v1204, %v1332
        %v1334 = vpop.f32.mrb[0].mxu0
        %1335 = vmatprep.mubr.f32.mxu0 0.0
        %v1336 = vand.u32 %v404, 4294901760
        %1337 = vmatmul.mubr.f32.gmra.mrb[0].mxu0 %v1336
        %v1338 = vpop.f32.mrb[0].mxu0
        %v1339 = vadd.f32 %v1210, %v1338
        %v1340 = vpop.f32.mrb[0].mxu0
        %1341 = vmatprep.mubr.f32.mxu0 0.0
        %v1342 = vand.u32 %v405, 4294901760
        %1343 = vmatmul.mubr.f32.gmra.mrb[0].mxu0 %v1342
        %v1344 = vpop.f32.mrb[0].mxu0
        %v1345 = vadd.f32 %v1216, %v1344
        %v1346 = vpop.f32.mrb[0].mxu0
        %1347 = vdwg.mxu0
        %vm1348 = vcmask 523264
        %v1350 = vsel %vm1348, %v342, 0
        %v1353 = vsel %vm1348, %v343, 0
        %v1356 = vsel %vm1348, %v344, 0
        %v1359 = vsel %vm1348, %v345, 0
        %v1362 = vsel %vm1348, %v346, 0
        %v1365 = vsel %vm1348, %v347, 0
        %v1368 = vsel %vm1348, %v348, 0
        %v1371 = vsel %vm1348, %v349, 0
        %1373 = vmatprep.subr.mxu0 0.0
        %v1374 = vand.u32 %v1303, 4294901760
        %1375 = vmatpush1.msra.mxu0 %v1374
        %1376 = vmatprep.subr.mxu0 0.0
        %v1377 = vand.u32 %v1309, 4294901760
        %1378 = vmatpush1.msra.mxu0 %v1377
        %1379 = vmatprep.subr.mxu0 0.0
        %v1380 = vand.u32 %v1315, 4294901760
        %1381 = vmatpush1.msra.mxu0 %v1380
        %1382 = vmatprep.subr.mxu0 0.0
        %v1383 = vand.u32 %v1321, 4294901760
        %1384 = vmatpush1.msra.mxu0 %v1383
        %1385 = vmatprep.subr.mxu0 0.0
        %v1386 = vand.u32 %v1327, 4294901760
        %1387 = vmatpush1.msra.mxu0 %v1386
        %1388 = vmatprep.subr.mxu0 0.0
        %v1389 = vand.u32 %v1333, 4294901760
        %1390 = vmatpush1.msra.mxu0 %v1389
        %1391 = vmatprep.subr.mxu0 0.0
        %v1392 = vand.u32 %v1339, 4294901760
        %1393 = vmatpush1.msra.mxu0 %v1392
        %1394 = vmatprep.subr.mxu0 0.0
        %v1395 = vand.u32 %v1345, 4294901760
        %1396 = vmatpush1.msra.mxu0 %v1395
        %1397 = vmatprep.subr.mxu0 0.0
        %1398 = vmatpush1.msra.mxu0 0.0
        %1399 = vmatprep.subr.mxu0 0.0
        %1400 = vmatpush1.msra.mxu0 0.0
        %1401 = vmatprep.subr.mxu0 0.0
        %1402 = vmatpush1.msra.mxu0 0.0
        %1403 = vmatprep.subr.mxu0 0.0
        %1404 = vmatpush1.msra.mxu0 0.0
        %1405 = vmatprep.subr.mxu0 0.0
        %1406 = vmatpush1.msra.mxu0 0.0
        %1407 = vmatprep.subr.mxu0 0.0
        %1408 = vmatpush1.msra.mxu0 0.0
        %1409 = vmatprep.subr.mxu0 0.0
        %1410 = vmatpush1.msra.mxu0 0.0
        %1411 = vmatprep.subr.mxu0 0.0
        %1412 = vmatpush1.msra.mxu0 0.0
        %1413 = vmatprep.subr.mxu0 0.0
        %1414 = vmatpush1.msra.mxu0 0.0
        %1415 = vmatprep.subr.mxu0 0.0
        %1416 = vmatpush1.msra.mxu0 0.0
        %1417 = vmatprep.subr.mxu0 0.0
        %1418 = vmatpush1.msra.mxu0 0.0
        %1419 = vmatprep.subr.mxu0 0.0
        %1420 = vmatpush1.msra.mxu0 0.0
        %1421 = vmatprep.subr.mxu0 0.0
        %1422 = vmatpush1.msra.mxu0 0.0
        %1423 = vmatprep.subr.mxu0 0.0
        %1424 = vmatpush1.msra.mxu0 0.0
        %1425 = vmatprep.subr.mxu0 0.0
        %1426 = vmatpush1.msra.mxu0 0.0
        %1427 = vmatprep.subr.mxu0 0.0
        %1428 = vmatpush1.msra.mxu0 0.0
        %1429 = vmatprep.subr.mxu0 0.0
        %1430 = vmatpush1.msra.mxu0 0.0
        %1431 = vmatprep.subr.mxu0 0.0
        %1432 = vmatpush1.msra.mxu0 0.0
        %1433 = vmatprep.subr.mxu0 0.0
        %1434 = vmatpush1.msra.mxu0 0.0
        %1435 = vmatprep.subr.mxu0 0.0
        %1436 = vmatpush1.msra.mxu0 0.0
        %1437 = vmatprep.subr.mxu0 0.0
        %1438 = vmatpush1.msra.mxu0 0.0
        %1439 = vmatprep.subr.mxu0 0.0
        %1440 = vmatpush1.msra.mxu0 0.0
        %1441 = vmatprep.subr.mxu0 0.0
        %1442 = vmatpush1.msra.mxu0 0.0
        %1443 = vmatprep.subr.mxu0 0.0
        %1444 = vmatpush1.msra.mxu0 0.0
        %1445 = vmatprep.mubr.f32.mxu0 0.0
        %v1446 = vand.u32 %v1350, 4294901760
        %v1447 = vsub.f32 %v1350, %v1446
        %v1448 = vand.u32 %v1447, 4294901760
        %v1449 = vsub.f32 %v1447, %v1448
        %v1450 = vand.u32 %v1449, 4294901760
        %1451 = vmatmul.mubr.f32.gmra.mrb[0].mxu0 %v1450
        %v1452 = vpop.f32.mrb[0].mxu0
        %v1453 = vadd.f32 0.0, %v1452
        %v1454 = vpop.f32.mrb[0].mxu0
        %1455 = vmatprep.mubr.f32.mxu0 0.0
        %v1456 = vand.u32 %v1353, 4294901760
        %v1457 = vsub.f32 %v1353, %v1456
        %v1458 = vand.u32 %v1457, 4294901760
        %v1459 = vsub.f32 %v1457, %v1458
        %v1460 = vand.u32 %v1459, 4294901760
        %1461 = vmatmul.mubr.f32.gmra.mrb[0].mxu0 %v1460
        %v1462 = vpop.f32.mrb[0].mxu0
        %v1463 = vadd.f32 0.0, %v1462
        %v1464 = vpop.f32.mrb[0].mxu0
        %1465 = vmatprep.mubr.f32.mxu0 0.0
        %v1466 = vand.u32 %v1356, 4294901760
        %v1467 = vsub.f32 %v1356, %v1466
        %v1468 = vand.u32 %v1467, 4294901760
        %v1469 = vsub.f32 %v1467, %v1468
        %v1470 = vand.u32 %v1469, 4294901760
        %1471 = vmatmul.mubr.f32.gmra.mrb[0].mxu0 %v1470
        %v1472 = vpop.f32.mrb[0].mxu0
        %v1473 = vadd.f32 0.0, %v1472
        %v1474 = vpop.f32.mrb[0].mxu0
        %1475 = vmatprep.mubr.f32.mxu0 0.0
        %v1476 = vand.u32 %v1359, 4294901760
        %v1477 = vsub.f32 %v1359, %v1476
        %v1478 = vand.u32 %v1477, 4294901760
        %v1479 = vsub.f32 %v1477, %v1478
        %v1480 = vand.u32 %v1479, 4294901760
        %1481 = vmatmul.mubr.f32.gmra.mrb[0].mxu0 %v1480
        %v1482 = vpop.f32.mrb[0].mxu0
        %v1483 = vadd.f32 0.0, %v1482
        %v1484 = vpop.f32.mrb[0].mxu0
        %1485 = vmatprep.mubr.f32.mxu0 0.0
        %v1486 = vand.u32 %v1362, 4294901760
        %v1487 = vsub.f32 %v1362, %v1486
        %v1488 = vand.u32 %v1487, 4294901760
        %v1489 = vsub.f32 %v1487, %v1488
        %v1490 = vand.u32 %v1489, 4294901760
        %1491 = vmatmul.mubr.f32.gmra.mrb[0].mxu0 %v1490
        %v1492 = vpop.f32.mrb[0].mxu0
        %v1493 = vadd.f32 0.0, %v1492
        %v1494 = vpop.f32.mrb[0].mxu0
        %1495 = vmatprep.mubr.f32.mxu0 0.0
        %v1496 = vand.u32 %v1365, 4294901760
        %v1497 = vsub.f32 %v1365, %v1496
        %v1498 = vand.u32 %v1497, 4294901760
        %v1499 = vsub.f32 %v1497, %v1498
        %v1500 = vand.u32 %v1499, 4294901760
        %1501 = vmatmul.mubr.f32.gmra.mrb[0].mxu0 %v1500
        %v1502 = vpop.f32.mrb[0].mxu0
        %v1503 = vadd.f32 0.0, %v1502
        %v1504 = vpop.f32.mrb[0].mxu0
        %1505 = vmatprep.mubr.f32.mxu0 0.0
        %v1506 = vand.u32 %v1368, 4294901760
        %v1507 = vsub.f32 %v1368, %v1506
        %v1508 = vand.u32 %v1507, 4294901760
        %v1509 = vsub.f32 %v1507, %v1508
        %v1510 = vand.u32 %v1509, 4294901760
        %1511 = vmatmul.mubr.f32.gmra.mrb[0].mxu0 %v1510
        %v1512 = vpop.f32.mrb[0].mxu0
        %v1513 = vadd.f32 0.0, %v1512
        %v1514 = vpop.f32.mrb[0].mxu0
        %1515 = vmatprep.mubr.f32.mxu0 0.0
        %v1516 = vand.u32 %v1371, 4294901760
        %v1517 = vsub.f32 %v1371, %v1516
        %v1518 = vand.u32 %v1517, 4294901760
        %v1519 = vsub.f32 %v1517, %v1518
        %v1520 = vand.u32 %v1519, 4294901760
        %1521 = vmatmul.mubr.f32.gmra.mrb[0].mxu0 %v1520
        %v1522 = vpop.f32.mrb[0].mxu0
        %v1523 = vadd.f32 0.0, %v1522
        %v1524 = vpop.f32.mrb[0].mxu0
        %1525 = vdwg.mxu0
        %1526 = vmatprep.subr.mxu0 0.0
        %v1527 = vand.u32 %v1303, 4294901760
        %v1528 = vsub.f32 %v1303, %v1527
        %v1529 = vand.u32 %v1528, 4294901760
        %v1530 = vsub.f32 %v1528, %v1529
        %v1531 = vand.u32 %v1530, 4294901760
        %1532 = vmatpush1.msra.mxu0 %v1531
        %1533 = vmatprep.subr.mxu0 0.0
        %v1534 = vand.u32 %v1309, 4294901760
        %v1535 = vsub.f32 %v1309, %v1534
        %v1536 = vand.u32 %v1535, 4294901760
        %v1537 = vsub.f32 %v1535, %v1536
        %v1538 = vand.u32 %v1537, 4294901760
        %1539 = vmatpush1.msra.mxu0 %v1538
        %1540 = vmatprep.subr.mxu0 0.0
        %v1541 = vand.u32 %v1315, 4294901760
        %v1542 = vsub.f32 %v1315, %v1541
        %v1543 = vand.u32 %v1542, 4294901760
        %v1544 = vsub.f32 %v1542, %v1543
        %v1545 = vand.u32 %v1544, 4294901760
        %1546 = vmatpush1.msra.mxu0 %v1545
        %1547 = vmatprep.subr.mxu0 0.0
        %v1548 = vand.u32 %v1321, 4294901760
        %v1549 = vsub.f32 %v1321, %v1548
        %v1550 = vand.u32 %v1549, 4294901760
        %v1551 = vsub.f32 %v1549, %v1550
        %v1552 = vand.u32 %v1551, 4294901760
        %1553 = vmatpush1.msra.mxu0 %v1552
        %1554 = vmatprep.subr.mxu0 0.0
        %v1555 = vand.u32 %v1327, 4294901760
        %v1556 = vsub.f32 %v1327, %v1555
        %v1557 = vand.u32 %v1556, 4294901760
        %v1558 = vsub.f32 %v1556, %v1557
        %v1559 = vand.u32 %v1558, 4294901760
        %1560 = vmatpush1.msra.mxu0 %v1559
        %1561 = vmatprep.subr.mxu0 0.0
        %v1562 = vand.u32 %v1333, 4294901760
        %v1563 = vsub.f32 %v1333, %v1562
        %v1564 = vand.u32 %v1563, 4294901760
        %v1565 = vsub.f32 %v1563, %v1564
        %v1566 = vand.u32 %v1565, 4294901760
        %1567 = vmatpush1.msra.mxu0 %v1566
        %1568 = vmatprep.subr.mxu0 0.0
        %v1569 = vand.u32 %v1339, 4294901760
        %v1570 = vsub.f32 %v1339, %v1569
        %v1571 = vand.u32 %v1570, 4294901760
        %v1572 = vsub.f32 %v1570, %v1571
        %v1573 = vand.u32 %v1572, 4294901760
        %1574 = vmatpush1.msra.mxu0 %v1573
        %1575 = vmatprep.subr.mxu0 0.0
        %v1576 = vand.u32 %v1345, 4294901760
        %v1577 = vsub.f32 %v1345, %v1576
        %v1578 = vand.u32 %v1577, 4294901760
        %v1579 = vsub.f32 %v1577, %v1578
        %v1580 = vand.u32 %v1579, 4294901760
        %1581 = vmatpush1.msra.mxu0 %v1580
        %1582 = vmatprep.subr.mxu0 0.0
        %1583 = vmatpush1.msra.mxu0 0.0
        %1584 = vmatprep.subr.mxu0 0.0
        %1585 = vmatpush1.msra.mxu0 0.0
        %1586 = vmatprep.subr.mxu0 0.0
        %1587 = vmatpush1.msra.mxu0 0.0
        %1588 = vmatprep.subr.mxu0 0.0
        %1589 = vmatpush1.msra.mxu0 0.0
        %1590 = vmatprep.subr.mxu0 0.0
        %1591 = vmatpush1.msra.mxu0 0.0
        %1592 = vmatprep.subr.mxu0 0.0
        %1593 = vmatpush1.msra.mxu0 0.0
        %1594 = vmatprep.subr.mxu0 0.0
        %1595 = vmatpush1.msra.mxu0 0.0
        %1596 = vmatprep.subr.mxu0 0.0
        %1597 = vmatpush1.msra.mxu0 0.0
        %1598 = vmatprep.subr.mxu0 0.0
        %1599 = vmatpush1.msra.mxu0 0.0
        %1600 = vmatprep.subr.mxu0 0.0
        %1601 = vmatpush1.msra.mxu0 0.0
        %1602 = vmatprep.subr.mxu0 0.0
        %1603 = vmatpush1.msra.mxu0 0.0
        %1604 = vmatprep.subr.mxu0 0.0
        %1605 = vmatpush1.msra.mxu0 0.0
        %1606 = vmatprep.subr.mxu0 0.0
        %1607 = vmatpush1.msra.mxu0 0.0
        %1608 = vmatprep.subr.mxu0 0.0
        %1609 = vmatpush1.msra.mxu0 0.0
        %1610 = vmatprep.subr.mxu0 0.0
        %1611 = vmatpush1.msra.mxu0 0.0
        %1612 = vmatprep.subr.mxu0 0.0
        %1613 = vmatpush1.msra.mxu0 0.0
        %1614 = vmatprep.subr.mxu0 0.0
        %1615 = vmatpush1.msra.mxu0 0.0
        %1616 = vmatprep.subr.mxu0 0.0
        %1617 = vmatpush1.msra.mxu0 0.0
        %1618 = vmatprep.subr.mxu0 0.0
        %1619 = vmatpush1.msra.mxu0 0.0
        %1620 = vmatprep.subr.mxu0 0.0
        %1621 = vmatpush1.msra.mxu0 0.0
        %1622 = vmatprep.subr.mxu0 0.0
        %1623 = vmatpush1.msra.mxu0 0.0
        %1624 = vmatprep.subr.mxu0 0.0
        %1625 = vmatpush1.msra.mxu0 0.0
        %1626 = vmatprep.subr.mxu0 0.0
        %1627 = vmatpush1.msra.mxu0 0.0
        %1628 = vmatprep.subr.mxu0 0.0
        %1629 = vmatpush1.msra.mxu0 0.0
        %1630 = vmatprep.mubr.f32.mxu0 0.0
        %v1631 = vand.u32 %v1350, 4294901760
        %1632 = vmatmul.mubr.f32.gmra.mrb[0].mxu0 %v1631
        %v1633 = vpop.f32.mrb[0].mxu0
        %v1634 = vadd.f32 %v1453, %v1633
        %v1635 = vpop.f32.mrb[0].mxu0
        %1636 = vmatprep.mubr.f32.mxu0 0.0
        %v1637 = vand.u32 %v1353, 4294901760
        %1638 = vmatmul.mubr.f32.gmra.mrb[0].mxu0 %v1637
        %v1639 = vpop.f32.mrb[0].mxu0
        %v1640 = vadd.f32 %v1463, %v1639
        %v1641 = vpop.f32.mrb[0].mxu0
        %1642 = vmatprep.mubr.f32.mxu0 0.0
        %v1643 = vand.u32 %v1356, 4294901760
        %1644 = vmatmul.mubr.f32.gmra.mrb[0].mxu0 %v1643
        %v1645 = vpop.f32.mrb[0].mxu0
        %v1646 = vadd.f32 %v1473, %v1645
        %v1647 = vpop.f32.mrb[0].mxu0
        %1648 = vmatprep.mubr.f32.mxu0 0.0
        %v1649 = vand.u32 %v1359, 4294901760
        %1650 = vmatmul.mubr.f32.gmra.mrb[0].mxu0 %v1649
        %v1651 = vpop.f32.mrb[0].mxu0
        %v1652 = vadd.f32 %v1483, %v1651
        %v1653 = vpop.f32.mrb[0].mxu0
        %1654 = vmatprep.mubr.f32.mxu0 0.0
        %v1655 = vand.u32 %v1362, 4294901760
        %1656 = vmatmul.mubr.f32.gmra.mrb[0].mxu0 %v1655
        %v1657 = vpop.f32.mrb[0].mxu0
        %v1658 = vadd.f32 %v1493, %v1657
        %v1659 = vpop.f32.mrb[0].mxu0
        %1660 = vmatprep.mubr.f32.mxu0 0.0
        %v1661 = vand.u32 %v1365, 4294901760
        %1662 = vmatmul.mubr.f32.gmra.mrb[0].mxu0 %v1661
        %v1663 = vpop.f32.mrb[0].mxu0
        %v1664 = vadd.f32 %v1503, %v1663
        %v1665 = vpop.f32.mrb[0].mxu0
        %1666 = vmatprep.mubr.f32.mxu0 0.0
        %v1667 = vand.u32 %v1368, 4294901760
        %1668 = vmatmul.mubr.f32.gmra.mrb[0].mxu0 %v1667
        %v1669 = vpop.f32.mrb[0].mxu0
        %v1670 = vadd.f32 %v1513, %v1669
        %v1671 = vpop.f32.mrb[0].mxu0
        %1672 = vmatprep.mubr.f32.mxu0 0.0
        %v1673 = vand.u32 %v1371, 4294901760
        %1674 = vmatmul.mubr.f32.gmra.mrb[0].mxu0 %v1673
        %v1675 = vpop.f32.mrb[0].mxu0
        %v1676 = vadd.f32 %v1523, %v1675
        %v1677 = vpop.f32.mrb[0].mxu0
        %1678 = vdwg.mxu0
        %1679 = vmatprep.subr.mxu0 0.0
        %v1680 = vand.u32 %v1303, 4294901760
        %v1681 = vsub.f32 %v1303, %v1680
        %1682 = vmatpush1.msra.mxu0 %v1681
        %1683 = vmatprep.subr.mxu0 0.0
        %v1684 = vand.u32 %v1309, 4294901760
        %v1685 = vsub.f32 %v1309, %v1684
        %1686 = vmatpush1.msra.mxu0 %v1685
        %1687 = vmatprep.subr.mxu0 0.0
        %v1688 = vand.u32 %v1315, 4294901760
        %v1689 = vsub.f32 %v1315, %v1688
        %1690 = vmatpush1.msra.mxu0 %v1689
        %1691 = vmatprep.subr.mxu0 0.0
        %v1692 = vand.u32 %v1321, 4294901760
        %v1693 = vsub.f32 %v1321, %v1692
        %1694 = vmatpush1.msra.mxu0 %v1693
        %1695 = vmatprep.subr.mxu0 0.0
        %v1696 = vand.u32 %v1327, 4294901760
        %v1697 = vsub.f32 %v1327, %v1696
        %1698 = vmatpush1.msra.mxu0 %v1697
        %1699 = vmatprep.subr.mxu0 0.0
        %v1700 = vand.u32 %v1333, 4294901760
        %v1701 = vsub.f32 %v1333, %v1700
        %1702 = vmatpush1.msra.mxu0 %v1701
        %1703 = vmatprep.subr.mxu0 0.0
        %v1704 = vand.u32 %v1339, 4294901760
        %v1705 = vsub.f32 %v1339, %v1704
        %1706 = vmatpush1.msra.mxu0 %v1705
        %1707 = vmatprep.subr.mxu0 0.0
        %v1708 = vand.u32 %v1345, 4294901760
        %v1709 = vsub.f32 %v1345, %v1708
        %1710 = vmatpush1.msra.mxu0 %v1709
        %1711 = vmatprep.subr.mxu0 0.0
        %1712 = vmatpush1.msra.mxu0 0.0
        %1713 = vmatprep.subr.mxu0 0.0
        %1714 = vmatpush1.msra.mxu0 0.0
        %1715 = vmatprep.subr.mxu0 0.0
        %1716 = vmatpush1.msra.mxu0 0.0
        %1717 = vmatprep.subr.mxu0 0.0
        %1718 = vmatpush1.msra.mxu0 0.0
        %1719 = vmatprep.subr.mxu0 0.0
        %1720 = vmatpush1.msra.mxu0 0.0
        %1721 = vmatprep.subr.mxu0 0.0
        %1722 = vmatpush1.msra.mxu0 0.0
        %1723 = vmatprep.subr.mxu0 0.0
        %1724 = vmatpush1.msra.mxu0 0.0
        %1725 = vmatprep.subr.mxu0 0.0
        %1726 = vmatpush1.msra.mxu0 0.0
        %1727 = vmatprep.subr.mxu0 0.0
        %1728 = vmatpush1.msra.mxu0 0.0
        %1729 = vmatprep.subr.mxu0 0.0
        %1730 = vmatpush1.msra.mxu0 0.0
        %1731 = vmatprep.subr.mxu0 0.0
        %1732 = vmatpush1.msra.mxu0 0.0
        %1733 = vmatprep.subr.mxu0 0.0
        %1734 = vmatpush1.msra.mxu0 0.0
        %1735 = vmatprep.subr.mxu0 0.0
        %1736 = vmatpush1.msra.mxu0 0.0
        %1737 = vmatprep.subr.mxu0 0.0
        %1738 = vmatpush1.msra.mxu0 0.0
        %1739 = vmatprep.subr.mxu0 0.0
        %1740 = vmatpush1.msra.mxu0 0.0
        %1741 = vmatprep.subr.mxu0 0.0
        %1742 = vmatpush1.msra.mxu0 0.0
        %1743 = vmatprep.subr.mxu0 0.0
        %1744 = vmatpush1.msra.mxu0 0.0
        %1745 = vmatprep.subr.mxu0 0.0
        %1746 = vmatpush1.msra.mxu0 0.0
        %1747 = vmatprep.subr.mxu0 0.0
        %1748 = vmatpush1.msra.mxu0 0.0
        %1749 = vmatprep.subr.mxu0 0.0
        %1750 = vmatpush1.msra.mxu0 0.0
        %1751 = vmatprep.subr.mxu0 0.0
        %1752 = vmatpush1.msra.mxu0 0.0
        %1753 = vmatprep.subr.mxu0 0.0
        %1754 = vmatpush1.msra.mxu0 0.0
        %1755 = vmatprep.subr.mxu0 0.0
        %1756 = vmatpush1.msra.mxu0 0.0
        %1757 = vmatprep.subr.mxu0 0.0
        %1758 = vmatpush1.msra.mxu0 0.0
        %1759 = vmatprep.mubr.f32.mxu0 0.0
        %v1760 = vand.u32 %v1350, 4294901760
        %v1761 = vsub.f32 %v1350, %v1760
        %1762 = vmatmul.mubr.f32.gmra.mrb[0].mxu0 %v1761
        %v1763 = vpop.f32.mrb[0].mxu0
        %v1764 = vadd.f32 %v1634, %v1763
        %v1765 = vpop.f32.mrb[0].mxu0
        %1766 = vmatprep.mubr.f32.mxu0 0.0
        %v1767 = vand.u32 %v1353, 4294901760
        %v1768 = vsub.f32 %v1353, %v1767
        %1769 = vmatmul.mubr.f32.gmra.mrb[0].mxu0 %v1768
        %v1770 = vpop.f32.mrb[0].mxu0
        %v1771 = vadd.f32 %v1640, %v1770
        %v1772 = vpop.f32.mrb[0].mxu0
        %1773 = vmatprep.mubr.f32.mxu0 0.0
        %v1774 = vand.u32 %v1356, 4294901760
        %v1775 = vsub.f32 %v1356, %v1774
        %1776 = vmatmul.mubr.f32.gmra.mrb[0].mxu0 %v1775
        %v1777 = vpop.f32.mrb[0].mxu0
        %v1778 = vadd.f32 %v1646, %v1777
        %v1779 = vpop.f32.mrb[0].mxu0
        %1780 = vmatprep.mubr.f32.mxu0 0.0
        %v1781 = vand.u32 %v1359, 4294901760
        %v1782 = vsub.f32 %v1359, %v1781
        %1783 = vmatmul.mubr.f32.gmra.mrb[0].mxu0 %v1782
        %v1784 = vpop.f32.mrb[0].mxu0
        %v1785 = vadd.f32 %v1652, %v1784
        %v1786 = vpop.f32.mrb[0].mxu0
        %1787 = vmatprep.mubr.f32.mxu0 0.0
        %v1788 = vand.u32 %v1362, 4294901760
        %v1789 = vsub.f32 %v1362, %v1788
        %1790 = vmatmul.mubr.f32.gmra.mrb[0].mxu0 %v1789
        %v1791 = vpop.f32.mrb[0].mxu0
        %v1792 = vadd.f32 %v1658, %v1791
        %v1793 = vpop.f32.mrb[0].mxu0
        %1794 = vmatprep.mubr.f32.mxu0 0.0
        %v1795 = vand.u32 %v1365, 4294901760
        %v1796 = vsub.f32 %v1365, %v1795
        %1797 = vmatmul.mubr.f32.gmra.mrb[0].mxu0 %v1796
        %v1798 = vpop.f32.mrb[0].mxu0
        %v1799 = vadd.f32 %v1664, %v1798
        %v1800 = vpop.f32.mrb[0].mxu0
        %1801 = vmatprep.mubr.f32.mxu0 0.0
        %v1802 = vand.u32 %v1368, 4294901760
        %v1803 = vsub.f32 %v1368, %v1802
        %1804 = vmatmul.mubr.f32.gmra.mrb[0].mxu0 %v1803
        %v1805 = vpop.f32.mrb[0].mxu0
        %v1806 = vadd.f32 %v1670, %v1805
        %v1807 = vpop.f32.mrb[0].mxu0
        %1808 = vmatprep.mubr.f32.mxu0 0.0
        %v1809 = vand.u32 %v1371, 4294901760
        %v1810 = vsub.f32 %v1371, %v1809
        %1811 = vmatmul.mubr.f32.gmra.mrb[0].mxu0 %v1810
        %v1812 = vpop.f32.mrb[0].mxu0
        %v1813 = vadd.f32 %v1676, %v1812
        %v1814 = vpop.f32.mrb[0].mxu0
        %1815 = vdwg.mxu0
        %1816 = vmatprep.subr.mxu0 0.0
        %v1817 = vand.u32 %v1303, 4294901760
        %1818 = vmatpush1.msra.mxu0 %v1817
        %1819 = vmatprep.subr.mxu0 0.0
        %v1820 = vand.u32 %v1309, 4294901760
        %1821 = vmatpush1.msra.mxu0 %v1820
        %1822 = vmatprep.subr.mxu0 0.0
        %v1823 = vand.u32 %v1315, 4294901760
        %1824 = vmatpush1.msra.mxu0 %v1823
        %1825 = vmatprep.subr.mxu0 0.0
        %v1826 = vand.u32 %v1321, 4294901760
        %1827 = vmatpush1.msra.mxu0 %v1826
        %1828 = vmatprep.subr.mxu0 0.0
        %v1829 = vand.u32 %v1327, 4294901760
        %1830 = vmatpush1.msra.mxu0 %v1829
        %1831 = vmatprep.subr.mxu0 0.0
        %v1832 = vand.u32 %v1333, 4294901760
        %1833 = vmatpush1.msra.mxu0 %v1832
        %1834 = vmatprep.subr.mxu0 0.0
        %v1835 = vand.u32 %v1339, 4294901760
        %1836 = vmatpush1.msra.mxu0 %v1835
        %1837 = vmatprep.subr.mxu0 0.0
        %v1838 = vand.u32 %v1345, 4294901760
        %1839 = vmatpush1.msra.mxu0 %v1838
        %1840 = vmatprep.subr.mxu0 0.0
        %1841 = vmatpush1.msra.mxu0 0.0
        %1842 = vmatprep.subr.mxu0 0.0
        %1843 = vmatpush1.msra.mxu0 0.0
        %1844 = vmatprep.subr.mxu0 0.0
        %1845 = vmatpush1.msra.mxu0 0.0
        %1846 = vmatprep.subr.mxu0 0.0
        %1847 = vmatpush1.msra.mxu0 0.0
        %1848 = vmatprep.subr.mxu0 0.0
        %1849 = vmatpush1.msra.mxu0 0.0
        %1850 = vmatprep.subr.mxu0 0.0
        %1851 = vmatpush1.msra.mxu0 0.0
        %1852 = vmatprep.subr.mxu0 0.0
        %1853 = vmatpush1.msra.mxu0 0.0
        %1854 = vmatprep.subr.mxu0 0.0
        %1855 = vmatpush1.msra.mxu0 0.0
        %1856 = vmatprep.subr.mxu0 0.0
        %1857 = vmatpush1.msra.mxu0 0.0
        %1858 = vmatprep.subr.mxu0 0.0
        %1859 = vmatpush1.msra.mxu0 0.0
        %1860 = vmatprep.subr.mxu0 0.0
        %1861 = vmatpush1.msra.mxu0 0.0
        %1862 = vmatprep.subr.mxu0 0.0
        %1863 = vmatpush1.msra.mxu0 0.0
        %1864 = vmatprep.subr.mxu0 0.0
        %1865 = vmatpush1.msra.mxu0 0.0
        %1866 = vmatprep.subr.mxu0 0.0
        %1867 = vmatpush1.msra.mxu0 0.0
        %1868 = vmatprep.subr.mxu0 0.0
        %1869 = vmatpush1.msra.mxu0 0.0
        %1870 = vmatprep.subr.mxu0 0.0
        %1871 = vmatpush1.msra.mxu0 0.0
        %1872 = vmatprep.subr.mxu0 0.0
        %1873 = vmatpush1.msra.mxu0 0.0
        %1874 = vmatprep.subr.mxu0 0.0
        %1875 = vmatpush1.msra.mxu0 0.0
        %1876 = vmatprep.subr.mxu0 0.0
        %1877 = vmatpush1.msra.mxu0 0.0
        %1878 = vmatprep.subr.mxu0 0.0
        %1879 = vmatpush1.msra.mxu0 0.0
        %1880 = vmatprep.subr.mxu0 0.0
        %1881 = vmatpush1.msra.mxu0 0.0
        %1882 = vmatprep.subr.mxu0 0.0
        %1883 = vmatpush1.msra.mxu0 0.0
        %1884 = vmatprep.subr.mxu0 0.0
        %1885 = vmatpush1.msra.mxu0 0.0
        %1886 = vmatprep.subr.mxu0 0.0
        %1887 = vmatpush1.msra.mxu0 0.0
        %1888 = vmatprep.mubr.f32.mxu0 0.0
        %v1889 = vand.u32 %v1350, 4294901760
        %v1890 = vsub.f32 %v1350, %v1889
        %v1891 = vand.u32 %v1890, 4294901760
        %1892 = vmatmul.mubr.f32.gmra.mrb[0].mxu0 %v1891
        %v1893 = vpop.f32.mrb[0].mxu0
        %v1894 = vadd.f32 %v1764, %v1893
        %v1895 = vpop.f32.mrb[0].mxu0
        %1896 = vmatprep.mubr.f32.mxu0 0.0
        %v1897 = vand.u32 %v1353, 4294901760
        %v1898 = vsub.f32 %v1353, %v1897
        %v1899 = vand.u32 %v1898, 4294901760
        %1900 = vmatmul.mubr.f32.gmra.mrb[0].mxu0 %v1899
        %v1901 = vpop.f32.mrb[0].mxu0
        %v1902 = vadd.f32 %v1771, %v1901
        %v1903 = vpop.f32.mrb[0].mxu0
        %1904 = vmatprep.mubr.f32.mxu0 0.0
        %v1905 = vand.u32 %v1356, 4294901760
        %v1906 = vsub.f32 %v1356, %v1905
        %v1907 = vand.u32 %v1906, 4294901760
        %1908 = vmatmul.mubr.f32.gmra.mrb[0].mxu0 %v1907
        %v1909 = vpop.f32.mrb[0].mxu0
        %v1910 = vadd.f32 %v1778, %v1909
        %v1911 = vpop.f32.mrb[0].mxu0
        %1912 = vmatprep.mubr.f32.mxu0 0.0
        %v1913 = vand.u32 %v1359, 4294901760
        %v1914 = vsub.f32 %v1359, %v1913
        %v1915 = vand.u32 %v1914, 4294901760
        %1916 = vmatmul.mubr.f32.gmra.mrb[0].mxu0 %v1915
        %v1917 = vpop.f32.mrb[0].mxu0
        %v1918 = vadd.f32 %v1785, %v1917
        %v1919 = vpop.f32.mrb[0].mxu0
        %1920 = vmatprep.mubr.f32.mxu0 0.0
        %v1921 = vand.u32 %v1362, 4294901760
        %v1922 = vsub.f32 %v1362, %v1921
        %v1923 = vand.u32 %v1922, 4294901760
        %1924 = vmatmul.mubr.f32.gmra.mrb[0].mxu0 %v1923
        %v1925 = vpop.f32.mrb[0].mxu0
        %v1926 = vadd.f32 %v1792, %v1925
        %v1927 = vpop.f32.mrb[0].mxu0
        %1928 = vmatprep.mubr.f32.mxu0 0.0
        %v1929 = vand.u32 %v1365, 4294901760
        %v1930 = vsub.f32 %v1365, %v1929
        %v1931 = vand.u32 %v1930, 4294901760
        %1932 = vmatmul.mubr.f32.gmra.mrb[0].mxu0 %v1931
        %v1933 = vpop.f32.mrb[0].mxu0
        %v1934 = vadd.f32 %v1799, %v1933
        %v1935 = vpop.f32.mrb[0].mxu0
        %1936 = vmatprep.mubr.f32.mxu0 0.0
        %v1937 = vand.u32 %v1368, 4294901760
        %v1938 = vsub.f32 %v1368, %v1937
        %v1939 = vand.u32 %v1938, 4294901760
        %1940 = vmatmul.mubr.f32.gmra.mrb[0].mxu0 %v1939
        %v1941 = vpop.f32.mrb[0].mxu0
        %v1942 = vadd.f32 %v1806, %v1941
        %v1943 = vpop.f32.mrb[0].mxu0
        %1944 = vmatprep.mubr.f32.mxu0 0.0
        %v1945 = vand.u32 %v1371, 4294901760
        %v1946 = vsub.f32 %v1371, %v1945
        %v1947 = vand.u32 %v1946, 4294901760
        %1948 = vmatmul.mubr.f32.gmra.mrb[0].mxu0 %v1947
        %v1949 = vpop.f32.mrb[0].mxu0
        %v1950 = vadd.f32 %v1813, %v1949
        %v1951 = vpop.f32.mrb[0].mxu0
        %1952 = vdwg.mxu0
        %1953 = vmatprep.subr.mxu0 0.0
        %v1954 = vand.u32 %v1303, 4294901760
        %v1955 = vsub.f32 %v1303, %v1954
        %v1956 = vand.u32 %v1955, 4294901760
        %1957 = vmatpush1.msra.mxu0 %v1956
        %1958 = vmatprep.subr.mxu0 0.0
        %v1959 = vand.u32 %v1309, 4294901760
        %v1960 = vsub.f32 %v1309, %v1959
        %v1961 = vand.u32 %v1960, 4294901760
        %1962 = vmatpush1.msra.mxu0 %v1961
        %1963 = vmatprep.subr.mxu0 0.0
        %v1964 = vand.u32 %v1315, 4294901760
        %v1965 = vsub.f32 %v1315, %v1964
        %v1966 = vand.u32 %v1965, 4294901760
        %1967 = vmatpush1.msra.mxu0 %v1966
        %1968 = vmatprep.subr.mxu0 0.0
        %v1969 = vand.u32 %v1321, 4294901760
        %v1970 = vsub.f32 %v1321, %v1969
        %v1971 = vand.u32 %v1970, 4294901760
        %1972 = vmatpush1.msra.mxu0 %v1971
        %1973 = vmatprep.subr.mxu0 0.0
        %v1974 = vand.u32 %v1327, 4294901760
        %v1975 = vsub.f32 %v1327, %v1974
        %v1976 = vand.u32 %v1975, 4294901760
        %1977 = vmatpush1.msra.mxu0 %v1976
        %1978 = vmatprep.subr.mxu0 0.0
        %v1979 = vand.u32 %v1333, 4294901760
        %v1980 = vsub.f32 %v1333, %v1979
        %v1981 = vand.u32 %v1980, 4294901760
        %1982 = vmatpush1.msra.mxu0 %v1981
        %1983 = vmatprep.subr.mxu0 0.0
        %v1984 = vand.u32 %v1339, 4294901760
        %v1985 = vsub.f32 %v1339, %v1984
        %v1986 = vand.u32 %v1985, 4294901760
        %1987 = vmatpush1.msra.mxu0 %v1986
        %1988 = vmatprep.subr.mxu0 0.0
        %v1989 = vand.u32 %v1345, 4294901760
        %v1990 = vsub.f32 %v1345, %v1989
        %v1991 = vand.u32 %v1990, 4294901760
        %1992 = vmatpush1.msra.mxu0 %v1991
        %1993 = vmatprep.subr.mxu0 0.0
        %1994 = vmatpush1.msra.mxu0 0.0
        %1995 = vmatprep.subr.mxu0 0.0
        %1996 = vmatpush1.msra.mxu0 0.0
        %1997 = vmatprep.subr.mxu0 0.0
        %1998 = vmatpush1.msra.mxu0 0.0
        %1999 = vmatprep.subr.mxu0 0.0
        %2000 = vmatpush1.msra.mxu0 0.0
        %2001 = vmatprep.subr.mxu0 0.0
        %2002 = vmatpush1.msra.mxu0 0.0
        %2003 = vmatprep.subr.mxu0 0.0
        %2004 = vmatpush1.msra.mxu0 0.0
        %2005 = vmatprep.subr.mxu0 0.0
        %2006 = vmatpush1.msra.mxu0 0.0
        %2007 = vmatprep.subr.mxu0 0.0
        %2008 = vmatpush1.msra.mxu0 0.0
        %2009 = vmatprep.subr.mxu0 0.0
        %2010 = vmatpush1.msra.mxu0 0.0
        %2011 = vmatprep.subr.mxu0 0.0
        %2012 = vmatpush1.msra.mxu0 0.0
        %2013 = vmatprep.subr.mxu0 0.0
        %2014 = vmatpush1.msra.mxu0 0.0
        %2015 = vmatprep.subr.mxu0 0.0
        %2016 = vmatpush1.msra.mxu0 0.0
        %2017 = vmatprep.subr.mxu0 0.0
        %2018 = vmatpush1.msra.mxu0 0.0
        %2019 = vmatprep.subr.mxu0 0.0
        %2020 = vmatpush1.msra.mxu0 0.0
        %2021 = vmatprep.subr.mxu0 0.0
        %2022 = vmatpush1.msra.mxu0 0.0
        %2023 = vmatprep.subr.mxu0 0.0
        %2024 = vmatpush1.msra.mxu0 0.0
        %2025 = vmatprep.subr.mxu0 0.0
        %2026 = vmatpush1.msra.mxu0 0.0
        %2027 = vmatprep.subr.mxu0 0.0
        %2028 = vmatpush1.msra.mxu0 0.0
        %2029 = vmatprep.subr.mxu0 0.0
        %2030 = vmatpush1.msra.mxu0 0.0
        %2031 = vmatprep.subr.mxu0 0.0
        %2032 = vmatpush1.msra.mxu0 0.0
        %2033 = vmatprep.subr.mxu0 0.0
        %2034 = vmatpush1.msra.mxu0 0.0
        %2035 = vmatprep.subr.mxu0 0.0
        %2036 = vmatpush1.msra.mxu0 0.0
        %2037 = vmatprep.subr.mxu0 0.0
        %2038 = vmatpush1.msra.mxu0 0.0
        %2039 = vmatprep.subr.mxu0 0.0
        %2040 = vmatpush1.msra.mxu0 0.0
        %2041 = vmatprep.mubr.f32.mxu0 0.0
        %v2042 = vand.u32 %v1350, 4294901760
        %2043 = vmatmul.mubr.f32.gmra.mrb[0].mxu0 %v2042
        %v2044 = vpop.f32.mrb[0].mxu0
        %v2045 = vadd.f32 %v1894, %v2044
        %v2046 = vpop.f32.mrb[0].mxu0
        %2047 = vmatprep.mubr.f32.mxu0 0.0
        %v2048 = vand.u32 %v1353, 4294901760
        %2049 = vmatmul.mubr.f32.gmra.mrb[0].mxu0 %v2048
        %v2050 = vpop.f32.mrb[0].mxu0
        %v2051 = vadd.f32 %v1902, %v2050
        %v2052 = vpop.f32.mrb[0].mxu0
        %2053 = vmatprep.mubr.f32.mxu0 0.0
        %v2054 = vand.u32 %v1356, 4294901760
        %2055 = vmatmul.mubr.f32.gmra.mrb[0].mxu0 %v2054
        %v2056 = vpop.f32.mrb[0].mxu0
        %v2057 = vadd.f32 %v1910, %v2056
        %v2058 = vpop.f32.mrb[0].mxu0
        %2059 = vmatprep.mubr.f32.mxu0 0.0
        %v2060 = vand.u32 %v1359, 4294901760
        %2061 = vmatmul.mubr.f32.gmra.mrb[0].mxu0 %v2060
        %v2062 = vpop.f32.mrb[0].mxu0
        %v2063 = vadd.f32 %v1918, %v2062
        %v2064 = vpop.f32.mrb[0].mxu0
        %2065 = vmatprep.mubr.f32.mxu0 0.0
        %v2066 = vand.u32 %v1362, 4294901760
        %2067 = vmatmul.mubr.f32.gmra.mrb[0].mxu0 %v2066
        %v2068 = vpop.f32.mrb[0].mxu0
        %v2069 = vadd.f32 %v1926, %v2068
        %v2070 = vpop.f32.mrb[0].mxu0
        %2071 = vmatprep.mubr.f32.mxu0 0.0
        %v2072 = vand.u32 %v1365, 4294901760
        %2073 = vmatmul.mubr.f32.gmra.mrb[0].mxu0 %v2072
        %v2074 = vpop.f32.mrb[0].mxu0
        %v2075 = vadd.f32 %v1934, %v2074
        %v2076 = vpop.f32.mrb[0].mxu0
        %2077 = vmatprep.mubr.f32.mxu0 0.0
        %v2078 = vand.u32 %v1368, 4294901760
        %2079 = vmatmul.mubr.f32.gmra.mrb[0].mxu0 %v2078
        %v2080 = vpop.f32.mrb[0].mxu0
        %v2081 = vadd.f32 %v1942, %v2080
        %v2082 = vpop.f32.mrb[0].mxu0
        %2083 = vmatprep.mubr.f32.mxu0 0.0
        %v2084 = vand.u32 %v1371, 4294901760
        %2085 = vmatmul.mubr.f32.gmra.mrb[0].mxu0 %v2084
        %v2086 = vpop.f32.mrb[0].mxu0
        %v2087 = vadd.f32 %v1950, %v2086
        %v2088 = vpop.f32.mrb[0].mxu0
        %2089 = vdwg.mxu0
        %2090 = vmatprep.subr.mxu0 0.0
        %v2091 = vand.u32 %v1303, 4294901760
        %2092 = vmatpush1.msra.mxu0 %v2091
        %2093 = vmatprep.subr.mxu0 0.0
        %v2094 = vand.u32 %v1309, 4294901760
        %2095 = vmatpush1.msra.mxu0 %v2094
        %2096 = vmatprep.subr.mxu0 0.0
        %v2097 = vand.u32 %v1315, 4294901760
        %2098 = vmatpush1.msra.mxu0 %v2097
        %2099 = vmatprep.subr.mxu0 0.0
        %v2100 = vand.u32 %v1321, 4294901760
        %2101 = vmatpush1.msra.mxu0 %v2100
        %2102 = vmatprep.subr.mxu0 0.0
        %v2103 = vand.u32 %v1327, 4294901760
        %2104 = vmatpush1.msra.mxu0 %v2103
        %2105 = vmatprep.subr.mxu0 0.0
        %v2106 = vand.u32 %v1333, 4294901760
        %2107 = vmatpush1.msra.mxu0 %v2106
        %2108 = vmatprep.subr.mxu0 0.0
        %v2109 = vand.u32 %v1339, 4294901760
        %2110 = vmatpush1.msra.mxu0 %v2109
        %2111 = vmatprep.subr.mxu0 0.0
        %v2112 = vand.u32 %v1345, 4294901760
        %2113 = vmatpush1.msra.mxu0 %v2112
        %2114 = vmatprep.subr.mxu0 0.0
        %2115 = vmatpush1.msra.mxu0 0.0
        %2116 = vmatprep.subr.mxu0 0.0
        %2117 = vmatpush1.msra.mxu0 0.0
        %2118 = vmatprep.subr.mxu0 0.0
        %2119 = vmatpush1.msra.mxu0 0.0
        %2120 = vmatprep.subr.mxu0 0.0
        %2121 = vmatpush1.msra.mxu0 0.0
        %2122 = vmatprep.subr.mxu0 0.0
        %2123 = vmatpush1.msra.mxu0 0.0
        %2124 = vmatprep.subr.mxu0 0.0
        %2125 = vmatpush1.msra.mxu0 0.0
        %2126 = vmatprep.subr.mxu0 0.0
        %2127 = vmatpush1.msra.mxu0 0.0
        %2128 = vmatprep.subr.mxu0 0.0
        %2129 = vmatpush1.msra.mxu0 0.0
        %2130 = vmatprep.subr.mxu0 0.0
        %2131 = vmatpush1.msra.mxu0 0.0
        %2132 = vmatprep.subr.mxu0 0.0
        %2133 = vmatpush1.msra.mxu0 0.0
        %2134 = vmatprep.subr.mxu0 0.0
        %2135 = vmatpush1.msra.mxu0 0.0
        %2136 = vmatprep.subr.mxu0 0.0
        %2137 = vmatpush1.msra.mxu0 0.0
        %2138 = vmatprep.subr.mxu0 0.0
        %2139 = vmatpush1.msra.mxu0 0.0
        %2140 = vmatprep.subr.mxu0 0.0
        %2141 = vmatpush1.msra.mxu0 0.0
        %2142 = vmatprep.subr.mxu0 0.0
        %2143 = vmatpush1.msra.mxu0 0.0
        %2144 = vmatprep.subr.mxu0 0.0
        %2145 = vmatpush1.msra.mxu0 0.0
        %2146 = vmatprep.subr.mxu0 0.0
        %2147 = vmatpush1.msra.mxu0 0.0
        %2148 = vmatprep.subr.mxu0 0.0
        %2149 = vmatpush1.msra.mxu0 0.0
        %2150 = vmatprep.subr.mxu0 0.0
        %2151 = vmatpush1.msra.mxu0 0.0
        %2152 = vmatprep.subr.mxu0 0.0
        %2153 = vmatpush1.msra.mxu0 0.0
        %2154 = vmatprep.subr.mxu0 0.0
        %2155 = vmatpush1.msra.mxu0 0.0
        %2156 = vmatprep.subr.mxu0 0.0
        %2157 = vmatpush1.msra.mxu0 0.0
        %2158 = vmatprep.subr.mxu0 0.0
        %2159 = vmatpush1.msra.mxu0 0.0
        %2160 = vmatprep.subr.mxu0 0.0
        %2161 = vmatpush1.msra.mxu0 0.0
        %2162 = vmatprep.mubr.f32.mxu0 0.0
        %v2163 = vand.u32 %v1350, 4294901760
        %2164 = vmatmul.mubr.f32.gmra.mrb[0].mxu0 %v2163
        %v2165 = vpop.f32.mrb[0].mxu0
        %v2166 = vadd.f32 %v2045, %v2165
        %v2167 = vpop.f32.mrb[0].mxu0
        %2168 = vmatprep.mubr.f32.mxu0 0.0
        %v2169 = vand.u32 %v1353, 4294901760
        %2170 = vmatmul.mubr.f32.gmra.mrb[0].mxu0 %v2169
        %v2171 = vpop.f32.mrb[0].mxu0
        %v2172 = vadd.f32 %v2051, %v2171
        %v2173 = vpop.f32.mrb[0].mxu0
        %2174 = vmatprep.mubr.f32.mxu0 0.0
        %v2175 = vand.u32 %v1356, 4294901760
        %2176 = vmatmul.mubr.f32.gmra.mrb[0].mxu0 %v2175
        %v2177 = vpop.f32.mrb[0].mxu0
        %v2178 = vadd.f32 %v2057, %v2177
        %v2179 = vpop.f32.mrb[0].mxu0
        %2180 = vmatprep.mubr.f32.mxu0 0.0
        %v2181 = vand.u32 %v1359, 4294901760
        %2182 = vmatmul.mubr.f32.gmra.mrb[0].mxu0 %v2181
        %v2183 = vpop.f32.mrb[0].mxu0
        %v2184 = vadd.f32 %v2063, %v2183
        %v2185 = vpop.f32.mrb[0].mxu0
        %2186 = vmatprep.mubr.f32.mxu0 0.0
        %v2187 = vand.u32 %v1362, 4294901760
        %2188 = vmatmul.mubr.f32.gmra.mrb[0].mxu0 %v2187
        %v2189 = vpop.f32.mrb[0].mxu0
        %v2190 = vadd.f32 %v2069, %v2189
        %v2191 = vpop.f32.mrb[0].mxu0
        %2192 = vmatprep.mubr.f32.mxu0 0.0
        %v2193 = vand.u32 %v1365, 4294901760
        %2194 = vmatmul.mubr.f32.gmra.mrb[0].mxu0 %v2193
        %v2195 = vpop.f32.mrb[0].mxu0
        %v2196 = vadd.f32 %v2075, %v2195
        %v2197 = vpop.f32.mrb[0].mxu0
        %2198 = vmatprep.mubr.f32.mxu0 0.0
        %v2199 = vand.u32 %v1368, 4294901760
        %2200 = vmatmul.mubr.f32.gmra.mrb[0].mxu0 %v2199
        %v2201 = vpop.f32.mrb[0].mxu0
        %v2202 = vadd.f32 %v2081, %v2201
        %v2203 = vpop.f32.mrb[0].mxu0
        %2204 = vmatprep.mubr.f32.mxu0 0.0
        %v2205 = vand.u32 %v1371, 4294901760
        %2206 = vmatmul.mubr.f32.gmra.mrb[0].mxu0 %v2205
        %v2207 = vpop.f32.mrb[0].mxu0
        %v2208 = vadd.f32 %v2087, %v2207
        %v2209 = vpop.f32.mrb[0].mxu0
        %2210 = vdwg.mxu0
        %v2211 = vmul.f32 %v2166, %v390
        %v2212 = vmul.f32 %v2172, %v391
        %v2213 = vmul.f32 %v2178, %v392
        %v2214 = vmul.f32 %v2184, %v393
        %v2215 = vmul.f32 %v2190, %v394
        %v2216 = vmul.f32 %v2196, %v395
        %v2217 = vmul.f32 %v2202, %v396
        %v2218 = vmul.f32 %v2208, %v397
        %v2219 = vsub.f32 %v2166, %v2211
        %v2220 = vsub.f32 %v2172, %v2212
        %v2221 = vsub.f32 %v2178, %v2213
        %v2222 = vsub.f32 %v2184, %v2214
        %v2223 = vsub.f32 %v2190, %v2215
        %v2224 = vsub.f32 %v2196, %v2216
        %v2225 = vsub.f32 %v2202, %v2217
        %v2226 = vsub.f32 %v2208, %v2218
        %2227 = vmatprep.subr.mxu0 0.0
        %v2228 = vand.u32 %v358, 4294901760
        %2229 = vmatpush1.msra.mxu0 %v2228
        %2230 = vmatprep.subr.mxu0 0.0
        %v2231 = vand.u32 %v359, 4294901760
        %2232 = vmatpush1.msra.mxu0 %v2231
        %2233 = vmatprep.subr.mxu0 0.0
        %v2234 = vand.u32 %v360, 4294901760
        %2235 = vmatpush1.msra.mxu0 %v2234
        %2236 = vmatprep.subr.mxu0 0.0
        %v2237 = vand.u32 %v361, 4294901760
        %2238 = vmatpush1.msra.mxu0 %v2237
        %2239 = vmatprep.subr.mxu0 0.0
        %v2240 = vand.u32 %v362, 4294901760
        %2241 = vmatpush1.msra.mxu0 %v2240
        %2242 = vmatprep.subr.mxu0 0.0
        %v2243 = vand.u32 %v363, 4294901760
        %2244 = vmatpush1.msra.mxu0 %v2243
        %2245 = vmatprep.subr.mxu0 0.0
        %v2246 = vand.u32 %v364, 4294901760
        %2247 = vmatpush1.msra.mxu0 %v2246
        %2248 = vmatprep.subr.mxu0 0.0
        %v2249 = vand.u32 %v365, 4294901760
        %2250 = vmatpush1.msra.mxu0 %v2249
        %2251 = vmatprep.subr.mxu0 0.0
        %v2252 = vand.u32 %v366, 4294901760
        %2253 = vmatpush1.msra.mxu0 %v2252
        %2254 = vmatprep.subr.mxu0 0.0
        %v2255 = vand.u32 %v367, 4294901760
        %2256 = vmatpush1.msra.mxu0 %v2255
        %2257 = vmatprep.subr.mxu0 0.0
        %v2258 = vand.u32 %v368, 4294901760
        %2259 = vmatpush1.msra.mxu0 %v2258
        %2260 = vmatprep.subr.mxu0 0.0
        %v2261 = vand.u32 %v369, 4294901760
        %2262 = vmatpush1.msra.mxu0 %v2261
        %2263 = vmatprep.subr.mxu0 0.0
        %v2264 = vand.u32 %v370, 4294901760
        %2265 = vmatpush1.msra.mxu0 %v2264
        %2266 = vmatprep.subr.mxu0 0.0
        %v2267 = vand.u32 %v371, 4294901760
        %2268 = vmatpush1.msra.mxu0 %v2267
        %2269 = vmatprep.subr.mxu0 0.0
        %v2270 = vand.u32 %v372, 4294901760
        %2271 = vmatpush1.msra.mxu0 %v2270
        %2272 = vmatprep.subr.mxu0 0.0
        %v2273 = vand.u32 %v373, 4294901760
        %2274 = vmatpush1.msra.mxu0 %v2273
        %2275 = vmatprep.subr.mxu0 0.0
        %2276 = vmatpush1.msra.mxu0 0.0
        %2277 = vmatprep.subr.mxu0 0.0
        %2278 = vmatpush1.msra.mxu0 0.0
        %2279 = vmatprep.subr.mxu0 0.0
        %2280 = vmatpush1.msra.mxu0 0.0
        %2281 = vmatprep.subr.mxu0 0.0
        %2282 = vmatpush1.msra.mxu0 0.0
        %2283 = vmatprep.subr.mxu0 0.0
        %2284 = vmatpush1.msra.mxu0 0.0
        %2285 = vmatprep.subr.mxu0 0.0
        %2286 = vmatpush1.msra.mxu0 0.0
        %2287 = vmatprep.subr.mxu0 0.0
        %2288 = vmatpush1.msra.mxu0 0.0
        %2289 = vmatprep.subr.mxu0 0.0
        %2290 = vmatpush1.msra.mxu0 0.0
        %2291 = vmatprep.subr.mxu0 0.0
        %2292 = vmatpush1.msra.mxu0 0.0
        %2293 = vmatprep.subr.mxu0 0.0
        %2294 = vmatpush1.msra.mxu0 0.0
        %2295 = vmatprep.subr.mxu0 0.0
        %2296 = vmatpush1.msra.mxu0 0.0
        %2297 = vmatprep.subr.mxu0 0.0
        %2298 = vmatpush1.msra.mxu0 0.0
        %2299 = vmatprep.subr.mxu0 0.0
        %2300 = vmatpush1.msra.mxu0 0.0
        %2301 = vmatprep.subr.mxu0 0.0
        %2302 = vmatpush1.msra.mxu0 0.0
        %2303 = vmatprep.subr.mxu0 0.0
        %2304 = vmatpush1.msra.mxu0 0.0
        %2305 = vmatprep.subr.mxu0 0.0
        %2306 = vmatpush1.msra.mxu0 0.0
        %2307 = vmatprep.mubr.f32.mxu0 0.0
        %v2308 = vand.u32 %v2211, 4294901760
        %v2309 = vsub.f32 %v2211, %v2308
        %v2310 = vand.u32 %v2309, 4294901760
        %v2311 = vsub.f32 %v2309, %v2310
        %v2312 = vand.u32 %v2311, 4294901760
        %2313 = vmatmul.mubr.f32.gmra.mrb[0].mxu0 %v2312
        %v2314 = vpop.f32.mrb[0].mxu0
        %v2315 = vadd.f32 0.0, %v2314
        %v2316 = vpop.f32.mrb[0].mxu0
        %2317 = vmatprep.mubr.f32.mxu0 0.0
        %v2318 = vand.u32 %v2212, 4294901760
        %v2319 = vsub.f32 %v2212, %v2318
        %v2320 = vand.u32 %v2319, 4294901760
        %v2321 = vsub.f32 %v2319, %v2320
        %v2322 = vand.u32 %v2321, 4294901760
        %2323 = vmatmul.mubr.f32.gmra.mrb[0].mxu0 %v2322
        %v2324 = vpop.f32.mrb[0].mxu0
        %v2325 = vadd.f32 0.0, %v2324
        %v2326 = vpop.f32.mrb[0].mxu0
        %2327 = vmatprep.mubr.f32.mxu0 0.0
        %v2328 = vand.u32 %v2213, 4294901760
        %v2329 = vsub.f32 %v2213, %v2328
        %v2330 = vand.u32 %v2329, 4294901760
        %v2331 = vsub.f32 %v2329, %v2330
        %v2332 = vand.u32 %v2331, 4294901760
        %2333 = vmatmul.mubr.f32.gmra.mrb[0].mxu0 %v2332
        %v2334 = vpop.f32.mrb[0].mxu0
        %v2335 = vadd.f32 0.0, %v2334
        %v2336 = vpop.f32.mrb[0].mxu0
        %2337 = vmatprep.mubr.f32.mxu0 0.0
        %v2338 = vand.u32 %v2214, 4294901760
        %v2339 = vsub.f32 %v2214, %v2338
        %v2340 = vand.u32 %v2339, 4294901760
        %v2341 = vsub.f32 %v2339, %v2340
        %v2342 = vand.u32 %v2341, 4294901760
        %2343 = vmatmul.mubr.f32.gmra.mrb[0].mxu0 %v2342
        %v2344 = vpop.f32.mrb[0].mxu0
        %v2345 = vadd.f32 0.0, %v2344
        %v2346 = vpop.f32.mrb[0].mxu0
        %2347 = vmatprep.mubr.f32.mxu0 0.0
        %v2348 = vand.u32 %v2215, 4294901760
        %v2349 = vsub.f32 %v2215, %v2348
        %v2350 = vand.u32 %v2349, 4294901760
        %v2351 = vsub.f32 %v2349, %v2350
        %v2352 = vand.u32 %v2351, 4294901760
        %2353 = vmatmul.mubr.f32.gmra.mrb[0].mxu0 %v2352
        %v2354 = vpop.f32.mrb[0].mxu0
        %v2355 = vadd.f32 0.0, %v2354
        %v2356 = vpop.f32.mrb[0].mxu0
        %2357 = vmatprep.mubr.f32.mxu0 0.0
        %v2358 = vand.u32 %v2216, 4294901760
        %v2359 = vsub.f32 %v2216, %v2358
        %v2360 = vand.u32 %v2359, 4294901760
        %v2361 = vsub.f32 %v2359, %v2360
        %v2362 = vand.u32 %v2361, 4294901760
        %2363 = vmatmul.mubr.f32.gmra.mrb[0].mxu0 %v2362
        %v2364 = vpop.f32.mrb[0].mxu0
        %v2365 = vadd.f32 0.0, %v2364
        %v2366 = vpop.f32.mrb[0].mxu0
        %2367 = vmatprep.mubr.f32.mxu0 0.0
        %v2368 = vand.u32 %v2217, 4294901760
        %v2369 = vsub.f32 %v2217, %v2368
        %v2370 = vand.u32 %v2369, 4294901760
        %v2371 = vsub.f32 %v2369, %v2370
        %v2372 = vand.u32 %v2371, 4294901760
        %2373 = vmatmul.mubr.f32.gmra.mrb[0].mxu0 %v2372
        %v2374 = vpop.f32.mrb[0].mxu0
        %v2375 = vadd.f32 0.0, %v2374
        %v2376 = vpop.f32.mrb[0].mxu0
        %2377 = vmatprep.mubr.f32.mxu0 0.0
        %v2378 = vand.u32 %v2218, 4294901760
        %v2379 = vsub.f32 %v2218, %v2378
        %v2380 = vand.u32 %v2379, 4294901760
        %v2381 = vsub.f32 %v2379, %v2380
        %v2382 = vand.u32 %v2381, 4294901760
        %2383 = vmatmul.mubr.f32.gmra.mrb[0].mxu0 %v2382
        %v2384 = vpop.f32.mrb[0].mxu0
        %v2385 = vadd.f32 0.0, %v2384
        %v2386 = vpop.f32.mrb[0].mxu0
        %2387 = vdwg.mxu0
        %2388 = vmatprep.subr.mxu0 0.0
        %v2389 = vand.u32 %v358, 4294901760
        %v2390 = vsub.f32 %v358, %v2389
        %v2391 = vand.u32 %v2390, 4294901760
        %v2392 = vsub.f32 %v2390, %v2391
        %v2393 = vand.u32 %v2392, 4294901760
        %2394 = vmatpush1.msra.mxu0 %v2393
        %2395 = vmatprep.subr.mxu0 0.0
        %v2396 = vand.u32 %v359, 4294901760
        %v2397 = vsub.f32 %v359, %v2396
        %v2398 = vand.u32 %v2397, 4294901760
        %v2399 = vsub.f32 %v2397, %v2398
        %v2400 = vand.u32 %v2399, 4294901760
        %2401 = vmatpush1.msra.mxu0 %v2400
        %2402 = vmatprep.subr.mxu0 0.0
        %v2403 = vand.u32 %v360, 4294901760
        %v2404 = vsub.f32 %v360, %v2403
        %v2405 = vand.u32 %v2404, 4294901760
        %v2406 = vsub.f32 %v2404, %v2405
        %v2407 = vand.u32 %v2406, 4294901760
        %2408 = vmatpush1.msra.mxu0 %v2407
        %2409 = vmatprep.subr.mxu0 0.0
        %v2410 = vand.u32 %v361, 4294901760
        %v2411 = vsub.f32 %v361, %v2410
        %v2412 = vand.u32 %v2411, 4294901760
        %v2413 = vsub.f32 %v2411, %v2412
        %v2414 = vand.u32 %v2413, 4294901760
        %2415 = vmatpush1.msra.mxu0 %v2414
        %2416 = vmatprep.subr.mxu0 0.0
        %v2417 = vand.u32 %v362, 4294901760
        %v2418 = vsub.f32 %v362, %v2417
        %v2419 = vand.u32 %v2418, 4294901760
        %v2420 = vsub.f32 %v2418, %v2419
        %v2421 = vand.u32 %v2420, 4294901760
        %2422 = vmatpush1.msra.mxu0 %v2421
        %2423 = vmatprep.subr.mxu0 0.0
        %v2424 = vand.u32 %v363, 4294901760
        %v2425 = vsub.f32 %v363, %v2424
        %v2426 = vand.u32 %v2425, 4294901760
        %v2427 = vsub.f32 %v2425, %v2426
        %v2428 = vand.u32 %v2427, 4294901760
        %2429 = vmatpush1.msra.mxu0 %v2428
        %2430 = vmatprep.subr.mxu0 0.0
        %v2431 = vand.u32 %v364, 4294901760
        %v2432 = vsub.f32 %v364, %v2431
        %v2433 = vand.u32 %v2432, 4294901760
        %v2434 = vsub.f32 %v2432, %v2433
        %v2435 = vand.u32 %v2434, 4294901760
        %2436 = vmatpush1.msra.mxu0 %v2435
        %2437 = vmatprep.subr.mxu0 0.0
        %v2438 = vand.u32 %v365, 4294901760
        %v2439 = vsub.f32 %v365, %v2438
        %v2440 = vand.u32 %v2439, 4294901760
        %v2441 = vsub.f32 %v2439, %v2440
        %v2442 = vand.u32 %v2441, 4294901760
        %2443 = vmatpush1.msra.mxu0 %v2442
        %2444 = vmatprep.subr.mxu0 0.0
        %v2445 = vand.u32 %v366, 4294901760
        %v2446 = vsub.f32 %v366, %v2445
        %v2447 = vand.u32 %v2446, 4294901760
        %v2448 = vsub.f32 %v2446, %v2447
        %v2449 = vand.u32 %v2448, 4294901760
        %2450 = vmatpush1.msra.mxu0 %v2449
        %2451 = vmatprep.subr.mxu0 0.0
        %v2452 = vand.u32 %v367, 4294901760
        %v2453 = vsub.f32 %v367, %v2452
        %v2454 = vand.u32 %v2453, 4294901760
        %v2455 = vsub.f32 %v2453, %v2454
        %v2456 = vand.u32 %v2455, 4294901760
        %2457 = vmatpush1.msra.mxu0 %v2456
        %2458 = vmatprep.subr.mxu0 0.0
        %v2459 = vand.u32 %v368, 4294901760
        %v2460 = vsub.f32 %v368, %v2459
        %v2461 = vand.u32 %v2460, 4294901760
        %v2462 = vsub.f32 %v2460, %v2461
        %v2463 = vand.u32 %v2462, 4294901760
        %2464 = vmatpush1.msra.mxu0 %v2463
        %2465 = vmatprep.subr.mxu0 0.0
        %v2466 = vand.u32 %v369, 4294901760
        %v2467 = vsub.f32 %v369, %v2466
        %v2468 = vand.u32 %v2467, 4294901760
        %v2469 = vsub.f32 %v2467, %v2468
        %v2470 = vand.u32 %v2469, 4294901760
        %2471 = vmatpush1.msra.mxu0 %v2470
        %2472 = vmatprep.subr.mxu0 0.0
        %v2473 = vand.u32 %v370, 4294901760
        %v2474 = vsub.f32 %v370, %v2473
        %v2475 = vand.u32 %v2474, 4294901760
        %v2476 = vsub.f32 %v2474, %v2475
        %v2477 = vand.u32 %v2476, 4294901760
        %2478 = vmatpush1.msra.mxu0 %v2477
        %2479 = vmatprep.subr.mxu0 0.0
        %v2480 = vand.u32 %v371, 4294901760
        %v2481 = vsub.f32 %v371, %v2480
        %v2482 = vand.u32 %v2481, 4294901760
        %v2483 = vsub.f32 %v2481, %v2482
        %v2484 = vand.u32 %v2483, 4294901760
        %2485 = vmatpush1.msra.mxu0 %v2484
        %2486 = vmatprep.subr.mxu0 0.0
        %v2487 = vand.u32 %v372, 4294901760
        %v2488 = vsub.f32 %v372, %v2487
        %v2489 = vand.u32 %v2488, 4294901760
        %v2490 = vsub.f32 %v2488, %v2489
        %v2491 = vand.u32 %v2490, 4294901760
        %2492 = vmatpush1.msra.mxu0 %v2491
        %2493 = vmatprep.subr.mxu0 0.0
        %v2494 = vand.u32 %v373, 4294901760
        %v2495 = vsub.f32 %v373, %v2494
        %v2496 = vand.u32 %v2495, 4294901760
        %v2497 = vsub.f32 %v2495, %v2496
        %v2498 = vand.u32 %v2497, 4294901760
        %2499 = vmatpush1.msra.mxu0 %v2498
        %2500 = vmatprep.subr.mxu0 0.0
        %2501 = vmatpush1.msra.mxu0 0.0
        %2502 = vmatprep.subr.mxu0 0.0
        %2503 = vmatpush1.msra.mxu0 0.0
        %2504 = vmatprep.subr.mxu0 0.0
        %2505 = vmatpush1.msra.mxu0 0.0
        %2506 = vmatprep.subr.mxu0 0.0
        %2507 = vmatpush1.msra.mxu0 0.0
        %2508 = vmatprep.subr.mxu0 0.0
        %2509 = vmatpush1.msra.mxu0 0.0
        %2510 = vmatprep.subr.mxu0 0.0
        %2511 = vmatpush1.msra.mxu0 0.0
        %2512 = vmatprep.subr.mxu0 0.0
        %2513 = vmatpush1.msra.mxu0 0.0
        %2514 = vmatprep.subr.mxu0 0.0
        %2515 = vmatpush1.msra.mxu0 0.0
        %2516 = vmatprep.subr.mxu0 0.0
        %2517 = vmatpush1.msra.mxu0 0.0
        %2518 = vmatprep.subr.mxu0 0.0
        %2519 = vmatpush1.msra.mxu0 0.0
        %2520 = vmatprep.subr.mxu0 0.0
        %2521 = vmatpush1.msra.mxu0 0.0
        %2522 = vmatprep.subr.mxu0 0.0
        %2523 = vmatpush1.msra.mxu0 0.0
        %2524 = vmatprep.subr.mxu0 0.0
        %2525 = vmatpush1.msra.mxu0 0.0
        %2526 = vmatprep.subr.mxu0 0.0
        %2527 = vmatpush1.msra.mxu0 0.0
        %2528 = vmatprep.subr.mxu0 0.0
        %2529 = vmatpush1.msra.mxu0 0.0
        %2530 = vmatprep.subr.mxu0 0.0
        %2531 = vmatpush1.msra.mxu0 0.0
        %2532 = vmatprep.mubr.f32.mxu0 0.0
        %v2533 = vand.u32 %v2211, 4294901760
        %2534 = vmatmul.mubr.f32.gmra.mrb[0].mxu0 %v2533
        %v2535 = vpop.f32.mrb[0].mxu0
        %v2536 = vadd.f32 %v2315, %v2535
        %v2537 = vpop.f32.mrb[0].mxu0
        %2538 = vmatprep.mubr.f32.mxu0 0.0
        %v2539 = vand.u32 %v2212, 4294901760
        %2540 = vmatmul.mubr.f32.gmra.mrb[0].mxu0 %v2539
        %v2541 = vpop.f32.mrb[0].mxu0
        %v2542 = vadd.f32 %v2325, %v2541
        %v2543 = vpop.f32.mrb[0].mxu0
        %2544 = vmatprep.mubr.f32.mxu0 0.0
        %v2545 = vand.u32 %v2213, 4294901760
        %2546 = vmatmul.mubr.f32.gmra.mrb[0].mxu0 %v2545
        %v2547 = vpop.f32.mrb[0].mxu0
        %v2548 = vadd.f32 %v2335, %v2547
        %v2549 = vpop.f32.mrb[0].mxu0
        %2550 = vmatprep.mubr.f32.mxu0 0.0
        %v2551 = vand.u32 %v2214, 4294901760
        %2552 = vmatmul.mubr.f32.gmra.mrb[0].mxu0 %v2551
        %v2553 = vpop.f32.mrb[0].mxu0
        %v2554 = vadd.f32 %v2345, %v2553
        %v2555 = vpop.f32.mrb[0].mxu0
        %2556 = vmatprep.mubr.f32.mxu0 0.0
        %v2557 = vand.u32 %v2215, 4294901760
        %2558 = vmatmul.mubr.f32.gmra.mrb[0].mxu0 %v2557
        %v2559 = vpop.f32.mrb[0].mxu0
        %v2560 = vadd.f32 %v2355, %v2559
        %v2561 = vpop.f32.mrb[0].mxu0
        %2562 = vmatprep.mubr.f32.mxu0 0.0
        %v2563 = vand.u32 %v2216, 4294901760
        %2564 = vmatmul.mubr.f32.gmra.mrb[0].mxu0 %v2563
        %v2565 = vpop.f32.mrb[0].mxu0
        %v2566 = vadd.f32 %v2365, %v2565
        %v2567 = vpop.f32.mrb[0].mxu0
        %2568 = vmatprep.mubr.f32.mxu0 0.0
        %v2569 = vand.u32 %v2217, 4294901760
        %2570 = vmatmul.mubr.f32.gmra.mrb[0].mxu0 %v2569
        %v2571 = vpop.f32.mrb[0].mxu0
        %v2572 = vadd.f32 %v2375, %v2571
        %v2573 = vpop.f32.mrb[0].mxu0
        %2574 = vmatprep.mubr.f32.mxu0 0.0
        %v2575 = vand.u32 %v2218, 4294901760
        %2576 = vmatmul.mubr.f32.gmra.mrb[0].mxu0 %v2575
        %v2577 = vpop.f32.mrb[0].mxu0
        %v2578 = vadd.f32 %v2385, %v2577
        %v2579 = vpop.f32.mrb[0].mxu0
        %2580 = vdwg.mxu0
        %2581 = vmatprep.subr.mxu0 0.0
        %v2582 = vand.u32 %v358, 4294901760
        %v2583 = vsub.f32 %v358, %v2582
        %2584 = vmatpush1.msra.mxu0 %v2583
        %2585 = vmatprep.subr.mxu0 0.0
        %v2586 = vand.u32 %v359, 4294901760
        %v2587 = vsub.f32 %v359, %v2586
        %2588 = vmatpush1.msra.mxu0 %v2587
        %2589 = vmatprep.subr.mxu0 0.0
        %v2590 = vand.u32 %v360, 4294901760
        %v2591 = vsub.f32 %v360, %v2590
        %2592 = vmatpush1.msra.mxu0 %v2591
        %2593 = vmatprep.subr.mxu0 0.0
        %v2594 = vand.u32 %v361, 4294901760
        %v2595 = vsub.f32 %v361, %v2594
        %2596 = vmatpush1.msra.mxu0 %v2595
        %2597 = vmatprep.subr.mxu0 0.0
        %v2598 = vand.u32 %v362, 4294901760
        %v2599 = vsub.f32 %v362, %v2598
        %2600 = vmatpush1.msra.mxu0 %v2599
        %2601 = vmatprep.subr.mxu0 0.0
        %v2602 = vand.u32 %v363, 4294901760
        %v2603 = vsub.f32 %v363, %v2602
        %2604 = vmatpush1.msra.mxu0 %v2603
        %2605 = vmatprep.subr.mxu0 0.0
        %v2606 = vand.u32 %v364, 4294901760
        %v2607 = vsub.f32 %v364, %v2606
        %2608 = vmatpush1.msra.mxu0 %v2607
        %2609 = vmatprep.subr.mxu0 0.0
        %v2610 = vand.u32 %v365, 4294901760
        %v2611 = vsub.f32 %v365, %v2610
        %2612 = vmatpush1.msra.mxu0 %v2611
        %2613 = vmatprep.subr.mxu0 0.0
        %v2614 = vand.u32 %v366, 4294901760
        %v2615 = vsub.f32 %v366, %v2614
        %2616 = vmatpush1.msra.mxu0 %v2615
        %2617 = vmatprep.subr.mxu0 0.0
        %v2618 = vand.u32 %v367, 4294901760
        %v2619 = vsub.f32 %v367, %v2618
        %2620 = vmatpush1.msra.mxu0 %v2619
        %2621 = vmatprep.subr.mxu0 0.0
        %v2622 = vand.u32 %v368, 4294901760
        %v2623 = vsub.f32 %v368, %v2622
        %2624 = vmatpush1.msra.mxu0 %v2623
        %2625 = vmatprep.subr.mxu0 0.0
        %v2626 = vand.u32 %v369, 4294901760
        %v2627 = vsub.f32 %v369, %v2626
        %2628 = vmatpush1.msra.mxu0 %v2627
        %2629 = vmatprep.subr.mxu0 0.0
        %v2630 = vand.u32 %v370, 4294901760
        %v2631 = vsub.f32 %v370, %v2630
        %2632 = vmatpush1.msra.mxu0 %v2631
        %2633 = vmatprep.subr.mxu0 0.0
        %v2634 = vand.u32 %v371, 4294901760
        %v2635 = vsub.f32 %v371, %v2634
        %2636 = vmatpush1.msra.mxu0 %v2635
        %2637 = vmatprep.subr.mxu0 0.0
        %v2638 = vand.u32 %v372, 4294901760
        %v2639 = vsub.f32 %v372, %v2638
        %2640 = vmatpush1.msra.mxu0 %v2639
        %2641 = vmatprep.subr.mxu0 0.0
        %v2642 = vand.u32 %v373, 4294901760
        %v2643 = vsub.f32 %v373, %v2642
        %2644 = vmatpush1.msra.mxu0 %v2643
        %2645 = vmatprep.subr.mxu0 0.0
        %2646 = vmatpush1.msra.mxu0 0.0
        %2647 = vmatprep.subr.mxu0 0.0
        %2648 = vmatpush1.msra.mxu0 0.0
        %2649 = vmatprep.subr.mxu0 0.0
        %2650 = vmatpush1.msra.mxu0 0.0
        %2651 = vmatprep.subr.mxu0 0.0
        %2652 = vmatpush1.msra.mxu0 0.0
        %2653 = vmatprep.subr.mxu0 0.0
        %2654 = vmatpush1.msra.mxu0 0.0
        %2655 = vmatprep.subr.mxu0 0.0
        %2656 = vmatpush1.msra.mxu0 0.0
        %2657 = vmatprep.subr.mxu0 0.0
        %2658 = vmatpush1.msra.mxu0 0.0
        %2659 = vmatprep.subr.mxu0 0.0
        %2660 = vmatpush1.msra.mxu0 0.0
        %2661 = vmatprep.subr.mxu0 0.0
        %2662 = vmatpush1.msra.mxu0 0.0
        %2663 = vmatprep.subr.mxu0 0.0
        %2664 = vmatpush1.msra.mxu0 0.0
        %2665 = vmatprep.subr.mxu0 0.0
        %2666 = vmatpush1.msra.mxu0 0.0
        %2667 = vmatprep.subr.mxu0 0.0
        %2668 = vmatpush1.msra.mxu0 0.0
        %2669 = vmatprep.subr.mxu0 0.0
        %2670 = vmatpush1.msra.mxu0 0.0
        %2671 = vmatprep.subr.mxu0 0.0
        %2672 = vmatpush1.msra.mxu0 0.0
        %2673 = vmatprep.subr.mxu0 0.0
        %2674 = vmatpush1.msra.mxu0 0.0
        %2675 = vmatprep.subr.mxu0 0.0
        %2676 = vmatpush1.msra.mxu0 0.0
        %2677 = vmatprep.mubr.f32.mxu0 0.0
        %v2678 = vand.u32 %v2211, 4294901760
        %v2679 = vsub.f32 %v2211, %v2678
        %2680 = vmatmul.mubr.f32.gmra.mrb[0].mxu0 %v2679
        %v2681 = vpop.f32.mrb[0].mxu0
        %v2682 = vadd.f32 %v2536, %v2681
        %v2683 = vpop.f32.mrb[0].mxu0
        %2684 = vmatprep.mubr.f32.mxu0 0.0
        %v2685 = vand.u32 %v2212, 4294901760
        %v2686 = vsub.f32 %v2212, %v2685
        %2687 = vmatmul.mubr.f32.gmra.mrb[0].mxu0 %v2686
        %v2688 = vpop.f32.mrb[0].mxu0
        %v2689 = vadd.f32 %v2542, %v2688
        %v2690 = vpop.f32.mrb[0].mxu0
        %2691 = vmatprep.mubr.f32.mxu0 0.0
        %v2692 = vand.u32 %v2213, 4294901760
        %v2693 = vsub.f32 %v2213, %v2692
        %2694 = vmatmul.mubr.f32.gmra.mrb[0].mxu0 %v2693
        %v2695 = vpop.f32.mrb[0].mxu0
        %v2696 = vadd.f32 %v2548, %v2695
        %v2697 = vpop.f32.mrb[0].mxu0
        %2698 = vmatprep.mubr.f32.mxu0 0.0
        %v2699 = vand.u32 %v2214, 4294901760
        %v2700 = vsub.f32 %v2214, %v2699
        %2701 = vmatmul.mubr.f32.gmra.mrb[0].mxu0 %v2700
        %v2702 = vpop.f32.mrb[0].mxu0
        %v2703 = vadd.f32 %v2554, %v2702
        %v2704 = vpop.f32.mrb[0].mxu0
        %2705 = vmatprep.mubr.f32.mxu0 0.0
        %v2706 = vand.u32 %v2215, 4294901760
        %v2707 = vsub.f32 %v2215, %v2706
        %2708 = vmatmul.mubr.f32.gmra.mrb[0].mxu0 %v2707
        %v2709 = vpop.f32.mrb[0].mxu0
        %v2710 = vadd.f32 %v2560, %v2709
        %v2711 = vpop.f32.mrb[0].mxu0
        %2712 = vmatprep.mubr.f32.mxu0 0.0
        %v2713 = vand.u32 %v2216, 4294901760
        %v2714 = vsub.f32 %v2216, %v2713
        %2715 = vmatmul.mubr.f32.gmra.mrb[0].mxu0 %v2714
        %v2716 = vpop.f32.mrb[0].mxu0
        %v2717 = vadd.f32 %v2566, %v2716
        %v2718 = vpop.f32.mrb[0].mxu0
        %2719 = vmatprep.mubr.f32.mxu0 0.0
        %v2720 = vand.u32 %v2217, 4294901760
        %v2721 = vsub.f32 %v2217, %v2720
        %2722 = vmatmul.mubr.f32.gmra.mrb[0].mxu0 %v2721
        %v2723 = vpop.f32.mrb[0].mxu0
        %v2724 = vadd.f32 %v2572, %v2723
        %v2725 = vpop.f32.mrb[0].mxu0
        %2726 = vmatprep.mubr.f32.mxu0 0.0
        %v2727 = vand.u32 %v2218, 4294901760
        %v2728 = vsub.f32 %v2218, %v2727
        %2729 = vmatmul.mubr.f32.gmra.mrb[0].mxu0 %v2728
        %v2730 = vpop.f32.mrb[0].mxu0
        %v2731 = vadd.f32 %v2578, %v2730
        %v2732 = vpop.f32.mrb[0].mxu0
        %2733 = vdwg.mxu0
        %2734 = vmatprep.subr.mxu0 0.0
        %v2735 = vand.u32 %v358, 4294901760
        %2736 = vmatpush1.msra.mxu0 %v2735
        %2737 = vmatprep.subr.mxu0 0.0
        %v2738 = vand.u32 %v359, 4294901760
        %2739 = vmatpush1.msra.mxu0 %v2738
        %2740 = vmatprep.subr.mxu0 0.0
        %v2741 = vand.u32 %v360, 4294901760
        %2742 = vmatpush1.msra.mxu0 %v2741
        %2743 = vmatprep.subr.mxu0 0.0
        %v2744 = vand.u32 %v361, 4294901760
        %2745 = vmatpush1.msra.mxu0 %v2744
        %2746 = vmatprep.subr.mxu0 0.0
        %v2747 = vand.u32 %v362, 4294901760
        %2748 = vmatpush1.msra.mxu0 %v2747
        %2749 = vmatprep.subr.mxu0 0.0
        %v2750 = vand.u32 %v363, 4294901760
        %2751 = vmatpush1.msra.mxu0 %v2750
        %2752 = vmatprep.subr.mxu0 0.0
        %v2753 = vand.u32 %v364, 4294901760
        %2754 = vmatpush1.msra.mxu0 %v2753
        %2755 = vmatprep.subr.mxu0 0.0
        %v2756 = vand.u32 %v365, 4294901760
        %2757 = vmatpush1.msra.mxu0 %v2756
        %2758 = vmatprep.subr.mxu0 0.0
        %v2759 = vand.u32 %v366, 4294901760
        %2760 = vmatpush1.msra.mxu0 %v2759
        %2761 = vmatprep.subr.mxu0 0.0
        %v2762 = vand.u32 %v367, 4294901760
        %2763 = vmatpush1.msra.mxu0 %v2762
        %2764 = vmatprep.subr.mxu0 0.0
        %v2765 = vand.u32 %v368, 4294901760
        %2766 = vmatpush1.msra.mxu0 %v2765
        %2767 = vmatprep.subr.mxu0 0.0
        %v2768 = vand.u32 %v369, 4294901760
        %2769 = vmatpush1.msra.mxu0 %v2768
        %2770 = vmatprep.subr.mxu0 0.0
        %v2771 = vand.u32 %v370, 4294901760
        %2772 = vmatpush1.msra.mxu0 %v2771
        %2773 = vmatprep.subr.mxu0 0.0
        %v2774 = vand.u32 %v371, 4294901760
        %2775 = vmatpush1.msra.mxu0 %v2774
        %2776 = vmatprep.subr.mxu0 0.0
        %v2777 = vand.u32 %v372, 4294901760
        %2778 = vmatpush1.msra.mxu0 %v2777
        %2779 = vmatprep.subr.mxu0 0.0
        %v2780 = vand.u32 %v373, 4294901760
        %2781 = vmatpush1.msra.mxu0 %v2780
        %2782 = vmatprep.subr.mxu0 0.0
        %2783 = vmatpush1.msra.mxu0 0.0
        %2784 = vmatprep.subr.mxu0 0.0
        %2785 = vmatpush1.msra.mxu0 0.0
        %2786 = vmatprep.subr.mxu0 0.0
        %2787 = vmatpush1.msra.mxu0 0.0
        %2788 = vmatprep.subr.mxu0 0.0
        %2789 = vmatpush1.msra.mxu0 0.0
        %2790 = vmatprep.subr.mxu0 0.0
        %2791 = vmatpush1.msra.mxu0 0.0
        %2792 = vmatprep.subr.mxu0 0.0
        %2793 = vmatpush1.msra.mxu0 0.0
        %2794 = vmatprep.subr.mxu0 0.0
        %2795 = vmatpush1.msra.mxu0 0.0
        %2796 = vmatprep.subr.mxu0 0.0
        %2797 = vmatpush1.msra.mxu0 0.0
        %2798 = vmatprep.subr.mxu0 0.0
        %2799 = vmatpush1.msra.mxu0 0.0
        %2800 = vmatprep.subr.mxu0 0.0
        %2801 = vmatpush1.msra.mxu0 0.0
        %2802 = vmatprep.subr.mxu0 0.0
        %2803 = vmatpush1.msra.mxu0 0.0
        %2804 = vmatprep.subr.mxu0 0.0
        %2805 = vmatpush1.msra.mxu0 0.0
        %2806 = vmatprep.subr.mxu0 0.0
        %2807 = vmatpush1.msra.mxu0 0.0
        %2808 = vmatprep.subr.mxu0 0.0
        %2809 = vmatpush1.msra.mxu0 0.0
        %2810 = vmatprep.subr.mxu0 0.0
        %2811 = vmatpush1.msra.mxu0 0.0
        %2812 = vmatprep.subr.mxu0 0.0
        %2813 = vmatpush1.msra.mxu0 0.0
        %2814 = vmatprep.mubr.f32.mxu0 0.0
        %v2815 = vand.u32 %v2211, 4294901760
        %v2816 = vsub.f32 %v2211, %v2815
        %v2817 = vand.u32 %v2816, 4294901760
        %2818 = vmatmul.mubr.f32.gmra.mrb[0].mxu0 %v2817
        %v2819 = vpop.f32.mrb[0].mxu0
        %v2820 = vadd.f32 %v2682, %v2819
        %v2821 = vpop.f32.mrb[0].mxu0
        %2822 = vmatprep.mubr.f32.mxu0 0.0
        %v2823 = vand.u32 %v2212, 4294901760
        %v2824 = vsub.f32 %v2212, %v2823
        %v2825 = vand.u32 %v2824, 4294901760
        %2826 = vmatmul.mubr.f32.gmra.mrb[0].mxu0 %v2825
        %v2827 = vpop.f32.mrb[0].mxu0
        %v2828 = vadd.f32 %v2689, %v2827
        %v2829 = vpop.f32.mrb[0].mxu0
        %2830 = vmatprep.mubr.f32.mxu0 0.0
        %v2831 = vand.u32 %v2213, 4294901760
        %v2832 = vsub.f32 %v2213, %v2831
        %v2833 = vand.u32 %v2832, 4294901760
        %2834 = vmatmul.mubr.f32.gmra.mrb[0].mxu0 %v2833
        %v2835 = vpop.f32.mrb[0].mxu0
        %v2836 = vadd.f32 %v2696, %v2835
        %v2837 = vpop.f32.mrb[0].mxu0
        %2838 = vmatprep.mubr.f32.mxu0 0.0
        %v2839 = vand.u32 %v2214, 4294901760
        %v2840 = vsub.f32 %v2214, %v2839
        %v2841 = vand.u32 %v2840, 4294901760
        %2842 = vmatmul.mubr.f32.gmra.mrb[0].mxu0 %v2841
        %v2843 = vpop.f32.mrb[0].mxu0
        %v2844 = vadd.f32 %v2703, %v2843
        %v2845 = vpop.f32.mrb[0].mxu0
        %2846 = vmatprep.mubr.f32.mxu0 0.0
        %v2847 = vand.u32 %v2215, 4294901760
        %v2848 = vsub.f32 %v2215, %v2847
        %v2849 = vand.u32 %v2848, 4294901760
        %2850 = vmatmul.mubr.f32.gmra.mrb[0].mxu0 %v2849
        %v2851 = vpop.f32.mrb[0].mxu0
        %v2852 = vadd.f32 %v2710, %v2851
        %v2853 = vpop.f32.mrb[0].mxu0
        %2854 = vmatprep.mubr.f32.mxu0 0.0
        %v2855 = vand.u32 %v2216, 4294901760
        %v2856 = vsub.f32 %v2216, %v2855
        %v2857 = vand.u32 %v2856, 4294901760
        %2858 = vmatmul.mubr.f32.gmra.mrb[0].mxu0 %v2857
        %v2859 = vpop.f32.mrb[0].mxu0
        %v2860 = vadd.f32 %v2717, %v2859
        %v2861 = vpop.f32.mrb[0].mxu0
        %2862 = vmatprep.mubr.f32.mxu0 0.0
        %v2863 = vand.u32 %v2217, 4294901760
        %v2864 = vsub.f32 %v2217, %v2863
        %v2865 = vand.u32 %v2864, 4294901760
        %2866 = vmatmul.mubr.f32.gmra.mrb[0].mxu0 %v2865
        %v2867 = vpop.f32.mrb[0].mxu0
        %v2868 = vadd.f32 %v2724, %v2867
        %v2869 = vpop.f32.mrb[0].mxu0
        %2870 = vmatprep.mubr.f32.mxu0 0.0
        %v2871 = vand.u32 %v2218, 4294901760
        %v2872 = vsub.f32 %v2218, %v2871
        %v2873 = vand.u32 %v2872, 4294901760
        %2874 = vmatmul.mubr.f32.gmra.mrb[0].mxu0 %v2873
        %v2875 = vpop.f32.mrb[0].mxu0
        %v2876 = vadd.f32 %v2731, %v2875
        %v2877 = vpop.f32.mrb[0].mxu0
        %2878 = vdwg.mxu0
        %2879 = vmatprep.subr.mxu0 0.0
        %v2880 = vand.u32 %v358, 4294901760
        %v2881 = vsub.f32 %v358, %v2880
        %v2882 = vand.u32 %v2881, 4294901760
        %2883 = vmatpush1.msra.mxu0 %v2882
        %2884 = vmatprep.subr.mxu0 0.0
        %v2885 = vand.u32 %v359, 4294901760
        %v2886 = vsub.f32 %v359, %v2885
        %v2887 = vand.u32 %v2886, 4294901760
        %2888 = vmatpush1.msra.mxu0 %v2887
        %2889 = vmatprep.subr.mxu0 0.0
        %v2890 = vand.u32 %v360, 4294901760
        %v2891 = vsub.f32 %v360, %v2890
        %v2892 = vand.u32 %v2891, 4294901760
        %2893 = vmatpush1.msra.mxu0 %v2892
        %2894 = vmatprep.subr.mxu0 0.0
        %v2895 = vand.u32 %v361, 4294901760
        %v2896 = vsub.f32 %v361, %v2895
        %v2897 = vand.u32 %v2896, 4294901760
        %2898 = vmatpush1.msra.mxu0 %v2897
        %2899 = vmatprep.subr.mxu0 0.0
        %v2900 = vand.u32 %v362, 4294901760
        %v2901 = vsub.f32 %v362, %v2900
        %v2902 = vand.u32 %v2901, 4294901760
        %2903 = vmatpush1.msra.mxu0 %v2902
        %2904 = vmatprep.subr.mxu0 0.0
        %v2905 = vand.u32 %v363, 4294901760
        %v2906 = vsub.f32 %v363, %v2905
        %v2907 = vand.u32 %v2906, 4294901760
        %2908 = vmatpush1.msra.mxu0 %v2907
        %2909 = vmatprep.subr.mxu0 0.0
        %v2910 = vand.u32 %v364, 4294901760
        %v2911 = vsub.f32 %v364, %v2910
        %v2912 = vand.u32 %v2911, 4294901760
        %2913 = vmatpush1.msra.mxu0 %v2912
        %2914 = vmatprep.subr.mxu0 0.0
        %v2915 = vand.u32 %v365, 4294901760
        %v2916 = vsub.f32 %v365, %v2915
        %v2917 = vand.u32 %v2916, 4294901760
        %2918 = vmatpush1.msra.mxu0 %v2917
        %2919 = vmatprep.subr.mxu0 0.0
        %v2920 = vand.u32 %v366, 4294901760
        %v2921 = vsub.f32 %v366, %v2920
        %v2922 = vand.u32 %v2921, 4294901760
        %2923 = vmatpush1.msra.mxu0 %v2922
        %2924 = vmatprep.subr.mxu0 0.0
        %v2925 = vand.u32 %v367, 4294901760
        %v2926 = vsub.f32 %v367, %v2925
        %v2927 = vand.u32 %v2926, 4294901760
        %2928 = vmatpush1.msra.mxu0 %v2927
        %2929 = vmatprep.subr.mxu0 0.0
        %v2930 = vand.u32 %v368, 4294901760
        %v2931 = vsub.f32 %v368, %v2930
        %v2932 = vand.u32 %v2931, 4294901760
        %2933 = vmatpush1.msra.mxu0 %v2932
        %2934 = vmatprep.subr.mxu0 0.0
        %v2935 = vand.u32 %v369, 4294901760
        %v2936 = vsub.f32 %v369, %v2935
        %v2937 = vand.u32 %v2936, 4294901760
        %2938 = vmatpush1.msra.mxu0 %v2937
        %2939 = vmatprep.subr.mxu0 0.0
        %v2940 = vand.u32 %v370, 4294901760
        %v2941 = vsub.f32 %v370, %v2940
        %v2942 = vand.u32 %v2941, 4294901760
        %2943 = vmatpush1.msra.mxu0 %v2942
        %2944 = vmatprep.subr.mxu0 0.0
        %v2945 = vand.u32 %v371, 4294901760
        %v2946 = vsub.f32 %v371, %v2945
        %v2947 = vand.u32 %v2946, 4294901760
        %2948 = vmatpush1.msra.mxu0 %v2947
        %2949 = vmatprep.subr.mxu0 0.0
        %v2950 = vand.u32 %v372, 4294901760
        %v2951 = vsub.f32 %v372, %v2950
        %v2952 = vand.u32 %v2951, 4294901760
        %2953 = vmatpush1.msra.mxu0 %v2952
        %2954 = vmatprep.subr.mxu0 0.0
        %v2955 = vand.u32 %v373, 4294901760
        %v2956 = vsub.f32 %v373, %v2955
        %v2957 = vand.u32 %v2956, 4294901760
        %2958 = vmatpush1.msra.mxu0 %v2957
        %2959 = vmatprep.subr.mxu0 0.0
        %2960 = vmatpush1.msra.mxu0 0.0
        %2961 = vmatprep.subr.mxu0 0.0
        %2962 = vmatpush1.msra.mxu0 0.0
        %2963 = vmatprep.subr.mxu0 0.0
        %2964 = vmatpush1.msra.mxu0 0.0
        %2965 = vmatprep.subr.mxu0 0.0
        %2966 = vmatpush1.msra.mxu0 0.0
        %2967 = vmatprep.subr.mxu0 0.0
        %2968 = vmatpush1.msra.mxu0 0.0
        %2969 = vmatprep.subr.mxu0 0.0
        %2970 = vmatpush1.msra.mxu0 0.0
        %2971 = vmatprep.subr.mxu0 0.0
        %2972 = vmatpush1.msra.mxu0 0.0
        %2973 = vmatprep.subr.mxu0 0.0
        %2974 = vmatpush1.msra.mxu0 0.0
        %2975 = vmatprep.subr.mxu0 0.0
        %2976 = vmatpush1.msra.mxu0 0.0
        %2977 = vmatprep.subr.mxu0 0.0
        %2978 = vmatpush1.msra.mxu0 0.0
        %2979 = vmatprep.subr.mxu0 0.0
        %2980 = vmatpush1.msra.mxu0 0.0
        %2981 = vmatprep.subr.mxu0 0.0
        %2982 = vmatpush1.msra.mxu0 0.0
        %2983 = vmatprep.subr.mxu0 0.0
        %2984 = vmatpush1.msra.mxu0 0.0
        %2985 = vmatprep.subr.mxu0 0.0
        %2986 = vmatpush1.msra.mxu0 0.0
        %2987 = vmatprep.subr.mxu0 0.0
        %2988 = vmatpush1.msra.mxu0 0.0
        %2989 = vmatprep.subr.mxu0 0.0
        %2990 = vmatpush1.msra.mxu0 0.0
        %2991 = vmatprep.mubr.f32.mxu0 0.0
        %v2992 = vand.u32 %v2211, 4294901760
        %2993 = vmatmul.mubr.f32.gmra.mrb[0].mxu0 %v2992
        %v2994 = vpop.f32.mrb[0].mxu0
        %v2995 = vadd.f32 %v2820, %v2994
        %v2996 = vpop.f32.mrb[0].mxu0
        %2997 = vmatprep.mubr.f32.mxu0 0.0
        %v2998 = vand.u32 %v2212, 4294901760
        %2999 = vmatmul.mubr.f32.gmra.mrb[0].mxu0 %v2998
        %v3000 = vpop.f32.mrb[0].mxu0
        %v3001 = vadd.f32 %v2828, %v3000
        %v3002 = vpop.f32.mrb[0].mxu0
        %3003 = vmatprep.mubr.f32.mxu0 0.0
        %v3004 = vand.u32 %v2213, 4294901760
        %3005 = vmatmul.mubr.f32.gmra.mrb[0].mxu0 %v3004
        %v3006 = vpop.f32.mrb[0].mxu0
        %v3007 = vadd.f32 %v2836, %v3006
        %v3008 = vpop.f32.mrb[0].mxu0
        %3009 = vmatprep.mubr.f32.mxu0 0.0
        %v3010 = vand.u32 %v2214, 4294901760
        %3011 = vmatmul.mubr.f32.gmra.mrb[0].mxu0 %v3010
        %v3012 = vpop.f32.mrb[0].mxu0
        %v3013 = vadd.f32 %v2844, %v3012
        %v3014 = vpop.f32.mrb[0].mxu0
        %3015 = vmatprep.mubr.f32.mxu0 0.0
        %v3016 = vand.u32 %v2215, 4294901760
        %3017 = vmatmul.mubr.f32.gmra.mrb[0].mxu0 %v3016
        %v3018 = vpop.f32.mrb[0].mxu0
        %v3019 = vadd.f32 %v2852, %v3018
        %v3020 = vpop.f32.mrb[0].mxu0
        %3021 = vmatprep.mubr.f32.mxu0 0.0
        %v3022 = vand.u32 %v2216, 4294901760
        %3023 = vmatmul.mubr.f32.gmra.mrb[0].mxu0 %v3022
        %v3024 = vpop.f32.mrb[0].mxu0
        %v3025 = vadd.f32 %v2860, %v3024
        %v3026 = vpop.f32.mrb[0].mxu0
        %3027 = vmatprep.mubr.f32.mxu0 0.0
        %v3028 = vand.u32 %v2217, 4294901760
        %3029 = vmatmul.mubr.f32.gmra.mrb[0].mxu0 %v3028
        %v3030 = vpop.f32.mrb[0].mxu0
        %v3031 = vadd.f32 %v2868, %v3030
        %v3032 = vpop.f32.mrb[0].mxu0
        %3033 = vmatprep.mubr.f32.mxu0 0.0
        %v3034 = vand.u32 %v2218, 4294901760
        %3035 = vmatmul.mubr.f32.gmra.mrb[0].mxu0 %v3034
        %v3036 = vpop.f32.mrb[0].mxu0
        %v3037 = vadd.f32 %v2876, %v3036
        %v3038 = vpop.f32.mrb[0].mxu0
        %3039 = vdwg.mxu0
        %3040 = vmatprep.subr.mxu0 0.0
        %v3041 = vand.u32 %v358, 4294901760
        %3042 = vmatpush1.msra.mxu0 %v3041
        %3043 = vmatprep.subr.mxu0 0.0
        %v3044 = vand.u32 %v359, 4294901760
        %3045 = vmatpush1.msra.mxu0 %v3044
        %3046 = vmatprep.subr.mxu0 0.0
        %v3047 = vand.u32 %v360, 4294901760
        %3048 = vmatpush1.msra.mxu0 %v3047
        %3049 = vmatprep.subr.mxu0 0.0
        %v3050 = vand.u32 %v361, 4294901760
        %3051 = vmatpush1.msra.mxu0 %v3050
        %3052 = vmatprep.subr.mxu0 0.0
        %v3053 = vand.u32 %v362, 4294901760
        %3054 = vmatpush1.msra.mxu0 %v3053
        %3055 = vmatprep.subr.mxu0 0.0
        %v3056 = vand.u32 %v363, 4294901760
        %3057 = vmatpush1.msra.mxu0 %v3056
        %3058 = vmatprep.subr.mxu0 0.0
        %v3059 = vand.u32 %v364, 4294901760
        %3060 = vmatpush1.msra.mxu0 %v3059
        %3061 = vmatprep.subr.mxu0 0.0
        %v3062 = vand.u32 %v365, 4294901760
        %3063 = vmatpush1.msra.mxu0 %v3062
        %3064 = vmatprep.subr.mxu0 0.0
        %v3065 = vand.u32 %v366, 4294901760
        %3066 = vmatpush1.msra.mxu0 %v3065
        %3067 = vmatprep.subr.mxu0 0.0
        %v3068 = vand.u32 %v367, 4294901760
        %3069 = vmatpush1.msra.mxu0 %v3068
        %3070 = vmatprep.subr.mxu0 0.0
        %v3071 = vand.u32 %v368, 4294901760
        %3072 = vmatpush1.msra.mxu0 %v3071
        %3073 = vmatprep.subr.mxu0 0.0
        %v3074 = vand.u32 %v369, 4294901760
        %3075 = vmatpush1.msra.mxu0 %v3074
        %3076 = vmatprep.subr.mxu0 0.0
        %v3077 = vand.u32 %v370, 4294901760
        %3078 = vmatpush1.msra.mxu0 %v3077
        %3079 = vmatprep.subr.mxu0 0.0
        %v3080 = vand.u32 %v371, 4294901760
        %3081 = vmatpush1.msra.mxu0 %v3080
        %3082 = vmatprep.subr.mxu0 0.0
        %v3083 = vand.u32 %v372, 4294901760
        %3084 = vmatpush1.msra.mxu0 %v3083
        %3085 = vmatprep.subr.mxu0 0.0
        %v3086 = vand.u32 %v373, 4294901760
        %3087 = vmatpush1.msra.mxu0 %v3086
        %3088 = vmatprep.subr.mxu0 0.0
        %3089 = vmatpush1.msra.mxu0 0.0
        %3090 = vmatprep.subr.mxu0 0.0
        %3091 = vmatpush1.msra.mxu0 0.0
        %3092 = vmatprep.subr.mxu0 0.0
        %3093 = vmatpush1.msra.mxu0 0.0
        %3094 = vmatprep.subr.mxu0 0.0
        %3095 = vmatpush1.msra.mxu0 0.0
        %3096 = vmatprep.subr.mxu0 0.0
        %3097 = vmatpush1.msra.mxu0 0.0
        %3098 = vmatprep.subr.mxu0 0.0
        %3099 = vmatpush1.msra.mxu0 0.0
        %3100 = vmatprep.subr.mxu0 0.0
        %3101 = vmatpush1.msra.mxu0 0.0
        %3102 = vmatprep.subr.mxu0 0.0
        %3103 = vmatpush1.msra.mxu0 0.0
        %3104 = vmatprep.subr.mxu0 0.0
        %3105 = vmatpush1.msra.mxu0 0.0
        %3106 = vmatprep.subr.mxu0 0.0
        %3107 = vmatpush1.msra.mxu0 0.0
        %3108 = vmatprep.subr.mxu0 0.0
        %3109 = vmatpush1.msra.mxu0 0.0
        %3110 = vmatprep.subr.mxu0 0.0
        %3111 = vmatpush1.msra.mxu0 0.0
        %3112 = vmatprep.subr.mxu0 0.0
        %3113 = vmatpush1.msra.mxu0 0.0
        %3114 = vmatprep.subr.mxu0 0.0
        %3115 = vmatpush1.msra.mxu0 0.0
        %3116 = vmatprep.subr.mxu0 0.0
        %3117 = vmatpush1.msra.mxu0 0.0
        %3118 = vmatprep.subr.mxu0 0.0
        %3119 = vmatpush1.msra.mxu0 0.0
        %3120 = vmatprep.mubr.f32.mxu0 0.0
        %v3121 = vand.u32 %v2211, 4294901760
        %3122 = vmatmul.mubr.f32.gmra.mrb[0].mxu0 %v3121
        %v3123 = vpop.f32.mrb[0].mxu0
        %v3124 = vadd.f32 %v2995, %v3123
        %v3125 = vpop.f32.mrb[0].mxu0
        %3126 = vmatprep.mubr.f32.mxu0 0.0
        %v3127 = vand.u32 %v2212, 4294901760
        %3128 = vmatmul.mubr.f32.gmra.mrb[0].mxu0 %v3127
        %v3129 = vpop.f32.mrb[0].mxu0
        %v3130 = vadd.f32 %v3001, %v3129
        %v3131 = vpop.f32.mrb[0].mxu0
        %3132 = vmatprep.mubr.f32.mxu0 0.0
        %v3133 = vand.u32 %v2213, 4294901760
        %3134 = vmatmul.mubr.f32.gmra.mrb[0].mxu0 %v3133
        %v3135 = vpop.f32.mrb[0].mxu0
        %v3136 = vadd.f32 %v3007, %v3135
        %v3137 = vpop.f32.mrb[0].mxu0
        %3138 = vmatprep.mubr.f32.mxu0 0.0
        %v3139 = vand.u32 %v2214, 4294901760
        %3140 = vmatmul.mubr.f32.gmra.mrb[0].mxu0 %v3139
        %v3141 = vpop.f32.mrb[0].mxu0
        %v3142 = vadd.f32 %v3013, %v3141
        %v3143 = vpop.f32.mrb[0].mxu0
        %3144 = vmatprep.mubr.f32.mxu0 0.0
        %v3145 = vand.u32 %v2215, 4294901760
        %3146 = vmatmul.mubr.f32.gmra.mrb[0].mxu0 %v3145
        %v3147 = vpop.f32.mrb[0].mxu0
        %v3148 = vadd.f32 %v3019, %v3147
        %v3149 = vpop.f32.mrb[0].mxu0
        %3150 = vmatprep.mubr.f32.mxu0 0.0
        %v3151 = vand.u32 %v2216, 4294901760
        %3152 = vmatmul.mubr.f32.gmra.mrb[0].mxu0 %v3151
        %v3153 = vpop.f32.mrb[0].mxu0
        %v3154 = vadd.f32 %v3025, %v3153
        %v3155 = vpop.f32.mrb[0].mxu0
        %3156 = vmatprep.mubr.f32.mxu0 0.0
        %v3157 = vand.u32 %v2217, 4294901760
        %3158 = vmatmul.mubr.f32.gmra.mrb[0].mxu0 %v3157
        %v3159 = vpop.f32.mrb[0].mxu0
        %v3160 = vadd.f32 %v3031, %v3159
        %v3161 = vpop.f32.mrb[0].mxu0
        %3162 = vmatprep.mubr.f32.mxu0 0.0
        %v3163 = vand.u32 %v2218, 4294901760
        %3164 = vmatmul.mubr.f32.gmra.mrb[0].mxu0 %v3163
        %v3165 = vpop.f32.mrb[0].mxu0
        %v3166 = vadd.f32 %v3037, %v3165
        %v3167 = vpop.f32.mrb[0].mxu0
        %3168 = vdwg.mxu0
        %v3170 = vsel %vm1348, %v350, 0
        %v3173 = vsel %vm1348, %v351, 0
        %v3176 = vsel %vm1348, %v352, 0
        %v3179 = vsel %vm1348, %v353, 0
        %v3182 = vsel %vm1348, %v354, 0
        %v3185 = vsel %vm1348, %v355, 0
        %v3188 = vsel %vm1348, %v356, 0
        %v3191 = vsel %vm1348, %v357, 0
        %3193 = vmatprep.subr.mxu0 0.0
        %v3194 = vand.u32 %v3124, 4294901760
        %3195 = vmatpush1.msra.mxu0 %v3194
        %3196 = vmatprep.subr.mxu0 0.0
        %v3197 = vand.u32 %v3130, 4294901760
        %3198 = vmatpush1.msra.mxu0 %v3197
        %3199 = vmatprep.subr.mxu0 0.0
        %v3200 = vand.u32 %v3136, 4294901760
        %3201 = vmatpush1.msra.mxu0 %v3200
        %3202 = vmatprep.subr.mxu0 0.0
        %v3203 = vand.u32 %v3142, 4294901760
        %3204 = vmatpush1.msra.mxu0 %v3203
        %3205 = vmatprep.subr.mxu0 0.0
        %v3206 = vand.u32 %v3148, 4294901760
        %3207 = vmatpush1.msra.mxu0 %v3206
        %3208 = vmatprep.subr.mxu0 0.0
        %v3209 = vand.u32 %v3154, 4294901760
        %3210 = vmatpush1.msra.mxu0 %v3209
        %3211 = vmatprep.subr.mxu0 0.0
        %v3212 = vand.u32 %v3160, 4294901760
        %3213 = vmatpush1.msra.mxu0 %v3212
        %3214 = vmatprep.subr.mxu0 0.0
        %v3215 = vand.u32 %v3166, 4294901760
        %3216 = vmatpush1.msra.mxu0 %v3215
        %3217 = vmatprep.subr.mxu0 0.0
        %3218 = vmatpush1.msra.mxu0 0.0
        %3219 = vmatprep.subr.mxu0 0.0
        %3220 = vmatpush1.msra.mxu0 0.0
        %3221 = vmatprep.subr.mxu0 0.0
        %3222 = vmatpush1.msra.mxu0 0.0
        %3223 = vmatprep.subr.mxu0 0.0
        %3224 = vmatpush1.msra.mxu0 0.0
        %3225 = vmatprep.subr.mxu0 0.0
        %3226 = vmatpush1.msra.mxu0 0.0
        %3227 = vmatprep.subr.mxu0 0.0
        %3228 = vmatpush1.msra.mxu0 0.0
        %3229 = vmatprep.subr.mxu0 0.0
        %3230 = vmatpush1.msra.mxu0 0.0
        %3231 = vmatprep.subr.mxu0 0.0
        %3232 = vmatpush1.msra.mxu0 0.0
        %3233 = vmatprep.subr.mxu0 0.0
        %3234 = vmatpush1.msra.mxu0 0.0
        %3235 = vmatprep.subr.mxu0 0.0
        %3236 = vmatpush1.msra.mxu0 0.0
        %3237 = vmatprep.subr.mxu0 0.0
        %3238 = vmatpush1.msra.mxu0 0.0
        %3239 = vmatprep.subr.mxu0 0.0
        %3240 = vmatpush1.msra.mxu0 0.0
        %3241 = vmatprep.subr.mxu0 0.0
        %3242 = vmatpush1.msra.mxu0 0.0
        %3243 = vmatprep.subr.mxu0 0.0
        %3244 = vmatpush1.msra.mxu0 0.0
        %3245 = vmatprep.subr.mxu0 0.0
        %3246 = vmatpush1.msra.mxu0 0.0
        %3247 = vmatprep.subr.mxu0 0.0
        %3248 = vmatpush1.msra.mxu0 0.0
        %3249 = vmatprep.subr.mxu0 0.0
        %3250 = vmatpush1.msra.mxu0 0.0
        %3251 = vmatprep.subr.mxu0 0.0
        %3252 = vmatpush1.msra.mxu0 0.0
        %3253 = vmatprep.subr.mxu0 0.0
        %3254 = vmatpush1.msra.mxu0 0.0
        %3255 = vmatprep.subr.mxu0 0.0
        %3256 = vmatpush1.msra.mxu0 0.0
        %3257 = vmatprep.subr.mxu0 0.0
        %3258 = vmatpush1.msra.mxu0 0.0
        %3259 = vmatprep.subr.mxu0 0.0
        %3260 = vmatpush1.msra.mxu0 0.0
        %3261 = vmatprep.subr.mxu0 0.0
        %3262 = vmatpush1.msra.mxu0 0.0
        %3263 = vmatprep.subr.mxu0 0.0
        %3264 = vmatpush1.msra.mxu0 0.0
        %3265 = vmatprep.mubr.f32.mxu0 0.0
        %v3266 = vand.u32 %v3170, 4294901760
        %v3267 = vsub.f32 %v3170, %v3266
        %v3268 = vand.u32 %v3267, 4294901760
        %v3269 = vsub.f32 %v3267, %v3268
        %v3270 = vand.u32 %v3269, 4294901760
        %3271 = vmatmul.mubr.f32.gmra.mrb[0].mxu0 %v3270
        %v3272 = vpop.f32.mrb[0].mxu0
        %v3273 = vadd.f32 0.0, %v3272
        %v3274 = vpop.f32.mrb[0].mxu0
        %3275 = vmatprep.mubr.f32.mxu0 0.0
        %v3276 = vand.u32 %v3173, 4294901760
        %v3277 = vsub.f32 %v3173, %v3276
        %v3278 = vand.u32 %v3277, 4294901760
        %v3279 = vsub.f32 %v3277, %v3278
        %v3280 = vand.u32 %v3279, 4294901760
        %3281 = vmatmul.mubr.f32.gmra.mrb[0].mxu0 %v3280
        %v3282 = vpop.f32.mrb[0].mxu0
        %v3283 = vadd.f32 0.0, %v3282
        %v3284 = vpop.f32.mrb[0].mxu0
        %3285 = vmatprep.mubr.f32.mxu0 0.0
        %v3286 = vand.u32 %v3176, 4294901760
        %v3287 = vsub.f32 %v3176, %v3286
        %v3288 = vand.u32 %v3287, 4294901760
        %v3289 = vsub.f32 %v3287, %v3288
        %v3290 = vand.u32 %v3289, 4294901760
        %3291 = vmatmul.mubr.f32.gmra.mrb[0].mxu0 %v3290
        %v3292 = vpop.f32.mrb[0].mxu0
        %v3293 = vadd.f32 0.0, %v3292
        %v3294 = vpop.f32.mrb[0].mxu0
        %3295 = vmatprep.mubr.f32.mxu0 0.0
        %v3296 = vand.u32 %v3179, 4294901760
        %v3297 = vsub.f32 %v3179, %v3296
        %v3298 = vand.u32 %v3297, 4294901760
        %v3299 = vsub.f32 %v3297, %v3298
        %v3300 = vand.u32 %v3299, 4294901760
        %3301 = vmatmul.mubr.f32.gmra.mrb[0].mxu0 %v3300
        %v3302 = vpop.f32.mrb[0].mxu0
        %v3303 = vadd.f32 0.0, %v3302
        %v3304 = vpop.f32.mrb[0].mxu0
        %3305 = vmatprep.mubr.f32.mxu0 0.0
        %v3306 = vand.u32 %v3182, 4294901760
        %v3307 = vsub.f32 %v3182, %v3306
        %v3308 = vand.u32 %v3307, 4294901760
        %v3309 = vsub.f32 %v3307, %v3308
        %v3310 = vand.u32 %v3309, 4294901760
        %3311 = vmatmul.mubr.f32.gmra.mrb[0].mxu0 %v3310
        %v3312 = vpop.f32.mrb[0].mxu0
        %v3313 = vadd.f32 0.0, %v3312
        %v3314 = vpop.f32.mrb[0].mxu0
        %3315 = vmatprep.mubr.f32.mxu0 0.0
        %v3316 = vand.u32 %v3185, 4294901760
        %v3317 = vsub.f32 %v3185, %v3316
        %v3318 = vand.u32 %v3317, 4294901760
        %v3319 = vsub.f32 %v3317, %v3318
        %v3320 = vand.u32 %v3319, 4294901760
        %3321 = vmatmul.mubr.f32.gmra.mrb[0].mxu0 %v3320
        %v3322 = vpop.f32.mrb[0].mxu0
        %v3323 = vadd.f32 0.0, %v3322
        %v3324 = vpop.f32.mrb[0].mxu0
        %3325 = vmatprep.mubr.f32.mxu0 0.0
        %v3326 = vand.u32 %v3188, 4294901760
        %v3327 = vsub.f32 %v3188, %v3326
        %v3328 = vand.u32 %v3327, 4294901760
        %v3329 = vsub.f32 %v3327, %v3328
        %v3330 = vand.u32 %v3329, 4294901760
        %3331 = vmatmul.mubr.f32.gmra.mrb[0].mxu0 %v3330
        %v3332 = vpop.f32.mrb[0].mxu0
        %v3333 = vadd.f32 0.0, %v3332
        %v3334 = vpop.f32.mrb[0].mxu0
        %3335 = vmatprep.mubr.f32.mxu0 0.0
        %v3336 = vand.u32 %v3191, 4294901760
        %v3337 = vsub.f32 %v3191, %v3336
        %v3338 = vand.u32 %v3337, 4294901760
        %v3339 = vsub.f32 %v3337, %v3338
        %v3340 = vand.u32 %v3339, 4294901760
        %3341 = vmatmul.mubr.f32.gmra.mrb[0].mxu0 %v3340
        %v3342 = vpop.f32.mrb[0].mxu0
        %v3343 = vadd.f32 0.0, %v3342
        %v3344 = vpop.f32.mrb[0].mxu0
        %3345 = vdwg.mxu0
        %3346 = vmatprep.subr.mxu0 0.0
        %v3347 = vand.u32 %v3124, 4294901760
        %v3348 = vsub.f32 %v3124, %v3347
        %v3349 = vand.u32 %v3348, 4294901760
        %v3350 = vsub.f32 %v3348, %v3349
        %v3351 = vand.u32 %v3350, 4294901760
        %3352 = vmatpush1.msra.mxu0 %v3351
        %3353 = vmatprep.subr.mxu0 0.0
        %v3354 = vand.u32 %v3130, 4294901760
        %v3355 = vsub.f32 %v3130, %v3354
        %v3356 = vand.u32 %v3355, 4294901760
        %v3357 = vsub.f32 %v3355, %v3356
        %v3358 = vand.u32 %v3357, 4294901760
        %3359 = vmatpush1.msra.mxu0 %v3358
        %3360 = vmatprep.subr.mxu0 0.0
        %v3361 = vand.u32 %v3136, 4294901760
        %v3362 = vsub.f32 %v3136, %v3361
        %v3363 = vand.u32 %v3362, 4294901760
        %v3364 = vsub.f32 %v3362, %v3363
        %v3365 = vand.u32 %v3364, 4294901760
        %3366 = vmatpush1.msra.mxu0 %v3365
        %3367 = vmatprep.subr.mxu0 0.0
        %v3368 = vand.u32 %v3142, 4294901760
        %v3369 = vsub.f32 %v3142, %v3368
        %v3370 = vand.u32 %v3369, 4294901760
        %v3371 = vsub.f32 %v3369, %v3370
        %v3372 = vand.u32 %v3371, 4294901760
        %3373 = vmatpush1.msra.mxu0 %v3372
        %3374 = vmatprep.subr.mxu0 0.0
        %v3375 = vand.u32 %v3148, 4294901760
        %v3376 = vsub.f32 %v3148, %v3375
        %v3377 = vand.u32 %v3376, 4294901760
        %v3378 = vsub.f32 %v3376, %v3377
        %v3379 = vand.u32 %v3378, 4294901760
        %3380 = vmatpush1.msra.mxu0 %v3379
        %3381 = vmatprep.subr.mxu0 0.0
        %v3382 = vand.u32 %v3154, 4294901760
        %v3383 = vsub.f32 %v3154, %v3382
        %v3384 = vand.u32 %v3383, 4294901760
        %v3385 = vsub.f32 %v3383, %v3384
        %v3386 = vand.u32 %v3385, 4294901760
        %3387 = vmatpush1.msra.mxu0 %v3386
        %3388 = vmatprep.subr.mxu0 0.0
        %v3389 = vand.u32 %v3160, 4294901760
        %v3390 = vsub.f32 %v3160, %v3389
        %v3391 = vand.u32 %v3390, 4294901760
        %v3392 = vsub.f32 %v3390, %v3391
        %v3393 = vand.u32 %v3392, 4294901760
        %3394 = vmatpush1.msra.mxu0 %v3393
        %3395 = vmatprep.subr.mxu0 0.0
        %v3396 = vand.u32 %v3166, 4294901760
        %v3397 = vsub.f32 %v3166, %v3396
        %v3398 = vand.u32 %v3397, 4294901760
        %v3399 = vsub.f32 %v3397, %v3398
        %v3400 = vand.u32 %v3399, 4294901760
        %3401 = vmatpush1.msra.mxu0 %v3400
        %3402 = vmatprep.subr.mxu0 0.0
        %3403 = vmatpush1.msra.mxu0 0.0
        %3404 = vmatprep.subr.mxu0 0.0
        %3405 = vmatpush1.msra.mxu0 0.0
        %3406 = vmatprep.subr.mxu0 0.0
        %3407 = vmatpush1.msra.mxu0 0.0
        %3408 = vmatprep.subr.mxu0 0.0
        %3409 = vmatpush1.msra.mxu0 0.0
        %3410 = vmatprep.subr.mxu0 0.0
        %3411 = vmatpush1.msra.mxu0 0.0
        %3412 = vmatprep.subr.mxu0 0.0
        %3413 = vmatpush1.msra.mxu0 0.0
        %3414 = vmatprep.subr.mxu0 0.0
        %3415 = vmatpush1.msra.mxu0 0.0
        %3416 = vmatprep.subr.mxu0 0.0
        %3417 = vmatpush1.msra.mxu0 0.0
        %3418 = vmatprep.subr.mxu0 0.0
        %3419 = vmatpush1.msra.mxu0 0.0
        %3420 = vmatprep.subr.mxu0 0.0
        %3421 = vmatpush1.msra.mxu0 0.0
        %3422 = vmatprep.subr.mxu0 0.0
        %3423 = vmatpush1.msra.mxu0 0.0
        %3424 = vmatprep.subr.mxu0 0.0
        %3425 = vmatpush1.msra.mxu0 0.0
        %3426 = vmatprep.subr.mxu0 0.0
        %3427 = vmatpush1.msra.mxu0 0.0
        %3428 = vmatprep.subr.mxu0 0.0
        %3429 = vmatpush1.msra.mxu0 0.0
        %3430 = vmatprep.subr.mxu0 0.0
        %3431 = vmatpush1.msra.mxu0 0.0
        %3432 = vmatprep.subr.mxu0 0.0
        %3433 = vmatpush1.msra.mxu0 0.0
        %3434 = vmatprep.subr.mxu0 0.0
        %3435 = vmatpush1.msra.mxu0 0.0
        %3436 = vmatprep.subr.mxu0 0.0
        %3437 = vmatpush1.msra.mxu0 0.0
        %3438 = vmatprep.subr.mxu0 0.0
        %3439 = vmatpush1.msra.mxu0 0.0
        %3440 = vmatprep.subr.mxu0 0.0
        %3441 = vmatpush1.msra.mxu0 0.0
        %3442 = vmatprep.subr.mxu0 0.0
        %3443 = vmatpush1.msra.mxu0 0.0
        %3444 = vmatprep.subr.mxu0 0.0
        %3445 = vmatpush1.msra.mxu0 0.0
        %3446 = vmatprep.subr.mxu0 0.0
        %3447 = vmatpush1.msra.mxu0 0.0
        %3448 = vmatprep.subr.mxu0 0.0
        %3449 = vmatpush1.msra.mxu0 0.0
        %3450 = vmatprep.mubr.f32.mxu0 0.0
        %v3451 = vand.u32 %v3170, 4294901760
        %3452 = vmatmul.mubr.f32.gmra.mrb[0].mxu0 %v3451
        %v3453 = vpop.f32.mrb[0].mxu0
        %v3454 = vadd.f32 %v3273, %v3453
        %v3455 = vpop.f32.mrb[0].mxu0
        %3456 = vmatprep.mubr.f32.mxu0 0.0
        %v3457 = vand.u32 %v3173, 4294901760
        %3458 = vmatmul.mubr.f32.gmra.mrb[0].mxu0 %v3457
        %v3459 = vpop.f32.mrb[0].mxu0
        %v3460 = vadd.f32 %v3283, %v3459
        %v3461 = vpop.f32.mrb[0].mxu0
        %3462 = vmatprep.mubr.f32.mxu0 0.0
        %v3463 = vand.u32 %v3176, 4294901760
        %3464 = vmatmul.mubr.f32.gmra.mrb[0].mxu0 %v3463
        %v3465 = vpop.f32.mrb[0].mxu0
        %v3466 = vadd.f32 %v3293, %v3465
        %v3467 = vpop.f32.mrb[0].mxu0
        %3468 = vmatprep.mubr.f32.mxu0 0.0
        %v3469 = vand.u32 %v3179, 4294901760
        %3470 = vmatmul.mubr.f32.gmra.mrb[0].mxu0 %v3469
        %v3471 = vpop.f32.mrb[0].mxu0
        %v3472 = vadd.f32 %v3303, %v3471
        %v3473 = vpop.f32.mrb[0].mxu0
        %3474 = vmatprep.mubr.f32.mxu0 0.0
        %v3475 = vand.u32 %v3182, 4294901760
        %3476 = vmatmul.mubr.f32.gmra.mrb[0].mxu0 %v3475
        %v3477 = vpop.f32.mrb[0].mxu0
        %v3478 = vadd.f32 %v3313, %v3477
        %v3479 = vpop.f32.mrb[0].mxu0
        %3480 = vmatprep.mubr.f32.mxu0 0.0
        %v3481 = vand.u32 %v3185, 4294901760
        %3482 = vmatmul.mubr.f32.gmra.mrb[0].mxu0 %v3481
        %v3483 = vpop.f32.mrb[0].mxu0
        %v3484 = vadd.f32 %v3323, %v3483
        %v3485 = vpop.f32.mrb[0].mxu0
        %3486 = vmatprep.mubr.f32.mxu0 0.0
        %v3487 = vand.u32 %v3188, 4294901760
        %3488 = vmatmul.mubr.f32.gmra.mrb[0].mxu0 %v3487
        %v3489 = vpop.f32.mrb[0].mxu0
        %v3490 = vadd.f32 %v3333, %v3489
        %v3491 = vpop.f32.mrb[0].mxu0
        %3492 = vmatprep.mubr.f32.mxu0 0.0
        %v3493 = vand.u32 %v3191, 4294901760
        %3494 = vmatmul.mubr.f32.gmra.mrb[0].mxu0 %v3493
        %v3495 = vpop.f32.mrb[0].mxu0
        %v3496 = vadd.f32 %v3343, %v3495
        %v3497 = vpop.f32.mrb[0].mxu0
        %3498 = vdwg.mxu0
        %3499 = vmatprep.subr.mxu0 0.0
        %v3500 = vand.u32 %v3124, 4294901760
        %v3501 = vsub.f32 %v3124, %v3500
        %3502 = vmatpush1.msra.mxu0 %v3501
        %3503 = vmatprep.subr.mxu0 0.0
        %v3504 = vand.u32 %v3130, 4294901760
        %v3505 = vsub.f32 %v3130, %v3504
        %3506 = vmatpush1.msra.mxu0 %v3505
        %3507 = vmatprep.subr.mxu0 0.0
        %v3508 = vand.u32 %v3136, 4294901760
        %v3509 = vsub.f32 %v3136, %v3508
        %3510 = vmatpush1.msra.mxu0 %v3509
        %3511 = vmatprep.subr.mxu0 0.0
        %v3512 = vand.u32 %v3142, 4294901760
        %v3513 = vsub.f32 %v3142, %v3512
        %3514 = vmatpush1.msra.mxu0 %v3513
        %3515 = vmatprep.subr.mxu0 0.0
        %v3516 = vand.u32 %v3148, 4294901760
        %v3517 = vsub.f32 %v3148, %v3516
        %3518 = vmatpush1.msra.mxu0 %v3517
        %3519 = vmatprep.subr.mxu0 0.0
        %v3520 = vand.u32 %v3154, 4294901760
        %v3521 = vsub.f32 %v3154, %v3520
        %3522 = vmatpush1.msra.mxu0 %v3521
        %3523 = vmatprep.subr.mxu0 0.0
        %v3524 = vand.u32 %v3160, 4294901760
        %v3525 = vsub.f32 %v3160, %v3524
        %3526 = vmatpush1.msra.mxu0 %v3525
        %3527 = vmatprep.subr.mxu0 0.0
        %v3528 = vand.u32 %v3166, 4294901760
        %v3529 = vsub.f32 %v3166, %v3528
        %3530 = vmatpush1.msra.mxu0 %v3529
        %3531 = vmatprep.subr.mxu0 0.0
        %3532 = vmatpush1.msra.mxu0 0.0
        %3533 = vmatprep.subr.mxu0 0.0
        %3534 = vmatpush1.msra.mxu0 0.0
        %3535 = vmatprep.subr.mxu0 0.0
        %3536 = vmatpush1.msra.mxu0 0.0
        %3537 = vmatprep.subr.mxu0 0.0
        %3538 = vmatpush1.msra.mxu0 0.0
        %3539 = vmatprep.subr.mxu0 0.0
        %3540 = vmatpush1.msra.mxu0 0.0
        %3541 = vmatprep.subr.mxu0 0.0
        %3542 = vmatpush1.msra.mxu0 0.0
        %3543 = vmatprep.subr.mxu0 0.0
        %3544 = vmatpush1.msra.mxu0 0.0
        %3545 = vmatprep.subr.mxu0 0.0
        %3546 = vmatpush1.msra.mxu0 0.0
        %3547 = vmatprep.subr.mxu0 0.0
        %3548 = vmatpush1.msra.mxu0 0.0
        %3549 = vmatprep.subr.mxu0 0.0
        %3550 = vmatpush1.msra.mxu0 0.0
        %3551 = vmatprep.subr.mxu0 0.0
        %3552 = vmatpush1.msra.mxu0 0.0
        %3553 = vmatprep.subr.mxu0 0.0
        %3554 = vmatpush1.msra.mxu0 0.0
        %3555 = vmatprep.subr.mxu0 0.0
        %3556 = vmatpush1.msra.mxu0 0.0
        %3557 = vmatprep.subr.mxu0 0.0
        %3558 = vmatpush1.msra.mxu0 0.0
        %3559 = vmatprep.subr.mxu0 0.0
        %3560 = vmatpush1.msra.mxu0 0.0
        %3561 = vmatprep.subr.mxu0 0.0
        %3562 = vmatpush1.msra.mxu0 0.0
        %3563 = vmatprep.subr.mxu0 0.0
        %3564 = vmatpush1.msra.mxu0 0.0
        %3565 = vmatprep.subr.mxu0 0.0
        %3566 = vmatpush1.msra.mxu0 0.0
        %3567 = vmatprep.subr.mxu0 0.0
        %3568 = vmatpush1.msra.mxu0 0.0
        %3569 = vmatprep.subr.mxu0 0.0
        %3570 = vmatpush1.msra.mxu0 0.0
        %3571 = vmatprep.subr.mxu0 0.0
        %3572 = vmatpush1.msra.mxu0 0.0
        %3573 = vmatprep.subr.mxu0 0.0
        %3574 = vmatpush1.msra.mxu0 0.0
        %3575 = vmatprep.subr.mxu0 0.0
        %3576 = vmatpush1.msra.mxu0 0.0
        %3577 = vmatprep.subr.mxu0 0.0
        %3578 = vmatpush1.msra.mxu0 0.0
        %3579 = vmatprep.mubr.f32.mxu0 0.0
        %v3580 = vand.u32 %v3170, 4294901760
        %v3581 = vsub.f32 %v3170, %v3580
        %3582 = vmatmul.mubr.f32.gmra.mrb[0].mxu0 %v3581
        %v3583 = vpop.f32.mrb[0].mxu0
        %v3584 = vadd.f32 %v3454, %v3583
        %v3585 = vpop.f32.mrb[0].mxu0
        %3586 = vmatprep.mubr.f32.mxu0 0.0
        %v3587 = vand.u32 %v3173, 4294901760
        %v3588 = vsub.f32 %v3173, %v3587
        %3589 = vmatmul.mubr.f32.gmra.mrb[0].mxu0 %v3588
        %v3590 = vpop.f32.mrb[0].mxu0
        %v3591 = vadd.f32 %v3460, %v3590
        %v3592 = vpop.f32.mrb[0].mxu0
        %3593 = vmatprep.mubr.f32.mxu0 0.0
        %v3594 = vand.u32 %v3176, 4294901760
        %v3595 = vsub.f32 %v3176, %v3594
        %3596 = vmatmul.mubr.f32.gmra.mrb[0].mxu0 %v3595
        %v3597 = vpop.f32.mrb[0].mxu0
        %v3598 = vadd.f32 %v3466, %v3597
        %v3599 = vpop.f32.mrb[0].mxu0
        %3600 = vmatprep.mubr.f32.mxu0 0.0
        %v3601 = vand.u32 %v3179, 4294901760
        %v3602 = vsub.f32 %v3179, %v3601
        %3603 = vmatmul.mubr.f32.gmra.mrb[0].mxu0 %v3602
        %v3604 = vpop.f32.mrb[0].mxu0
        %v3605 = vadd.f32 %v3472, %v3604
        %v3606 = vpop.f32.mrb[0].mxu0
        %3607 = vmatprep.mubr.f32.mxu0 0.0
        %v3608 = vand.u32 %v3182, 4294901760
        %v3609 = vsub.f32 %v3182, %v3608
        %3610 = vmatmul.mubr.f32.gmra.mrb[0].mxu0 %v3609
        %v3611 = vpop.f32.mrb[0].mxu0
        %v3612 = vadd.f32 %v3478, %v3611
        %v3613 = vpop.f32.mrb[0].mxu0
        %3614 = vmatprep.mubr.f32.mxu0 0.0
        %v3615 = vand.u32 %v3185, 4294901760
        %v3616 = vsub.f32 %v3185, %v3615
        %3617 = vmatmul.mubr.f32.gmra.mrb[0].mxu0 %v3616
        %v3618 = vpop.f32.mrb[0].mxu0
        %v3619 = vadd.f32 %v3484, %v3618
        %v3620 = vpop.f32.mrb[0].mxu0
        %3621 = vmatprep.mubr.f32.mxu0 0.0
        %v3622 = vand.u32 %v3188, 4294901760
        %v3623 = vsub.f32 %v3188, %v3622
        %3624 = vmatmul.mubr.f32.gmra.mrb[0].mxu0 %v3623
        %v3625 = vpop.f32.mrb[0].mxu0
        %v3626 = vadd.f32 %v3490, %v3625
        %v3627 = vpop.f32.mrb[0].mxu0
        %3628 = vmatprep.mubr.f32.mxu0 0.0
        %v3629 = vand.u32 %v3191, 4294901760
        %v3630 = vsub.f32 %v3191, %v3629
        %3631 = vmatmul.mubr.f32.gmra.mrb[0].mxu0 %v3630
        %v3632 = vpop.f32.mrb[0].mxu0
        %v3633 = vadd.f32 %v3496, %v3632
        %v3634 = vpop.f32.mrb[0].mxu0
        %3635 = vdwg.mxu0
        %3636 = vmatprep.subr.mxu0 0.0
        %v3637 = vand.u32 %v3124, 4294901760
        %3638 = vmatpush1.msra.mxu0 %v3637
        %3639 = vmatprep.subr.mxu0 0.0
        %v3640 = vand.u32 %v3130, 4294901760
        %3641 = vmatpush1.msra.mxu0 %v3640
        %3642 = vmatprep.subr.mxu0 0.0
        %v3643 = vand.u32 %v3136, 4294901760
        %3644 = vmatpush1.msra.mxu0 %v3643
        %3645 = vmatprep.subr.mxu0 0.0
        %v3646 = vand.u32 %v3142, 4294901760
        %3647 = vmatpush1.msra.mxu0 %v3646
        %3648 = vmatprep.subr.mxu0 0.0
        %v3649 = vand.u32 %v3148, 4294901760
        %3650 = vmatpush1.msra.mxu0 %v3649
        %3651 = vmatprep.subr.mxu0 0.0
        %v3652 = vand.u32 %v3154, 4294901760
        %3653 = vmatpush1.msra.mxu0 %v3652
        %3654 = vmatprep.subr.mxu0 0.0
        %v3655 = vand.u32 %v3160, 4294901760
        %3656 = vmatpush1.msra.mxu0 %v3655
        %3657 = vmatprep.subr.mxu0 0.0
        %v3658 = vand.u32 %v3166, 4294901760
        %3659 = vmatpush1.msra.mxu0 %v3658
        %3660 = vmatprep.subr.mxu0 0.0
        %3661 = vmatpush1.msra.mxu0 0.0
        %3662 = vmatprep.subr.mxu0 0.0
        %3663 = vmatpush1.msra.mxu0 0.0
        %3664 = vmatprep.subr.mxu0 0.0
        %3665 = vmatpush1.msra.mxu0 0.0
        %3666 = vmatprep.subr.mxu0 0.0
        %3667 = vmatpush1.msra.mxu0 0.0
        %3668 = vmatprep.subr.mxu0 0.0
        %3669 = vmatpush1.msra.mxu0 0.0
        %3670 = vmatprep.subr.mxu0 0.0
        %3671 = vmatpush1.msra.mxu0 0.0
        %3672 = vmatprep.subr.mxu0 0.0
        %3673 = vmatpush1.msra.mxu0 0.0
        %3674 = vmatprep.subr.mxu0 0.0
        %3675 = vmatpush1.msra.mxu0 0.0
        %3676 = vmatprep.subr.mxu0 0.0
        %3677 = vmatpush1.msra.mxu0 0.0
        %3678 = vmatprep.subr.mxu0 0.0
        %3679 = vmatpush1.msra.mxu0 0.0
        %3680 = vmatprep.subr.mxu0 0.0
        %3681 = vmatpush1.msra.mxu0 0.0
        %3682 = vmatprep.subr.mxu0 0.0
        %3683 = vmatpush1.msra.mxu0 0.0
        %3684 = vmatprep.subr.mxu0 0.0
        %3685 = vmatpush1.msra.mxu0 0.0
        %3686 = vmatprep.subr.mxu0 0.0
        %3687 = vmatpush1.msra.mxu0 0.0
        %3688 = vmatprep.subr.mxu0 0.0
        %3689 = vmatpush1.msra.mxu0 0.0
        %3690 = vmatprep.subr.mxu0 0.0
        %3691 = vmatpush1.msra.mxu0 0.0
        %3692 = vmatprep.subr.mxu0 0.0
        %3693 = vmatpush1.msra.mxu0 0.0
        %3694 = vmatprep.subr.mxu0 0.0
        %3695 = vmatpush1.msra.mxu0 0.0
        %3696 = vmatprep.subr.mxu0 0.0
        %3697 = vmatpush1.msra.mxu0 0.0
        %3698 = vmatprep.subr.mxu0 0.0
        %3699 = vmatpush1.msra.mxu0 0.0
        %3700 = vmatprep.subr.mxu0 0.0
        %3701 = vmatpush1.msra.mxu0 0.0
        %3702 = vmatprep.subr.mxu0 0.0
        %3703 = vmatpush1.msra.mxu0 0.0
        %3704 = vmatprep.subr.mxu0 0.0
        %3705 = vmatpush1.msra.mxu0 0.0
        %3706 = vmatprep.subr.mxu0 0.0
        %3707 = vmatpush1.msra.mxu0 0.0
        %3708 = vmatprep.mubr.f32.mxu0 0.0
        %v3709 = vand.u32 %v3170, 4294901760
        %v3710 = vsub.f32 %v3170, %v3709
        %v3711 = vand.u32 %v3710, 4294901760
        %3712 = vmatmul.mubr.f32.gmra.mrb[0].mxu0 %v3711
        %v3713 = vpop.f32.mrb[0].mxu0
        %v3714 = vadd.f32 %v3584, %v3713
        %v3715 = vpop.f32.mrb[0].mxu0
        %3716 = vmatprep.mubr.f32.mxu0 0.0
        %v3717 = vand.u32 %v3173, 4294901760
        %v3718 = vsub.f32 %v3173, %v3717
        %v3719 = vand.u32 %v3718, 4294901760
        %3720 = vmatmul.mubr.f32.gmra.mrb[0].mxu0 %v3719
        %v3721 = vpop.f32.mrb[0].mxu0
        %v3722 = vadd.f32 %v3591, %v3721
        %v3723 = vpop.f32.mrb[0].mxu0
        %3724 = vmatprep.mubr.f32.mxu0 0.0
        %v3725 = vand.u32 %v3176, 4294901760
        %v3726 = vsub.f32 %v3176, %v3725
        %v3727 = vand.u32 %v3726, 4294901760
        %3728 = vmatmul.mubr.f32.gmra.mrb[0].mxu0 %v3727
        %v3729 = vpop.f32.mrb[0].mxu0
        %v3730 = vadd.f32 %v3598, %v3729
        %v3731 = vpop.f32.mrb[0].mxu0
        %3732 = vmatprep.mubr.f32.mxu0 0.0
        %v3733 = vand.u32 %v3179, 4294901760
        %v3734 = vsub.f32 %v3179, %v3733
        %v3735 = vand.u32 %v3734, 4294901760
        %3736 = vmatmul.mubr.f32.gmra.mrb[0].mxu0 %v3735
        %v3737 = vpop.f32.mrb[0].mxu0
        %v3738 = vadd.f32 %v3605, %v3737
        %v3739 = vpop.f32.mrb[0].mxu0
        %3740 = vmatprep.mubr.f32.mxu0 0.0
        %v3741 = vand.u32 %v3182, 4294901760
        %v3742 = vsub.f32 %v3182, %v3741
        %v3743 = vand.u32 %v3742, 4294901760
        %3744 = vmatmul.mubr.f32.gmra.mrb[0].mxu0 %v3743
        %v3745 = vpop.f32.mrb[0].mxu0
        %v3746 = vadd.f32 %v3612, %v3745
        %v3747 = vpop.f32.mrb[0].mxu0
        %3748 = vmatprep.mubr.f32.mxu0 0.0
        %v3749 = vand.u32 %v3185, 4294901760
        %v3750 = vsub.f32 %v3185, %v3749
        %v3751 = vand.u32 %v3750, 4294901760
        %3752 = vmatmul.mubr.f32.gmra.mrb[0].mxu0 %v3751
        %v3753 = vpop.f32.mrb[0].mxu0
        %v3754 = vadd.f32 %v3619, %v3753
        %v3755 = vpop.f32.mrb[0].mxu0
        %3756 = vmatprep.mubr.f32.mxu0 0.0
        %v3757 = vand.u32 %v3188, 4294901760
        %v3758 = vsub.f32 %v3188, %v3757
        %v3759 = vand.u32 %v3758, 4294901760
        %3760 = vmatmul.mubr.f32.gmra.mrb[0].mxu0 %v3759
        %v3761 = vpop.f32.mrb[0].mxu0
        %v3762 = vadd.f32 %v3626, %v3761
        %v3763 = vpop.f32.mrb[0].mxu0
        %3764 = vmatprep.mubr.f32.mxu0 0.0
        %v3765 = vand.u32 %v3191, 4294901760
        %v3766 = vsub.f32 %v3191, %v3765
        %v3767 = vand.u32 %v3766, 4294901760
        %3768 = vmatmul.mubr.f32.gmra.mrb[0].mxu0 %v3767
        %v3769 = vpop.f32.mrb[0].mxu0
        %v3770 = vadd.f32 %v3633, %v3769
        %v3771 = vpop.f32.mrb[0].mxu0
        %3772 = vdwg.mxu0
        %3773 = vmatprep.subr.mxu0 0.0
        %v3774 = vand.u32 %v3124, 4294901760
        %v3775 = vsub.f32 %v3124, %v3774
        %v3776 = vand.u32 %v3775, 4294901760
        %3777 = vmatpush1.msra.mxu0 %v3776
        %3778 = vmatprep.subr.mxu0 0.0
        %v3779 = vand.u32 %v3130, 4294901760
        %v3780 = vsub.f32 %v3130, %v3779
        %v3781 = vand.u32 %v3780, 4294901760
        %3782 = vmatpush1.msra.mxu0 %v3781
        %3783 = vmatprep.subr.mxu0 0.0
        %v3784 = vand.u32 %v3136, 4294901760
        %v3785 = vsub.f32 %v3136, %v3784
        %v3786 = vand.u32 %v3785, 4294901760
        %3787 = vmatpush1.msra.mxu0 %v3786
        %3788 = vmatprep.subr.mxu0 0.0
        %v3789 = vand.u32 %v3142, 4294901760
        %v3790 = vsub.f32 %v3142, %v3789
        %v3791 = vand.u32 %v3790, 4294901760
        %3792 = vmatpush1.msra.mxu0 %v3791
        %3793 = vmatprep.subr.mxu0 0.0
        %v3794 = vand.u32 %v3148, 4294901760
        %v3795 = vsub.f32 %v3148, %v3794
        %v3796 = vand.u32 %v3795, 4294901760
        %3797 = vmatpush1.msra.mxu0 %v3796
        %3798 = vmatprep.subr.mxu0 0.0
        %v3799 = vand.u32 %v3154, 4294901760
        %v3800 = vsub.f32 %v3154, %v3799
        %v3801 = vand.u32 %v3800, 4294901760
        %3802 = vmatpush1.msra.mxu0 %v3801
        %3803 = vmatprep.subr.mxu0 0.0
        %v3804 = vand.u32 %v3160, 4294901760
        %v3805 = vsub.f32 %v3160, %v3804
        %v3806 = vand.u32 %v3805, 4294901760
        %3807 = vmatpush1.msra.mxu0 %v3806
        %3808 = vmatprep.subr.mxu0 0.0
        %v3809 = vand.u32 %v3166, 4294901760
        %v3810 = vsub.f32 %v3166, %v3809
        %v3811 = vand.u32 %v3810, 4294901760
        %3812 = vmatpush1.msra.mxu0 %v3811
        %3813 = vmatprep.subr.mxu0 0.0
        %3814 = vmatpush1.msra.mxu0 0.0
        %3815 = vmatprep.subr.mxu0 0.0
        %3816 = vmatpush1.msra.mxu0 0.0
        %3817 = vmatprep.subr.mxu0 0.0
        %3818 = vmatpush1.msra.mxu0 0.0
        %3819 = vmatprep.subr.mxu0 0.0
        %3820 = vmatpush1.msra.mxu0 0.0
        %3821 = vmatprep.subr.mxu0 0.0
        %3822 = vmatpush1.msra.mxu0 0.0
        %3823 = vmatprep.subr.mxu0 0.0
        %3824 = vmatpush1.msra.mxu0 0.0
        %3825 = vmatprep.subr.mxu0 0.0
        %3826 = vmatpush1.msra.mxu0 0.0
        %3827 = vmatprep.subr.mxu0 0.0
        %3828 = vmatpush1.msra.mxu0 0.0
        %3829 = vmatprep.subr.mxu0 0.0
        %3830 = vmatpush1.msra.mxu0 0.0
        %3831 = vmatprep.subr.mxu0 0.0
        %3832 = vmatpush1.msra.mxu0 0.0
        %3833 = vmatprep.subr.mxu0 0.0
        %3834 = vmatpush1.msra.mxu0 0.0
        %3835 = vmatprep.subr.mxu0 0.0
        %3836 = vmatpush1.msra.mxu0 0.0
        %3837 = vmatprep.subr.mxu0 0.0
        %3838 = vmatpush1.msra.mxu0 0.0
        %3839 = vmatprep.subr.mxu0 0.0
        %3840 = vmatpush1.msra.mxu0 0.0
        %3841 = vmatprep.subr.mxu0 0.0
        %3842 = vmatpush1.msra.mxu0 0.0
        %3843 = vmatprep.subr.mxu0 0.0
        %3844 = vmatpush1.msra.mxu0 0.0
        %3845 = vmatprep.subr.mxu0 0.0
        %3846 = vmatpush1.msra.mxu0 0.0
        %3847 = vmatprep.subr.mxu0 0.0
        %3848 = vmatpush1.msra.mxu0 0.0
        %3849 = vmatprep.subr.mxu0 0.0
        %3850 = vmatpush1.msra.mxu0 0.0
        %3851 = vmatprep.subr.mxu0 0.0
        %3852 = vmatpush1.msra.mxu0 0.0
        %3853 = vmatprep.subr.mxu0 0.0
        %3854 = vmatpush1.msra.mxu0 0.0
        %3855 = vmatprep.subr.mxu0 0.0
        %3856 = vmatpush1.msra.mxu0 0.0
        %3857 = vmatprep.subr.mxu0 0.0
        %3858 = vmatpush1.msra.mxu0 0.0
        %3859 = vmatprep.subr.mxu0 0.0
        %3860 = vmatpush1.msra.mxu0 0.0
        %3861 = vmatprep.mubr.f32.mxu0 0.0
        %v3862 = vand.u32 %v3170, 4294901760
        %3863 = vmatmul.mubr.f32.gmra.mrb[0].mxu0 %v3862
        %v3864 = vpop.f32.mrb[0].mxu0
        %v3865 = vadd.f32 %v3714, %v3864
        %v3866 = vpop.f32.mrb[0].mxu0
        %3867 = vmatprep.mubr.f32.mxu0 0.0
        %v3868 = vand.u32 %v3173, 4294901760
        %3869 = vmatmul.mubr.f32.gmra.mrb[0].mxu0 %v3868
        %v3870 = vpop.f32.mrb[0].mxu0
        %v3871 = vadd.f32 %v3722, %v3870
        %v3872 = vpop.f32.mrb[0].mxu0
        %3873 = vmatprep.mubr.f32.mxu0 0.0
        %v3874 = vand.u32 %v3176, 4294901760
        %3875 = vmatmul.mubr.f32.gmra.mrb[0].mxu0 %v3874
        %v3876 = vpop.f32.mrb[0].mxu0
        %v3877 = vadd.f32 %v3730, %v3876
        %v3878 = vpop.f32.mrb[0].mxu0
        %3879 = vmatprep.mubr.f32.mxu0 0.0
        %v3880 = vand.u32 %v3179, 4294901760
        %3881 = vmatmul.mubr.f32.gmra.mrb[0].mxu0 %v3880
        %v3882 = vpop.f32.mrb[0].mxu0
        %v3883 = vadd.f32 %v3738, %v3882
        %v3884 = vpop.f32.mrb[0].mxu0
        %3885 = vmatprep.mubr.f32.mxu0 0.0
        %v3886 = vand.u32 %v3182, 4294901760
        %3887 = vmatmul.mubr.f32.gmra.mrb[0].mxu0 %v3886
        %v3888 = vpop.f32.mrb[0].mxu0
        %v3889 = vadd.f32 %v3746, %v3888
        %v3890 = vpop.f32.mrb[0].mxu0
        %3891 = vmatprep.mubr.f32.mxu0 0.0
        %v3892 = vand.u32 %v3185, 4294901760
        %3893 = vmatmul.mubr.f32.gmra.mrb[0].mxu0 %v3892
        %v3894 = vpop.f32.mrb[0].mxu0
        %v3895 = vadd.f32 %v3754, %v3894
        %v3896 = vpop.f32.mrb[0].mxu0
        %3897 = vmatprep.mubr.f32.mxu0 0.0
        %v3898 = vand.u32 %v3188, 4294901760
        %3899 = vmatmul.mubr.f32.gmra.mrb[0].mxu0 %v3898
        %v3900 = vpop.f32.mrb[0].mxu0
        %v3901 = vadd.f32 %v3762, %v3900
        %v3902 = vpop.f32.mrb[0].mxu0
        %3903 = vmatprep.mubr.f32.mxu0 0.0
        %v3904 = vand.u32 %v3191, 4294901760
        %3905 = vmatmul.mubr.f32.gmra.mrb[0].mxu0 %v3904
        %v3906 = vpop.f32.mrb[0].mxu0
        %v3907 = vadd.f32 %v3770, %v3906
        %v3908 = vpop.f32.mrb[0].mxu0
        %3909 = vdwg.mxu0
        %3910 = vmatprep.subr.mxu0 0.0
        %v3911 = vand.u32 %v3124, 4294901760
        %3912 = vmatpush1.msra.mxu0 %v3911
        %3913 = vmatprep.subr.mxu0 0.0
        %v3914 = vand.u32 %v3130, 4294901760
        %3915 = vmatpush1.msra.mxu0 %v3914
        %3916 = vmatprep.subr.mxu0 0.0
        %v3917 = vand.u32 %v3136, 4294901760
        %3918 = vmatpush1.msra.mxu0 %v3917
        %3919 = vmatprep.subr.mxu0 0.0
        %v3920 = vand.u32 %v3142, 4294901760
        %3921 = vmatpush1.msra.mxu0 %v3920
        %3922 = vmatprep.subr.mxu0 0.0
        %v3923 = vand.u32 %v3148, 4294901760
        %3924 = vmatpush1.msra.mxu0 %v3923
        %3925 = vmatprep.subr.mxu0 0.0
        %v3926 = vand.u32 %v3154, 4294901760
        %3927 = vmatpush1.msra.mxu0 %v3926
        %3928 = vmatprep.subr.mxu0 0.0
        %v3929 = vand.u32 %v3160, 4294901760
        %3930 = vmatpush1.msra.mxu0 %v3929
        %3931 = vmatprep.subr.mxu0 0.0
        %v3932 = vand.u32 %v3166, 4294901760
        %3933 = vmatpush1.msra.mxu0 %v3932
        %3934 = vmatprep.subr.mxu0 0.0
        %3935 = vmatpush1.msra.mxu0 0.0
        %3936 = vmatprep.subr.mxu0 0.0
        %3937 = vmatpush1.msra.mxu0 0.0
        %3938 = vmatprep.subr.mxu0 0.0
        %3939 = vmatpush1.msra.mxu0 0.0
        %3940 = vmatprep.subr.mxu0 0.0
        %3941 = vmatpush1.msra.mxu0 0.0
        %3942 = vmatprep.subr.mxu0 0.0
        %3943 = vmatpush1.msra.mxu0 0.0
        %3944 = vmatprep.subr.mxu0 0.0
        %3945 = vmatpush1.msra.mxu0 0.0
        %3946 = vmatprep.subr.mxu0 0.0
        %3947 = vmatpush1.msra.mxu0 0.0
        %3948 = vmatprep.subr.mxu0 0.0
        %3949 = vmatpush1.msra.mxu0 0.0
        %3950 = vmatprep.subr.mxu0 0.0
        %3951 = vmatpush1.msra.mxu0 0.0
        %3952 = vmatprep.subr.mxu0 0.0
        %3953 = vmatpush1.msra.mxu0 0.0
        %3954 = vmatprep.subr.mxu0 0.0
        %3955 = vmatpush1.msra.mxu0 0.0
        %3956 = vmatprep.subr.mxu0 0.0
        %3957 = vmatpush1.msra.mxu0 0.0
        %3958 = vmatprep.subr.mxu0 0.0
        %3959 = vmatpush1.msra.mxu0 0.0
        %3960 = vmatprep.subr.mxu0 0.0
        %3961 = vmatpush1.msra.mxu0 0.0
        %3962 = vmatprep.subr.mxu0 0.0
        %3963 = vmatpush1.msra.mxu0 0.0
        %3964 = vmatprep.subr.mxu0 0.0
        %3965 = vmatpush1.msra.mxu0 0.0
        %3966 = vmatprep.subr.mxu0 0.0
        %3967 = vmatpush1.msra.mxu0 0.0
        %3968 = vmatprep.subr.mxu0 0.0
        %3969 = vmatpush1.msra.mxu0 0.0
        %3970 = vmatprep.subr.mxu0 0.0
        %3971 = vmatpush1.msra.mxu0 0.0
        %3972 = vmatprep.subr.mxu0 0.0
        %3973 = vmatpush1.msra.mxu0 0.0
        %3974 = vmatprep.subr.mxu0 0.0
        %3975 = vmatpush1.msra.mxu0 0.0
        %3976 = vmatprep.subr.mxu0 0.0
        %3977 = vmatpush1.msra.mxu0 0.0
        %3978 = vmatprep.subr.mxu0 0.0
        %3979 = vmatpush1.msra.mxu0 0.0
        %3980 = vmatprep.subr.mxu0 0.0
        %3981 = vmatpush1.msra.mxu0 0.0
        %3982 = vmatprep.mubr.f32.mxu0 0.0
        %v3983 = vand.u32 %v3170, 4294901760
        %3984 = vmatmul.mubr.f32.gmra.mrb[0].mxu0 %v3983
        %v3985 = vpop.f32.mrb[0].mxu0
        %v3986 = vadd.f32 %v3865, %v3985
        %v3987 = vpop.f32.mrb[0].mxu0
        %3988 = vmatprep.mubr.f32.mxu0 0.0
        %v3989 = vand.u32 %v3173, 4294901760
        %3990 = vmatmul.mubr.f32.gmra.mrb[0].mxu0 %v3989
        %v3991 = vpop.f32.mrb[0].mxu0
        %v3992 = vadd.f32 %v3871, %v3991
        %v3993 = vpop.f32.mrb[0].mxu0
        %3994 = vmatprep.mubr.f32.mxu0 0.0
        %v3995 = vand.u32 %v3176, 4294901760
        %3996 = vmatmul.mubr.f32.gmra.mrb[0].mxu0 %v3995
        %v3997 = vpop.f32.mrb[0].mxu0
        %v3998 = vadd.f32 %v3877, %v3997
        %v3999 = vpop.f32.mrb[0].mxu0
        %4000 = vmatprep.mubr.f32.mxu0 0.0
        %v4001 = vand.u32 %v3179, 4294901760
        %4002 = vmatmul.mubr.f32.gmra.mrb[0].mxu0 %v4001
        %v4003 = vpop.f32.mrb[0].mxu0
        %v4004 = vadd.f32 %v3883, %v4003
        %v4005 = vpop.f32.mrb[0].mxu0
        %4006 = vmatprep.mubr.f32.mxu0 0.0
        %v4007 = vand.u32 %v3182, 4294901760
        %4008 = vmatmul.mubr.f32.gmra.mrb[0].mxu0 %v4007
        %v4009 = vpop.f32.mrb[0].mxu0
        %v4010 = vadd.f32 %v3889, %v4009
        %v4011 = vpop.f32.mrb[0].mxu0
        %4012 = vmatprep.mubr.f32.mxu0 0.0
        %v4013 = vand.u32 %v3185, 4294901760
        %4014 = vmatmul.mubr.f32.gmra.mrb[0].mxu0 %v4013
        %v4015 = vpop.f32.mrb[0].mxu0
        %v4016 = vadd.f32 %v3895, %v4015
        %v4017 = vpop.f32.mrb[0].mxu0
        %4018 = vmatprep.mubr.f32.mxu0 0.0
        %v4019 = vand.u32 %v3188, 4294901760
        %4020 = vmatmul.mubr.f32.gmra.mrb[0].mxu0 %v4019
        %v4021 = vpop.f32.mrb[0].mxu0
        %v4022 = vadd.f32 %v3901, %v4021
        %v4023 = vpop.f32.mrb[0].mxu0
        %4024 = vmatprep.mubr.f32.mxu0 0.0
        %v4025 = vand.u32 %v3191, 4294901760
        %4026 = vmatmul.mubr.f32.gmra.mrb[0].mxu0 %v4025
        %v4027 = vpop.f32.mrb[0].mxu0
        %v4028 = vadd.f32 %v3907, %v4027
        %v4029 = vpop.f32.mrb[0].mxu0
        %4030 = vdwg.mxu0
        %4031 = vst [vmem:[%s335] sm:$0xff] %v3986
        %4032 = vst [vmem:[%s335 + $0x8] sm:$0xff] %v3992
        %4033 = vst [vmem:[%s335 + $0x10] sm:$0xff] %v3998
        %4034 = vst [vmem:[%s335 + $0x18] sm:$0xff] %v4004
        %4035 = vst [vmem:[%s335 + $0x20] sm:$0xff] %v4010
        %4036 = vst [vmem:[%s335 + $0x28] sm:$0xff] %v4016
        %4037 = vst [vmem:[%s335 + $0x30] sm:$0xff] %v4022
        %4038 = vst [vmem:[%s335 + $0x38] sm:$0xff] %v4028
        %4039 = vmatprep.subr.mxu0 0.0
        %v4040 = vand.u32 %v358, 4294901760
        %4041 = vmatpush1.msra.mxu0 %v4040
        %4042 = vmatprep.subr.mxu0 0.0
        %v4043 = vand.u32 %v359, 4294901760
        %4044 = vmatpush1.msra.mxu0 %v4043
        %4045 = vmatprep.subr.mxu0 0.0
        %v4046 = vand.u32 %v360, 4294901760
        %4047 = vmatpush1.msra.mxu0 %v4046
        %4048 = vmatprep.subr.mxu0 0.0
        %v4049 = vand.u32 %v361, 4294901760
        %4050 = vmatpush1.msra.mxu0 %v4049
        %4051 = vmatprep.subr.mxu0 0.0
        %v4052 = vand.u32 %v362, 4294901760
        %4053 = vmatpush1.msra.mxu0 %v4052
        %4054 = vmatprep.subr.mxu0 0.0
        %v4055 = vand.u32 %v363, 4294901760
        %4056 = vmatpush1.msra.mxu0 %v4055
        %4057 = vmatprep.subr.mxu0 0.0
        %v4058 = vand.u32 %v364, 4294901760
        %4059 = vmatpush1.msra.mxu0 %v4058
        %4060 = vmatprep.subr.mxu0 0.0
        %v4061 = vand.u32 %v365, 4294901760
        %4062 = vmatpush1.msra.mxu0 %v4061
        %4063 = vmatprep.subr.mxu0 0.0
        %v4064 = vand.u32 %v366, 4294901760
        %4065 = vmatpush1.msra.mxu0 %v4064
        %4066 = vmatprep.subr.mxu0 0.0
        %v4067 = vand.u32 %v367, 4294901760
        %4068 = vmatpush1.msra.mxu0 %v4067
        %4069 = vmatprep.subr.mxu0 0.0
        %v4070 = vand.u32 %v368, 4294901760
        %4071 = vmatpush1.msra.mxu0 %v4070
        %4072 = vmatprep.subr.mxu0 0.0
        %v4073 = vand.u32 %v369, 4294901760
        %4074 = vmatpush1.msra.mxu0 %v4073
        %4075 = vmatprep.subr.mxu0 0.0
        %v4076 = vand.u32 %v370, 4294901760
        %4077 = vmatpush1.msra.mxu0 %v4076
        %4078 = vmatprep.subr.mxu0 0.0
        %v4079 = vand.u32 %v371, 4294901760
        %4080 = vmatpush1.msra.mxu0 %v4079
        %4081 = vmatprep.subr.mxu0 0.0
        %v4082 = vand.u32 %v372, 4294901760
        %4083 = vmatpush1.msra.mxu0 %v4082
        %4084 = vmatprep.subr.mxu0 0.0
        %v4085 = vand.u32 %v373, 4294901760
        %4086 = vmatpush1.msra.mxu0 %v4085
        %4087 = vmatprep.subr.mxu0 0.0
        %4088 = vmatpush1.msra.mxu0 0.0
        %4089 = vmatprep.subr.mxu0 0.0
        %4090 = vmatpush1.msra.mxu0 0.0
        %4091 = vmatprep.subr.mxu0 0.0
        %4092 = vmatpush1.msra.mxu0 0.0
        %4093 = vmatprep.subr.mxu0 0.0
        %4094 = vmatpush1.msra.mxu0 0.0
        %4095 = vmatprep.subr.mxu0 0.0
        %4096 = vmatpush1.msra.mxu0 0.0
        %4097 = vmatprep.subr.mxu0 0.0
        %4098 = vmatpush1.msra.mxu0 0.0
        %4099 = vmatprep.subr.mxu0 0.0
        %4100 = vmatpush1.msra.mxu0 0.0
        %4101 = vmatprep.subr.mxu0 0.0
        %4102 = vmatpush1.msra.mxu0 0.0
        %4103 = vmatprep.subr.mxu0 0.0
        %4104 = vmatpush1.msra.mxu0 0.0
        %4105 = vmatprep.subr.mxu0 0.0
        %4106 = vmatpush1.msra.mxu0 0.0
        %4107 = vmatprep.subr.mxu0 0.0
        %4108 = vmatpush1.msra.mxu0 0.0
        %4109 = vmatprep.subr.mxu0 0.0
        %4110 = vmatpush1.msra.mxu0 0.0
        %4111 = vmatprep.subr.mxu0 0.0
        %4112 = vmatpush1.msra.mxu0 0.0
        %4113 = vmatprep.subr.mxu0 0.0
        %4114 = vmatpush1.msra.mxu0 0.0
        %4115 = vmatprep.subr.mxu0 0.0
        %4116 = vmatpush1.msra.mxu0 0.0
        %4117 = vmatprep.subr.mxu0 0.0
        %4118 = vmatpush1.msra.mxu0 0.0
        %4119 = vmatprep.mubr.f32.mxu0 0.0
        %v4120 = vand.u32 %v2219, 4294901760
        %v4121 = vsub.f32 %v2219, %v4120
        %v4122 = vand.u32 %v4121, 4294901760
        %v4123 = vsub.f32 %v4121, %v4122
        %v4124 = vand.u32 %v4123, 4294901760
        %4125 = vmatmul.mubr.f32.gmra.mrb[0].mxu0 %v4124
        %v4126 = vpop.f32.mrb[0].mxu0
        %v4127 = vadd.f32 0.0, %v4126
        %v4128 = vpop.f32.mrb[0].mxu0
        %4129 = vmatprep.mubr.f32.mxu0 0.0
        %v4130 = vand.u32 %v2220, 4294901760
        %v4131 = vsub.f32 %v2220, %v4130
        %v4132 = vand.u32 %v4131, 4294901760
        %v4133 = vsub.f32 %v4131, %v4132
        %v4134 = vand.u32 %v4133, 4294901760
        %4135 = vmatmul.mubr.f32.gmra.mrb[0].mxu0 %v4134
        %v4136 = vpop.f32.mrb[0].mxu0
        %v4137 = vadd.f32 0.0, %v4136
        %v4138 = vpop.f32.mrb[0].mxu0
        %4139 = vmatprep.mubr.f32.mxu0 0.0
        %v4140 = vand.u32 %v2221, 4294901760
        %v4141 = vsub.f32 %v2221, %v4140
        %v4142 = vand.u32 %v4141, 4294901760
        %v4143 = vsub.f32 %v4141, %v4142
        %v4144 = vand.u32 %v4143, 4294901760
        %4145 = vmatmul.mubr.f32.gmra.mrb[0].mxu0 %v4144
        %v4146 = vpop.f32.mrb[0].mxu0
        %v4147 = vadd.f32 0.0, %v4146
        %v4148 = vpop.f32.mrb[0].mxu0
        %4149 = vmatprep.mubr.f32.mxu0 0.0
        %v4150 = vand.u32 %v2222, 4294901760
        %v4151 = vsub.f32 %v2222, %v4150
        %v4152 = vand.u32 %v4151, 4294901760
        %v4153 = vsub.f32 %v4151, %v4152
        %v4154 = vand.u32 %v4153, 4294901760
        %4155 = vmatmul.mubr.f32.gmra.mrb[0].mxu0 %v4154
        %v4156 = vpop.f32.mrb[0].mxu0
        %v4157 = vadd.f32 0.0, %v4156
        %v4158 = vpop.f32.mrb[0].mxu0
        %4159 = vmatprep.mubr.f32.mxu0 0.0
        %v4160 = vand.u32 %v2223, 4294901760
        %v4161 = vsub.f32 %v2223, %v4160
        %v4162 = vand.u32 %v4161, 4294901760
        %v4163 = vsub.f32 %v4161, %v4162
        %v4164 = vand.u32 %v4163, 4294901760
        %4165 = vmatmul.mubr.f32.gmra.mrb[0].mxu0 %v4164
        %v4166 = vpop.f32.mrb[0].mxu0
        %v4167 = vadd.f32 0.0, %v4166
        %v4168 = vpop.f32.mrb[0].mxu0
        %4169 = vmatprep.mubr.f32.mxu0 0.0
        %v4170 = vand.u32 %v2224, 4294901760
        %v4171 = vsub.f32 %v2224, %v4170
        %v4172 = vand.u32 %v4171, 4294901760
        %v4173 = vsub.f32 %v4171, %v4172
        %v4174 = vand.u32 %v4173, 4294901760
        %4175 = vmatmul.mubr.f32.gmra.mrb[0].mxu0 %v4174
        %v4176 = vpop.f32.mrb[0].mxu0
        %v4177 = vadd.f32 0.0, %v4176
        %v4178 = vpop.f32.mrb[0].mxu0
        %4179 = vmatprep.mubr.f32.mxu0 0.0
        %v4180 = vand.u32 %v2225, 4294901760
        %v4181 = vsub.f32 %v2225, %v4180
        %v4182 = vand.u32 %v4181, 4294901760
        %v4183 = vsub.f32 %v4181, %v4182
        %v4184 = vand.u32 %v4183, 4294901760
        %4185 = vmatmul.mubr.f32.gmra.mrb[0].mxu0 %v4184
        %v4186 = vpop.f32.mrb[0].mxu0
        %v4187 = vadd.f32 0.0, %v4186
        %v4188 = vpop.f32.mrb[0].mxu0
        %4189 = vmatprep.mubr.f32.mxu0 0.0
        %v4190 = vand.u32 %v2226, 4294901760
        %v4191 = vsub.f32 %v2226, %v4190
        %v4192 = vand.u32 %v4191, 4294901760
        %v4193 = vsub.f32 %v4191, %v4192
        %v4194 = vand.u32 %v4193, 4294901760
        %4195 = vmatmul.mubr.f32.gmra.mrb[0].mxu0 %v4194
        %v4196 = vpop.f32.mrb[0].mxu0
        %v4197 = vadd.f32 0.0, %v4196
        %v4198 = vpop.f32.mrb[0].mxu0
        %4199 = vdwg.mxu0
        %4200 = vmatprep.subr.mxu0 0.0
        %v4201 = vand.u32 %v358, 4294901760
        %v4202 = vsub.f32 %v358, %v4201
        %v4203 = vand.u32 %v4202, 4294901760
        %v4204 = vsub.f32 %v4202, %v4203
        %v4205 = vand.u32 %v4204, 4294901760
        %4206 = vmatpush1.msra.mxu0 %v4205
        %4207 = vmatprep.subr.mxu0 0.0
        %v4208 = vand.u32 %v359, 4294901760
        %v4209 = vsub.f32 %v359, %v4208
        %v4210 = vand.u32 %v4209, 4294901760
        %v4211 = vsub.f32 %v4209, %v4210
        %v4212 = vand.u32 %v4211, 4294901760
        %4213 = vmatpush1.msra.mxu0 %v4212
        %4214 = vmatprep.subr.mxu0 0.0
        %v4215 = vand.u32 %v360, 4294901760
        %v4216 = vsub.f32 %v360, %v4215
        %v4217 = vand.u32 %v4216, 4294901760
        %v4218 = vsub.f32 %v4216, %v4217
        %v4219 = vand.u32 %v4218, 4294901760
        %4220 = vmatpush1.msra.mxu0 %v4219
        %4221 = vmatprep.subr.mxu0 0.0
        %v4222 = vand.u32 %v361, 4294901760
        %v4223 = vsub.f32 %v361, %v4222
        %v4224 = vand.u32 %v4223, 4294901760
        %v4225 = vsub.f32 %v4223, %v4224
        %v4226 = vand.u32 %v4225, 4294901760
        %4227 = vmatpush1.msra.mxu0 %v4226
        %4228 = vmatprep.subr.mxu0 0.0
        %v4229 = vand.u32 %v362, 4294901760
        %v4230 = vsub.f32 %v362, %v4229
        %v4231 = vand.u32 %v4230, 4294901760
        %v4232 = vsub.f32 %v4230, %v4231
        %v4233 = vand.u32 %v4232, 4294901760
        %4234 = vmatpush1.msra.mxu0 %v4233
        %4235 = vmatprep.subr.mxu0 0.0
        %v4236 = vand.u32 %v363, 4294901760
        %v4237 = vsub.f32 %v363, %v4236
        %v4238 = vand.u32 %v4237, 4294901760
        %v4239 = vsub.f32 %v4237, %v4238
        %v4240 = vand.u32 %v4239, 4294901760
        %4241 = vmatpush1.msra.mxu0 %v4240
        %4242 = vmatprep.subr.mxu0 0.0
        %v4243 = vand.u32 %v364, 4294901760
        %v4244 = vsub.f32 %v364, %v4243
        %v4245 = vand.u32 %v4244, 4294901760
        %v4246 = vsub.f32 %v4244, %v4245
        %v4247 = vand.u32 %v4246, 4294901760
        %4248 = vmatpush1.msra.mxu0 %v4247
        %4249 = vmatprep.subr.mxu0 0.0
        %v4250 = vand.u32 %v365, 4294901760
        %v4251 = vsub.f32 %v365, %v4250
        %v4252 = vand.u32 %v4251, 4294901760
        %v4253 = vsub.f32 %v4251, %v4252
        %v4254 = vand.u32 %v4253, 4294901760
        %4255 = vmatpush1.msra.mxu0 %v4254
        %4256 = vmatprep.subr.mxu0 0.0
        %v4257 = vand.u32 %v366, 4294901760
        %v4258 = vsub.f32 %v366, %v4257
        %v4259 = vand.u32 %v4258, 4294901760
        %v4260 = vsub.f32 %v4258, %v4259
        %v4261 = vand.u32 %v4260, 4294901760
        %4262 = vmatpush1.msra.mxu0 %v4261
        %4263 = vmatprep.subr.mxu0 0.0
        %v4264 = vand.u32 %v367, 4294901760
        %v4265 = vsub.f32 %v367, %v4264
        %v4266 = vand.u32 %v4265, 4294901760
        %v4267 = vsub.f32 %v4265, %v4266
        %v4268 = vand.u32 %v4267, 4294901760
        %4269 = vmatpush1.msra.mxu0 %v4268
        %4270 = vmatprep.subr.mxu0 0.0
        %v4271 = vand.u32 %v368, 4294901760
        %v4272 = vsub.f32 %v368, %v4271
        %v4273 = vand.u32 %v4272, 4294901760
        %v4274 = vsub.f32 %v4272, %v4273
        %v4275 = vand.u32 %v4274, 4294901760
        %4276 = vmatpush1.msra.mxu0 %v4275
        %4277 = vmatprep.subr.mxu0 0.0
        %v4278 = vand.u32 %v369, 4294901760
        %v4279 = vsub.f32 %v369, %v4278
        %v4280 = vand.u32 %v4279, 4294901760
        %v4281 = vsub.f32 %v4279, %v4280
        %v4282 = vand.u32 %v4281, 4294901760
        %4283 = vmatpush1.msra.mxu0 %v4282
        %4284 = vmatprep.subr.mxu0 0.0
        %v4285 = vand.u32 %v370, 4294901760
        %v4286 = vsub.f32 %v370, %v4285
        %v4287 = vand.u32 %v4286, 4294901760
        %v4288 = vsub.f32 %v4286, %v4287
        %v4289 = vand.u32 %v4288, 4294901760
        %4290 = vmatpush1.msra.mxu0 %v4289
        %4291 = vmatprep.subr.mxu0 0.0
        %v4292 = vand.u32 %v371, 4294901760
        %v4293 = vsub.f32 %v371, %v4292
        %v4294 = vand.u32 %v4293, 4294901760
        %v4295 = vsub.f32 %v4293, %v4294
        %v4296 = vand.u32 %v4295, 4294901760
        %4297 = vmatpush1.msra.mxu0 %v4296
        %4298 = vmatprep.subr.mxu0 0.0
        %v4299 = vand.u32 %v372, 4294901760
        %v4300 = vsub.f32 %v372, %v4299
        %v4301 = vand.u32 %v4300, 4294901760
        %v4302 = vsub.f32 %v4300, %v4301
        %v4303 = vand.u32 %v4302, 4294901760
        %4304 = vmatpush1.msra.mxu0 %v4303
        %4305 = vmatprep.subr.mxu0 0.0
        %v4306 = vand.u32 %v373, 4294901760
        %v4307 = vsub.f32 %v373, %v4306
        %v4308 = vand.u32 %v4307, 4294901760
        %v4309 = vsub.f32 %v4307, %v4308
        %v4310 = vand.u32 %v4309, 4294901760
        %4311 = vmatpush1.msra.mxu0 %v4310
        %4312 = vmatprep.subr.mxu0 0.0
        %4313 = vmatpush1.msra.mxu0 0.0
        %4314 = vmatprep.subr.mxu0 0.0
        %4315 = vmatpush1.msra.mxu0 0.0
        %4316 = vmatprep.subr.mxu0 0.0
        %4317 = vmatpush1.msra.mxu0 0.0
        %4318 = vmatprep.subr.mxu0 0.0
        %4319 = vmatpush1.msra.mxu0 0.0
        %4320 = vmatprep.subr.mxu0 0.0
        %4321 = vmatpush1.msra.mxu0 0.0
        %4322 = vmatprep.subr.mxu0 0.0
        %4323 = vmatpush1.msra.mxu0 0.0
        %4324 = vmatprep.subr.mxu0 0.0
        %4325 = vmatpush1.msra.mxu0 0.0
        %4326 = vmatprep.subr.mxu0 0.0
        %4327 = vmatpush1.msra.mxu0 0.0
        %4328 = vmatprep.subr.mxu0 0.0
        %4329 = vmatpush1.msra.mxu0 0.0
        %4330 = vmatprep.subr.mxu0 0.0
        %4331 = vmatpush1.msra.mxu0 0.0
        %4332 = vmatprep.subr.mxu0 0.0
        %4333 = vmatpush1.msra.mxu0 0.0
        %4334 = vmatprep.subr.mxu0 0.0
        %4335 = vmatpush1.msra.mxu0 0.0
        %4336 = vmatprep.subr.mxu0 0.0
        %4337 = vmatpush1.msra.mxu0 0.0
        %4338 = vmatprep.subr.mxu0 0.0
        %4339 = vmatpush1.msra.mxu0 0.0
        %4340 = vmatprep.subr.mxu0 0.0
        %4341 = vmatpush1.msra.mxu0 0.0
        %4342 = vmatprep.subr.mxu0 0.0
        %4343 = vmatpush1.msra.mxu0 0.0
        %4344 = vmatprep.mubr.f32.mxu0 0.0
        %v4345 = vand.u32 %v2219, 4294901760
        %4346 = vmatmul.mubr.f32.gmra.mrb[0].mxu0 %v4345
        %v4347 = vpop.f32.mrb[0].mxu0
        %v4348 = vadd.f32 %v4127, %v4347
        %v4349 = vpop.f32.mrb[0].mxu0
        %4350 = vmatprep.mubr.f32.mxu0 0.0
        %v4351 = vand.u32 %v2220, 4294901760
        %4352 = vmatmul.mubr.f32.gmra.mrb[0].mxu0 %v4351
        %v4353 = vpop.f32.mrb[0].mxu0
        %v4354 = vadd.f32 %v4137, %v4353
        %v4355 = vpop.f32.mrb[0].mxu0
        %4356 = vmatprep.mubr.f32.mxu0 0.0
        %v4357 = vand.u32 %v2221, 4294901760
        %4358 = vmatmul.mubr.f32.gmra.mrb[0].mxu0 %v4357
        %v4359 = vpop.f32.mrb[0].mxu0
        %v4360 = vadd.f32 %v4147, %v4359
        %v4361 = vpop.f32.mrb[0].mxu0
        %4362 = vmatprep.mubr.f32.mxu0 0.0
        %v4363 = vand.u32 %v2222, 4294901760
        %4364 = vmatmul.mubr.f32.gmra.mrb[0].mxu0 %v4363
        %v4365 = vpop.f32.mrb[0].mxu0
        %v4366 = vadd.f32 %v4157, %v4365
        %v4367 = vpop.f32.mrb[0].mxu0
        %4368 = vmatprep.mubr.f32.mxu0 0.0
        %v4369 = vand.u32 %v2223, 4294901760
        %4370 = vmatmul.mubr.f32.gmra.mrb[0].mxu0 %v4369
        %v4371 = vpop.f32.mrb[0].mxu0
        %v4372 = vadd.f32 %v4167, %v4371
        %v4373 = vpop.f32.mrb[0].mxu0
        %4374 = vmatprep.mubr.f32.mxu0 0.0
        %v4375 = vand.u32 %v2224, 4294901760
        %4376 = vmatmul.mubr.f32.gmra.mrb[0].mxu0 %v4375
        %v4377 = vpop.f32.mrb[0].mxu0
        %v4378 = vadd.f32 %v4177, %v4377
        %v4379 = vpop.f32.mrb[0].mxu0
        %4380 = vmatprep.mubr.f32.mxu0 0.0
        %v4381 = vand.u32 %v2225, 4294901760
        %4382 = vmatmul.mubr.f32.gmra.mrb[0].mxu0 %v4381
        %v4383 = vpop.f32.mrb[0].mxu0
        %v4384 = vadd.f32 %v4187, %v4383
        %v4385 = vpop.f32.mrb[0].mxu0
        %4386 = vmatprep.mubr.f32.mxu0 0.0
        %v4387 = vand.u32 %v2226, 4294901760
        %4388 = vmatmul.mubr.f32.gmra.mrb[0].mxu0 %v4387
        %v4389 = vpop.f32.mrb[0].mxu0
        %v4390 = vadd.f32 %v4197, %v4389
        %v4391 = vpop.f32.mrb[0].mxu0
        %4392 = vdwg.mxu0
        %4393 = vmatprep.subr.mxu0 0.0
        %v4394 = vand.u32 %v358, 4294901760
        %v4395 = vsub.f32 %v358, %v4394
        %4396 = vmatpush1.msra.mxu0 %v4395
        %4397 = vmatprep.subr.mxu0 0.0
        %v4398 = vand.u32 %v359, 4294901760
        %v4399 = vsub.f32 %v359, %v4398
        %4400 = vmatpush1.msra.mxu0 %v4399
        %4401 = vmatprep.subr.mxu0 0.0
        %v4402 = vand.u32 %v360, 4294901760
        %v4403 = vsub.f32 %v360, %v4402
        %4404 = vmatpush1.msra.mxu0 %v4403
        %4405 = vmatprep.subr.mxu0 0.0
        %v4406 = vand.u32 %v361, 4294901760
        %v4407 = vsub.f32 %v361, %v4406
        %4408 = vmatpush1.msra.mxu0 %v4407
        %4409 = vmatprep.subr.mxu0 0.0
        %v4410 = vand.u32 %v362, 4294901760
        %v4411 = vsub.f32 %v362, %v4410
        %4412 = vmatpush1.msra.mxu0 %v4411
        %4413 = vmatprep.subr.mxu0 0.0
        %v4414 = vand.u32 %v363, 4294901760
        %v4415 = vsub.f32 %v363, %v4414
        %4416 = vmatpush1.msra.mxu0 %v4415
        %4417 = vmatprep.subr.mxu0 0.0
        %v4418 = vand.u32 %v364, 4294901760
        %v4419 = vsub.f32 %v364, %v4418
        %4420 = vmatpush1.msra.mxu0 %v4419
        %4421 = vmatprep.subr.mxu0 0.0
        %v4422 = vand.u32 %v365, 4294901760
        %v4423 = vsub.f32 %v365, %v4422
        %4424 = vmatpush1.msra.mxu0 %v4423
        %4425 = vmatprep.subr.mxu0 0.0
        %v4426 = vand.u32 %v366, 4294901760
        %v4427 = vsub.f32 %v366, %v4426
        %4428 = vmatpush1.msra.mxu0 %v4427
        %4429 = vmatprep.subr.mxu0 0.0
        %v4430 = vand.u32 %v367, 4294901760
        %v4431 = vsub.f32 %v367, %v4430
        %4432 = vmatpush1.msra.mxu0 %v4431
        %4433 = vmatprep.subr.mxu0 0.0
        %v4434 = vand.u32 %v368, 4294901760
        %v4435 = vsub.f32 %v368, %v4434
        %4436 = vmatpush1.msra.mxu0 %v4435
        %4437 = vmatprep.subr.mxu0 0.0
        %v4438 = vand.u32 %v369, 4294901760
        %v4439 = vsub.f32 %v369, %v4438
        %4440 = vmatpush1.msra.mxu0 %v4439
        %4441 = vmatprep.subr.mxu0 0.0
        %v4442 = vand.u32 %v370, 4294901760
        %v4443 = vsub.f32 %v370, %v4442
        %4444 = vmatpush1.msra.mxu0 %v4443
        %4445 = vmatprep.subr.mxu0 0.0
        %v4446 = vand.u32 %v371, 4294901760
        %v4447 = vsub.f32 %v371, %v4446
        %4448 = vmatpush1.msra.mxu0 %v4447
        %4449 = vmatprep.subr.mxu0 0.0
        %v4450 = vand.u32 %v372, 4294901760
        %v4451 = vsub.f32 %v372, %v4450
        %4452 = vmatpush1.msra.mxu0 %v4451
        %4453 = vmatprep.subr.mxu0 0.0
        %v4454 = vand.u32 %v373, 4294901760
        %v4455 = vsub.f32 %v373, %v4454
        %4456 = vmatpush1.msra.mxu0 %v4455
        %4457 = vmatprep.subr.mxu0 0.0
        %4458 = vmatpush1.msra.mxu0 0.0
        %4459 = vmatprep.subr.mxu0 0.0
        %4460 = vmatpush1.msra.mxu0 0.0
        %4461 = vmatprep.subr.mxu0 0.0
        %4462 = vmatpush1.msra.mxu0 0.0
        %4463 = vmatprep.subr.mxu0 0.0
        %4464 = vmatpush1.msra.mxu0 0.0
        %4465 = vmatprep.subr.mxu0 0.0
        %4466 = vmatpush1.msra.mxu0 0.0
        %4467 = vmatprep.subr.mxu0 0.0
        %4468 = vmatpush1.msra.mxu0 0.0
        %4469 = vmatprep.subr.mxu0 0.0
        %4470 = vmatpush1.msra.mxu0 0.0
        %4471 = vmatprep.subr.mxu0 0.0
        %4472 = vmatpush1.msra.mxu0 0.0
        %4473 = vmatprep.subr.mxu0 0.0
        %4474 = vmatpush1.msra.mxu0 0.0
        %4475 = vmatprep.subr.mxu0 0.0
        %4476 = vmatpush1.msra.mxu0 0.0
        %4477 = vmatprep.subr.mxu0 0.0
        %4478 = vmatpush1.msra.mxu0 0.0
        %4479 = vmatprep.subr.mxu0 0.0
        %4480 = vmatpush1.msra.mxu0 0.0
        %4481 = vmatprep.subr.mxu0 0.0
        %4482 = vmatpush1.msra.mxu0 0.0
        %4483 = vmatprep.subr.mxu0 0.0
        %4484 = vmatpush1.msra.mxu0 0.0
        %4485 = vmatprep.subr.mxu0 0.0
        %4486 = vmatpush1.msra.mxu0 0.0
        %4487 = vmatprep.subr.mxu0 0.0
        %4488 = vmatpush1.msra.mxu0 0.0
        %4489 = vmatprep.mubr.f32.mxu0 0.0
        %v4490 = vand.u32 %v2219, 4294901760
        %v4491 = vsub.f32 %v2219, %v4490
        %4492 = vmatmul.mubr.f32.gmra.mrb[0].mxu0 %v4491
        %v4493 = vpop.f32.mrb[0].mxu0
        %v4494 = vadd.f32 %v4348, %v4493
        %v4495 = vpop.f32.mrb[0].mxu0
        %4496 = vmatprep.mubr.f32.mxu0 0.0
        %v4497 = vand.u32 %v2220, 4294901760
        %v4498 = vsub.f32 %v2220, %v4497
        %4499 = vmatmul.mubr.f32.gmra.mrb[0].mxu0 %v4498
        %v4500 = vpop.f32.mrb[0].mxu0
        %v4501 = vadd.f32 %v4354, %v4500
        %v4502 = vpop.f32.mrb[0].mxu0
        %4503 = vmatprep.mubr.f32.mxu0 0.0
        %v4504 = vand.u32 %v2221, 4294901760
        %v4505 = vsub.f32 %v2221, %v4504
        %4506 = vmatmul.mubr.f32.gmra.mrb[0].mxu0 %v4505
        %v4507 = vpop.f32.mrb[0].mxu0
        %v4508 = vadd.f32 %v4360, %v4507
        %v4509 = vpop.f32.mrb[0].mxu0
        %4510 = vmatprep.mubr.f32.mxu0 0.0
        %v4511 = vand.u32 %v2222, 4294901760
        %v4512 = vsub.f32 %v2222, %v4511
        %4513 = vmatmul.mubr.f32.gmra.mrb[0].mxu0 %v4512
        %v4514 = vpop.f32.mrb[0].mxu0
        %v4515 = vadd.f32 %v4366, %v4514
        %v4516 = vpop.f32.mrb[0].mxu0
        %4517 = vmatprep.mubr.f32.mxu0 0.0
        %v4518 = vand.u32 %v2223, 4294901760
        %v4519 = vsub.f32 %v2223, %v4518
        %4520 = vmatmul.mubr.f32.gmra.mrb[0].mxu0 %v4519
        %v4521 = vpop.f32.mrb[0].mxu0
        %v4522 = vadd.f32 %v4372, %v4521
        %v4523 = vpop.f32.mrb[0].mxu0
        %4524 = vmatprep.mubr.f32.mxu0 0.0
        %v4525 = vand.u32 %v2224, 4294901760
        %v4526 = vsub.f32 %v2224, %v4525
        %4527 = vmatmul.mubr.f32.gmra.mrb[0].mxu0 %v4526
        %v4528 = vpop.f32.mrb[0].mxu0
        %v4529 = vadd.f32 %v4378, %v4528
        %v4530 = vpop.f32.mrb[0].mxu0
        %4531 = vmatprep.mubr.f32.mxu0 0.0
        %v4532 = vand.u32 %v2225, 4294901760
        %v4533 = vsub.f32 %v2225, %v4532
        %4534 = vmatmul.mubr.f32.gmra.mrb[0].mxu0 %v4533
        %v4535 = vpop.f32.mrb[0].mxu0
        %v4536 = vadd.f32 %v4384, %v4535
        %v4537 = vpop.f32.mrb[0].mxu0
        %4538 = vmatprep.mubr.f32.mxu0 0.0
        %v4539 = vand.u32 %v2226, 4294901760
        %v4540 = vsub.f32 %v2226, %v4539
        %4541 = vmatmul.mubr.f32.gmra.mrb[0].mxu0 %v4540
        %v4542 = vpop.f32.mrb[0].mxu0
        %v4543 = vadd.f32 %v4390, %v4542
        %v4544 = vpop.f32.mrb[0].mxu0
        %4545 = vdwg.mxu0
        %4546 = vmatprep.subr.mxu0 0.0
        %v4547 = vand.u32 %v358, 4294901760
        %4548 = vmatpush1.msra.mxu0 %v4547
        %4549 = vmatprep.subr.mxu0 0.0
        %v4550 = vand.u32 %v359, 4294901760
        %4551 = vmatpush1.msra.mxu0 %v4550
        %4552 = vmatprep.subr.mxu0 0.0
        %v4553 = vand.u32 %v360, 4294901760
        %4554 = vmatpush1.msra.mxu0 %v4553
        %4555 = vmatprep.subr.mxu0 0.0
        %v4556 = vand.u32 %v361, 4294901760
        %4557 = vmatpush1.msra.mxu0 %v4556
        %4558 = vmatprep.subr.mxu0 0.0
        %v4559 = vand.u32 %v362, 4294901760
        %4560 = vmatpush1.msra.mxu0 %v4559
        %4561 = vmatprep.subr.mxu0 0.0
        %v4562 = vand.u32 %v363, 4294901760
        %4563 = vmatpush1.msra.mxu0 %v4562
        %4564 = vmatprep.subr.mxu0 0.0
        %v4565 = vand.u32 %v364, 4294901760
        %4566 = vmatpush1.msra.mxu0 %v4565
        %4567 = vmatprep.subr.mxu0 0.0
        %v4568 = vand.u32 %v365, 4294901760
        %4569 = vmatpush1.msra.mxu0 %v4568
        %4570 = vmatprep.subr.mxu0 0.0
        %v4571 = vand.u32 %v366, 4294901760
        %4572 = vmatpush1.msra.mxu0 %v4571
        %4573 = vmatprep.subr.mxu0 0.0
        %v4574 = vand.u32 %v367, 4294901760
        %4575 = vmatpush1.msra.mxu0 %v4574
        %4576 = vmatprep.subr.mxu0 0.0
        %v4577 = vand.u32 %v368, 4294901760
        %4578 = vmatpush1.msra.mxu0 %v4577
        %4579 = vmatprep.subr.mxu0 0.0
        %v4580 = vand.u32 %v369, 4294901760
        %4581 = vmatpush1.msra.mxu0 %v4580
        %4582 = vmatprep.subr.mxu0 0.0
        %v4583 = vand.u32 %v370, 4294901760
        %4584 = vmatpush1.msra.mxu0 %v4583
        %4585 = vmatprep.subr.mxu0 0.0
        %v4586 = vand.u32 %v371, 4294901760
        %4587 = vmatpush1.msra.mxu0 %v4586
        %4588 = vmatprep.subr.mxu0 0.0
        %v4589 = vand.u32 %v372, 4294901760
        %4590 = vmatpush1.msra.mxu0 %v4589
        %4591 = vmatprep.subr.mxu0 0.0
        %v4592 = vand.u32 %v373, 4294901760
        %4593 = vmatpush1.msra.mxu0 %v4592
        %4594 = vmatprep.subr.mxu0 0.0
        %4595 = vmatpush1.msra.mxu0 0.0
        %4596 = vmatprep.subr.mxu0 0.0
        %4597 = vmatpush1.msra.mxu0 0.0
        %4598 = vmatprep.subr.mxu0 0.0
        %4599 = vmatpush1.msra.mxu0 0.0
        %4600 = vmatprep.subr.mxu0 0.0
        %4601 = vmatpush1.msra.mxu0 0.0
        %4602 = vmatprep.subr.mxu0 0.0
        %4603 = vmatpush1.msra.mxu0 0.0
        %4604 = vmatprep.subr.mxu0 0.0
        %4605 = vmatpush1.msra.mxu0 0.0
        %4606 = vmatprep.subr.mxu0 0.0
        %4607 = vmatpush1.msra.mxu0 0.0
        %4608 = vmatprep.subr.mxu0 0.0
        %4609 = vmatpush1.msra.mxu0 0.0
        %4610 = vmatprep.subr.mxu0 0.0
        %4611 = vmatpush1.msra.mxu0 0.0
        %4612 = vmatprep.subr.mxu0 0.0
        %4613 = vmatpush1.msra.mxu0 0.0
        %4614 = vmatprep.subr.mxu0 0.0
        %4615 = vmatpush1.msra.mxu0 0.0
        %4616 = vmatprep.subr.mxu0 0.0
        %4617 = vmatpush1.msra.mxu0 0.0
        %4618 = vmatprep.subr.mxu0 0.0
        %4619 = vmatpush1.msra.mxu0 0.0
        %4620 = vmatprep.subr.mxu0 0.0
        %4621 = vmatpush1.msra.mxu0 0.0
        %4622 = vmatprep.subr.mxu0 0.0
        %4623 = vmatpush1.msra.mxu0 0.0
        %4624 = vmatprep.subr.mxu0 0.0
        %4625 = vmatpush1.msra.mxu0 0.0
        %4626 = vmatprep.mubr.f32.mxu0 0.0
        %v4627 = vand.u32 %v2219, 4294901760
        %v4628 = vsub.f32 %v2219, %v4627
        %v4629 = vand.u32 %v4628, 4294901760
        %4630 = vmatmul.mubr.f32.gmra.mrb[0].mxu0 %v4629
        %v4631 = vpop.f32.mrb[0].mxu0
        %v4632 = vadd.f32 %v4494, %v4631
        %v4633 = vpop.f32.mrb[0].mxu0
        %4634 = vmatprep.mubr.f32.mxu0 0.0
        %v4635 = vand.u32 %v2220, 4294901760
        %v4636 = vsub.f32 %v2220, %v4635
        %v4637 = vand.u32 %v4636, 4294901760
        %4638 = vmatmul.mubr.f32.gmra.mrb[0].mxu0 %v4637
        %v4639 = vpop.f32.mrb[0].mxu0
        %v4640 = vadd.f32 %v4501, %v4639
        %v4641 = vpop.f32.mrb[0].mxu0
        %4642 = vmatprep.mubr.f32.mxu0 0.0
        %v4643 = vand.u32 %v2221, 4294901760
        %v4644 = vsub.f32 %v2221, %v4643
        %v4645 = vand.u32 %v4644, 4294901760
        %4646 = vmatmul.mubr.f32.gmra.mrb[0].mxu0 %v4645
        %v4647 = vpop.f32.mrb[0].mxu0
        %v4648 = vadd.f32 %v4508, %v4647
        %v4649 = vpop.f32.mrb[0].mxu0
        %4650 = vmatprep.mubr.f32.mxu0 0.0
        %v4651 = vand.u32 %v2222, 4294901760
        %v4652 = vsub.f32 %v2222, %v4651
        %v4653 = vand.u32 %v4652, 4294901760
        %4654 = vmatmul.mubr.f32.gmra.mrb[0].mxu0 %v4653
        %v4655 = vpop.f32.mrb[0].mxu0
        %v4656 = vadd.f32 %v4515, %v4655
        %v4657 = vpop.f32.mrb[0].mxu0
        %4658 = vmatprep.mubr.f32.mxu0 0.0
        %v4659 = vand.u32 %v2223, 4294901760
        %v4660 = vsub.f32 %v2223, %v4659
        %v4661 = vand.u32 %v4660, 4294901760
        %4662 = vmatmul.mubr.f32.gmra.mrb[0].mxu0 %v4661
        %v4663 = vpop.f32.mrb[0].mxu0
        %v4664 = vadd.f32 %v4522, %v4663
        %v4665 = vpop.f32.mrb[0].mxu0
        %4666 = vmatprep.mubr.f32.mxu0 0.0
        %v4667 = vand.u32 %v2224, 4294901760
        %v4668 = vsub.f32 %v2224, %v4667
        %v4669 = vand.u32 %v4668, 4294901760
        %4670 = vmatmul.mubr.f32.gmra.mrb[0].mxu0 %v4669
        %v4671 = vpop.f32.mrb[0].mxu0
        %v4672 = vadd.f32 %v4529, %v4671
        %v4673 = vpop.f32.mrb[0].mxu0
        %4674 = vmatprep.mubr.f32.mxu0 0.0
        %v4675 = vand.u32 %v2225, 4294901760
        %v4676 = vsub.f32 %v2225, %v4675
        %v4677 = vand.u32 %v4676, 4294901760
        %4678 = vmatmul.mubr.f32.gmra.mrb[0].mxu0 %v4677
        %v4679 = vpop.f32.mrb[0].mxu0
        %v4680 = vadd.f32 %v4536, %v4679
        %v4681 = vpop.f32.mrb[0].mxu0
        %4682 = vmatprep.mubr.f32.mxu0 0.0
        %v4683 = vand.u32 %v2226, 4294901760
        %v4684 = vsub.f32 %v2226, %v4683
        %v4685 = vand.u32 %v4684, 4294901760
        %4686 = vmatmul.mubr.f32.gmra.mrb[0].mxu0 %v4685
        %v4687 = vpop.f32.mrb[0].mxu0
        %v4688 = vadd.f32 %v4543, %v4687
        %v4689 = vpop.f32.mrb[0].mxu0
        %4690 = vdwg.mxu0
        %4691 = vmatprep.subr.mxu0 0.0
        %v4692 = vand.u32 %v358, 4294901760
        %v4693 = vsub.f32 %v358, %v4692
        %v4694 = vand.u32 %v4693, 4294901760
        %4695 = vmatpush1.msra.mxu0 %v4694
        %4696 = vmatprep.subr.mxu0 0.0
        %v4697 = vand.u32 %v359, 4294901760
        %v4698 = vsub.f32 %v359, %v4697
        %v4699 = vand.u32 %v4698, 4294901760
        %4700 = vmatpush1.msra.mxu0 %v4699
        %4701 = vmatprep.subr.mxu0 0.0
        %v4702 = vand.u32 %v360, 4294901760
        %v4703 = vsub.f32 %v360, %v4702
        %v4704 = vand.u32 %v4703, 4294901760
        %4705 = vmatpush1.msra.mxu0 %v4704
        %4706 = vmatprep.subr.mxu0 0.0
        %v4707 = vand.u32 %v361, 4294901760
        %v4708 = vsub.f32 %v361, %v4707
        %v4709 = vand.u32 %v4708, 4294901760
        %4710 = vmatpush1.msra.mxu0 %v4709
        %4711 = vmatprep.subr.mxu0 0.0
        %v4712 = vand.u32 %v362, 4294901760
        %v4713 = vsub.f32 %v362, %v4712
        %v4714 = vand.u32 %v4713, 4294901760
        %4715 = vmatpush1.msra.mxu0 %v4714
        %4716 = vmatprep.subr.mxu0 0.0
        %v4717 = vand.u32 %v363, 4294901760
        %v4718 = vsub.f32 %v363, %v4717
        %v4719 = vand.u32 %v4718, 4294901760
        %4720 = vmatpush1.msra.mxu0 %v4719
        %4721 = vmatprep.subr.mxu0 0.0
        %v4722 = vand.u32 %v364, 4294901760
        %v4723 = vsub.f32 %v364, %v4722
        %v4724 = vand.u32 %v4723, 4294901760
        %4725 = vmatpush1.msra.mxu0 %v4724
        %4726 = vmatprep.subr.mxu0 0.0
        %v4727 = vand.u32 %v365, 4294901760
        %v4728 = vsub.f32 %v365, %v4727
        %v4729 = vand.u32 %v4728, 4294901760
        %4730 = vmatpush1.msra.mxu0 %v4729
        %4731 = vmatprep.subr.mxu0 0.0
        %v4732 = vand.u32 %v366, 4294901760
        %v4733 = vsub.f32 %v366, %v4732
        %v4734 = vand.u32 %v4733, 4294901760
        %4735 = vmatpush1.msra.mxu0 %v4734
        %4736 = vmatprep.subr.mxu0 0.0
        %v4737 = vand.u32 %v367, 4294901760
        %v4738 = vsub.f32 %v367, %v4737
        %v4739 = vand.u32 %v4738, 4294901760
        %4740 = vmatpush1.msra.mxu0 %v4739
        %4741 = vmatprep.subr.mxu0 0.0
        %v4742 = vand.u32 %v368, 4294901760
        %v4743 = vsub.f32 %v368, %v4742
        %v4744 = vand.u32 %v4743, 4294901760
        %4745 = vmatpush1.msra.mxu0 %v4744
        %4746 = vmatprep.subr.mxu0 0.0
        %v4747 = vand.u32 %v369, 4294901760
        %v4748 = vsub.f32 %v369, %v4747
        %v4749 = vand.u32 %v4748, 4294901760
        %4750 = vmatpush1.msra.mxu0 %v4749
        %4751 = vmatprep.subr.mxu0 0.0
        %v4752 = vand.u32 %v370, 4294901760
        %v4753 = vsub.f32 %v370, %v4752
        %v4754 = vand.u32 %v4753, 4294901760
        %4755 = vmatpush1.msra.mxu0 %v4754
        %4756 = vmatprep.subr.mxu0 0.0
        %v4757 = vand.u32 %v371, 4294901760
        %v4758 = vsub.f32 %v371, %v4757
        %v4759 = vand.u32 %v4758, 4294901760
        %4760 = vmatpush1.msra.mxu0 %v4759
        %4761 = vmatprep.subr.mxu0 0.0
        %v4762 = vand.u32 %v372, 4294901760
        %v4763 = vsub.f32 %v372, %v4762
        %v4764 = vand.u32 %v4763, 4294901760
        %4765 = vmatpush1.msra.mxu0 %v4764
        %4766 = vmatprep.subr.mxu0 0.0
        %v4767 = vand.u32 %v373, 4294901760
        %v4768 = vsub.f32 %v373, %v4767
        %v4769 = vand.u32 %v4768, 4294901760
        %4770 = vmatpush1.msra.mxu0 %v4769
        %4771 = vmatprep.subr.mxu0 0.0
        %4772 = vmatpush1.msra.mxu0 0.0
        %4773 = vmatprep.subr.mxu0 0.0
        %4774 = vmatpush1.msra.mxu0 0.0
        %4775 = vmatprep.subr.mxu0 0.0
        %4776 = vmatpush1.msra.mxu0 0.0
        %4777 = vmatprep.subr.mxu0 0.0
        %4778 = vmatpush1.msra.mxu0 0.0
        %4779 = vmatprep.subr.mxu0 0.0
        %4780 = vmatpush1.msra.mxu0 0.0
        %4781 = vmatprep.subr.mxu0 0.0
        %4782 = vmatpush1.msra.mxu0 0.0
        %4783 = vmatprep.subr.mxu0 0.0
        %4784 = vmatpush1.msra.mxu0 0.0
        %4785 = vmatprep.subr.mxu0 0.0
        %4786 = vmatpush1.msra.mxu0 0.0
        %4787 = vmatprep.subr.mxu0 0.0
        %4788 = vmatpush1.msra.mxu0 0.0
        %4789 = vmatprep.subr.mxu0 0.0
        %4790 = vmatpush1.msra.mxu0 0.0
        %4791 = vmatprep.subr.mxu0 0.0
        %4792 = vmatpush1.msra.mxu0 0.0
        %4793 = vmatprep.subr.mxu0 0.0
        %4794 = vmatpush1.msra.mxu0 0.0
        %4795 = vmatprep.subr.mxu0 0.0
        %4796 = vmatpush1.msra.mxu0 0.0
        %4797 = vmatprep.subr.mxu0 0.0
        %4798 = vmatpush1.msra.mxu0 0.0
        %4799 = vmatprep.subr.mxu0 0.0
        %4800 = vmatpush1.msra.mxu0 0.0
        %4801 = vmatprep.subr.mxu0 0.0
        %4802 = vmatpush1.msra.mxu0 0.0
        %4803 = vmatprep.mubr.f32.mxu0 0.0
        %v4804 = vand.u32 %v2219, 4294901760
        %4805 = vmatmul.mubr.f32.gmra.mrb[0].mxu0 %v4804
        %v4806 = vpop.f32.mrb[0].mxu0
        %v4807 = vadd.f32 %v4632, %v4806
        %v4808 = vpop.f32.mrb[0].mxu0
        %4809 = vmatprep.mubr.f32.mxu0 0.0
        %v4810 = vand.u32 %v2220, 4294901760
        %4811 = vmatmul.mubr.f32.gmra.mrb[0].mxu0 %v4810
        %v4812 = vpop.f32.mrb[0].mxu0
        %v4813 = vadd.f32 %v4640, %v4812
        %v4814 = vpop.f32.mrb[0].mxu0
        %4815 = vmatprep.mubr.f32.mxu0 0.0
        %v4816 = vand.u32 %v2221, 4294901760
        %4817 = vmatmul.mubr.f32.gmra.mrb[0].mxu0 %v4816
        %v4818 = vpop.f32.mrb[0].mxu0
        %v4819 = vadd.f32 %v4648, %v4818
        %v4820 = vpop.f32.mrb[0].mxu0
        %4821 = vmatprep.mubr.f32.mxu0 0.0
        %v4822 = vand.u32 %v2222, 4294901760
        %4823 = vmatmul.mubr.f32.gmra.mrb[0].mxu0 %v4822
        %v4824 = vpop.f32.mrb[0].mxu0
        %v4825 = vadd.f32 %v4656, %v4824
        %v4826 = vpop.f32.mrb[0].mxu0
        %4827 = vmatprep.mubr.f32.mxu0 0.0
        %v4828 = vand.u32 %v2223, 4294901760
        %4829 = vmatmul.mubr.f32.gmra.mrb[0].mxu0 %v4828
        %v4830 = vpop.f32.mrb[0].mxu0
        %v4831 = vadd.f32 %v4664, %v4830
        %v4832 = vpop.f32.mrb[0].mxu0
        %4833 = vmatprep.mubr.f32.mxu0 0.0
        %v4834 = vand.u32 %v2224, 4294901760
        %4835 = vmatmul.mubr.f32.gmra.mrb[0].mxu0 %v4834
        %v4836 = vpop.f32.mrb[0].mxu0
        %v4837 = vadd.f32 %v4672, %v4836
        %v4838 = vpop.f32.mrb[0].mxu0
        %4839 = vmatprep.mubr.f32.mxu0 0.0
        %v4840 = vand.u32 %v2225, 4294901760
        %4841 = vmatmul.mubr.f32.gmra.mrb[0].mxu0 %v4840
        %v4842 = vpop.f32.mrb[0].mxu0
        %v4843 = vadd.f32 %v4680, %v4842
        %v4844 = vpop.f32.mrb[0].mxu0
        %4845 = vmatprep.mubr.f32.mxu0 0.0
        %v4846 = vand.u32 %v2226, 4294901760
        %4847 = vmatmul.mubr.f32.gmra.mrb[0].mxu0 %v4846
        %v4848 = vpop.f32.mrb[0].mxu0
        %v4849 = vadd.f32 %v4688, %v4848
        %v4850 = vpop.f32.mrb[0].mxu0
        %4851 = vdwg.mxu0
        %4852 = vmatprep.subr.mxu0 0.0
        %v4853 = vand.u32 %v358, 4294901760
        %4854 = vmatpush1.msra.mxu0 %v4853
        %4855 = vmatprep.subr.mxu0 0.0
        %v4856 = vand.u32 %v359, 4294901760
        %4857 = vmatpush1.msra.mxu0 %v4856
        %4858 = vmatprep.subr.mxu0 0.0
        %v4859 = vand.u32 %v360, 4294901760
        %4860 = vmatpush1.msra.mxu0 %v4859
        %4861 = vmatprep.subr.mxu0 0.0
        %v4862 = vand.u32 %v361, 4294901760
        %4863 = vmatpush1.msra.mxu0 %v4862
        %4864 = vmatprep.subr.mxu0 0.0
        %v4865 = vand.u32 %v362, 4294901760
        %4866 = vmatpush1.msra.mxu0 %v4865
        %4867 = vmatprep.subr.mxu0 0.0
        %v4868 = vand.u32 %v363, 4294901760
        %4869 = vmatpush1.msra.mxu0 %v4868
        %4870 = vmatprep.subr.mxu0 0.0
        %v4871 = vand.u32 %v364, 4294901760
        %4872 = vmatpush1.msra.mxu0 %v4871
        %4873 = vmatprep.subr.mxu0 0.0
        %v4874 = vand.u32 %v365, 4294901760
        %4875 = vmatpush1.msra.mxu0 %v4874
        %4876 = vmatprep.subr.mxu0 0.0
        %v4877 = vand.u32 %v366, 4294901760
        %4878 = vmatpush1.msra.mxu0 %v4877
        %4879 = vmatprep.subr.mxu0 0.0
        %v4880 = vand.u32 %v367, 4294901760
        %4881 = vmatpush1.msra.mxu0 %v4880
        %4882 = vmatprep.subr.mxu0 0.0
        %v4883 = vand.u32 %v368, 4294901760
        %4884 = vmatpush1.msra.mxu0 %v4883
        %4885 = vmatprep.subr.mxu0 0.0
        %v4886 = vand.u32 %v369, 4294901760
        %4887 = vmatpush1.msra.mxu0 %v4886
        %4888 = vmatprep.subr.mxu0 0.0
        %v4889 = vand.u32 %v370, 4294901760
        %4890 = vmatpush1.msra.mxu0 %v4889
        %4891 = vmatprep.subr.mxu0 0.0
        %v4892 = vand.u32 %v371, 4294901760
        %4893 = vmatpush1.msra.mxu0 %v4892
        %4894 = vmatprep.subr.mxu0 0.0
        %v4895 = vand.u32 %v372, 4294901760
        %4896 = vmatpush1.msra.mxu0 %v4895
        %4897 = vmatprep.subr.mxu0 0.0
        %v4898 = vand.u32 %v373, 4294901760
        %4899 = vmatpush1.msra.mxu0 %v4898
        %4900 = vmatprep.subr.mxu0 0.0
        %4901 = vmatpush1.msra.mxu0 0.0
        %4902 = vmatprep.subr.mxu0 0.0
        %4903 = vmatpush1.msra.mxu0 0.0
        %4904 = vmatprep.subr.mxu0 0.0
        %4905 = vmatpush1.msra.mxu0 0.0
        %4906 = vmatprep.subr.mxu0 0.0
        %4907 = vmatpush1.msra.mxu0 0.0
        %4908 = vmatprep.subr.mxu0 0.0
        %4909 = vmatpush1.msra.mxu0 0.0
        %4910 = vmatprep.subr.mxu0 0.0
        %4911 = vmatpush1.msra.mxu0 0.0
        %4912 = vmatprep.subr.mxu0 0.0
        %4913 = vmatpush1.msra.mxu0 0.0
        %4914 = vmatprep.subr.mxu0 0.0
        %4915 = vmatpush1.msra.mxu0 0.0
        %4916 = vmatprep.subr.mxu0 0.0
        %4917 = vmatpush1.msra.mxu0 0.0
        %4918 = vmatprep.subr.mxu0 0.0
        %4919 = vmatpush1.msra.mxu0 0.0
        %4920 = vmatprep.subr.mxu0 0.0
        %4921 = vmatpush1.msra.mxu0 0.0
        %4922 = vmatprep.subr.mxu0 0.0
        %4923 = vmatpush1.msra.mxu0 0.0
        %4924 = vmatprep.subr.mxu0 0.0
        %4925 = vmatpush1.msra.mxu0 0.0
        %4926 = vmatprep.subr.mxu0 0.0
        %4927 = vmatpush1.msra.mxu0 0.0
        %4928 = vmatprep.subr.mxu0 0.0
        %4929 = vmatpush1.msra.mxu0 0.0
        %4930 = vmatprep.subr.mxu0 0.0
        %4931 = vmatpush1.msra.mxu0 0.0
        %4932 = vmatprep.mubr.f32.mxu0 0.0
        %v4933 = vand.u32 %v2219, 4294901760
        %4934 = vmatmul.mubr.f32.gmra.mrb[0].mxu0 %v4933
        %v4935 = vpop.f32.mrb[0].mxu0
        %v4936 = vadd.f32 %v4807, %v4935
        %v4937 = vpop.f32.mrb[0].mxu0
        %4938 = vmatprep.mubr.f32.mxu0 0.0
        %v4939 = vand.u32 %v2220, 4294901760
        %4940 = vmatmul.mubr.f32.gmra.mrb[0].mxu0 %v4939
        %v4941 = vpop.f32.mrb[0].mxu0
        %v4942 = vadd.f32 %v4813, %v4941
        %v4943 = vpop.f32.mrb[0].mxu0
        %4944 = vmatprep.mubr.f32.mxu0 0.0
        %v4945 = vand.u32 %v2221, 4294901760
        %4946 = vmatmul.mubr.f32.gmra.mrb[0].mxu0 %v4945
        %v4947 = vpop.f32.mrb[0].mxu0
        %v4948 = vadd.f32 %v4819, %v4947
        %v4949 = vpop.f32.mrb[0].mxu0
        %4950 = vmatprep.mubr.f32.mxu0 0.0
        %v4951 = vand.u32 %v2222, 4294901760
        %4952 = vmatmul.mubr.f32.gmra.mrb[0].mxu0 %v4951
        %v4953 = vpop.f32.mrb[0].mxu0
        %v4954 = vadd.f32 %v4825, %v4953
        %v4955 = vpop.f32.mrb[0].mxu0
        %4956 = vmatprep.mubr.f32.mxu0 0.0
        %v4957 = vand.u32 %v2223, 4294901760
        %4958 = vmatmul.mubr.f32.gmra.mrb[0].mxu0 %v4957
        %v4959 = vpop.f32.mrb[0].mxu0
        %v4960 = vadd.f32 %v4831, %v4959
        %v4961 = vpop.f32.mrb[0].mxu0
        %4962 = vmatprep.mubr.f32.mxu0 0.0
        %v4963 = vand.u32 %v2224, 4294901760
        %4964 = vmatmul.mubr.f32.gmra.mrb[0].mxu0 %v4963
        %v4965 = vpop.f32.mrb[0].mxu0
        %v4966 = vadd.f32 %v4837, %v4965
        %v4967 = vpop.f32.mrb[0].mxu0
        %4968 = vmatprep.mubr.f32.mxu0 0.0
        %v4969 = vand.u32 %v2225, 4294901760
        %4970 = vmatmul.mubr.f32.gmra.mrb[0].mxu0 %v4969
        %v4971 = vpop.f32.mrb[0].mxu0
        %v4972 = vadd.f32 %v4843, %v4971
        %v4973 = vpop.f32.mrb[0].mxu0
        %4974 = vmatprep.mubr.f32.mxu0 0.0
        %v4975 = vand.u32 %v2226, 4294901760
        %4976 = vmatmul.mubr.f32.gmra.mrb[0].mxu0 %v4975
        %v4977 = vpop.f32.mrb[0].mxu0
        %v4978 = vadd.f32 %v4849, %v4977
        %v4979 = vpop.f32.mrb[0].mxu0
        %4980 = vdwg.mxu0
        %4981 = vmatprep.subr.mxu0 0.0
        %v4982 = vand.u32 %v4936, 4294901760
        %4983 = vmatpush1.msra.mxu0 %v4982
        %4984 = vmatprep.subr.mxu0 0.0
        %v4985 = vand.u32 %v4942, 4294901760
        %4986 = vmatpush1.msra.mxu0 %v4985
        %4987 = vmatprep.subr.mxu0 0.0
        %v4988 = vand.u32 %v4948, 4294901760
        %4989 = vmatpush1.msra.mxu0 %v4988
        %4990 = vmatprep.subr.mxu0 0.0
        %v4991 = vand.u32 %v4954, 4294901760
        %4992 = vmatpush1.msra.mxu0 %v4991
        %4993 = vmatprep.subr.mxu0 0.0
        %v4994 = vand.u32 %v4960, 4294901760
        %4995 = vmatpush1.msra.mxu0 %v4994
        %4996 = vmatprep.subr.mxu0 0.0
        %v4997 = vand.u32 %v4966, 4294901760
        %4998 = vmatpush1.msra.mxu0 %v4997
        %4999 = vmatprep.subr.mxu0 0.0
        %v5000 = vand.u32 %v4972, 4294901760
        %5001 = vmatpush1.msra.mxu0 %v5000
        %5002 = vmatprep.subr.mxu0 0.0
        %v5003 = vand.u32 %v4978, 4294901760
        %5004 = vmatpush1.msra.mxu0 %v5003
        %5005 = vmatprep.subr.mxu0 0.0
        %5006 = vmatpush1.msra.mxu0 0.0
        %5007 = vmatprep.subr.mxu0 0.0
        %5008 = vmatpush1.msra.mxu0 0.0
        %5009 = vmatprep.subr.mxu0 0.0
        %5010 = vmatpush1.msra.mxu0 0.0
        %5011 = vmatprep.subr.mxu0 0.0
        %5012 = vmatpush1.msra.mxu0 0.0
        %5013 = vmatprep.subr.mxu0 0.0
        %5014 = vmatpush1.msra.mxu0 0.0
        %5015 = vmatprep.subr.mxu0 0.0
        %5016 = vmatpush1.msra.mxu0 0.0
        %5017 = vmatprep.subr.mxu0 0.0
        %5018 = vmatpush1.msra.mxu0 0.0
        %5019 = vmatprep.subr.mxu0 0.0
        %5020 = vmatpush1.msra.mxu0 0.0
        %5021 = vmatprep.subr.mxu0 0.0
        %5022 = vmatpush1.msra.mxu0 0.0
        %5023 = vmatprep.subr.mxu0 0.0
        %5024 = vmatpush1.msra.mxu0 0.0
        %5025 = vmatprep.subr.mxu0 0.0
        %5026 = vmatpush1.msra.mxu0 0.0
        %5027 = vmatprep.subr.mxu0 0.0
        %5028 = vmatpush1.msra.mxu0 0.0
        %5029 = vmatprep.subr.mxu0 0.0
        %5030 = vmatpush1.msra.mxu0 0.0
        %5031 = vmatprep.subr.mxu0 0.0
        %5032 = vmatpush1.msra.mxu0 0.0
        %5033 = vmatprep.subr.mxu0 0.0
        %5034 = vmatpush1.msra.mxu0 0.0
        %5035 = vmatprep.subr.mxu0 0.0
        %5036 = vmatpush1.msra.mxu0 0.0
        %5037 = vmatprep.subr.mxu0 0.0
        %5038 = vmatpush1.msra.mxu0 0.0
        %5039 = vmatprep.subr.mxu0 0.0
        %5040 = vmatpush1.msra.mxu0 0.0
        %5041 = vmatprep.subr.mxu0 0.0
        %5042 = vmatpush1.msra.mxu0 0.0
        %5043 = vmatprep.subr.mxu0 0.0
        %5044 = vmatpush1.msra.mxu0 0.0
        %5045 = vmatprep.subr.mxu0 0.0
        %5046 = vmatpush1.msra.mxu0 0.0
        %5047 = vmatprep.subr.mxu0 0.0
        %5048 = vmatpush1.msra.mxu0 0.0
        %5049 = vmatprep.subr.mxu0 0.0
        %5050 = vmatpush1.msra.mxu0 0.0
        %5051 = vmatprep.subr.mxu0 0.0
        %5052 = vmatpush1.msra.mxu0 0.0
        %5053 = vmatprep.mubr.f32.mxu0 0.0
        %v5054 = vand.u32 %v3170, 4294901760
        %v5055 = vsub.f32 %v3170, %v5054
        %v5056 = vand.u32 %v5055, 4294901760
        %v5057 = vsub.f32 %v5055, %v5056
        %v5058 = vand.u32 %v5057, 4294901760
        %5059 = vmatmul.mubr.f32.gmra.mrb[0].mxu0 %v5058
        %v5060 = vpop.f32.mrb[0].mxu0
        %v5061 = vadd.f32 0.0, %v5060
        %v5062 = vpop.f32.mrb[0].mxu0
        %5063 = vmatprep.mubr.f32.mxu0 0.0
        %v5064 = vand.u32 %v3173, 4294901760
        %v5065 = vsub.f32 %v3173, %v5064
        %v5066 = vand.u32 %v5065, 4294901760
        %v5067 = vsub.f32 %v5065, %v5066
        %v5068 = vand.u32 %v5067, 4294901760
        %5069 = vmatmul.mubr.f32.gmra.mrb[0].mxu0 %v5068
        %v5070 = vpop.f32.mrb[0].mxu0
        %v5071 = vadd.f32 0.0, %v5070
        %v5072 = vpop.f32.mrb[0].mxu0
        %5073 = vmatprep.mubr.f32.mxu0 0.0
        %v5074 = vand.u32 %v3176, 4294901760
        %v5075 = vsub.f32 %v3176, %v5074
        %v5076 = vand.u32 %v5075, 4294901760
        %v5077 = vsub.f32 %v5075, %v5076
        %v5078 = vand.u32 %v5077, 4294901760
        %5079 = vmatmul.mubr.f32.gmra.mrb[0].mxu0 %v5078
        %v5080 = vpop.f32.mrb[0].mxu0
        %v5081 = vadd.f32 0.0, %v5080
        %v5082 = vpop.f32.mrb[0].mxu0
        %5083 = vmatprep.mubr.f32.mxu0 0.0
        %v5084 = vand.u32 %v3179, 4294901760
        %v5085 = vsub.f32 %v3179, %v5084
        %v5086 = vand.u32 %v5085, 4294901760
        %v5087 = vsub.f32 %v5085, %v5086
        %v5088 = vand.u32 %v5087, 4294901760
        %5089 = vmatmul.mubr.f32.gmra.mrb[0].mxu0 %v5088
        %v5090 = vpop.f32.mrb[0].mxu0
        %v5091 = vadd.f32 0.0, %v5090
        %v5092 = vpop.f32.mrb[0].mxu0
        %5093 = vmatprep.mubr.f32.mxu0 0.0
        %v5094 = vand.u32 %v3182, 4294901760
        %v5095 = vsub.f32 %v3182, %v5094
        %v5096 = vand.u32 %v5095, 4294901760
        %v5097 = vsub.f32 %v5095, %v5096
        %v5098 = vand.u32 %v5097, 4294901760
        %5099 = vmatmul.mubr.f32.gmra.mrb[0].mxu0 %v5098
        %v5100 = vpop.f32.mrb[0].mxu0
        %v5101 = vadd.f32 0.0, %v5100
        %v5102 = vpop.f32.mrb[0].mxu0
        %5103 = vmatprep.mubr.f32.mxu0 0.0
        %v5104 = vand.u32 %v3185, 4294901760
        %v5105 = vsub.f32 %v3185, %v5104
        %v5106 = vand.u32 %v5105, 4294901760
        %v5107 = vsub.f32 %v5105, %v5106
        %v5108 = vand.u32 %v5107, 4294901760
        %5109 = vmatmul.mubr.f32.gmra.mrb[0].mxu0 %v5108
        %v5110 = vpop.f32.mrb[0].mxu0
        %v5111 = vadd.f32 0.0, %v5110
        %v5112 = vpop.f32.mrb[0].mxu0
        %5113 = vmatprep.mubr.f32.mxu0 0.0
        %v5114 = vand.u32 %v3188, 4294901760
        %v5115 = vsub.f32 %v3188, %v5114
        %v5116 = vand.u32 %v5115, 4294901760
        %v5117 = vsub.f32 %v5115, %v5116
        %v5118 = vand.u32 %v5117, 4294901760
        %5119 = vmatmul.mubr.f32.gmra.mrb[0].mxu0 %v5118
        %v5120 = vpop.f32.mrb[0].mxu0
        %v5121 = vadd.f32 0.0, %v5120
        %v5122 = vpop.f32.mrb[0].mxu0
        %5123 = vmatprep.mubr.f32.mxu0 0.0
        %v5124 = vand.u32 %v3191, 4294901760
        %v5125 = vsub.f32 %v3191, %v5124
        %v5126 = vand.u32 %v5125, 4294901760
        %v5127 = vsub.f32 %v5125, %v5126
        %v5128 = vand.u32 %v5127, 4294901760
        %5129 = vmatmul.mubr.f32.gmra.mrb[0].mxu0 %v5128
        %v5130 = vpop.f32.mrb[0].mxu0
        %v5131 = vadd.f32 0.0, %v5130
        %v5132 = vpop.f32.mrb[0].mxu0
        %5133 = vdwg.mxu0
        %5134 = vmatprep.subr.mxu0 0.0
        %v5135 = vand.u32 %v4936, 4294901760
        %v5136 = vsub.f32 %v4936, %v5135
        %v5137 = vand.u32 %v5136, 4294901760
        %v5138 = vsub.f32 %v5136, %v5137
        %v5139 = vand.u32 %v5138, 4294901760
        %5140 = vmatpush1.msra.mxu0 %v5139
        %5141 = vmatprep.subr.mxu0 0.0
        %v5142 = vand.u32 %v4942, 4294901760
        %v5143 = vsub.f32 %v4942, %v5142
        %v5144 = vand.u32 %v5143, 4294901760
        %v5145 = vsub.f32 %v5143, %v5144
        %v5146 = vand.u32 %v5145, 4294901760
        %5147 = vmatpush1.msra.mxu0 %v5146
        %5148 = vmatprep.subr.mxu0 0.0
        %v5149 = vand.u32 %v4948, 4294901760
        %v5150 = vsub.f32 %v4948, %v5149
        %v5151 = vand.u32 %v5150, 4294901760
        %v5152 = vsub.f32 %v5150, %v5151
        %v5153 = vand.u32 %v5152, 4294901760
        %5154 = vmatpush1.msra.mxu0 %v5153
        %5155 = vmatprep.subr.mxu0 0.0
        %v5156 = vand.u32 %v4954, 4294901760
        %v5157 = vsub.f32 %v4954, %v5156
        %v5158 = vand.u32 %v5157, 4294901760
        %v5159 = vsub.f32 %v5157, %v5158
        %v5160 = vand.u32 %v5159, 4294901760
        %5161 = vmatpush1.msra.mxu0 %v5160
        %5162 = vmatprep.subr.mxu0 0.0
        %v5163 = vand.u32 %v4960, 4294901760
        %v5164 = vsub.f32 %v4960, %v5163
        %v5165 = vand.u32 %v5164, 4294901760
        %v5166 = vsub.f32 %v5164, %v5165
        %v5167 = vand.u32 %v5166, 4294901760
        %5168 = vmatpush1.msra.mxu0 %v5167
        %5169 = vmatprep.subr.mxu0 0.0
        %v5170 = vand.u32 %v4966, 4294901760
        %v5171 = vsub.f32 %v4966, %v5170
        %v5172 = vand.u32 %v5171, 4294901760
        %v5173 = vsub.f32 %v5171, %v5172
        %v5174 = vand.u32 %v5173, 4294901760
        %5175 = vmatpush1.msra.mxu0 %v5174
        %5176 = vmatprep.subr.mxu0 0.0
        %v5177 = vand.u32 %v4972, 4294901760
        %v5178 = vsub.f32 %v4972, %v5177
        %v5179 = vand.u32 %v5178, 4294901760
        %v5180 = vsub.f32 %v5178, %v5179
        %v5181 = vand.u32 %v5180, 4294901760
        %5182 = vmatpush1.msra.mxu0 %v5181
        %5183 = vmatprep.subr.mxu0 0.0
        %v5184 = vand.u32 %v4978, 4294901760
        %v5185 = vsub.f32 %v4978, %v5184
        %v5186 = vand.u32 %v5185, 4294901760
        %v5187 = vsub.f32 %v5185, %v5186
        %v5188 = vand.u32 %v5187, 4294901760
        %5189 = vmatpush1.msra.mxu0 %v5188
        %5190 = vmatprep.subr.mxu0 0.0
        %5191 = vmatpush1.msra.mxu0 0.0
        %5192 = vmatprep.subr.mxu0 0.0
        %5193 = vmatpush1.msra.mxu0 0.0
        %5194 = vmatprep.subr.mxu0 0.0
        %5195 = vmatpush1.msra.mxu0 0.0
        %5196 = vmatprep.subr.mxu0 0.0
        %5197 = vmatpush1.msra.mxu0 0.0
        %5198 = vmatprep.subr.mxu0 0.0
        %5199 = vmatpush1.msra.mxu0 0.0
        %5200 = vmatprep.subr.mxu0 0.0
        %5201 = vmatpush1.msra.mxu0 0.0
        %5202 = vmatprep.subr.mxu0 0.0
        %5203 = vmatpush1.msra.mxu0 0.0
        %5204 = vmatprep.subr.mxu0 0.0
        %5205 = vmatpush1.msra.mxu0 0.0
        %5206 = vmatprep.subr.mxu0 0.0
        %5207 = vmatpush1.msra.mxu0 0.0
        %5208 = vmatprep.subr.mxu0 0.0
        %5209 = vmatpush1.msra.mxu0 0.0
        %5210 = vmatprep.subr.mxu0 0.0
        %5211 = vmatpush1.msra.mxu0 0.0
        %5212 = vmatprep.subr.mxu0 0.0
        %5213 = vmatpush1.msra.mxu0 0.0
        %5214 = vmatprep.subr.mxu0 0.0
        %5215 = vmatpush1.msra.mxu0 0.0
        %5216 = vmatprep.subr.mxu0 0.0
        %5217 = vmatpush1.msra.mxu0 0.0
        %5218 = vmatprep.subr.mxu0 0.0
        %5219 = vmatpush1.msra.mxu0 0.0
        %5220 = vmatprep.subr.mxu0 0.0
        %5221 = vmatpush1.msra.mxu0 0.0
        %5222 = vmatprep.subr.mxu0 0.0
        %5223 = vmatpush1.msra.mxu0 0.0
        %5224 = vmatprep.subr.mxu0 0.0
        %5225 = vmatpush1.msra.mxu0 0.0
        %5226 = vmatprep.subr.mxu0 0.0
        %5227 = vmatpush1.msra.mxu0 0.0
        %5228 = vmatprep.subr.mxu0 0.0
        %5229 = vmatpush1.msra.mxu0 0.0
        %5230 = vmatprep.subr.mxu0 0.0
        %5231 = vmatpush1.msra.mxu0 0.0
        %5232 = vmatprep.subr.mxu0 0.0
        %5233 = vmatpush1.msra.mxu0 0.0
        %5234 = vmatprep.subr.mxu0 0.0
        %5235 = vmatpush1.msra.mxu0 0.0
        %5236 = vmatprep.subr.mxu0 0.0
        %5237 = vmatpush1.msra.mxu0 0.0
        %5238 = vmatprep.mubr.f32.mxu0 0.0
        %v5239 = vand.u32 %v3170, 4294901760
        %5240 = vmatmul.mubr.f32.gmra.mrb[0].mxu0 %v5239
        %v5241 = vpop.f32.mrb[0].mxu0
        %v5242 = vadd.f32 %v5061, %v5241
        %v5243 = vpop.f32.mrb[0].mxu0
        %5244 = vmatprep.mubr.f32.mxu0 0.0
        %v5245 = vand.u32 %v3173, 4294901760
        %5246 = vmatmul.mubr.f32.gmra.mrb[0].mxu0 %v5245
        %v5247 = vpop.f32.mrb[0].mxu0
        %v5248 = vadd.f32 %v5071, %v5247
        %v5249 = vpop.f32.mrb[0].mxu0
        %5250 = vmatprep.mubr.f32.mxu0 0.0
        %v5251 = vand.u32 %v3176, 4294901760
        %5252 = vmatmul.mubr.f32.gmra.mrb[0].mxu0 %v5251
        %v5253 = vpop.f32.mrb[0].mxu0
        %v5254 = vadd.f32 %v5081, %v5253
        %v5255 = vpop.f32.mrb[0].mxu0
        %5256 = vmatprep.mubr.f32.mxu0 0.0
        %v5257 = vand.u32 %v3179, 4294901760
        %5258 = vmatmul.mubr.f32.gmra.mrb[0].mxu0 %v5257
        %v5259 = vpop.f32.mrb[0].mxu0
        %v5260 = vadd.f32 %v5091, %v5259
        %v5261 = vpop.f32.mrb[0].mxu0
        %5262 = vmatprep.mubr.f32.mxu0 0.0
        %v5263 = vand.u32 %v3182, 4294901760
        %5264 = vmatmul.mubr.f32.gmra.mrb[0].mxu0 %v5263
        %v5265 = vpop.f32.mrb[0].mxu0
        %v5266 = vadd.f32 %v5101, %v5265
        %v5267 = vpop.f32.mrb[0].mxu0
        %5268 = vmatprep.mubr.f32.mxu0 0.0
        %v5269 = vand.u32 %v3185, 4294901760
        %5270 = vmatmul.mubr.f32.gmra.mrb[0].mxu0 %v5269
        %v5271 = vpop.f32.mrb[0].mxu0
        %v5272 = vadd.f32 %v5111, %v5271
        %v5273 = vpop.f32.mrb[0].mxu0
        %5274 = vmatprep.mubr.f32.mxu0 0.0
        %v5275 = vand.u32 %v3188, 4294901760
        %5276 = vmatmul.mubr.f32.gmra.mrb[0].mxu0 %v5275
        %v5277 = vpop.f32.mrb[0].mxu0
        %v5278 = vadd.f32 %v5121, %v5277
        %v5279 = vpop.f32.mrb[0].mxu0
        %5280 = vmatprep.mubr.f32.mxu0 0.0
        %v5281 = vand.u32 %v3191, 4294901760
        %5282 = vmatmul.mubr.f32.gmra.mrb[0].mxu0 %v5281
        %v5283 = vpop.f32.mrb[0].mxu0
        %v5284 = vadd.f32 %v5131, %v5283
        %v5285 = vpop.f32.mrb[0].mxu0
        %5286 = vdwg.mxu0
        %5287 = vmatprep.subr.mxu0 0.0
        %v5288 = vand.u32 %v4936, 4294901760
        %v5289 = vsub.f32 %v4936, %v5288
        %5290 = vmatpush1.msra.mxu0 %v5289
        %5291 = vmatprep.subr.mxu0 0.0
        %v5292 = vand.u32 %v4942, 4294901760
        %v5293 = vsub.f32 %v4942, %v5292
        %5294 = vmatpush1.msra.mxu0 %v5293
        %5295 = vmatprep.subr.mxu0 0.0
        %v5296 = vand.u32 %v4948, 4294901760
        %v5297 = vsub.f32 %v4948, %v5296
        %5298 = vmatpush1.msra.mxu0 %v5297
        %5299 = vmatprep.subr.mxu0 0.0
        %v5300 = vand.u32 %v4954, 4294901760
        %v5301 = vsub.f32 %v4954, %v5300
        %5302 = vmatpush1.msra.mxu0 %v5301
        %5303 = vmatprep.subr.mxu0 0.0
        %v5304 = vand.u32 %v4960, 4294901760
        %v5305 = vsub.f32 %v4960, %v5304
        %5306 = vmatpush1.msra.mxu0 %v5305
        %5307 = vmatprep.subr.mxu0 0.0
        %v5308 = vand.u32 %v4966, 4294901760
        %v5309 = vsub.f32 %v4966, %v5308
        %5310 = vmatpush1.msra.mxu0 %v5309
        %5311 = vmatprep.subr.mxu0 0.0
        %v5312 = vand.u32 %v4972, 4294901760
        %v5313 = vsub.f32 %v4972, %v5312
        %5314 = vmatpush1.msra.mxu0 %v5313
        %5315 = vmatprep.subr.mxu0 0.0
        %v5316 = vand.u32 %v4978, 4294901760
        %v5317 = vsub.f32 %v4978, %v5316
        %5318 = vmatpush1.msra.mxu0 %v5317
        %5319 = vmatprep.subr.mxu0 0.0
        %5320 = vmatpush1.msra.mxu0 0.0
        %5321 = vmatprep.subr.mxu0 0.0
        %5322 = vmatpush1.msra.mxu0 0.0
        %5323 = vmatprep.subr.mxu0 0.0
        %5324 = vmatpush1.msra.mxu0 0.0
        %5325 = vmatprep.subr.mxu0 0.0
        %5326 = vmatpush1.msra.mxu0 0.0
        %5327 = vmatprep.subr.mxu0 0.0
        %5328 = vmatpush1.msra.mxu0 0.0
        %5329 = vmatprep.subr.mxu0 0.0
        %5330 = vmatpush1.msra.mxu0 0.0
        %5331 = vmatprep.subr.mxu0 0.0
        %5332 = vmatpush1.msra.mxu0 0.0
        %5333 = vmatprep.subr.mxu0 0.0
        %5334 = vmatpush1.msra.mxu0 0.0
        %5335 = vmatprep.subr.mxu0 0.0
        %5336 = vmatpush1.msra.mxu0 0.0
        %5337 = vmatprep.subr.mxu0 0.0
        %5338 = vmatpush1.msra.mxu0 0.0
        %5339 = vmatprep.subr.mxu0 0.0
        %5340 = vmatpush1.msra.mxu0 0.0
        %5341 = vmatprep.subr.mxu0 0.0
        %5342 = vmatpush1.msra.mxu0 0.0
        %5343 = vmatprep.subr.mxu0 0.0
        %5344 = vmatpush1.msra.mxu0 0.0
        %5345 = vmatprep.subr.mxu0 0.0
        %5346 = vmatpush1.msra.mxu0 0.0
        %5347 = vmatprep.subr.mxu0 0.0
        %5348 = vmatpush1.msra.mxu0 0.0
        %5349 = vmatprep.subr.mxu0 0.0
        %5350 = vmatpush1.msra.mxu0 0.0
        %5351 = vmatprep.subr.mxu0 0.0
        %5352 = vmatpush1.msra.mxu0 0.0
        %5353 = vmatprep.subr.mxu0 0.0
        %5354 = vmatpush1.msra.mxu0 0.0
        %5355 = vmatprep.subr.mxu0 0.0
        %5356 = vmatpush1.msra.mxu0 0.0
        %5357 = vmatprep.subr.mxu0 0.0
        %5358 = vmatpush1.msra.mxu0 0.0
        %5359 = vmatprep.subr.mxu0 0.0
        %5360 = vmatpush1.msra.mxu0 0.0
        %5361 = vmatprep.subr.mxu0 0.0
        %5362 = vmatpush1.msra.mxu0 0.0
        %5363 = vmatprep.subr.mxu0 0.0
        %5364 = vmatpush1.msra.mxu0 0.0
        %5365 = vmatprep.subr.mxu0 0.0
        %5366 = vmatpush1.msra.mxu0 0.0
        %5367 = vmatprep.mubr.f32.mxu0 0.0
        %v5368 = vand.u32 %v3170, 4294901760
        %v5369 = vsub.f32 %v3170, %v5368
        %5370 = vmatmul.mubr.f32.gmra.mrb[0].mxu0 %v5369
        %v5371 = vpop.f32.mrb[0].mxu0
        %v5372 = vadd.f32 %v5242, %v5371
        %v5373 = vpop.f32.mrb[0].mxu0
        %5374 = vmatprep.mubr.f32.mxu0 0.0
        %v5375 = vand.u32 %v3173, 4294901760
        %v5376 = vsub.f32 %v3173, %v5375
        %5377 = vmatmul.mubr.f32.gmra.mrb[0].mxu0 %v5376
        %v5378 = vpop.f32.mrb[0].mxu0
        %v5379 = vadd.f32 %v5248, %v5378
        %v5380 = vpop.f32.mrb[0].mxu0
        %5381 = vmatprep.mubr.f32.mxu0 0.0
        %v5382 = vand.u32 %v3176, 4294901760
        %v5383 = vsub.f32 %v3176, %v5382
        %5384 = vmatmul.mubr.f32.gmra.mrb[0].mxu0 %v5383
        %v5385 = vpop.f32.mrb[0].mxu0
        %v5386 = vadd.f32 %v5254, %v5385
        %v5387 = vpop.f32.mrb[0].mxu0
        %5388 = vmatprep.mubr.f32.mxu0 0.0
        %v5389 = vand.u32 %v3179, 4294901760
        %v5390 = vsub.f32 %v3179, %v5389
        %5391 = vmatmul.mubr.f32.gmra.mrb[0].mxu0 %v5390
        %v5392 = vpop.f32.mrb[0].mxu0
        %v5393 = vadd.f32 %v5260, %v5392
        %v5394 = vpop.f32.mrb[0].mxu0
        %5395 = vmatprep.mubr.f32.mxu0 0.0
        %v5396 = vand.u32 %v3182, 4294901760
        %v5397 = vsub.f32 %v3182, %v5396
        %5398 = vmatmul.mubr.f32.gmra.mrb[0].mxu0 %v5397
        %v5399 = vpop.f32.mrb[0].mxu0
        %v5400 = vadd.f32 %v5266, %v5399
        %v5401 = vpop.f32.mrb[0].mxu0
        %5402 = vmatprep.mubr.f32.mxu0 0.0
        %v5403 = vand.u32 %v3185, 4294901760
        %v5404 = vsub.f32 %v3185, %v5403
        %5405 = vmatmul.mubr.f32.gmra.mrb[0].mxu0 %v5404
        %v5406 = vpop.f32.mrb[0].mxu0
        %v5407 = vadd.f32 %v5272, %v5406
        %v5408 = vpop.f32.mrb[0].mxu0
        %5409 = vmatprep.mubr.f32.mxu0 0.0
        %v5410 = vand.u32 %v3188, 4294901760
        %v5411 = vsub.f32 %v3188, %v5410
        %5412 = vmatmul.mubr.f32.gmra.mrb[0].mxu0 %v5411
        %v5413 = vpop.f32.mrb[0].mxu0
        %v5414 = vadd.f32 %v5278, %v5413
        %v5415 = vpop.f32.mrb[0].mxu0
        %5416 = vmatprep.mubr.f32.mxu0 0.0
        %v5417 = vand.u32 %v3191, 4294901760
        %v5418 = vsub.f32 %v3191, %v5417
        %5419 = vmatmul.mubr.f32.gmra.mrb[0].mxu0 %v5418
        %v5420 = vpop.f32.mrb[0].mxu0
        %v5421 = vadd.f32 %v5284, %v5420
        %v5422 = vpop.f32.mrb[0].mxu0
        %5423 = vdwg.mxu0
        %5424 = vmatprep.subr.mxu0 0.0
        %v5425 = vand.u32 %v4936, 4294901760
        %5426 = vmatpush1.msra.mxu0 %v5425
        %5427 = vmatprep.subr.mxu0 0.0
        %v5428 = vand.u32 %v4942, 4294901760
        %5429 = vmatpush1.msra.mxu0 %v5428
        %5430 = vmatprep.subr.mxu0 0.0
        %v5431 = vand.u32 %v4948, 4294901760
        %5432 = vmatpush1.msra.mxu0 %v5431
        %5433 = vmatprep.subr.mxu0 0.0
        %v5434 = vand.u32 %v4954, 4294901760
        %5435 = vmatpush1.msra.mxu0 %v5434
        %5436 = vmatprep.subr.mxu0 0.0
        %v5437 = vand.u32 %v4960, 4294901760
        %5438 = vmatpush1.msra.mxu0 %v5437
        %5439 = vmatprep.subr.mxu0 0.0
        %v5440 = vand.u32 %v4966, 4294901760
        %5441 = vmatpush1.msra.mxu0 %v5440
        %5442 = vmatprep.subr.mxu0 0.0
        %v5443 = vand.u32 %v4972, 4294901760
        %5444 = vmatpush1.msra.mxu0 %v5443
        %5445 = vmatprep.subr.mxu0 0.0
        %v5446 = vand.u32 %v4978, 4294901760
        %5447 = vmatpush1.msra.mxu0 %v5446
        %5448 = vmatprep.subr.mxu0 0.0
        %5449 = vmatpush1.msra.mxu0 0.0
        %5450 = vmatprep.subr.mxu0 0.0
        %5451 = vmatpush1.msra.mxu0 0.0
        %5452 = vmatprep.subr.mxu0 0.0
        %5453 = vmatpush1.msra.mxu0 0.0
        %5454 = vmatprep.subr.mxu0 0.0
        %5455 = vmatpush1.msra.mxu0 0.0
        %5456 = vmatprep.subr.mxu0 0.0
        %5457 = vmatpush1.msra.mxu0 0.0
        %5458 = vmatprep.subr.mxu0 0.0
        %5459 = vmatpush1.msra.mxu0 0.0
        %5460 = vmatprep.subr.mxu0 0.0
        %5461 = vmatpush1.msra.mxu0 0.0
        %5462 = vmatprep.subr.mxu0 0.0
        %5463 = vmatpush1.msra.mxu0 0.0
        %5464 = vmatprep.subr.mxu0 0.0
        %5465 = vmatpush1.msra.mxu0 0.0
        %5466 = vmatprep.subr.mxu0 0.0
        %5467 = vmatpush1.msra.mxu0 0.0
        %5468 = vmatprep.subr.mxu0 0.0
        %5469 = vmatpush1.msra.mxu0 0.0
        %5470 = vmatprep.subr.mxu0 0.0
        %5471 = vmatpush1.msra.mxu0 0.0
        %5472 = vmatprep.subr.mxu0 0.0
        %5473 = vmatpush1.msra.mxu0 0.0
        %5474 = vmatprep.subr.mxu0 0.0
        %5475 = vmatpush1.msra.mxu0 0.0
        %5476 = vmatprep.subr.mxu0 0.0
        %5477 = vmatpush1.msra.mxu0 0.0
        %5478 = vmatprep.subr.mxu0 0.0
        %5479 = vmatpush1.msra.mxu0 0.0
        %5480 = vmatprep.subr.mxu0 0.0
        %5481 = vmatpush1.msra.mxu0 0.0
        %5482 = vmatprep.subr.mxu0 0.0
        %5483 = vmatpush1.msra.mxu0 0.0
        %5484 = vmatprep.subr.mxu0 0.0
        %5485 = vmatpush1.msra.mxu0 0.0
        %5486 = vmatprep.subr.mxu0 0.0
        %5487 = vmatpush1.msra.mxu0 0.0
        %5488 = vmatprep.subr.mxu0 0.0
        %5489 = vmatpush1.msra.mxu0 0.0
        %5490 = vmatprep.subr.mxu0 0.0
        %5491 = vmatpush1.msra.mxu0 0.0
        %5492 = vmatprep.subr.mxu0 0.0
        %5493 = vmatpush1.msra.mxu0 0.0
        %5494 = vmatprep.subr.mxu0 0.0
        %5495 = vmatpush1.msra.mxu0 0.0
        %5496 = vmatprep.mubr.f32.mxu0 0.0
        %v5497 = vand.u32 %v3170, 4294901760
        %v5498 = vsub.f32 %v3170, %v5497
        %v5499 = vand.u32 %v5498, 4294901760
        %5500 = vmatmul.mubr.f32.gmra.mrb[0].mxu0 %v5499
        %v5501 = vpop.f32.mrb[0].mxu0
        %v5502 = vadd.f32 %v5372, %v5501
        %v5503 = vpop.f32.mrb[0].mxu0
        %5504 = vmatprep.mubr.f32.mxu0 0.0
        %v5505 = vand.u32 %v3173, 4294901760
        %v5506 = vsub.f32 %v3173, %v5505
        %v5507 = vand.u32 %v5506, 4294901760
        %5508 = vmatmul.mubr.f32.gmra.mrb[0].mxu0 %v5507
        %v5509 = vpop.f32.mrb[0].mxu0
        %v5510 = vadd.f32 %v5379, %v5509
        %v5511 = vpop.f32.mrb[0].mxu0
        %5512 = vmatprep.mubr.f32.mxu0 0.0
        %v5513 = vand.u32 %v3176, 4294901760
        %v5514 = vsub.f32 %v3176, %v5513
        %v5515 = vand.u32 %v5514, 4294901760
        %5516 = vmatmul.mubr.f32.gmra.mrb[0].mxu0 %v5515
        %v5517 = vpop.f32.mrb[0].mxu0
        %v5518 = vadd.f32 %v5386, %v5517
        %v5519 = vpop.f32.mrb[0].mxu0
        %5520 = vmatprep.mubr.f32.mxu0 0.0
        %v5521 = vand.u32 %v3179, 4294901760
        %v5522 = vsub.f32 %v3179, %v5521
        %v5523 = vand.u32 %v5522, 4294901760
        %5524 = vmatmul.mubr.f32.gmra.mrb[0].mxu0 %v5523
        %v5525 = vpop.f32.mrb[0].mxu0
        %v5526 = vadd.f32 %v5393, %v5525
        %v5527 = vpop.f32.mrb[0].mxu0
        %5528 = vmatprep.mubr.f32.mxu0 0.0
        %v5529 = vand.u32 %v3182, 4294901760
        %v5530 = vsub.f32 %v3182, %v5529
        %v5531 = vand.u32 %v5530, 4294901760
        %5532 = vmatmul.mubr.f32.gmra.mrb[0].mxu0 %v5531
        %v5533 = vpop.f32.mrb[0].mxu0
        %v5534 = vadd.f32 %v5400, %v5533
        %v5535 = vpop.f32.mrb[0].mxu0
        %5536 = vmatprep.mubr.f32.mxu0 0.0
        %v5537 = vand.u32 %v3185, 4294901760
        %v5538 = vsub.f32 %v3185, %v5537
        %v5539 = vand.u32 %v5538, 4294901760
        %5540 = vmatmul.mubr.f32.gmra.mrb[0].mxu0 %v5539
        %v5541 = vpop.f32.mrb[0].mxu0
        %v5542 = vadd.f32 %v5407, %v5541
        %v5543 = vpop.f32.mrb[0].mxu0
        %5544 = vmatprep.mubr.f32.mxu0 0.0
        %v5545 = vand.u32 %v3188, 4294901760
        %v5546 = vsub.f32 %v3188, %v5545
        %v5547 = vand.u32 %v5546, 4294901760
        %5548 = vmatmul.mubr.f32.gmra.mrb[0].mxu0 %v5547
        %v5549 = vpop.f32.mrb[0].mxu0
        %v5550 = vadd.f32 %v5414, %v5549
        %v5551 = vpop.f32.mrb[0].mxu0
        %5552 = vmatprep.mubr.f32.mxu0 0.0
        %v5553 = vand.u32 %v3191, 4294901760
        %v5554 = vsub.f32 %v3191, %v5553
        %v5555 = vand.u32 %v5554, 4294901760
        %5556 = vmatmul.mubr.f32.gmra.mrb[0].mxu0 %v5555
        %v5557 = vpop.f32.mrb[0].mxu0
        %v5558 = vadd.f32 %v5421, %v5557
        %v5559 = vpop.f32.mrb[0].mxu0
        %5560 = vdwg.mxu0
        %5561 = vmatprep.subr.mxu0 0.0
        %v5562 = vand.u32 %v4936, 4294901760
        %v5563 = vsub.f32 %v4936, %v5562
        %v5564 = vand.u32 %v5563, 4294901760
        %5565 = vmatpush1.msra.mxu0 %v5564
        %5566 = vmatprep.subr.mxu0 0.0
        %v5567 = vand.u32 %v4942, 4294901760
        %v5568 = vsub.f32 %v4942, %v5567
        %v5569 = vand.u32 %v5568, 4294901760
        %5570 = vmatpush1.msra.mxu0 %v5569
        %5571 = vmatprep.subr.mxu0 0.0
        %v5572 = vand.u32 %v4948, 4294901760
        %v5573 = vsub.f32 %v4948, %v5572
        %v5574 = vand.u32 %v5573, 4294901760
        %5575 = vmatpush1.msra.mxu0 %v5574
        %5576 = vmatprep.subr.mxu0 0.0
        %v5577 = vand.u32 %v4954, 4294901760
        %v5578 = vsub.f32 %v4954, %v5577
        %v5579 = vand.u32 %v5578, 4294901760
        %5580 = vmatpush1.msra.mxu0 %v5579
        %5581 = vmatprep.subr.mxu0 0.0
        %v5582 = vand.u32 %v4960, 4294901760
        %v5583 = vsub.f32 %v4960, %v5582
        %v5584 = vand.u32 %v5583, 4294901760
        %5585 = vmatpush1.msra.mxu0 %v5584
        %5586 = vmatprep.subr.mxu0 0.0
        %v5587 = vand.u32 %v4966, 4294901760
        %v5588 = vsub.f32 %v4966, %v5587
        %v5589 = vand.u32 %v5588, 4294901760
        %5590 = vmatpush1.msra.mxu0 %v5589
        %5591 = vmatprep.subr.mxu0 0.0
        %v5592 = vand.u32 %v4972, 4294901760
        %v5593 = vsub.f32 %v4972, %v5592
        %v5594 = vand.u32 %v5593, 4294901760
        %5595 = vmatpush1.msra.mxu0 %v5594
        %5596 = vmatprep.subr.mxu0 0.0
        %v5597 = vand.u32 %v4978, 4294901760
        %v5598 = vsub.f32 %v4978, %v5597
        %v5599 = vand.u32 %v5598, 4294901760
        %5600 = vmatpush1.msra.mxu0 %v5599
        %5601 = vmatprep.subr.mxu0 0.0
        %5602 = vmatpush1.msra.mxu0 0.0
        %5603 = vmatprep.subr.mxu0 0.0
        %5604 = vmatpush1.msra.mxu0 0.0
        %5605 = vmatprep.subr.mxu0 0.0
        %5606 = vmatpush1.msra.mxu0 0.0
        %5607 = vmatprep.subr.mxu0 0.0
        %5608 = vmatpush1.msra.mxu0 0.0
        %5609 = vmatprep.subr.mxu0 0.0
        %5610 = vmatpush1.msra.mxu0 0.0
        %5611 = vmatprep.subr.mxu0 0.0
        %5612 = vmatpush1.msra.mxu0 0.0
        %5613 = vmatprep.subr.mxu0 0.0
        %5614 = vmatpush1.msra.mxu0 0.0
        %5615 = vmatprep.subr.mxu0 0.0
        %5616 = vmatpush1.msra.mxu0 0.0
        %5617 = vmatprep.subr.mxu0 0.0
        %5618 = vmatpush1.msra.mxu0 0.0
        %5619 = vmatprep.subr.mxu0 0.0
        %5620 = vmatpush1.msra.mxu0 0.0
        %5621 = vmatprep.subr.mxu0 0.0
        %5622 = vmatpush1.msra.mxu0 0.0
        %5623 = vmatprep.subr.mxu0 0.0
        %5624 = vmatpush1.msra.mxu0 0.0
        %5625 = vmatprep.subr.mxu0 0.0
        %5626 = vmatpush1.msra.mxu0 0.0
        %5627 = vmatprep.subr.mxu0 0.0
        %5628 = vmatpush1.msra.mxu0 0.0
        %5629 = vmatprep.subr.mxu0 0.0
        %5630 = vmatpush1.msra.mxu0 0.0
        %5631 = vmatprep.subr.mxu0 0.0
        %5632 = vmatpush1.msra.mxu0 0.0
        %5633 = vmatprep.subr.mxu0 0.0
        %5634 = vmatpush1.msra.mxu0 0.0
        %5635 = vmatprep.subr.mxu0 0.0
        %5636 = vmatpush1.msra.mxu0 0.0
        %5637 = vmatprep.subr.mxu0 0.0
        %5638 = vmatpush1.msra.mxu0 0.0
        %5639 = vmatprep.subr.mxu0 0.0
        %5640 = vmatpush1.msra.mxu0 0.0
        %5641 = vmatprep.subr.mxu0 0.0
        %5642 = vmatpush1.msra.mxu0 0.0
        %5643 = vmatprep.subr.mxu0 0.0
        %5644 = vmatpush1.msra.mxu0 0.0
        %5645 = vmatprep.subr.mxu0 0.0
        %5646 = vmatpush1.msra.mxu0 0.0
        %5647 = vmatprep.subr.mxu0 0.0
        %5648 = vmatpush1.msra.mxu0 0.0
        %5649 = vmatprep.mubr.f32.mxu0 0.0
        %v5650 = vand.u32 %v3170, 4294901760
        %5651 = vmatmul.mubr.f32.gmra.mrb[0].mxu0 %v5650
        %v5652 = vpop.f32.mrb[0].mxu0
        %v5653 = vadd.f32 %v5502, %v5652
        %v5654 = vpop.f32.mrb[0].mxu0
        %5655 = vmatprep.mubr.f32.mxu0 0.0
        %v5656 = vand.u32 %v3173, 4294901760
        %5657 = vmatmul.mubr.f32.gmra.mrb[0].mxu0 %v5656
        %v5658 = vpop.f32.mrb[0].mxu0
        %v5659 = vadd.f32 %v5510, %v5658
        %v5660 = vpop.f32.mrb[0].mxu0
        %5661 = vmatprep.mubr.f32.mxu0 0.0
        %v5662 = vand.u32 %v3176, 4294901760
        %5663 = vmatmul.mubr.f32.gmra.mrb[0].mxu0 %v5662
        %v5664 = vpop.f32.mrb[0].mxu0
        %v5665 = vadd.f32 %v5518, %v5664
        %v5666 = vpop.f32.mrb[0].mxu0
        %5667 = vmatprep.mubr.f32.mxu0 0.0
        %v5668 = vand.u32 %v3179, 4294901760
        %5669 = vmatmul.mubr.f32.gmra.mrb[0].mxu0 %v5668
        %v5670 = vpop.f32.mrb[0].mxu0
        %v5671 = vadd.f32 %v5526, %v5670
        %v5672 = vpop.f32.mrb[0].mxu0
        %5673 = vmatprep.mubr.f32.mxu0 0.0
        %v5674 = vand.u32 %v3182, 4294901760
        %5675 = vmatmul.mubr.f32.gmra.mrb[0].mxu0 %v5674
        %v5676 = vpop.f32.mrb[0].mxu0
        %v5677 = vadd.f32 %v5534, %v5676
        %v5678 = vpop.f32.mrb[0].mxu0
        %5679 = vmatprep.mubr.f32.mxu0 0.0
        %v5680 = vand.u32 %v3185, 4294901760
        %5681 = vmatmul.mubr.f32.gmra.mrb[0].mxu0 %v5680
        %v5682 = vpop.f32.mrb[0].mxu0
        %v5683 = vadd.f32 %v5542, %v5682
        %v5684 = vpop.f32.mrb[0].mxu0
        %5685 = vmatprep.mubr.f32.mxu0 0.0
        %v5686 = vand.u32 %v3188, 4294901760
        %5687 = vmatmul.mubr.f32.gmra.mrb[0].mxu0 %v5686
        %v5688 = vpop.f32.mrb[0].mxu0
        %v5689 = vadd.f32 %v5550, %v5688
        %v5690 = vpop.f32.mrb[0].mxu0
        %5691 = vmatprep.mubr.f32.mxu0 0.0
        %v5692 = vand.u32 %v3191, 4294901760
        %5693 = vmatmul.mubr.f32.gmra.mrb[0].mxu0 %v5692
        %v5694 = vpop.f32.mrb[0].mxu0
        %v5695 = vadd.f32 %v5558, %v5694
        %v5696 = vpop.f32.mrb[0].mxu0
        %5697 = vdwg.mxu0
        %5698 = vmatprep.subr.mxu0 0.0
        %v5699 = vand.u32 %v4936, 4294901760
        %5700 = vmatpush1.msra.mxu0 %v5699
        %5701 = vmatprep.subr.mxu0 0.0
        %v5702 = vand.u32 %v4942, 4294901760
        %5703 = vmatpush1.msra.mxu0 %v5702
        %5704 = vmatprep.subr.mxu0 0.0
        %v5705 = vand.u32 %v4948, 4294901760
        %5706 = vmatpush1.msra.mxu0 %v5705
        %5707 = vmatprep.subr.mxu0 0.0
        %v5708 = vand.u32 %v4954, 4294901760
        %5709 = vmatpush1.msra.mxu0 %v5708
        %5710 = vmatprep.subr.mxu0 0.0
        %v5711 = vand.u32 %v4960, 4294901760
        %5712 = vmatpush1.msra.mxu0 %v5711
        %5713 = vmatprep.subr.mxu0 0.0
        %v5714 = vand.u32 %v4966, 4294901760
        %5715 = vmatpush1.msra.mxu0 %v5714
        %5716 = vmatprep.subr.mxu0 0.0
        %v5717 = vand.u32 %v4972, 4294901760
        %5718 = vmatpush1.msra.mxu0 %v5717
        %5719 = vmatprep.subr.mxu0 0.0
        %v5720 = vand.u32 %v4978, 4294901760
        %5721 = vmatpush1.msra.mxu0 %v5720
        %5722 = vmatprep.subr.mxu0 0.0
        %5723 = vmatpush1.msra.mxu0 0.0
        %5724 = vmatprep.subr.mxu0 0.0
        %5725 = vmatpush1.msra.mxu0 0.0
        %5726 = vmatprep.subr.mxu0 0.0
        %5727 = vmatpush1.msra.mxu0 0.0
        %5728 = vmatprep.subr.mxu0 0.0
        %5729 = vmatpush1.msra.mxu0 0.0
        %5730 = vmatprep.subr.mxu0 0.0
        %5731 = vmatpush1.msra.mxu0 0.0
        %5732 = vmatprep.subr.mxu0 0.0
        %5733 = vmatpush1.msra.mxu0 0.0
        %5734 = vmatprep.subr.mxu0 0.0
        %5735 = vmatpush1.msra.mxu0 0.0
        %5736 = vmatprep.subr.mxu0 0.0
        %5737 = vmatpush1.msra.mxu0 0.0
        %5738 = vmatprep.subr.mxu0 0.0
        %5739 = vmatpush1.msra.mxu0 0.0
        %5740 = vmatprep.subr.mxu0 0.0
        %5741 = vmatpush1.msra.mxu0 0.0
        %5742 = vmatprep.subr.mxu0 0.0
        %5743 = vmatpush1.msra.mxu0 0.0
        %5744 = vmatprep.subr.mxu0 0.0
        %5745 = vmatpush1.msra.mxu0 0.0
        %5746 = vmatprep.subr.mxu0 0.0
        %5747 = vmatpush1.msra.mxu0 0.0
        %5748 = vmatprep.subr.mxu0 0.0
        %5749 = vmatpush1.msra.mxu0 0.0
        %5750 = vmatprep.subr.mxu0 0.0
        %5751 = vmatpush1.msra.mxu0 0.0
        %5752 = vmatprep.subr.mxu0 0.0
        %5753 = vmatpush1.msra.mxu0 0.0
        %5754 = vmatprep.subr.mxu0 0.0
        %5755 = vmatpush1.msra.mxu0 0.0
        %5756 = vmatprep.subr.mxu0 0.0
        %5757 = vmatpush1.msra.mxu0 0.0
        %5758 = vmatprep.subr.mxu0 0.0
        %5759 = vmatpush1.msra.mxu0 0.0
        %5760 = vmatprep.subr.mxu0 0.0
        %5761 = vmatpush1.msra.mxu0 0.0
        %5762 = vmatprep.subr.mxu0 0.0
        %5763 = vmatpush1.msra.mxu0 0.0
        %5764 = vmatprep.subr.mxu0 0.0
        %5765 = vmatpush1.msra.mxu0 0.0
        %5766 = vmatprep.subr.mxu0 0.0
        %5767 = vmatpush1.msra.mxu0 0.0
        %5768 = vmatprep.subr.mxu0 0.0
        %5769 = vmatpush1.msra.mxu0 0.0
        %5770 = vmatprep.mubr.f32.mxu0 0.0
        %v5771 = vand.u32 %v3170, 4294901760
        %5772 = vmatmul.mubr.f32.gmra.mrb[0].mxu0 %v5771
        %v5773 = vpop.f32.mrb[0].mxu0
        %v5774 = vadd.f32 %v5653, %v5773
        %v5775 = vpop.f32.mrb[0].mxu0
        %5776 = vmatprep.mubr.f32.mxu0 0.0
        %v5777 = vand.u32 %v3173, 4294901760
        %5778 = vmatmul.mubr.f32.gmra.mrb[0].mxu0 %v5777
        %v5779 = vpop.f32.mrb[0].mxu0
        %v5780 = vadd.f32 %v5659, %v5779
        %v5781 = vpop.f32.mrb[0].mxu0
        %5782 = vmatprep.mubr.f32.mxu0 0.0
        %v5783 = vand.u32 %v3176, 4294901760
        %5784 = vmatmul.mubr.f32.gmra.mrb[0].mxu0 %v5783
        %v5785 = vpop.f32.mrb[0].mxu0
        %v5786 = vadd.f32 %v5665, %v5785
        %v5787 = vpop.f32.mrb[0].mxu0
        %5788 = vmatprep.mubr.f32.mxu0 0.0
        %v5789 = vand.u32 %v3179, 4294901760
        %5790 = vmatmul.mubr.f32.gmra.mrb[0].mxu0 %v5789
        %v5791 = vpop.f32.mrb[0].mxu0
        %v5792 = vadd.f32 %v5671, %v5791
        %v5793 = vpop.f32.mrb[0].mxu0
        %5794 = vmatprep.mubr.f32.mxu0 0.0
        %v5795 = vand.u32 %v3182, 4294901760
        %5796 = vmatmul.mubr.f32.gmra.mrb[0].mxu0 %v5795
        %v5797 = vpop.f32.mrb[0].mxu0
        %v5798 = vadd.f32 %v5677, %v5797
        %v5799 = vpop.f32.mrb[0].mxu0
        %5800 = vmatprep.mubr.f32.mxu0 0.0
        %v5801 = vand.u32 %v3185, 4294901760
        %5802 = vmatmul.mubr.f32.gmra.mrb[0].mxu0 %v5801
        %v5803 = vpop.f32.mrb[0].mxu0
        %v5804 = vadd.f32 %v5683, %v5803
        %v5805 = vpop.f32.mrb[0].mxu0
        %5806 = vmatprep.mubr.f32.mxu0 0.0
        %v5807 = vand.u32 %v3188, 4294901760
        %5808 = vmatmul.mubr.f32.gmra.mrb[0].mxu0 %v5807
        %v5809 = vpop.f32.mrb[0].mxu0
        %v5810 = vadd.f32 %v5689, %v5809
        %v5811 = vpop.f32.mrb[0].mxu0
        %5812 = vmatprep.mubr.f32.mxu0 0.0
        %v5813 = vand.u32 %v3191, 4294901760
        %5814 = vmatmul.mubr.f32.gmra.mrb[0].mxu0 %v5813
        %v5815 = vpop.f32.mrb[0].mxu0
        %v5816 = vadd.f32 %v5695, %v5815
        %v5817 = vpop.f32.mrb[0].mxu0
        %5818 = vdwg.mxu0
        %5819 = vst [vmem:[%s341] sm:$0xff] %v5774
        %5820 = vst [vmem:[%s341 + $0x8] sm:$0xff] %v5780
        %5821 = vst [vmem:[%s341 + $0x10] sm:$0xff] %v5786
        %5822 = vst [vmem:[%s341 + $0x18] sm:$0xff] %v5792
        %5823 = vst [vmem:[%s341 + $0x20] sm:$0xff] %v5798
        %5824 = vst [vmem:[%s341 + $0x28] sm:$0xff] %v5804
        %5825 = vst [vmem:[%s341 + $0x30] sm:$0xff] %v5810
        %5826 = vst [vmem:[%s341 + $0x38] sm:$0xff] %v5816
        %s5827 = sand.u32 %s158, 1
        %s5828 = sand.u32 %s158, 1
        %s5829 = smul.addr %s5828, 64
        %s5830 = scalar_lea.vmem [#allocation3], %s5829
        %s5831 = sand.u32 %s184, 1
        %s5832 = sand.u32 %s184, 1
        %s5833 = smul.addr %s5832, 64
        %s5834 = scalar_lea.vmem [#allocation4], %s5833
        // Predicated region
        $region83: #{learnable_dct_forward.1} parent=77 // pred_check
          %p5835 = pneg %p168
        $region84: #{learnable_dct_forward.1} parent=77 // pred_check_branch
          %5837 = sbr.rel (%p5835) target = $region86
        $region85: #{learnable_dct_forward.1} parent=77 // pred_region
          %s5838 = smul.addr %s19, 8
          %s5839 = scalar_lea.vmem %s6, %s5838
          // Predicated region
          $region87: #{learnable_dct_forward.1} parent=85 // pred_check
            _
          $region88: #{learnable_dct_forward.1} parent=85 // pred_check_branch
            %5841 = sbr.rel (0) target = $region90
          $region89: #{learnable_dct_forward.1} parent=85 // pred_region
            // Predicated region
            $region91: #{learnable_dct_forward.1} parent=89 // pred_check
              _
            $region92: #{learnable_dct_forward.1} parent=89 // pred_check_branch
              %5843 = sbr.rel (0) target = $region94
            $region93: #{learnable_dct_forward.1} parent=89 // pred_region
              // Predicated region
              $region106: #{learnable_dct_forward.1} parent=93 // pred_check
                _
              $region107: #{learnable_dct_forward.1} parent=93 // pred_check_branch
                %5872 = sbr.rel (0) target = $region109
              $region108: #{learnable_dct_forward.1} parent=93 // pred_region
                loop: start=0, step=1, limit=1
                $region110: #{learnable_dct_forward.1} parent=108 // loop_pre_header
                  _
                $region111: #{learnable_dct_forward.1} parent=108 // loop_header
                  %s5874 = sphi 0, %s5878
                  %p5875 = scmp.ge.s32.totalorder %s5874, 1
                  %s5879 = sphi %s5830, %s5830
                  %s5880 = sphi %s5839, %s5839
                $region112: #{learnable_dct_forward.1} parent=108 // loop_header_branch
                  %5877 = sbr.rel (%p5875) target = $region116
                $region113: #{learnable_dct_forward.1} parent=108 // loop_body
                  %v5881 = vld [vmem:[%s5879] sm:$0xff]
                  %5882 = vst [vmem:[%s5880] sm:$0xff] %v5881
                  %v5883 = vld [vmem:[%s5879 + $0x8] sm:$0xff]
                  %5884 = vst [vmem:[%s5880 + $0x10] sm:$0xff] %v5883
                  %v5885 = vld [vmem:[%s5879 + $0x10] sm:$0xff]
                  %5886 = vst [vmem:[%s5880 + $0x20] sm:$0xff] %v5885
                  %v5887 = vld [vmem:[%s5879 + $0x18] sm:$0xff]
                  %5888 = vst [vmem:[%s5880 + $0x30] sm:$0xff] %v5887
                  %v5889 = vld [vmem:[%s5879 + $0x20] sm:$0xff]
                  %5890 = vst [vmem:[%s5880 + $0x40] sm:$0xff] %v5889
                  %v5891 = vld [vmem:[%s5879 + $0x28] sm:$0xff]
                  %5892 = vst [vmem:[%s5880 + $0x50] sm:$0xff] %v5891
                  %v5893 = vld [vmem:[%s5879 + $0x30] sm:$0xff]
                  %5894 = vst [vmem:[%s5880 + $0x60] sm:$0xff] %v5893
                  %v5895 = vld [vmem:[%s5879 + $0x38] sm:$0xff]
                  %5896 = vst [vmem:[%s5880 + $0x70] sm:$0xff] %v5895
                $region114: #{learnable_dct_forward.1} parent=108 // loop_footer
                  %s5878 = sadd.s32 1, %s5874
                $region115: #{learnable_dct_forward.1} parent=108 // loop_footer_branch
                  %5873 = sbr.rel target = $region111
                $region116: #{learnable_dct_forward.1} parent=108 // loop_exit
                  _
              $region109: #{learnable_dct_forward.1} parent=93 // pred_fallthru
                _
              // Predicated region
              $region117: #{learnable_dct_forward.1} parent=93 // pred_check
                _
              $region118: #{learnable_dct_forward.1} parent=93 // pred_check_branch
                %5898 = sbr.rel target = $region120
              $region119: #{learnable_dct_forward.1} parent=93 // pred_region
                _
              $region120: #{learnable_dct_forward.1} parent=93 // pred_fallthru
                _
            $region94: #{learnable_dct_forward.1} parent=89 // pred_fallthru
              _
            // Predicated region
            $region95: #{learnable_dct_forward.1} parent=89 // pred_check
              _
            $region96: #{learnable_dct_forward.1} parent=89 // pred_check_branch
              %5845 = sbr.rel target = $region98
            $region97: #{learnable_dct_forward.1} parent=89 // pred_region
              loop: start=0, step=1, limit=1
              $region99: #{learnable_dct_forward.1} parent=97 // loop_pre_header
                _
              $region100: #{learnable_dct_forward.1} parent=97 // loop_header
                %s5848 = sphi 0, %s5852
                %p5849 = scmp.ge.s32.totalorder %s5848, 1
                %s5853 = sphi %s5830, %s5830
                %s5854 = sphi %s5839, %s5839
              $region101: #{learnable_dct_forward.1} parent=97 // loop_header_branch
                %5851 = sbr.rel (%p5849) target = $region105
              $region102: #{learnable_dct_forward.1} parent=97 // loop_body
                %v5855 = vld [vmem:[%s5853] sm:$0xff]
                %5856 = vst [vmem:[%s5854] sm:$0xff] %v5855
                %v5857 = vld [vmem:[%s5853 + $0x8] sm:$0xff]
                %5858 = vst [vmem:[%s5854 + $0x10] sm:$0xff] %v5857
                %v5859 = vld [vmem:[%s5853 + $0x10] sm:$0xff]
                %5860 = vst [vmem:[%s5854 + $0x20] sm:$0xff] %v5859
                %v5861 = vld [vmem:[%s5853 + $0x18] sm:$0xff]
                %5862 = vst [vmem:[%s5854 + $0x30] sm:$0xff] %v5861
                %v5863 = vld [vmem:[%s5853 + $0x20] sm:$0xff]
                %5864 = vst [vmem:[%s5854 + $0x40] sm:$0xff] %v5863
                %v5865 = vld [vmem:[%s5853 + $0x28] sm:$0xff]
                %5866 = vst [vmem:[%s5854 + $0x50] sm:$0xff] %v5865
                %v5867 = vld [vmem:[%s5853 + $0x30] sm:$0xff]
                %5868 = vst [vmem:[%s5854 + $0x60] sm:$0xff] %v5867
                %v5869 = vld [vmem:[%s5853 + $0x38] sm:$0xff]
                %5870 = vst [vmem:[%s5854 + $0x70] sm:$0xff] %v5869
              $region103: #{learnable_dct_forward.1} parent=97 // loop_footer
                %s5852 = sadd.s32 1, %s5848
              $region104: #{learnable_dct_forward.1} parent=97 // loop_footer_branch
                %5847 = sbr.rel target = $region100
              $region105: #{learnable_dct_forward.1} parent=97 // loop_exit
                _
            $region98: #{learnable_dct_forward.1} parent=89 // pred_fallthru
              _
          $region90: #{learnable_dct_forward.1} parent=85 // pred_fallthru
            _
          %5899 = vnop
        $region86: #{learnable_dct_forward.1} parent=77 // pred_fallthru
          _
        // Predicated region
        $region121: #{learnable_dct_forward.1} parent=77 // pred_check
          %p5900 = pneg %p194
        $region122: #{learnable_dct_forward.1} parent=77 // pred_check_branch
          %5902 = sbr.rel (%p5900) target = $region124
        $region123: #{learnable_dct_forward.1} parent=77 // pred_region
          %s5903 = smul.addr %s19, 8
          %s5904 = scalar_lea.vmem %s7, %s5903
          // Predicated region
          $region125: #{learnable_dct_forward.1} parent=123 // pred_check
            _
          $region126: #{learnable_dct_forward.1} parent=123 // pred_check_branch
            %5906 = sbr.rel (0) target = $region128
          $region127: #{learnable_dct_forward.1} parent=123 // pred_region
            // Predicated region
            $region129: #{learnable_dct_forward.1} parent=127 // pred_check
              _
            $region130: #{learnable_dct_forward.1} parent=127 // pred_check_branch
              %5908 = sbr.rel (0) target = $region132
            $region131: #{learnable_dct_forward.1} parent=127 // pred_region
              // Predicated region
              $region144: #{learnable_dct_forward.1} parent=131 // pred_check
                _
              $region145: #{learnable_dct_forward.1} parent=131 // pred_check_branch
                %5937 = sbr.rel (0) target = $region147
              $region146: #{learnable_dct_forward.1} parent=131 // pred_region
                loop: start=0, step=1, limit=1
                $region148: #{learnable_dct_forward.1} parent=146 // loop_pre_header
                  _
                $region149: #{learnable_dct_forward.1} parent=146 // loop_header
                  %s5939 = sphi 0, %s5943
                  %p5940 = scmp.ge.s32.totalorder %s5939, 1
                  %s5944 = sphi %s5834, %s5834
                  %s5945 = sphi %s5904, %s5904
                $region150: #{learnable_dct_forward.1} parent=146 // loop_header_branch
                  %5942 = sbr.rel (%p5940) target = $region154
                $region151: #{learnable_dct_forward.1} parent=146 // loop_body
                  %v5946 = vld [vmem:[%s5944] sm:$0xff]
                  %5947 = vst [vmem:[%s5945] sm:$0xff] %v5946
                  %v5948 = vld [vmem:[%s5944 + $0x8] sm:$0xff]
                  %5949 = vst [vmem:[%s5945 + $0x10] sm:$0xff] %v5948
                  %v5950 = vld [vmem:[%s5944 + $0x10] sm:$0xff]
                  %5951 = vst [vmem:[%s5945 + $0x20] sm:$0xff] %v5950
                  %v5952 = vld [vmem:[%s5944 + $0x18] sm:$0xff]
                  %5953 = vst [vmem:[%s5945 + $0x30] sm:$0xff] %v5952
                  %v5954 = vld [vmem:[%s5944 + $0x20] sm:$0xff]
                  %5955 = vst [vmem:[%s5945 + $0x40] sm:$0xff] %v5954
                  %v5956 = vld [vmem:[%s5944 + $0x28] sm:$0xff]
                  %5957 = vst [vmem:[%s5945 + $0x50] sm:$0xff] %v5956
                  %v5958 = vld [vmem:[%s5944 + $0x30] sm:$0xff]
                  %5959 = vst [vmem:[%s5945 + $0x60] sm:$0xff] %v5958
                  %v5960 = vld [vmem:[%s5944 + $0x38] sm:$0xff]
                  %5961 = vst [vmem:[%s5945 + $0x70] sm:$0xff] %v5960
                $region152: #{learnable_dct_forward.1} parent=146 // loop_footer
                  %s5943 = sadd.s32 1, %s5939
                $region153: #{learnable_dct_forward.1} parent=146 // loop_footer_branch
                  %5938 = sbr.rel target = $region149
                $region154: #{learnable_dct_forward.1} parent=146 // loop_exit
                  _
              $region147: #{learnable_dct_forward.1} parent=131 // pred_fallthru
                _
              // Predicated region
              $region155: #{learnable_dct_forward.1} parent=131 // pred_check
                _
              $region156: #{learnable_dct_forward.1} parent=131 // pred_check_branch
                %5963 = sbr.rel target = $region158
              $region157: #{learnable_dct_forward.1} parent=131 // pred_region
                _
              $region158: #{learnable_dct_forward.1} parent=131 // pred_fallthru
                _
            $region132: #{learnable_dct_forward.1} parent=127 // pred_fallthru
              _
            // Predicated region
            $region133: #{learnable_dct_forward.1} parent=127 // pred_check
              _
            $region134: #{learnable_dct_forward.1} parent=127 // pred_check_branch
              %5910 = sbr.rel target = $region136
            $region135: #{learnable_dct_forward.1} parent=127 // pred_region
              loop: start=0, step=1, limit=1
              $region137: #{learnable_dct_forward.1} parent=135 // loop_pre_header
                _
              $region138: #{learnable_dct_forward.1} parent=135 // loop_header
                %s5913 = sphi 0, %s5917
                %p5914 = scmp.ge.s32.totalorder %s5913, 1
                %s5918 = sphi %s5834, %s5834
                %s5919 = sphi %s5904, %s5904
              $region139: #{learnable_dct_forward.1} parent=135 // loop_header_branch
                %5916 = sbr.rel (%p5914) target = $region143
              $region140: #{learnable_dct_forward.1} parent=135 // loop_body
                %v5920 = vld [vmem:[%s5918] sm:$0xff]
                %5921 = vst [vmem:[%s5919] sm:$0xff] %v5920
                %v5922 = vld [vmem:[%s5918 + $0x8] sm:$0xff]
                %5923 = vst [vmem:[%s5919 + $0x10] sm:$0xff] %v5922
                %v5924 = vld [vmem:[%s5918 + $0x10] sm:$0xff]
                %5925 = vst [vmem:[%s5919 + $0x20] sm:$0xff] %v5924
                %v5926 = vld [vmem:[%s5918 + $0x18] sm:$0xff]
                %5927 = vst [vmem:[%s5919 + $0x30] sm:$0xff] %v5926
                %v5928 = vld [vmem:[%s5918 + $0x20] sm:$0xff]
                %5929 = vst [vmem:[%s5919 + $0x40] sm:$0xff] %v5928
                %v5930 = vld [vmem:[%s5918 + $0x28] sm:$0xff]
                %5931 = vst [vmem:[%s5919 + $0x50] sm:$0xff] %v5930
                %v5932 = vld [vmem:[%s5918 + $0x30] sm:$0xff]
                %5933 = vst [vmem:[%s5919 + $0x60] sm:$0xff] %v5932
                %v5934 = vld [vmem:[%s5918 + $0x38] sm:$0xff]
                %5935 = vst [vmem:[%s5919 + $0x70] sm:$0xff] %v5934
              $region141: #{learnable_dct_forward.1} parent=135 // loop_footer
                %s5917 = sadd.s32 1, %s5913
              $region142: #{learnable_dct_forward.1} parent=135 // loop_footer_branch
                %5912 = sbr.rel target = $region138
              $region143: #{learnable_dct_forward.1} parent=135 // loop_exit
                _
            $region136: #{learnable_dct_forward.1} parent=127 // pred_fallthru
              _
          $region128: #{learnable_dct_forward.1} parent=123 // pred_fallthru
            _
          %5964 = vnop
        $region124: #{learnable_dct_forward.1} parent=77 // pred_fallthru
          _
      $region78: #{learnable_dct_forward.1} parent=5 // pred_fallthru
        _
      %p5965 = scmp.le.s32.totalorder 2, %s14
      // Predicated region
      $region159: #{learnable_dct_forward.1} parent=5 // pred_check
        %p5966 = pneg %p5965
      $region160: #{learnable_dct_forward.1} parent=5 // pred_check_branch
        %5968 = sbr.rel (%p5966) target = $region162
      $region161: #{learnable_dct_forward.1} parent=5 // pred_region
        %s5969 = ssub.s32 %s14, 2
        // Predicated region
        $region163: #{learnable_dct_forward.1} parent=161 // pred_check
          %p5970 = pneg %p174
        $region164: #{learnable_dct_forward.1} parent=161 // pred_check_branch
          %5972 = sbr.rel (%p5970) target = $region166
        $region165: #{learnable_dct_forward.1} parent=161 // pred_region
          %s5973 = sand.u32 %s159, 1
          %s5974 = sand.u32 %s159, 1
          %s5975 = smul.addr %s5974, 64
          %s5976 = scalar_lea.vmem [#allocation3], %s5975
        $region166: #{learnable_dct_forward.1} parent=161 // pred_fallthru
          _
        // Predicated region
        $region167: #{learnable_dct_forward.1} parent=161 // pred_check
          %p5977 = pneg %p200
        $region168: #{learnable_dct_forward.1} parent=161 // pred_check_branch
          %5979 = sbr.rel (%p5977) target = $region170
        $region169: #{learnable_dct_forward.1} parent=161 // pred_region
          %s5980 = sand.u32 %s185, 1
          %s5981 = sand.u32 %s185, 1
          %s5982 = smul.addr %s5981, 64
          %s5983 = scalar_lea.vmem [#allocation4], %s5982
        $region170: #{learnable_dct_forward.1} parent=161 // pred_fallthru
          _
      $region162: #{learnable_dct_forward.1} parent=5 // pred_fallthru
        _
    $region6: #{learnable_dct_forward.1} parent=1 // loop_footer
      %s18 = sadd.s32 1, %s14
    $region7: #{learnable_dct_forward.1} parent=1 // loop_footer_branch
      %13 = sbr.rel target = $region3
    $region8: #{learnable_dct_forward.1} parent=1 // loop_exit
      _

</llo_original>
